<compile_context>
chip_gen: v5e
topology: v5e:2x2
jax: 0.10.0
libtpu: 0.0.40
codegen_flags: <defaults>
</compile_context>

<pallas_src>
import functools

import jax
import jax.numpy as jnp
from jax.experimental import pallas as pl
from jax.experimental.pallas import tpu as pltpu

NEG_INF = -1e30
LEAKY_SLOPE = 0.2                    # DGL GATConv default negative_slope
VMEM_LIMIT = 32 * 1024 * 1024        # safe on v5e/v6e (128 MiB) and v7x (64 MiB)


def _round_up(x, m):
    return ((x + m - 1) // m) * m


def _leaky_relu(x):
    return jnp.where(x > 0, x, LEAKY_SLOPE * x)


def _elu(x):
    # clamp the discarded branch so exp() never produces inf
    return jnp.where(x > 0, x, jnp.exp(jnp.minimum(x, 0.0)) - 1.0)


def _pick_tile(n):
    # 128 -> ~29%, 256 -> ~63%, 512 -> ~85% of HBM roofline for mem-bound
    # tiled kernels (measured); 256/512 also fill the 2x256^2 MXU on v6e/v7x.
    if n >= 1024:
        return 512
    if n >= 256:
        return 256
    return 128


# ---------------------------------------------------------------------------
# Kernel 1: fused projection.  zfull = x @ [W | W@A]; split into z and [el|er].
# ---------------------------------------------------------------------------
def project_kernel(x_ref, wf_ref, z_ref, eler_ref, *, hf, use_bf16):
    x = x_ref[...]
    wf = wf_ref[...]
    if use_bf16:
        x = x.astype(jnp.bfloat16)
        wf = wf.astype(jnp.bfloat16)
    zfull = jnp.dot(x, wf, preferred_element_type=jnp.float32)   # (t, HF+2H)
    z_ref[...] = zfull[:, :hf].astype(z_ref.dtype)               # bf16/f32
    eler_ref[...] = zfull[:, hf:]                                # f32 logits


def gat_project(x_p, w_fused, *, hf, tile_n, use_bf16):
    n_pad, din = x_p.shape
    width = w_fused.shape[1]
    two_h = width - hf
    z_dtype = jnp.bfloat16 if use_bf16 else jnp.float32
    kern = functools.partial(project_kernel, hf=hf, use_bf16=use_bf16)
    return pl.pallas_call(
        kern,
        grid=(n_pad // tile_n,),
        in_specs=[
            pl.BlockSpec((tile_n, din), lambda i: (i, 0)),
            pl.BlockSpec((din, width), lambda i: (0, 0)),
        ],
        out_specs=[
            pl.BlockSpec((tile_n, hf), lambda i: (i, 0)),       # lane-dense z
            pl.BlockSpec((tile_n, two_h), lambda i: (i, 0)),    # [el | er]
        ],
        out_shape=[
            jax.ShapeDtypeStruct((n_pad, hf), z_dtype),
            jax.ShapeDtypeStruct((n_pad, two_h), jnp.float32),
        ],
        compiler_params=pltpu.CompilerParams(
            dimension_semantics=("parallel",),
            vmem_limit_bytes=VMEM_LIMIT,
        ),
    )(x_p, w_fused)


# ---------------------------------------------------------------------------
# Kernel 2: masked online-softmax + aggregation, heads folded into lanes.
# ---------------------------------------------------------------------------
def attn_kernel(nz_ref, z_ref, elt_ref, er_ref, adj_ref, b_ref, out_ref,
                acc_ref, m_ref, l_ref, *, num_heads, out_feats, apply_elu,
                use_bf16):
    qi = pl.program_id(0)
    ki = pl.program_id(1)
    nk = pl.num_programs(1)
    f = out_feats

    @pl.when(ki == 0)
    def _init():
        m_ref[...] = jnp.full(m_ref.shape, NEG_INF, m_ref.dtype)
        l_ref[...] = jnp.zeros_like(l_ref)
        acc_ref[...] = jnp.zeros_like(acc_ref)

    # Block-sparse skip: only spend the O(tq*tk*H) exp/VPU work when this
    # adjacency tile has at least one edge (table lives in SMEM via prefetch).
    @pl.when(nz_ref[qi * nk + ki] != 0)
    def _compute():
        adj_ok = adj_ref[...] != 0                    # (tq, tk) shared by heads
        z_tile = z_ref[...]                           # (tk, H*F) bf16/f32
        elt = elt_ref[...]                            # (H, tk)  src halves
        er = er_ref[...]                              # (tq, H)  dst halves
        for h in range(num_heads):                    # static, unrolled
            e = _leaky_relu(er[:, h:h + 1] + elt[h:h + 1, :])      # (tq, tk)
            e = jnp.where(adj_ok, e, NEG_INF)
            m_prev = m_ref[:, h:h + 1]
            m_new = jnp.maximum(m_prev, jnp.max(e, axis=-1, keepdims=True))
            corr = jnp.exp(m_prev - m_new)                         # (tq, 1)
            if use_bf16:
                # bf16 exp (bf16 EUP on v6e/v7x) and p is already the MXU
                # input dtype; NEG_INF still saturates -> exp -> 0.
                p = jnp.exp((e - m_new).astype(jnp.bfloat16))
                p_sum = jnp.sum(p.astype(jnp.float32), axis=-1, keepdims=True)
            else:
                p = jnp.exp(e - m_new)
                p_sum = jnp.sum(p, axis=-1, keepdims=True)
            pv = jnp.dot(p, z_tile[:, h * f:(h + 1) * f],
                         preferred_element_type=jnp.float32)       # (tq, F)
            l_ref[:, h:h + 1] = corr * l_ref[:, h:h + 1] + p_sum
            acc_ref[:, h * f:(h + 1) * f] = (
                corr * acc_ref[:, h * f:(h + 1) * f] + pv)
            m_ref[:, h:h + 1] = m_new

    @pl.when(ki == nk - 1)
    def _finalize():
        # approx EUP reciprocal on the fast (bf16) path; exact divide on the
        # f32 debug path so it can be checked tightly.
        inv = pl.reciprocal(l_ref[...], approx=use_bf16)           # (tq, H)
        bias = b_ref[...]                                          # (1, H*F)
        acc = acc_ref[...]                                         # (tq, H*F)
        for h in range(num_heads):
            res = (acc[:, h * f:(h + 1) * f] * inv[:, h:h + 1]
                   + bias[:, h * f:(h + 1) * f])
            if apply_elu:
                res = _elu(res)
            out_ref[:, h * f:(h + 1) * f] = res.astype(out_ref.dtype)


def gat_attention(z, el_t, er, adj_p, nz_tab, b_row, *, num_heads, out_feats,
                  tile_n, apply_elu, use_bf16):
    n_pad, hf = z.shape
    tq = tk = tile_n
    grid = (n_pad // tq, n_pad // tk)            # src (reduction) axis last
    kern = functools.partial(attn_kernel, num_heads=num_heads,
                             out_feats=out_feats, apply_elu=apply_elu,
                             use_bf16=use_bf16)
    return pl.pallas_call(
        kern,
        grid_spec=pltpu.PrefetchScalarGridSpec(
            num_scalar_prefetch=1,                       # nz_tab -> SMEM
            grid=grid,
            in_specs=[
                pl.BlockSpec((tk, hf), lambda qi, ki, nz: (ki, 0)),        # z[src]
                pl.BlockSpec((num_heads, tk), lambda qi, ki, nz: (0, ki)), # el[src]
                pl.BlockSpec((tq, num_heads), lambda qi, ki, nz: (qi, 0)), # er[dst]
                pl.BlockSpec((tq, tk), lambda qi, ki, nz: (qi, ki)),       # adj int8
                pl.BlockSpec((1, hf), lambda qi, ki, nz: (0, 0)),          # bias
            ],
            out_specs=pl.BlockSpec((tq, hf), lambda qi, ki, nz: (qi, 0)),  # lane-dense
            scratch_shapes=[
                pltpu.VMEM((tq, hf), jnp.float32),          # output accumulator
                pltpu.VMEM((tq, num_heads), jnp.float32),   # running max
                pltpu.VMEM((tq, num_heads), jnp.float32),   # running sum
            ],
        ),
        out_shape=jax.ShapeDtypeStruct((n_pad, hf), jnp.float32),
        compiler_params=pltpu.CompilerParams(
            # NOTE(v7x): with very small graphs the parallel extent can be 1
            # (one dst tile) and one of the two TensorCores idles; cap tile_n
            # so n_pad // tile_n >= 2 on large inputs (handled by _pick_tile).
            dimension_semantics=("parallel", "arbitrary"),
            vmem_limit_bytes=VMEM_LIMIT,
        ),
    )(nz_tab, z, el_t, er, adj_p, b_row)


# ---------------------------------------------------------------------------
# Layer wrapper and full forward.
# ---------------------------------------------------------------------------
def build_logit_matrix(al, ar):
    """A (H*F, 2H) block-diag matrix so that z @ A = [el_0..el_{H-1}, er_0..]."""
    h, f = al.shape
    rows = jnp.arange(h * f)
    head_of_row = rows // f
    a = jnp.zeros((h * f, 2 * h), jnp.float32)
    a = a.at[rows, head_of_row].set(al.reshape(-1))
    a = a.at[rows, h + head_of_row].set(ar.reshape(-1))
    return a


def gat_conv_layer(x_p, adj_p, nz_tab, w, al, ar, b, *, apply_elu, use_bf16,
                   tile_n):
    num_heads, out_feats = al.shape
    hf = num_heads * out_feats
    a_mat = build_logit_matrix(al, ar)                         # (H*F, 2H)
    w_fused = jnp.concatenate([w, jnp.dot(w, a_mat)], axis=1)  # (din, HF+2H)
    z, eler = gat_project(x_p, w_fused, hf=hf, tile_n=tile_n,
                          use_bf16=use_bf16)
    # tiny O(N*H) layout plumbing for the attention kernel
    el_t = eler[:, :num_heads].T                               # (H, N) src
    er = eler[:, num_heads:]                                   # (N, H) dst
    b_row = b.reshape(1, hf)
    return gat_attention(z, el_t, er, adj_p, nz_tab, b_row,
                         num_heads=num_heads, out_feats=out_feats,
                         tile_n=tile_n, apply_elu=apply_elu,
                         use_bf16=use_bf16)                    # (N_pad, H*F)


def _gat_forward(feat, adj, w1, al1, ar1, b1, w2, al2, ar2, b2,
                 use_bf16=True, tile_n=None):
    n, din = feat.shape
    if tile_n is None:
        tile_n = _pick_tile(n)
    n_pad = _round_up(max(n, tile_n), tile_n)
    nq = n_pad // tile_n

    x_p = jnp.zeros((n_pad, din), jnp.float32).at[:n, :].set(feat)
    adj_p = jnp.zeros((n_pad, n_pad), jnp.int8).at[:n, :n].set(
        (adj != 0).astype(jnp.int8))
    # self-loops on padded rows avoid 0/0 softmax rows (real rows already have
    # self-loops, as dgl.add_self_loop guarantees).
    pad_eye = (jnp.eye(n_pad, dtype=jnp.int8)
               * (jnp.arange(n_pad) >= n).astype(jnp.int8))
    adj_p = jnp.maximum(adj_p, pad_eye)

    # per-(dst_tile, src_tile) "has any edge" table for block-sparse skipping
    nz_tab = jnp.any(
        adj_p.reshape(nq, tile_n, nq, tile_n) != 0, axis=(1, 3)
    ).astype(jnp.int32).reshape(-1)

    # layer 0: GATConv(in -> hid, heads[0]), ELU; kernel output lane order is
    # head-major, so it IS the torch flatten(1) layout - no transpose needed.
    h1 = gat_conv_layer(x_p, adj_p, nz_tab, w1, al1, ar1, b1, apply_elu=True,
                        use_bf16=use_bf16, tile_n=tile_n)    # (N_pad, H0*hid)

    # layer 1: GATConv(hid*H0 -> out, heads[1]), no activation, mean over heads
    h2 = gat_conv_layer(h1, adj_p, nz_tab, w2, al2, ar2, b2, apply_elu=False,
                        use_bf16=use_bf16, tile_n=tile_n)    # (N_pad, H1*out)
    h2_heads, out_sz = al2.shape
    return h2.reshape(n_pad, h2_heads, out_sz).mean(axis=1)[:n]


gat_forward = jax.jit(_gat_forward, static_argnames=("use_bf16", "tile_n"))


# ---------------- pure-JAX reference (for correctness check) ----------------
def gat_layer_ref(x, adj, w, al, ar, b, *, apply_elu, use_bf16):
    n = x.shape[0]
    h, f = al.shape
    if use_bf16:
        z = jnp.dot(x.astype(jnp.bfloat16), w.astype(jnp.bfloat16),
                    preferred_element_type=jnp.float32)
    else:
        z = jnp.dot(x, w, preferred_element_type=jnp.float32)
    z = z.reshape(n, h, f)
    el = jnp.sum(z * al[None], axis=-1)                   # (N, H)
    er = jnp.sum(z * ar[None], axis=-1)                   # (N, H)
    e = _leaky_relu(er[:, None, :] + el[None, :, :])      # (dst, src, H)
    e = jnp.where((adj != 0)[:, :, None], e, NEG_INF)
    alpha = jax.nn.softmax(e, axis=1)                     # over src
    if use_bf16:
        out = jnp.einsum("dsh,shf->dhf", alpha.astype(jnp.bfloat16),
                         z.astype(jnp.bfloat16),
                         preferred_element_type=jnp.float32)
    else:
        out = jnp.einsum("dsh,shf->dhf", alpha, z)
    out = out + b[None]
    if apply_elu:
        out = _elu(out)
    return out                                            # (N, H, F)


def gat_forward_ref(feat, adj, w1, al1, ar1, b1, w2, al2, ar2, b2, use_bf16):
    h1 = gat_layer_ref(feat, adj, w1, al1, ar1, b1,
                       apply_elu=True, use_bf16=use_bf16)
    h1 = h1.reshape(feat.shape[0], -1)
    h2 = gat_layer_ref(h1, adj, w2, al2, ar2, b2,
                       apply_elu=False, use_bf16=use_bf16)
    return h2.mean(axis=1)


if __name__ == "__main__":
    key = jax.random.PRNGKey(0)
    N, in_size, hid, out_size = 16, 8, 8, 3
    heads = (4, 2)

    k = jax.random.split(key, 10)
    feat = jax.random.normal(k[0], (N, in_size), jnp.float32)

    # adjacency A[dst, src] with self-loops (dgl.add_self_loop)
    adj = (jax.random.uniform(k[1], (N, N)) < 0.3).astype(jnp.float32)
    adj = jnp.maximum(adj, jnp.eye(N, dtype=jnp.float32))

    # layer 0: GATConv(in_size -> hid, heads[0]), activation = ELU, flatten
    w1 = jax.random.normal(k[2], (in_size, heads[0] * hid), jnp.float32) * 0.3
    al1 = jax.random.normal(k[3], (heads[0], hid), jnp.float32) * 0.3
    ar1 = jax.random.normal(k[4], (heads[0], hid), jnp.float32) * 0.3
    b1 = jax.random.normal(k[5], (heads[0], hid), jnp.float32) * 0.1

    # layer 1: GATConv(hid*heads[0] -> out_size, heads[1]), no act, mean heads
    w2 = jax.random.normal(k[6], (heads[0] * hid, heads[1] * out_size),
                           jnp.float32) * 0.3
    al2 = jax.random.normal(k[7], (heads[1], out_size), jnp.float32) * 0.3
    ar2 = jax.random.normal(k[8], (heads[1], out_size), jnp.float32) * 0.3
    b2 = jax.random.normal(k[9], (heads[1], out_size), jnp.float32) * 0.1

    # fast path: bf16 MXU/exp, fused projection, approx reciprocal
    out = gat_forward(feat, adj, w1, al1, ar1, b1, w2, al2, ar2, b2)
    out = jax.block_until_ready(out)
    assert out.shape == (N, out_size)

    # strict structural check on the full-f32 path (exact reciprocal):
    out_f32 = jax.block_until_ready(
        gat_forward(feat, adj, w1, al1, ar1, b1, w2, al2, ar2, b2,
                    use_bf16=False))
    ref_f32 = gat_forward_ref(feat, adj, w1, al1, ar1, b1, w2, al2, ar2, b2,
                              use_bf16=False)
    assert jnp.allclose(out_f32, ref_f32, rtol=1e-3, atol=1e-3), \
        "f32 path mismatch vs reference"

    # loose sanity check on the bf16 fast path (bf16 MXU inputs, bf16 exp,
    # fused x@(W@A) logits and approx reciprocal all shift rounding slightly).
    ref_bf16 = gat_forward_ref(feat, adj, w1, al1, ar1, b1, w2, al2, ar2, b2,
                               use_bf16=True)
    assert jnp.allclose(out, ref_bf16, rtol=5e-2, atol=5e-2), \
        "bf16 path mismatch vs reference"

    print("KERNEL_OK")
</pallas_src>

<mosaic_0001>
module attributes {stable_mosaic.version = 11 : i64} {
  func.func @project_kernel(%arg0: i32, %arg1: memref<128x8xf32, #tpu.memory_space<vmem>>, %arg2: memref<8x40xf32, #tpu.memory_space<vmem>>, %arg3: memref<128x32xbf16, #tpu.memory_space<vmem>>, %arg4: memref<128x8xf32, #tpu.memory_space<vmem>>) attributes {dimension_semantics = [#tpu.dimension_semantics<parallel>], iteration_bounds = array<i64: 1>, scalar_prefetch = 0 : i64, scratch_operands = 0 : i64, tpu.core_type = #tpu.core_type<tc>, window_params = [{transform_indices = @transform_0, window_bounds = array<i64: 128, 8>}, {pipeline_mode = #tpu.pipeline_mode<synchronous>, transform_indices = @transform_1, window_bounds = array<i64: 8, 40>}, {transform_indices = @transform_2, window_bounds = array<i64: 128, 32>}, {transform_indices = @transform_3, window_bounds = array<i64: 128, 8>}]} {
    %c0 = arith.constant 0 : index
    %c0_0 = arith.constant 0 : index
    %0 = vector.load %arg1[%c0, %c0_0] : memref<128x8xf32, #tpu.memory_space<vmem>>, vector<128x8xf32>
    %c0_1 = arith.constant 0 : index
    %c0_2 = arith.constant 0 : index
    %1 = vector.load %arg2[%c0_1, %c0_2] : memref<8x40xf32, #tpu.memory_space<vmem>>, vector<8x40xf32>
    %2 = arith.truncf %0 : vector<128x8xf32> to vector<128x8xbf16>
    %3 = arith.truncf %1 : vector<8x40xf32> to vector<8x40xbf16>
    %cst = arith.constant dense<0.000000e+00> : vector<128x40xf32>
    %4 = tpu.matmul %2, %3, %cst {dimension_numbers = #tpu.dot_dimension_numbers<[1], [0], [0], [1], [0, 0, 1, 1], [], []>} : vector<128x8xbf16>, vector<8x40xbf16>, vector<128x40xf32> -> vector<128x40xf32>
    %5 = vector.extract_strided_slice %4 {offsets = [0, 0], sizes = [128, 32], strides = [1, 1]} : vector<128x40xf32> to vector<128x32xf32>
    %6 = arith.truncf %5 : vector<128x32xf32> to vector<128x32xbf16>
    %c0_3 = arith.constant 0 : index
    %c0_4 = arith.constant 0 : index
    %7 = vector.load %arg3[%c0_3, %c0_4] : memref<128x32xbf16, #tpu.memory_space<vmem>>, vector<128x32xbf16>
    tpu.vector_store %arg3[%c0_3, %c0_4], %6 {strides = array<i32>} : memref<128x32xbf16, #tpu.memory_space<vmem>>, vector<128x32xbf16>,
    %8 = vector.extract_strided_slice %4 {offsets = [0, 32], sizes = [128, 8], strides = [1, 1]} : vector<128x40xf32> to vector<128x8xf32>
    %c0_5 = arith.constant 0 : index
    %c0_6 = arith.constant 0 : index
    %9 = vector.load %arg4[%c0_5, %c0_6] : memref<128x8xf32, #tpu.memory_space<vmem>>, vector<128x8xf32>
    tpu.vector_store %arg4[%c0_5, %c0_6], %8 {strides = array<i32>} : memref<128x8xf32, #tpu.memory_space<vmem>>, vector<128x8xf32>,
    return
  }
  func.func @transform_0(%arg0: i32) -> (i32, i32) {
    %c0_i32 = arith.constant 0 : i32
    %c0_i32_0 = arith.constant 0 : i32
    return %arg0, %c0_i32 : i32, i32
  }
  func.func @transform_1(%arg0: i32) -> (i32, i32) {
    %c0_i32 = arith.constant 0 : i32
    %c0_i32_0 = arith.constant 0 : i32
    %c0_i32_1 = arith.constant 0 : i32
    return %c0_i32, %c0_i32_0 : i32, i32
  }
  func.func @transform_2(%arg0: i32) -> (i32, i32) {
    %c0_i32 = arith.constant 0 : i32
    %c0_i32_0 = arith.constant 0 : i32
    return %arg0, %c0_i32 : i32, i32
  }
  func.func @transform_3(%arg0: i32) -> (i32, i32) {
    %c0_i32 = arith.constant 0 : i32
    %c0_i32_0 = arith.constant 0 : i32
    return %arg0, %c0_i32 : i32, i32
  }
}

module attributes {stable_mosaic.version = 11 : i64} {
  func.func @attn_kernel(%arg0: i32, %arg1: i32, %arg2: memref<1xi32, #tpu.memory_space<smem>>, %arg3: memref<128x32xbf16, #tpu.memory_space<vmem>>, %arg4: memref<4x128xf32, #tpu.memory_space<vmem>>, %arg5: memref<128x4xf32, #tpu.memory_space<vmem>>, %arg6: memref<128x128xi8, #tpu.memory_space<vmem>>, %arg7: memref<1x32xf32, #tpu.memory_space<vmem>>, %arg8: memref<128x32xf32, #tpu.memory_space<vmem>>, %arg9: memref<128x32xf32, #tpu.memory_space<vmem>>, %arg10: memref<128x4xf32, #tpu.memory_space<vmem>>, %arg11: memref<128x4xf32, #tpu.memory_space<vmem>>) attributes {dimension_semantics = [#tpu.dimension_semantics<parallel>, #tpu.dimension_semantics<arbitrary>], iteration_bounds = array<i64: 1, 1>, scalar_prefetch = 1 : i64, scratch_operands = 3 : i64, tpu.core_type = #tpu.core_type<tc>, window_params = [{transform_indices = @transform_0, window_bounds = array<i64: 128, 32>}, {transform_indices = @transform_1, window_bounds = array<i64: 4, 128>}, {transform_indices = @transform_2, window_bounds = array<i64: 128, 4>}, {transform_indices = @transform_3, window_bounds = array<i64: 128, 128>}, {pipeline_mode = #tpu.pipeline_mode<synchronous>, transform_indices = @transform_4, window_bounds = array<i64: 1, 32>}, {transform_indices = @transform_5, window_bounds = array<i64: 128, 32>}]} {
    %c0_i32 = arith.constant 0 : i32
    %0 = arith.cmpi eq, %arg1, %c0_i32 : i32
    %1 = arith.extui %0 : i1 to i32
    %c0_i32_0 = arith.constant 0 : i32
    %2 = arith.cmpi ne, %1, %c0_i32_0 : i32
    scf.if %2 {
      %cst = arith.constant -1.000000e+30 : f32
      %13 = vector.broadcast %cst : f32 to vector<128x4xf32>
      %c0 = arith.constant 0 : index
      %c0_5 = arith.constant 0 : index
      %14 = vector.load %arg10[%c0, %c0_5] : memref<128x4xf32, #tpu.memory_space<vmem>>, vector<128x4xf32>
      tpu.vector_store %arg10[%c0, %c0_5], %13 {strides = array<i32>} : memref<128x4xf32, #tpu.memory_space<vmem>>, vector<128x4xf32>,
      %cst_6 = arith.constant 0.000000e+00 : f32
      %15 = vector.broadcast %cst_6 : f32 to vector<128x4xf32>
      %c0_7 = arith.constant 0 : index
      %c0_8 = arith.constant 0 : index
      %16 = vector.load %arg11[%c0_7, %c0_8] : memref<128x4xf32, #tpu.memory_space<vmem>>, vector<128x4xf32>
      tpu.vector_store %arg11[%c0_7, %c0_8], %15 {strides = array<i32>} : memref<128x4xf32, #tpu.memory_space<vmem>>, vector<128x4xf32>,
      %cst_9 = arith.constant 0.000000e+00 : f32
      %17 = vector.broadcast %cst_9 : f32 to vector<128x32xf32>
      %c0_10 = arith.constant 0 : index
      %c0_11 = arith.constant 0 : index
      %18 = vector.load %arg9[%c0_10, %c0_11] : memref<128x32xf32, #tpu.memory_space<vmem>>, vector<128x32xf32>
      tpu.vector_store %arg9[%c0_10, %c0_11], %17 {strides = array<i32>} : memref<128x32xf32, #tpu.memory_space<vmem>>, vector<128x32xf32>,
    } else {
    }
    %c1_i32 = arith.constant 1 : i32
    %3 = arith.muli %arg0, %c1_i32 : i32
    %4 = arith.addi %3, %arg1 : i32
    %5 = arith.index_cast %4 : i32 to index
    %6 = memref.load %arg2[%5] : memref<1xi32, #tpu.memory_space<smem>>
    %c0_i32_1 = arith.constant 0 : i32
    %7 = arith.cmpi ne, %6, %c0_i32_1 : i32
    %8 = arith.extui %7 : i1 to i32
    %c0_i32_2 = arith.constant 0 : i32
    %9 = arith.cmpi ne, %8, %c0_i32_2 : i32
    scf.if %9 {
      %c0 = arith.constant 0 : index
      %c0_5 = arith.constant 0 : index
      %13 = vector.load %arg6[%c0, %c0_5] : memref<128x128xi8, #tpu.memory_space<vmem>>, vector<128x128xi8>
      %c0_i8 = arith.constant 0 : i8
      %14 = vector.broadcast %c0_i8 : i8 to vector<128x128xi8>
      %15 = arith.cmpi ne, %13, %14 : vector<128x128xi8>
      %c0_6 = arith.constant 0 : index
      %c0_7 = arith.constant 0 : index
      %16 = vector.load %arg3[%c0_6, %c0_7] : memref<128x32xbf16, #tpu.memory_space<vmem>>, vector<128x32xbf16>
      %c0_8 = arith.constant 0 : index
      %c0_9 = arith.constant 0 : index
      %17 = vector.load %arg4[%c0_8, %c0_9] : memref<4x128xf32, #tpu.memory_space<vmem>>, vector<4x128xf32>
      %c0_10 = arith.constant 0 : index
      %c0_11 = arith.constant 0 : index
      %18 = vector.load %arg5[%c0_10, %c0_11] : memref<128x4xf32, #tpu.memory_space<vmem>>, vector<128x4xf32>
      %19 = vector.extract_strided_slice %18 {offsets = [0, 0], sizes = [128, 1], strides = [1, 1]} : vector<128x4xf32> to vector<128x1xf32>
      %20 = vector.extract_strided_slice %17 {offsets = [0, 0], sizes = [1, 128], strides = [1, 1]} : vector<4x128xf32> to vector<1x128xf32>
      %21 = vector.broadcast %19 : vector<128x1xf32> to vector<128x128xf32>
      %22 = vector.broadcast %20 : vector<1x128xf32> to vector<128x128xf32>
      %23 = arith.addf %21, %22 : vector<128x128xf32>
      %cst = arith.constant 0.000000e+00 : f32
      %24 = vector.broadcast %cst : f32 to vector<128x128xf32>
      %25 = arith.cmpf ogt, %23, %24 : vector<128x128xf32>
      %cst_12 = arith.constant 2.000000e-01 : f32
      %26 = vector.broadcast %cst_12 : f32 to vector<128x128xf32>
      %27 = arith.mulf %26, %23 : vector<128x128xf32>
      %28 = arith.select %25, %23, %27 : vector<128x128xi1>, vector<128x128xf32>
      %cst_13 = arith.constant -1.000000e+30 : f32
      %29 = vector.broadcast %cst_13 : f32 to vector<128x128xf32>
      %30 = arith.select %15, %28, %29 : vector<128x128xi1>, vector<128x128xf32>
      %c0_14 = arith.constant 0 : index
      %c0_15 = arith.constant 0 : index
      %31 = vector.load %arg10[%c0_14, %c0_15] : memref<128x4xf32, #tpu.memory_space<vmem>>, vector<128x1xf32>
      %cst_16 = arith.constant dense<0xFF800000> : vector<128xf32>
      %32 = vector.multi_reduction <maximumf>, %30, %cst_16 [1] : vector<128x128xf32> to vector<128xf32>
      %33 = vector.shape_cast %32 : vector<128xf32> to vector<128x1xf32>
      %34 = arith.maximumf %31, %33 : vector<128x1xf32>
      %35 = arith.subf %31, %34 : vector<128x1xf32>
      %36 = math.exp %35 : vector<128x1xf32>
      %37 = vector.broadcast %34 : vector<128x1xf32> to vector<128x128xf32>
      %38 = arith.subf %30, %37 : vector<128x128xf32>
      %39 = arith.truncf %38 : vector<128x128xf32> to vector<128x128xbf16>
      %40 = math.exp %39 : vector<128x128xbf16>
      %41 = arith.extf %40 : vector<128x128xbf16> to vector<128x128xf32>
      %cst_17 = arith.constant dense<0.000000e+00> : vector<128xf32>
      %42 = vector.multi_reduction <add>, %41, %cst_17 [1] : vector<128x128xf32> to vector<128xf32>
      %43 = vector.shape_cast %42 : vector<128xf32> to vector<128x1xf32>
      %44 = vector.extract_strided_slice %16 {offsets = [0, 0], sizes = [128, 8], strides = [1, 1]} : vector<128x32xbf16> to vector<128x8xbf16>
      %cst_18 = arith.constant dense<0.000000e+00> : vector<128x8xf32>
      %45 = tpu.matmul %40, %44, %cst_18 {dimension_numbers = #tpu.dot_dimension_numbers<[1], [0], [0], [1], [0, 0, 1, 1], [], []>} : vector<128x128xbf16>, vector<128x8xbf16>, vector<128x8xf32> -> vector<128x8xf32>
      %c0_19 = arith.constant 0 : index
      %c0_20 = arith.constant 0 : index
      %46 = vector.load %arg11[%c0_19, %c0_20] : memref<128x4xf32, #tpu.memory_space<vmem>>, vector<128x1xf32>
      %47 = arith.mulf %36, %46 : vector<128x1xf32>
      %48 = arith.addf %47, %43 : vector<128x1xf32>
      %c0_21 = arith.constant 0 : index
      %c0_22 = arith.constant 0 : index
      %49 = vector.load %arg11[%c0_21, %c0_22] : memref<128x4xf32, #tpu.memory_space<vmem>>, vector<128x1xf32>
      tpu.vector_store %arg11[%c0_21, %c0_22], %48 {strides = array<i32>} : memref<128x4xf32, #tpu.memory_space<vmem>>, vector<128x1xf32>,
      %c0_23 = arith.constant 0 : index
      %c0_24 = arith.constant 0 : index
      %50 = vector.load %arg9[%c0_23, %c0_24] : memref<128x32xf32, #tpu.memory_space<vmem>>, vector<128x8xf32>
      %51 = vector.broadcast %36 : vector<128x1xf32> to vector<128x8xf32>
      %52 = arith.mulf %51, %50 : vector<128x8xf32>
      %53 = arith.addf %52, %45 : vector<128x8xf32>
      %c0_25 = arith.constant 0 : index
      %c0_26 = arith.constant 0 : index
      %54 = vector.load %arg9[%c0_25, %c0_26] : memref<128x32xf32, #tpu.memory_space<vmem>>, vector<128x8xf32>
      tpu.vector_store %arg9[%c0_25, %c0_26], %53 {strides = array<i32>} : memref<128x32xf32, #tpu.memory_space<vmem>>, vector<128x8xf32>,
      %c0_27 = arith.constant 0 : index
      %c0_28 = arith.constant 0 : index
      %55 = vector.load %arg10[%c0_27, %c0_28] : memref<128x4xf32, #tpu.memory_space<vmem>>, vector<128x1xf32>
      tpu.vector_store %arg10[%c0_27, %c0_28], %34 {strides = array<i32>} : memref<128x4xf32, #tpu.memory_space<vmem>>, vector<128x1xf32>,
      %56 = vector.extract_strided_slice %18 {offsets = [0, 1], sizes = [128, 1], strides = [1, 1]} : vector<128x4xf32> to vector<128x1xf32>
      %57 = vector.extract_strided_slice %17 {offsets = [1, 0], sizes = [1, 128], strides = [1, 1]} : vector<4x128xf32> to vector<1x128xf32>
      %58 = vector.broadcast %56 : vector<128x1xf32> to vector<128x128xf32>
      %59 = vector.broadcast %57 : vector<1x128xf32> to vector<128x128xf32>
      %60 = arith.addf %58, %59 : vector<128x128xf32>
      %cst_29 = arith.constant 0.000000e+00 : f32
      %61 = vector.broadcast %cst_29 : f32 to vector<128x128xf32>
      %62 = arith.cmpf ogt, %60, %61 : vector<128x128xf32>
      %cst_30 = arith.constant 2.000000e-01 : f32
      %63 = vector.broadcast %cst_30 : f32 to vector<128x128xf32>
      %64 = arith.mulf %63, %60 : vector<128x128xf32>
      %65 = arith.select %62, %60, %64 : vector<128x128xi1>, vector<128x128xf32>
      %cst_31 = arith.constant -1.000000e+30 : f32
      %66 = vector.broadcast %cst_31 : f32 to vector<128x128xf32>
      %67 = arith.select %15, %65, %66 : vector<128x128xi1>, vector<128x128xf32>
      %c0_32 = arith.constant 0 : index
      %c1 = arith.constant 1 : index
      %68 = vector.load %arg10[%c0_32, %c1] : memref<128x4xf32, #tpu.memory_space<vmem>>, vector<128x1xf32>
      %cst_33 = arith.constant dense<0xFF800000> : vector<128xf32>
      %69 = vector.multi_reduction <maximumf>, %67, %cst_33 [1] : vector<128x128xf32> to vector<128xf32>
      %70 = vector.shape_cast %69 : vector<128xf32> to vector<128x1xf32>
      %71 = arith.maximumf %68, %70 : vector<128x1xf32>
      %72 = arith.subf %68, %71 : vector<128x1xf32>
      %73 = math.exp %72 : vector<128x1xf32>
      %74 = vector.broadcast %71 : vector<128x1xf32> to vector<128x128xf32>
      %75 = arith.subf %67, %74 : vector<128x128xf32>
      %76 = arith.truncf %75 : vector<128x128xf32> to vector<128x128xbf16>
      %77 = math.exp %76 : vector<128x128xbf16>
      %78 = arith.extf %77 : vector<128x128xbf16> to vector<128x128xf32>
      %cst_34 = arith.constant dense<0.000000e+00> : vector<128xf32>
      %79 = vector.multi_reduction <add>, %78, %cst_34 [1] : vector<128x128xf32> to vector<128xf32>
      %80 = vector.shape_cast %79 : vector<128xf32> to vector<128x1xf32>
      %81 = vector.extract_strided_slice %16 {offsets = [0, 8], sizes = [128, 8], strides = [1, 1]} : vector<128x32xbf16> to vector<128x8xbf16>
      %cst_35 = arith.constant dense<0.000000e+00> : vector<128x8xf32>
      %82 = tpu.matmul %77, %81, %cst_35 {dimension_numbers = #tpu.dot_dimension_numbers<[1], [0], [0], [1], [0, 0, 1, 1], [], []>} : vector<128x128xbf16>, vector<128x8xbf16>, vector<128x8xf32> -> vector<128x8xf32>
      %c0_36 = arith.constant 0 : index
      %c1_37 = arith.constant 1 : index
      %83 = vector.load %arg11[%c0_36, %c1_37] : memref<128x4xf32, #tpu.memory_space<vmem>>, vector<128x1xf32>
      %84 = arith.mulf %73, %83 : vector<128x1xf32>
      %85 = arith.addf %84, %80 : vector<128x1xf32>
      %c0_38 = arith.constant 0 : index
      %c1_39 = arith.constant 1 : index
      %86 = vector.load %arg11[%c0_38, %c1_39] : memref<128x4xf32, #tpu.memory_space<vmem>>, vector<128x1xf32>
      tpu.vector_store %arg11[%c0_38, %c1_39], %85 {strides = array<i32>} : memref<128x4xf32, #tpu.memory_space<vmem>>, vector<128x1xf32>,
      %c0_40 = arith.constant 0 : index
      %c8 = arith.constant 8 : index
      %87 = vector.load %arg9[%c0_40, %c8] : memref<128x32xf32, #tpu.memory_space<vmem>>, vector<128x8xf32>
      %88 = vector.broadcast %73 : vector<128x1xf32> to vector<128x8xf32>
      %89 = arith.mulf %88, %87 : vector<128x8xf32>
      %90 = arith.addf %89, %82 : vector<128x8xf32>
      %c0_41 = arith.constant 0 : index
      %c8_42 = arith.constant 8 : index
      %91 = vector.load %arg9[%c0_41, %c8_42] : memref<128x32xf32, #tpu.memory_space<vmem>>, vector<128x8xf32>
      tpu.vector_store %arg9[%c0_41, %c8_42], %90 {strides = array<i32>} : memref<128x32xf32, #tpu.memory_space<vmem>>, vector<128x8xf32>,
      %c0_43 = arith.constant 0 : index
      %c1_44 = arith.constant 1 : index
      %92 = vector.load %arg10[%c0_43, %c1_44] : memref<128x4xf32, #tpu.memory_space<vmem>>, vector<128x1xf32>
      tpu.vector_store %arg10[%c0_43, %c1_44], %71 {strides = array<i32>} : memref<128x4xf32, #tpu.memory_space<vmem>>, vector<128x1xf32>,
      %93 = vector.extract_strided_slice %18 {offsets = [0, 2], sizes = [128, 1], strides = [1, 1]} : vector<128x4xf32> to vector<128x1xf32>
      %94 = vector.extract_strided_slice %17 {offsets = [2, 0], sizes = [1, 128], strides = [1, 1]} : vector<4x128xf32> to vector<1x128xf32>
      %95 = vector.broadcast %93 : vector<128x1xf32> to vector<128x128xf32>
      %96 = vector.broadcast %94 : vector<1x128xf32> to vector<128x128xf32>
      %97 = arith.addf %95, %96 : vector<128x128xf32>
      %cst_45 = arith.constant 0.000000e+00 : f32
      %98 = vector.broadcast %cst_45 : f32 to vector<128x128xf32>
      %99 = arith.cmpf ogt, %97, %98 : vector<128x128xf32>
      %cst_46 = arith.constant 2.000000e-01 : f32
      %100 = vector.broadcast %cst_46 : f32 to vector<128x128xf32>
      %101 = arith.mulf %100, %97 : vector<128x128xf32>
      %102 = arith.select %99, %97, %101 : vector<128x128xi1>, vector<128x128xf32>
      %cst_47 = arith.constant -1.000000e+30 : f32
      %103 = vector.broadcast %cst_47 : f32 to vector<128x128xf32>
      %104 = arith.select %15, %102, %103 : vector<128x128xi1>, vector<128x128xf32>
      %c0_48 = arith.constant 0 : index
      %c2 = arith.constant 2 : index
      %105 = vector.load %arg10[%c0_48, %c2] : memref<128x4xf32, #tpu.memory_space<vmem>>, vector<128x1xf32>
      %cst_49 = arith.constant dense<0xFF800000> : vector<128xf32>
      %106 = vector.multi_reduction <maximumf>, %104, %cst_49 [1] : vector<128x128xf32> to vector<128xf32>
      %107 = vector.shape_cast %106 : vector<128xf32> to vector<128x1xf32>
      %108 = arith.maximumf %105, %107 : vector<128x1xf32>
      %109 = arith.subf %105, %108 : vector<128x1xf32>
      %110 = math.exp %109 : vector<128x1xf32>
      %111 = vector.broadcast %108 : vector<128x1xf32> to vector<128x128xf32>
      %112 = arith.subf %104, %111 : vector<128x128xf32>
      %113 = arith.truncf %112 : vector<128x128xf32> to vector<128x128xbf16>
      %114 = math.exp %113 : vector<128x128xbf16>
      %115 = arith.extf %114 : vector<128x128xbf16> to vector<128x128xf32>
      %cst_50 = arith.constant dense<0.000000e+00> : vector<128xf32>
      %116 = vector.multi_reduction <add>, %115, %cst_50 [1] : vector<128x128xf32> to vector<128xf32>
      %117 = vector.shape_cast %116 : vector<128xf32> to vector<128x1xf32>
      %118 = vector.extract_strided_slice %16 {offsets = [0, 16], sizes = [128, 8], strides = [1, 1]} : vector<128x32xbf16> to vector<128x8xbf16>
      %cst_51 = arith.constant dense<0.000000e+00> : vector<128x8xf32>
      %119 = tpu.matmul %114, %118, %cst_51 {dimension_numbers = #tpu.dot_dimension_numbers<[1], [0], [0], [1], [0, 0, 1, 1], [], []>} : vector<128x128xbf16>, vector<128x8xbf16>, vector<128x8xf32> -> vector<128x8xf32>
      %c0_52 = arith.constant 0 : index
      %c2_53 = arith.constant 2 : index
      %120 = vector.load %arg11[%c0_52, %c2_53] : memref<128x4xf32, #tpu.memory_space<vmem>>, vector<128x1xf32>
      %121 = arith.mulf %110, %120 : vector<128x1xf32>
      %122 = arith.addf %121, %117 : vector<128x1xf32>
      %c0_54 = arith.constant 0 : index
      %c2_55 = arith.constant 2 : index
      %123 = vector.load %arg11[%c0_54, %c2_55] : memref<128x4xf32, #tpu.memory_space<vmem>>, vector<128x1xf32>
      tpu.vector_store %arg11[%c0_54, %c2_55], %122 {strides = array<i32>} : memref<128x4xf32, #tpu.memory_space<vmem>>, vector<128x1xf32>,
      %c0_56 = arith.constant 0 : index
      %c16 = arith.constant 16 : index
      %124 = vector.load %arg9[%c0_56, %c16] : memref<128x32xf32, #tpu.memory_space<vmem>>, vector<128x8xf32>
      %125 = vector.broadcast %110 : vector<128x1xf32> to vector<128x8xf32>
      %126 = arith.mulf %125, %124 : vector<128x8xf32>
      %127 = arith.addf %126, %119 : vector<128x8xf32>
      %c0_57 = arith.constant 0 : index
      %c16_58 = arith.constant 16 : index
      %128 = vector.load %arg9[%c0_57, %c16_58] : memref<128x32xf32, #tpu.memory_space<vmem>>, vector<128x8xf32>
      tpu.vector_store %arg9[%c0_57, %c16_58], %127 {strides = array<i32>} : memref<128x32xf32, #tpu.memory_space<vmem>>, vector<128x8xf32>,
      %c0_59 = arith.constant 0 : index
      %c2_60 = arith.constant 2 : index
      %129 = vector.load %arg10[%c0_59, %c2_60] : memref<128x4xf32, #tpu.memory_space<vmem>>, vector<128x1xf32>
      tpu.vector_store %arg10[%c0_59, %c2_60], %108 {strides = array<i32>} : memref<128x4xf32, #tpu.memory_space<vmem>>, vector<128x1xf32>,
      %130 = vector.extract_strided_slice %18 {offsets = [0, 3], sizes = [128, 1], strides = [1, 1]} : vector<128x4xf32> to vector<128x1xf32>
      %131 = vector.extract_strided_slice %17 {offsets = [3, 0], sizes = [1, 128], strides = [1, 1]} : vector<4x128xf32> to vector<1x128xf32>
      %132 = vector.broadcast %130 : vector<128x1xf32> to vector<128x128xf32>
      %133 = vector.broadcast %131 : vector<1x128xf32> to vector<128x128xf32>
      %134 = arith.addf %132, %133 : vector<128x128xf32>
      %cst_61 = arith.constant 0.000000e+00 : f32
      %135 = vector.broadcast %cst_61 : f32 to vector<128x128xf32>
      %136 = arith.cmpf ogt, %134, %135 : vector<128x128xf32>
      %cst_62 = arith.constant 2.000000e-01 : f32
      %137 = vector.broadcast %cst_62 : f32 to vector<128x128xf32>
      %138 = arith.mulf %137, %134 : vector<128x128xf32>
      %139 = arith.select %136, %134, %138 : vector<128x128xi1>, vector<128x128xf32>
      %cst_63 = arith.constant -1.000000e+30 : f32
      %140 = vector.broadcast %cst_63 : f32 to vector<128x128xf32>
      %141 = arith.select %15, %139, %140 : vector<128x128xi1>, vector<128x128xf32>
      %c0_64 = arith.constant 0 : index
      %c3 = arith.constant 3 : index
      %142 = vector.load %arg10[%c0_64, %c3] : memref<128x4xf32, #tpu.memory_space<vmem>>, vector<128x1xf32>
      %cst_65 = arith.constant dense<0xFF800000> : vector<128xf32>
      %143 = vector.multi_reduction <maximumf>, %141, %cst_65 [1] : vector<128x128xf32> to vector<128xf32>
      %144 = vector.shape_cast %143 : vector<128xf32> to vector<128x1xf32>
      %145 = arith.maximumf %142, %144 : vector<128x1xf32>
      %146 = arith.subf %142, %145 : vector<128x1xf32>
      %147 = math.exp %146 : vector<128x1xf32>
      %148 = vector.broadcast %145 : vector<128x1xf32> to vector<128x128xf32>
      %149 = arith.subf %141, %148 : vector<128x128xf32>
      %150 = arith.truncf %149 : vector<128x128xf32> to vector<128x128xbf16>
      %151 = math.exp %150 : vector<128x128xbf16>
      %152 = arith.extf %151 : vector<128x128xbf16> to vector<128x128xf32>
      %cst_66 = arith.constant dense<0.000000e+00> : vector<128xf32>
      %153 = vector.multi_reduction <add>, %152, %cst_66 [1] : vector<128x128xf32> to vector<128xf32>
      %154 = vector.shape_cast %153 : vector<128xf32> to vector<128x1xf32>
      %155 = vector.extract_strided_slice %16 {offsets = [0, 24], sizes = [128, 8], strides = [1, 1]} : vector<128x32xbf16> to vector<128x8xbf16>
      %cst_67 = arith.constant dense<0.000000e+00> : vector<128x8xf32>
      %156 = tpu.matmul %151, %155, %cst_67 {dimension_numbers = #tpu.dot_dimension_numbers<[1], [0], [0], [1], [0, 0, 1, 1], [], []>} : vector<128x128xbf16>, vector<128x8xbf16>, vector<128x8xf32> -> vector<128x8xf32>
      %c0_68 = arith.constant 0 : index
      %c3_69 = arith.constant 3 : index
      %157 = vector.load %arg11[%c0_68, %c3_69] : memref<128x4xf32, #tpu.memory_space<vmem>>, vector<128x1xf32>
      %158 = arith.mulf %147, %157 : vector<128x1xf32>
      %159 = arith.addf %158, %154 : vector<128x1xf32>
      %c0_70 = arith.constant 0 : index
      %c3_71 = arith.constant 3 : index
      %160 = vector.load %arg11[%c0_70, %c3_71] : memref<128x4xf32, #tpu.memory_space<vmem>>, vector<128x1xf32>
      tpu.vector_store %arg11[%c0_70, %c3_71], %159 {strides = array<i32>} : memref<128x4xf32, #tpu.memory_space<vmem>>, vector<128x1xf32>,
      %c0_72 = arith.constant 0 : index
      %c24 = arith.constant 24 : index
      %161 = vector.load %arg9[%c0_72, %c24] : memref<128x32xf32, #tpu.memory_space<vmem>>, vector<128x8xf32>
      %162 = vector.broadcast %147 : vector<128x1xf32> to vector<128x8xf32>
      %163 = arith.mulf %162, %161 : vector<128x8xf32>
      %164 = arith.addf %163, %156 : vector<128x8xf32>
      %c0_73 = arith.constant 0 : index
      %c24_74 = arith.constant 24 : index
      %165 = vector.load %arg9[%c0_73, %c24_74] : memref<128x32xf32, #tpu.memory_space<vmem>>, vector<128x8xf32>
      tpu.vector_store %arg9[%c0_73, %c24_74], %164 {strides = array<i32>} : memref<128x32xf32, #tpu.memory_space<vmem>>, vector<128x8xf32>,
      %c0_75 = arith.constant 0 : index
      %c3_76 = arith.constant 3 : index
      %166 = vector.load %arg10[%c0_75, %c3_76] : memref<128x4xf32, #tpu.memory_space<vmem>>, vector<128x1xf32>
      tpu.vector_store %arg10[%c0_75, %c3_76], %145 {strides = array<i32>} : memref<128x4xf32, #tpu.memory_space<vmem>>, vector<128x1xf32>,
    } else {
    }
    %c0_i32_3 = arith.constant 0 : i32
    %10 = arith.cmpi eq, %arg1, %c0_i32_3 : i32
    %11 = arith.extui %10 : i1 to i32
    %c0_i32_4 = arith.constant 0 : i32
    %12 = arith.cmpi ne, %11, %c0_i32_4 : i32
    scf.if %12 {
      %c0 = arith.constant 0 : index
      %c0_5 = arith.constant 0 : index
      %13 = vector.load %arg11[%c0, %c0_5] : memref<128x4xf32, #tpu.memory_space<vmem>>, vector<128x4xf32>
      %14 = tpu.reciprocal %13 {approx = true} : vector<128x4xf32> -> vector<128x4xf32>
      %c0_6 = arith.constant 0 : index
      %c0_7 = arith.constant 0 : index
      %15 = vector.load %arg7[%c0_6, %c0_7] : memref<1x32xf32, #tpu.memory_space<vmem>>, vector<1x32xf32>
      %c0_8 = arith.constant 0 : index
      %c0_9 = arith.constant 0 : index
      %16 = vector.load %arg9[%c0_8, %c0_9] : memref<128x32xf32, #tpu.memory_space<vmem>>, vector<128x32xf32>
      %17 = vector.extract_strided_slice %16 {offsets = [0, 0], sizes = [128, 8], strides = [1, 1]} : vector<128x32xf32> to vector<128x8xf32>
      %18 = vector.extract_strided_slice %14 {offsets = [0, 0], sizes = [128, 1], strides = [1, 1]} : vector<128x4xf32> to vector<128x1xf32>
      %19 = vector.broadcast %18 : vector<128x1xf32> to vector<128x8xf32>
      %20 = arith.mulf %17, %19 : vector<128x8xf32>
      %21 = vector.extract_strided_slice %15 {offsets = [0, 0], sizes = [1, 8], strides = [1, 1]} : vector<1x32xf32> to vector<1x8xf32>
      %22 = vector.broadcast %21 : vector<1x8xf32> to vector<128x8xf32>
      %23 = arith.addf %20, %22 : vector<128x8xf32>
      %cst = arith.constant 0.000000e+00 : f32
      %24 = vector.broadcast %cst : f32 to vector<128x8xf32>
      %25 = arith.cmpf ogt, %23, %24 : vector<128x8xf32>
      %cst_10 = arith.constant 0.000000e+00 : f32
      %26 = vector.broadcast %cst_10 : f32 to vector<128x8xf32>
      %27 = arith.minimumf %23, %26 : vector<128x8xf32>
      %28 = math.exp %27 : vector<128x8xf32>
      %cst_11 = arith.constant 1.000000e+00 : f32
      %29 = vector.broadcast %cst_11 : f32 to vector<128x8xf32>
      %30 = arith.subf %28, %29 : vector<128x8xf32>
      %31 = arith.select %25, %23, %30 : vector<128x8xi1>, vector<128x8xf32>
      %c0_12 = arith.constant 0 : index
      %c0_13 = arith.constant 0 : index
      %32 = vector.load %arg8[%c0_12, %c0_13] : memref<128x32xf32, #tpu.memory_space<vmem>>, vector<128x8xf32>
      tpu.vector_store %arg8[%c0_12, %c0_13], %31 {strides = array<i32>} : memref<128x32xf32, #tpu.memory_space<vmem>>, vector<128x8xf32>,
      %33 = vector.extract_strided_slice %16 {offsets = [0, 8], sizes = [128, 8], strides = [1, 1]} : vector<128x32xf32> to vector<128x8xf32>
      %34 = vector.extract_strided_slice %14 {offsets = [0, 1], sizes = [128, 1], strides = [1, 1]} : vector<128x4xf32> to vector<128x1xf32>
      %35 = vector.broadcast %34 : vector<128x1xf32> to vector<128x8xf32>
      %36 = arith.mulf %33, %35 : vector<128x8xf32>
      %37 = vector.extract_strided_slice %15 {offsets = [0, 8], sizes = [1, 8], strides = [1, 1]} : vector<1x32xf32> to vector<1x8xf32>
      %38 = vector.broadcast %37 : vector<1x8xf32> to vector<128x8xf32>
      %39 = arith.addf %36, %38 : vector<128x8xf32>
      %cst_14 = arith.constant 0.000000e+00 : f32
      %40 = vector.broadcast %cst_14 : f32 to vector<128x8xf32>
      %41 = arith.cmpf ogt, %39, %40 : vector<128x8xf32>
      %cst_15 = arith.constant 0.000000e+00 : f32
      %42 = vector.broadcast %cst_15 : f32 to vector<128x8xf32>
      %43 = arith.minimumf %39, %42 : vector<128x8xf32>
      %44 = math.exp %43 : vector<128x8xf32>
      %cst_16 = arith.constant 1.000000e+00 : f32
      %45 = vector.broadcast %cst_16 : f32 to vector<128x8xf32>
      %46 = arith.subf %44, %45 : vector<128x8xf32>
      %47 = arith.select %41, %39, %46 : vector<128x8xi1>, vector<128x8xf32>
      %c0_17 = arith.constant 0 : index
      %c8 = arith.constant 8 : index
      %48 = vector.load %arg8[%c0_17, %c8] : memref<128x32xf32, #tpu.memory_space<vmem>>, vector<128x8xf32>
      tpu.vector_store %arg8[%c0_17, %c8], %47 {strides = array<i32>} : memref<128x32xf32, #tpu.memory_space<vmem>>, vector<128x8xf32>,
      %49 = vector.extract_strided_slice %16 {offsets = [0, 16], sizes = [128, 8], strides = [1, 1]} : vector<128x32xf32> to vector<128x8xf32>
      %50 = vector.extract_strided_slice %14 {offsets = [0, 2], sizes = [128, 1], strides = [1, 1]} : vector<128x4xf32> to vector<128x1xf32>
      %51 = vector.broadcast %50 : vector<128x1xf32> to vector<128x8xf32>
      %52 = arith.mulf %49, %51 : vector<128x8xf32>
      %53 = vector.extract_strided_slice %15 {offsets = [0, 16], sizes = [1, 8], strides = [1, 1]} : vector<1x32xf32> to vector<1x8xf32>
      %54 = vector.broadcast %53 : vector<1x8xf32> to vector<128x8xf32>
      %55 = arith.addf %52, %54 : vector<128x8xf32>
      %cst_18 = arith.constant 0.000000e+00 : f32
      %56 = vector.broadcast %cst_18 : f32 to vector<128x8xf32>
      %57 = arith.cmpf ogt, %55, %56 : vector<128x8xf32>
      %cst_19 = arith.constant 0.000000e+00 : f32
      %58 = vector.broadcast %cst_19 : f32 to vector<128x8xf32>
      %59 = arith.minimumf %55, %58 : vector<128x8xf32>
      %60 = math.exp %59 : vector<128x8xf32>
      %cst_20 = arith.constant 1.000000e+00 : f32
      %61 = vector.broadcast %cst_20 : f32 to vector<128x8xf32>
      %62 = arith.subf %60, %61 : vector<128x8xf32>
      %63 = arith.select %57, %55, %62 : vector<128x8xi1>, vector<128x8xf32>
      %c0_21 = arith.constant 0 : index
      %c16 = arith.constant 16 : index
      %64 = vector.load %arg8[%c0_21, %c16] : memref<128x32xf32, #tpu.memory_space<vmem>>, vector<128x8xf32>
      tpu.vector_store %arg8[%c0_21, %c16], %63 {strides = array<i32>} : memref<128x32xf32, #tpu.memory_space<vmem>>, vector<128x8xf32>,
      %65 = vector.extract_strided_slice %16 {offsets = [0, 24], sizes = [128, 8], strides = [1, 1]} : vector<128x32xf32> to vector<128x8xf32>
      %66 = vector.extract_strided_slice %14 {offsets = [0, 3], sizes = [128, 1], strides = [1, 1]} : vector<128x4xf32> to vector<128x1xf32>
      %67 = vector.broadcast %66 : vector<128x1xf32> to vector<128x8xf32>
      %68 = arith.mulf %65, %67 : vector<128x8xf32>
      %69 = vector.extract_strided_slice %15 {offsets = [0, 24], sizes = [1, 8], strides = [1, 1]} : vector<1x32xf32> to vector<1x8xf32>
      %70 = vector.broadcast %69 : vector<1x8xf32> to vector<128x8xf32>
      %71 = arith.addf %68, %70 : vector<128x8xf32>
      %cst_22 = arith.constant 0.000000e+00 : f32
      %72 = vector.broadcast %cst_22 : f32 to vector<128x8xf32>
      %73 = arith.cmpf ogt, %71, %72 : vector<128x8xf32>
      %cst_23 = arith.constant 0.000000e+00 : f32
      %74 = vector.broadcast %cst_23 : f32 to vector<128x8xf32>
      %75 = arith.minimumf %71, %74 : vector<128x8xf32>
      %76 = math.exp %75 : vector<128x8xf32>
      %cst_24 = arith.constant 1.000000e+00 : f32
      %77 = vector.broadcast %cst_24 : f32 to vector<128x8xf32>
      %78 = arith.subf %76, %77 : vector<128x8xf32>
      %79 = arith.select %73, %71, %78 : vector<128x8xi1>, vector<128x8xf32>
      %c0_25 = arith.constant 0 : index
      %c24 = arith.constant 24 : index
      %80 = vector.load %arg8[%c0_25, %c24] : memref<128x32xf32, #tpu.memory_space<vmem>>, vector<128x8xf32>
      tpu.vector_store %arg8[%c0_25, %c24], %79 {strides = array<i32>} : memref<128x32xf32, #tpu.memory_space<vmem>>, vector<128x8xf32>,
    } else {
    }
    return
  }
  func.func @transform_0(%arg0: i32, %arg1: i32, %arg2: memref<1xi32, #tpu.memory_space<smem>>) -> (i32, i32) {
    %c0_i32 = arith.constant 0 : i32
    %c0_i32_0 = arith.constant 0 : i32
    return %arg1, %c0_i32 : i32, i32
  }
  func.func @transform_1(%arg0: i32, %arg1: i32, %arg2: memref<1xi32, #tpu.memory_space<smem>>) -> (i32, i32) {
    %c0_i32 = arith.constant 0 : i32
    %c0_i32_0 = arith.constant 0 : i32
    return %c0_i32, %arg1 : i32, i32
  }
  func.func @transform_2(%arg0: i32, %arg1: i32, %arg2: memref<1xi32, #tpu.memory_space<smem>>) -> (i32, i32) {
    %c0_i32 = arith.constant 0 : i32
    %c0_i32_0 = arith.constant 0 : i32
    return %arg0, %c0_i32 : i32, i32
  }
  func.func @transform_3(%arg0: i32, %arg1: i32, %arg2: memref<1xi32, #tpu.memory_space<smem>>) -> (i32, i32) {
    %c0_i32 = arith.constant 0 : i32
    return %arg0, %arg1 : i32, i32
  }
  func.func @transform_4(%arg0: i32, %arg1: i32, %arg2: memref<1xi32, #tpu.memory_space<smem>>) -> (i32, i32) {
    %c0_i32 = arith.constant 0 : i32
    %c0_i32_0 = arith.constant 0 : i32
    %c0_i32_1 = arith.constant 0 : i32
    return %c0_i32, %c0_i32_0 : i32, i32
  }
  func.func @transform_5(%arg0: i32, %arg1: i32, %arg2: memref<1xi32, #tpu.memory_space<smem>>) -> (i32, i32) {
    %c0_i32 = arith.constant 0 : i32
    %c0_i32_0 = arith.constant 0 : i32
    return %arg0, %c0_i32 : i32, i32
  }
}

module attributes {stable_mosaic.version = 11 : i64} {
  func.func @project_kernel(%arg0: i32, %arg1: memref<128x32xf32, #tpu.memory_space<vmem>>, %arg2: memref<32x10xf32, #tpu.memory_space<vmem>>, %arg3: memref<128x6xbf16, #tpu.memory_space<vmem>>, %arg4: memref<128x4xf32, #tpu.memory_space<vmem>>) attributes {dimension_semantics = [#tpu.dimension_semantics<parallel>], iteration_bounds = array<i64: 1>, scalar_prefetch = 0 : i64, scratch_operands = 0 : i64, tpu.core_type = #tpu.core_type<tc>, window_params = [{transform_indices = @transform_0, window_bounds = array<i64: 128, 32>}, {pipeline_mode = #tpu.pipeline_mode<synchronous>, transform_indices = @transform_1, window_bounds = array<i64: 32, 10>}, {transform_indices = @transform_2, window_bounds = array<i64: 128, 6>}, {transform_indices = @transform_3, window_bounds = array<i64: 128, 4>}]} {
    %c0 = arith.constant 0 : index
    %c0_0 = arith.constant 0 : index
    %0 = vector.load %arg1[%c0, %c0_0] : memref<128x32xf32, #tpu.memory_space<vmem>>, vector<128x32xf32>
    %c0_1 = arith.constant 0 : index
    %c0_2 = arith.constant 0 : index
    %1 = vector.load %arg2[%c0_1, %c0_2] : memref<32x10xf32, #tpu.memory_space<vmem>>, vector<32x10xf32>
    %2 = arith.truncf %0 : vector<128x32xf32> to vector<128x32xbf16>
    %3 = arith.truncf %1 : vector<32x10xf32> to vector<32x10xbf16>
    %cst = arith.constant dense<0.000000e+00> : vector<128x10xf32>
    %4 = tpu.matmul %2, %3, %cst {dimension_numbers = #tpu.dot_dimension_numbers<[1], [0], [0], [1], [0, 0, 1, 1], [], []>} : vector<128x32xbf16>, vector<32x10xbf16>, vector<128x10xf32> -> vector<128x10xf32>
    %5 = vector.extract_strided_slice %4 {offsets = [0, 0], sizes = [128, 6], strides = [1, 1]} : vector<128x10xf32> to vector<128x6xf32>
    %6 = arith.truncf %5 : vector<128x6xf32> to vector<128x6xbf16>
    %c0_3 = arith.constant 0 : index
    %c0_4 = arith.constant 0 : index
    %7 = vector.load %arg3[%c0_3, %c0_4] : memref<128x6xbf16, #tpu.memory_space<vmem>>, vector<128x6xbf16>
    tpu.vector_store %arg3[%c0_3, %c0_4], %6 {strides = array<i32>} : memref<128x6xbf16, #tpu.memory_space<vmem>>, vector<128x6xbf16>,
    %8 = vector.extract_strided_slice %4 {offsets = [0, 6], sizes = [128, 4], strides = [1, 1]} : vector<128x10xf32> to vector<128x4xf32>
    %c0_5 = arith.constant 0 : index
    %c0_6 = arith.constant 0 : index
    %9 = vector.load %arg4[%c0_5, %c0_6] : memref<128x4xf32, #tpu.memory_space<vmem>>, vector<128x4xf32>
    tpu.vector_store %arg4[%c0_5, %c0_6], %8 {strides = array<i32>} : memref<128x4xf32, #tpu.memory_space<vmem>>, vector<128x4xf32>,
    return
  }
  func.func @transform_0(%arg0: i32) -> (i32, i32) {
    %c0_i32 = arith.constant 0 : i32
    %c0_i32_0 = arith.constant 0 : i32
    return %arg0, %c0_i32 : i32, i32
  }
  func.func @transform_1(%arg0: i32) -> (i32, i32) {
    %c0_i32 = arith.constant 0 : i32
    %c0_i32_0 = arith.constant 0 : i32
    %c0_i32_1 = arith.constant 0 : i32
    return %c0_i32, %c0_i32_0 : i32, i32
  }
  func.func @transform_2(%arg0: i32) -> (i32, i32) {
    %c0_i32 = arith.constant 0 : i32
    %c0_i32_0 = arith.constant 0 : i32
    return %arg0, %c0_i32 : i32, i32
  }
  func.func @transform_3(%arg0: i32) -> (i32, i32) {
    %c0_i32 = arith.constant 0 : i32
    %c0_i32_0 = arith.constant 0 : i32
    return %arg0, %c0_i32 : i32, i32
  }
}

module attributes {stable_mosaic.version = 11 : i64} {
  func.func @attn_kernel(%arg0: i32, %arg1: i32, %arg2: memref<1xi32, #tpu.memory_space<smem>>, %arg3: memref<128x6xbf16, #tpu.memory_space<vmem>>, %arg4: memref<2x128xf32, #tpu.memory_space<vmem>>, %arg5: memref<128x2xf32, #tpu.memory_space<vmem>>, %arg6: memref<128x128xi8, #tpu.memory_space<vmem>>, %arg7: memref<1x6xf32, #tpu.memory_space<vmem>>, %arg8: memref<128x6xf32, #tpu.memory_space<vmem>>, %arg9: memref<128x6xf32, #tpu.memory_space<vmem>>, %arg10: memref<128x2xf32, #tpu.memory_space<vmem>>, %arg11: memref<128x2xf32, #tpu.memory_space<vmem>>) attributes {dimension_semantics = [#tpu.dimension_semantics<parallel>, #tpu.dimension_semantics<arbitrary>], iteration_bounds = array<i64: 1, 1>, scalar_prefetch = 1 : i64, scratch_operands = 3 : i64, tpu.core_type = #tpu.core_type<tc>, window_params = [{transform_indices = @transform_0, window_bounds = array<i64: 128, 6>}, {transform_indices = @transform_1, window_bounds = array<i64: 2, 128>}, {transform_indices = @transform_2, window_bounds = array<i64: 128, 2>}, {transform_indices = @transform_3, window_bounds = array<i64: 128, 128>}, {pipeline_mode = #tpu.pipeline_mode<synchronous>, transform_indices = @transform_4, window_bounds = array<i64: 1, 6>}, {transform_indices = @transform_5, window_bounds = array<i64: 128, 6>}]} {
    %c0_i32 = arith.constant 0 : i32
    %0 = arith.cmpi eq, %arg1, %c0_i32 : i32
    %1 = arith.extui %0 : i1 to i32
    %c0_i32_0 = arith.constant 0 : i32
    %2 = arith.cmpi ne, %1, %c0_i32_0 : i32
    scf.if %2 {
      %cst = arith.constant -1.000000e+30 : f32
      %13 = vector.broadcast %cst : f32 to vector<128x2xf32>
      %c0 = arith.constant 0 : index
      %c0_5 = arith.constant 0 : index
      %14 = vector.load %arg10[%c0, %c0_5] : memref<128x2xf32, #tpu.memory_space<vmem>>, vector<128x2xf32>
      tpu.vector_store %arg10[%c0, %c0_5], %13 {strides = array<i32>} : memref<128x2xf32, #tpu.memory_space<vmem>>, vector<128x2xf32>,
      %cst_6 = arith.constant 0.000000e+00 : f32
      %15 = vector.broadcast %cst_6 : f32 to vector<128x2xf32>
      %c0_7 = arith.constant 0 : index
      %c0_8 = arith.constant 0 : index
      %16 = vector.load %arg11[%c0_7, %c0_8] : memref<128x2xf32, #tpu.memory_space<vmem>>, vector<128x2xf32>
      tpu.vector_store %arg11[%c0_7, %c0_8], %15 {strides = array<i32>} : memref<128x2xf32, #tpu.memory_space<vmem>>, vector<128x2xf32>,
      %cst_9 = arith.constant 0.000000e+00 : f32
      %17 = vector.broadcast %cst_9 : f32 to vector<128x6xf32>
      %c0_10 = arith.constant 0 : index
      %c0_11 = arith.constant 0 : index
      %18 = vector.load %arg9[%c0_10, %c0_11] : memref<128x6xf32, #tpu.memory_space<vmem>>, vector<128x6xf32>
      tpu.vector_store %arg9[%c0_10, %c0_11], %17 {strides = array<i32>} : memref<128x6xf32, #tpu.memory_space<vmem>>, vector<128x6xf32>,
    } else {
    }
    %c1_i32 = arith.constant 1 : i32
    %3 = arith.muli %arg0, %c1_i32 : i32
    %4 = arith.addi %3, %arg1 : i32
    %5 = arith.index_cast %4 : i32 to index
    %6 = memref.load %arg2[%5] : memref<1xi32, #tpu.memory_space<smem>>
    %c0_i32_1 = arith.constant 0 : i32
    %7 = arith.cmpi ne, %6, %c0_i32_1 : i32
    %8 = arith.extui %7 : i1 to i32
    %c0_i32_2 = arith.constant 0 : i32
    %9 = arith.cmpi ne, %8, %c0_i32_2 : i32
    scf.if %9 {
      %c0 = arith.constant 0 : index
      %c0_5 = arith.constant 0 : index
      %13 = vector.load %arg6[%c0, %c0_5] : memref<128x128xi8, #tpu.memory_space<vmem>>, vector<128x128xi8>
      %c0_i8 = arith.constant 0 : i8
      %14 = vector.broadcast %c0_i8 : i8 to vector<128x128xi8>
      %15 = arith.cmpi ne, %13, %14 : vector<128x128xi8>
      %c0_6 = arith.constant 0 : index
      %c0_7 = arith.constant 0 : index
      %16 = vector.load %arg3[%c0_6, %c0_7] : memref<128x6xbf16, #tpu.memory_space<vmem>>, vector<128x6xbf16>
      %c0_8 = arith.constant 0 : index
      %c0_9 = arith.constant 0 : index
      %17 = vector.load %arg4[%c0_8, %c0_9] : memref<2x128xf32, #tpu.memory_space<vmem>>, vector<2x128xf32>
      %c0_10 = arith.constant 0 : index
      %c0_11 = arith.constant 0 : index
      %18 = vector.load %arg5[%c0_10, %c0_11] : memref<128x2xf32, #tpu.memory_space<vmem>>, vector<128x2xf32>
      %19 = vector.extract_strided_slice %18 {offsets = [0, 0], sizes = [128, 1], strides = [1, 1]} : vector<128x2xf32> to vector<128x1xf32>
      %20 = vector.extract_strided_slice %17 {offsets = [0, 0], sizes = [1, 128], strides = [1, 1]} : vector<2x128xf32> to vector<1x128xf32>
      %21 = vector.broadcast %19 : vector<128x1xf32> to vector<128x128xf32>
      %22 = vector.broadcast %20 : vector<1x128xf32> to vector<128x128xf32>
      %23 = arith.addf %21, %22 : vector<128x128xf32>
      %cst = arith.constant 0.000000e+00 : f32
      %24 = vector.broadcast %cst : f32 to vector<128x128xf32>
      %25 = arith.cmpf ogt, %23, %24 : vector<128x128xf32>
      %cst_12 = arith.constant 2.000000e-01 : f32
      %26 = vector.broadcast %cst_12 : f32 to vector<128x128xf32>
      %27 = arith.mulf %26, %23 : vector<128x128xf32>
      %28 = arith.select %25, %23, %27 : vector<128x128xi1>, vector<128x128xf32>
      %cst_13 = arith.constant -1.000000e+30 : f32
      %29 = vector.broadcast %cst_13 : f32 to vector<128x128xf32>
      %30 = arith.select %15, %28, %29 : vector<128x128xi1>, vector<128x128xf32>
      %c0_14 = arith.constant 0 : index
      %c0_15 = arith.constant 0 : index
      %31 = vector.load %arg10[%c0_14, %c0_15] : memref<128x2xf32, #tpu.memory_space<vmem>>, vector<128x1xf32>
      %cst_16 = arith.constant dense<0xFF800000> : vector<128xf32>
      %32 = vector.multi_reduction <maximumf>, %30, %cst_16 [1] : vector<128x128xf32> to vector<128xf32>
      %33 = vector.shape_cast %32 : vector<128xf32> to vector<128x1xf32>
      %34 = arith.maximumf %31, %33 : vector<128x1xf32>
      %35 = arith.subf %31, %34 : vector<128x1xf32>
      %36 = math.exp %35 : vector<128x1xf32>
      %37 = vector.broadcast %34 : vector<128x1xf32> to vector<128x128xf32>
      %38 = arith.subf %30, %37 : vector<128x128xf32>
      %39 = arith.truncf %38 : vector<128x128xf32> to vector<128x128xbf16>
      %40 = math.exp %39 : vector<128x128xbf16>
      %41 = arith.extf %40 : vector<128x128xbf16> to vector<128x128xf32>
      %cst_17 = arith.constant dense<0.000000e+00> : vector<128xf32>
      %42 = vector.multi_reduction <add>, %41, %cst_17 [1] : vector<128x128xf32> to vector<128xf32>
      %43 = vector.shape_cast %42 : vector<128xf32> to vector<128x1xf32>
      %44 = vector.extract_strided_slice %16 {offsets = [0, 0], sizes = [128, 3], strides = [1, 1]} : vector<128x6xbf16> to vector<128x3xbf16>
      %cst_18 = arith.constant dense<0.000000e+00> : vector<128x3xf32>
      %45 = tpu.matmul %40, %44, %cst_18 {dimension_numbers = #tpu.dot_dimension_numbers<[1], [0], [0], [1], [0, 0, 1, 1], [], []>} : vector<128x128xbf16>, vector<128x3xbf16>, vector<128x3xf32> -> vector<128x3xf32>
      %c0_19 = arith.constant 0 : index
      %c0_20 = arith.constant 0 : index
      %46 = vector.load %arg11[%c0_19, %c0_20] : memref<128x2xf32, #tpu.memory_space<vmem>>, vector<128x1xf32>
      %47 = arith.mulf %36, %46 : vector<128x1xf32>
      %48 = arith.addf %47, %43 : vector<128x1xf32>
      %c0_21 = arith.constant 0 : index
      %c0_22 = arith.constant 0 : index
      %49 = vector.load %arg11[%c0_21, %c0_22] : memref<128x2xf32, #tpu.memory_space<vmem>>, vector<128x1xf32>
      tpu.vector_store %arg11[%c0_21, %c0_22], %48 {strides = array<i32>} : memref<128x2xf32, #tpu.memory_space<vmem>>, vector<128x1xf32>,
      %c0_23 = arith.constant 0 : index
      %c0_24 = arith.constant 0 : index
      %50 = vector.load %arg9[%c0_23, %c0_24] : memref<128x6xf32, #tpu.memory_space<vmem>>, vector<128x3xf32>
      %51 = vector.broadcast %36 : vector<128x1xf32> to vector<128x3xf32>
      %52 = arith.mulf %51, %50 : vector<128x3xf32>
      %53 = arith.addf %52, %45 : vector<128x3xf32>
      %c0_25 = arith.constant 0 : index
      %c0_26 = arith.constant 0 : index
      %54 = vector.load %arg9[%c0_25, %c0_26] : memref<128x6xf32, #tpu.memory_space<vmem>>, vector<128x3xf32>
      tpu.vector_store %arg9[%c0_25, %c0_26], %53 {strides = array<i32>} : memref<128x6xf32, #tpu.memory_space<vmem>>, vector<128x3xf32>,
      %c0_27 = arith.constant 0 : index
      %c0_28 = arith.constant 0 : index
      %55 = vector.load %arg10[%c0_27, %c0_28] : memref<128x2xf32, #tpu.memory_space<vmem>>, vector<128x1xf32>
      tpu.vector_store %arg10[%c0_27, %c0_28], %34 {strides = array<i32>} : memref<128x2xf32, #tpu.memory_space<vmem>>, vector<128x1xf32>,
      %56 = vector.extract_strided_slice %18 {offsets = [0, 1], sizes = [128, 1], strides = [1, 1]} : vector<128x2xf32> to vector<128x1xf32>
      %57 = vector.extract_strided_slice %17 {offsets = [1, 0], sizes = [1, 128], strides = [1, 1]} : vector<2x128xf32> to vector<1x128xf32>
      %58 = vector.broadcast %56 : vector<128x1xf32> to vector<128x128xf32>
      %59 = vector.broadcast %57 : vector<1x128xf32> to vector<128x128xf32>
      %60 = arith.addf %58, %59 : vector<128x128xf32>
      %cst_29 = arith.constant 0.000000e+00 : f32
      %61 = vector.broadcast %cst_29 : f32 to vector<128x128xf32>
      %62 = arith.cmpf ogt, %60, %61 : vector<128x128xf32>
      %cst_30 = arith.constant 2.000000e-01 : f32
      %63 = vector.broadcast %cst_30 : f32 to vector<128x128xf32>
      %64 = arith.mulf %63, %60 : vector<128x128xf32>
      %65 = arith.select %62, %60, %64 : vector<128x128xi1>, vector<128x128xf32>
      %cst_31 = arith.constant -1.000000e+30 : f32
      %66 = vector.broadcast %cst_31 : f32 to vector<128x128xf32>
      %67 = arith.select %15, %65, %66 : vector<128x128xi1>, vector<128x128xf32>
      %c0_32 = arith.constant 0 : index
      %c1 = arith.constant 1 : index
      %68 = vector.load %arg10[%c0_32, %c1] : memref<128x2xf32, #tpu.memory_space<vmem>>, vector<128x1xf32>
      %cst_33 = arith.constant dense<0xFF800000> : vector<128xf32>
      %69 = vector.multi_reduction <maximumf>, %67, %cst_33 [1] : vector<128x128xf32> to vector<128xf32>
      %70 = vector.shape_cast %69 : vector<128xf32> to vector<128x1xf32>
      %71 = arith.maximumf %68, %70 : vector<128x1xf32>
      %72 = arith.subf %68, %71 : vector<128x1xf32>
      %73 = math.exp %72 : vector<128x1xf32>
      %74 = vector.broadcast %71 : vector<128x1xf32> to vector<128x128xf32>
      %75 = arith.subf %67, %74 : vector<128x128xf32>
      %76 = arith.truncf %75 : vector<128x128xf32> to vector<128x128xbf16>
      %77 = math.exp %76 : vector<128x128xbf16>
      %78 = arith.extf %77 : vector<128x128xbf16> to vector<128x128xf32>
      %cst_34 = arith.constant dense<0.000000e+00> : vector<128xf32>
      %79 = vector.multi_reduction <add>, %78, %cst_34 [1] : vector<128x128xf32> to vector<128xf32>
      %80 = vector.shape_cast %79 : vector<128xf32> to vector<128x1xf32>
      %81 = vector.extract_strided_slice %16 {offsets = [0, 3], sizes = [128, 3], strides = [1, 1]} : vector<128x6xbf16> to vector<128x3xbf16>
      %cst_35 = arith.constant dense<0.000000e+00> : vector<128x3xf32>
      %82 = tpu.matmul %77, %81, %cst_35 {dimension_numbers = #tpu.dot_dimension_numbers<[1], [0], [0], [1], [0, 0, 1, 1], [], []>} : vector<128x128xbf16>, vector<128x3xbf16>, vector<128x3xf32> -> vector<128x3xf32>
      %c0_36 = arith.constant 0 : index
      %c1_37 = arith.constant 1 : index
      %83 = vector.load %arg11[%c0_36, %c1_37] : memref<128x2xf32, #tpu.memory_space<vmem>>, vector<128x1xf32>
      %84 = arith.mulf %73, %83 : vector<128x1xf32>
      %85 = arith.addf %84, %80 : vector<128x1xf32>
      %c0_38 = arith.constant 0 : index
      %c1_39 = arith.constant 1 : index
      %86 = vector.load %arg11[%c0_38, %c1_39] : memref<128x2xf32, #tpu.memory_space<vmem>>, vector<128x1xf32>
      tpu.vector_store %arg11[%c0_38, %c1_39], %85 {strides = array<i32>} : memref<128x2xf32, #tpu.memory_space<vmem>>, vector<128x1xf32>,
      %c0_40 = arith.constant 0 : index
      %c3 = arith.constant 3 : index
      %87 = vector.load %arg9[%c0_40, %c3] : memref<128x6xf32, #tpu.memory_space<vmem>>, vector<128x3xf32>
      %88 = vector.broadcast %73 : vector<128x1xf32> to vector<128x3xf32>
      %89 = arith.mulf %88, %87 : vector<128x3xf32>
      %90 = arith.addf %89, %82 : vector<128x3xf32>
      %c0_41 = arith.constant 0 : index
      %c3_42 = arith.constant 3 : index
      %91 = vector.load %arg9[%c0_41, %c3_42] : memref<128x6xf32, #tpu.memory_space<vmem>>, vector<128x3xf32>
      tpu.vector_store %arg9[%c0_41, %c3_42], %90 {strides = array<i32>} : memref<128x6xf32, #tpu.memory_space<vmem>>, vector<128x3xf32>,
      %c0_43 = arith.constant 0 : index
      %c1_44 = arith.constant 1 : index
      %92 = vector.load %arg10[%c0_43, %c1_44] : memref<128x2xf32, #tpu.memory_space<vmem>>, vector<128x1xf32>
      tpu.vector_store %arg10[%c0_43, %c1_44], %71 {strides = array<i32>} : memref<128x2xf32, #tpu.memory_space<vmem>>, vector<128x1xf32>,
    } else {
    }
    %c0_i32_3 = arith.constant 0 : i32
    %10 = arith.cmpi eq, %arg1, %c0_i32_3 : i32
    %11 = arith.extui %10 : i1 to i32
    %c0_i32_4 = arith.constant 0 : i32
    %12 = arith.cmpi ne, %11, %c0_i32_4 : i32
    scf.if %12 {
      %c0 = arith.constant 0 : index
      %c0_5 = arith.constant 0 : index
      %13 = vector.load %arg11[%c0, %c0_5] : memref<128x2xf32, #tpu.memory_space<vmem>>, vector<128x2xf32>
      %14 = tpu.reciprocal %13 {approx = true} : vector<128x2xf32> -> vector<128x2xf32>
      %c0_6 = arith.constant 0 : index
      %c0_7 = arith.constant 0 : index
      %15 = vector.load %arg7[%c0_6, %c0_7] : memref<1x6xf32, #tpu.memory_space<vmem>>, vector<1x6xf32>
      %c0_8 = arith.constant 0 : index
      %c0_9 = arith.constant 0 : index
      %16 = vector.load %arg9[%c0_8, %c0_9] : memref<128x6xf32, #tpu.memory_space<vmem>>, vector<128x6xf32>
      %17 = vector.extract_strided_slice %16 {offsets = [0, 0], sizes = [128, 3], strides = [1, 1]} : vector<128x6xf32> to vector<128x3xf32>
      %18 = vector.extract_strided_slice %14 {offsets = [0, 0], sizes = [128, 1], strides = [1, 1]} : vector<128x2xf32> to vector<128x1xf32>
      %19 = vector.broadcast %18 : vector<128x1xf32> to vector<128x3xf32>
      %20 = arith.mulf %17, %19 : vector<128x3xf32>
      %21 = vector.extract_strided_slice %15 {offsets = [0, 0], sizes = [1, 3], strides = [1, 1]} : vector<1x6xf32> to vector<1x3xf32>
      %22 = vector.broadcast %21 : vector<1x3xf32> to vector<128x3xf32>
      %23 = arith.addf %20, %22 : vector<128x3xf32>
      %c0_10 = arith.constant 0 : index
      %c0_11 = arith.constant 0 : index
      %24 = vector.load %arg8[%c0_10, %c0_11] : memref<128x6xf32, #tpu.memory_space<vmem>>, vector<128x3xf32>
      tpu.vector_store %arg8[%c0_10, %c0_11], %23 {strides = array<i32>} : memref<128x6xf32, #tpu.memory_space<vmem>>, vector<128x3xf32>,
      %25 = vector.extract_strided_slice %16 {offsets = [0, 3], sizes = [128, 3], strides = [1, 1]} : vector<128x6xf32> to vector<128x3xf32>
      %26 = vector.extract_strided_slice %14 {offsets = [0, 1], sizes = [128, 1], strides = [1, 1]} : vector<128x2xf32> to vector<128x1xf32>
      %27 = vector.broadcast %26 : vector<128x1xf32> to vector<128x3xf32>
      %28 = arith.mulf %25, %27 : vector<128x3xf32>
      %29 = vector.extract_strided_slice %15 {offsets = [0, 3], sizes = [1, 3], strides = [1, 1]} : vector<1x6xf32> to vector<1x3xf32>
      %30 = vector.broadcast %29 : vector<1x3xf32> to vector<128x3xf32>
      %31 = arith.addf %28, %30 : vector<128x3xf32>
      %c0_12 = arith.constant 0 : index
      %c3 = arith.constant 3 : index
      %32 = vector.load %arg8[%c0_12, %c3] : memref<128x6xf32, #tpu.memory_space<vmem>>, vector<128x3xf32>
      tpu.vector_store %arg8[%c0_12, %c3], %31 {strides = array<i32>} : memref<128x6xf32, #tpu.memory_space<vmem>>, vector<128x3xf32>,
    } else {
    }
    return
  }
  func.func @transform_0(%arg0: i32, %arg1: i32, %arg2: memref<1xi32, #tpu.memory_space<smem>>) -> (i32, i32) {
    %c0_i32 = arith.constant 0 : i32
    %c0_i32_0 = arith.constant 0 : i32
    return %arg1, %c0_i32 : i32, i32
  }
  func.func @transform_1(%arg0: i32, %arg1: i32, %arg2: memref<1xi32, #tpu.memory_space<smem>>) -> (i32, i32) {
    %c0_i32 = arith.constant 0 : i32
    %c0_i32_0 = arith.constant 0 : i32
    return %c0_i32, %arg1 : i32, i32
  }
  func.func @transform_2(%arg0: i32, %arg1: i32, %arg2: memref<1xi32, #tpu.memory_space<smem>>) -> (i32, i32) {
    %c0_i32 = arith.constant 0 : i32
    %c0_i32_0 = arith.constant 0 : i32
    return %arg0, %c0_i32 : i32, i32
  }
  func.func @transform_3(%arg0: i32, %arg1: i32, %arg2: memref<1xi32, #tpu.memory_space<smem>>) -> (i32, i32) {
    %c0_i32 = arith.constant 0 : i32
    return %arg0, %arg1 : i32, i32
  }
  func.func @transform_4(%arg0: i32, %arg1: i32, %arg2: memref<1xi32, #tpu.memory_space<smem>>) -> (i32, i32) {
    %c0_i32 = arith.constant 0 : i32
    %c0_i32_0 = arith.constant 0 : i32
    %c0_i32_1 = arith.constant 0 : i32
    return %c0_i32, %c0_i32_0 : i32, i32
  }
  func.func @transform_5(%arg0: i32, %arg1: i32, %arg2: memref<1xi32, #tpu.memory_space<smem>>) -> (i32, i32) {
    %c0_i32 = arith.constant 0 : i32
    %c0_i32_0 = arith.constant 0 : i32
    return %arg0, %c0_i32 : i32, i32
  }
}

</mosaic_0001>

<llo_original>
// kernel: _gat_forward.4
$region0: #{_gat_forward.4}
  #allocation0 [shape = 'u32[]', space=smem, size = 0x4, offset = 0x4, fixed_abs, tag = 'smem constant byte address 0x4 - core index']
  #allocation1 [shape = 'u32[72,128]{1,0:T(1,128)}', space=vmem, size = 0x9000, scoped, tag = 'internal scratch']
  %s0 = inlined_call_operand.vmem [shape: f32[128,8], index: 0, kind: input, shape index: {}]
  %s1 = inlined_call_operand.vmem [shape: f32[8,40], index: 1, kind: input, shape index: {}]
  %s2 = inlined_call_operand.vmem [shape: bf16[128,32], index: 2, kind: output, shape index: {0}]
  %s3 = inlined_call_operand.vmem [shape: f32[128,8], index: 3, kind: output, shape index: {1}]
  %4 = xla_tuple %s2, %s3
  %s5 = sld [smem:[#allocation0]]
  $region26: #{_gat_forward.4} parent=0
    _
  %s7 = ssub.s32 1, %s5
  %s8 = scalar_select 0, %s7, %s5
  // Predicated region
  $region2: #{_gat_forward.4} parent=0 // pred_check
    _
  $region3: #{_gat_forward.4} parent=0 // pred_check_branch
    %10 = sbr.rel (0) target = $region5
  $region4: #{_gat_forward.4} parent=0 // pred_region
    _
  $region5: #{_gat_forward.4} parent=0 // pred_fallthru
    _
  // Predicated region
  $region6: #{_gat_forward.4} parent=0 // pred_check
    _
  $region7: #{_gat_forward.4} parent=0 // pred_check_branch
    %12 = sbr.rel (0) target = $region9
  $region8: #{_gat_forward.4} parent=0 // pred_region
    _
  $region9: #{_gat_forward.4} parent=0 // pred_fallthru
    _
  %v14 = vld [vmem:[%s0] sm:$0xff]
  %v15 = vld [vmem:[%s0 + $0x8] sm:$0xff]
  %v16 = vld [vmem:[%s0 + $0x10] sm:$0xff]
  %v17 = vld [vmem:[%s0 + $0x18] sm:$0xff]
  %v18 = vld [vmem:[%s0 + $0x20] sm:$0xff]
  %v19 = vld [vmem:[%s0 + $0x28] sm:$0xff]
  %v20 = vld [vmem:[%s0 + $0x30] sm:$0xff]
  %v21 = vld [vmem:[%s0 + $0x38] sm:$0xff]
  %v22 = vld [vmem:[%s0 + $0x40] sm:$0xff]
  %v23 = vld [vmem:[%s0 + $0x48] sm:$0xff]
  %v24 = vld [vmem:[%s0 + $0x50] sm:$0xff]
  %v25 = vld [vmem:[%s0 + $0x58] sm:$0xff]
  %v26 = vld [vmem:[%s0 + $0x60] sm:$0xff]
  %v27 = vld [vmem:[%s0 + $0x68] sm:$0xff]
  %v28 = vld [vmem:[%s0 + $0x70] sm:$0xff]
  %v29 = vld [vmem:[%s0 + $0x78] sm:$0xff]
  %v30 = vld [vmem:[%s1] sm:$0xff]
  %v31 = vpack.c.bf16 %v15, %v14
  %v32 = vpack.c.bf16 %v17, %v16
  %v33 = vpack.c.bf16 %v19, %v18
  %v34 = vpack.c.bf16 %v21, %v20
  %v35 = vpack.c.bf16 %v23, %v22
  %v36 = vpack.c.bf16 %v25, %v24
  %v37 = vpack.c.bf16 %v27, %v26
  %v38 = vpack.c.bf16 %v29, %v28
  %v39 = vpack.c.bf16 %v30, %v30
  %vm40 = vcmask 64512
  %v42 = vsel %vm40, %v31, 0
  %v45 = vsel %vm40, %v32, 0
  %v48 = vsel %vm40, %v33, 0
  %v51 = vsel %vm40, %v34, 0
  %v54 = vsel %vm40, %v35, 0
  %v57 = vsel %vm40, %v36, 0
  %v60 = vsel %vm40, %v37, 0
  %v63 = vsel %vm40, %v38, 0
  %vm65 = vcmask 1043456
  %v67 = vsel %vm65, %v39, 0
  %69 = vmatpush.bf16.msra.mxu0 0
  %70 = vmatpush.bf16.msra.mxu0 0
  %71 = vmatpush.bf16.msra.mxu0 0
  %72 = vmatpush.bf16.msra.mxu0 0
  %73 = vmatpush.bf16.msra.mxu0 0
  %74 = vmatpush.bf16.msra.mxu0 0
  %75 = vmatpush.bf16.msra.mxu0 0
  %76 = vmatpush.bf16.msra.mxu0 %v67
  %77 = vmatmul.bf16.gmra.mxu0 %v42
  %v78 = vpop.f32.mrf.mxu0
  %v79 = vadd.f32 0.0, %v78
  %v80 = vpop.f32.mrf.mxu0
  %v81 = vadd.f32 0.0, %v80
  %82 = vmatmul.bf16.gmra.mxu0 %v45
  %v83 = vpop.f32.mrf.mxu0
  %v84 = vadd.f32 0.0, %v83
  %v85 = vpop.f32.mrf.mxu0
  %v86 = vadd.f32 0.0, %v85
  %87 = vmatmul.bf16.gmra.mxu0 %v48
  %v88 = vpop.f32.mrf.mxu0
  %v89 = vadd.f32 0.0, %v88
  %v90 = vpop.f32.mrf.mxu0
  %v91 = vadd.f32 0.0, %v90
  %92 = vmatmul.bf16.gmra.mxu0 %v51
  %v93 = vpop.f32.mrf.mxu0
  %v94 = vadd.f32 0.0, %v93
  %v95 = vpop.f32.mrf.mxu0
  %v96 = vadd.f32 0.0, %v95
  %97 = vmatmul.bf16.gmra.mxu0 %v54
  %v98 = vpop.f32.mrf.mxu0
  %v99 = vadd.f32 0.0, %v98
  %v100 = vpop.f32.mrf.mxu0
  %v101 = vadd.f32 0.0, %v100
  %102 = vmatmul.bf16.gmra.mxu0 %v57
  %v103 = vpop.f32.mrf.mxu0
  %v104 = vadd.f32 0.0, %v103
  %v105 = vpop.f32.mrf.mxu0
  %v106 = vadd.f32 0.0, %v105
  %107 = vmatmul.bf16.gmra.mxu0 %v60
  %v108 = vpop.f32.mrf.mxu0
  %v109 = vadd.f32 0.0, %v108
  %v110 = vpop.f32.mrf.mxu0
  %v111 = vadd.f32 0.0, %v110
  %112 = vmatmul.bf16.gmra.mxu0 %v63
  %v113 = vpop.f32.mrf.mxu0
  %v114 = vadd.f32 0.0, %v113
  %v115 = vpop.f32.mrf.mxu0
  %v116 = vadd.f32 0.0, %v115
  %117 = vdwg.mxu0
  %v118 = vpack.c.bf16 %v79, %v79
  %v119 = vpack.c.bf16 %v81, %v81
  %v120 = vpack.c.bf16 %v84, %v84
  %v121 = vpack.c.bf16 %v86, %v86
  %v122 = vpack.c.bf16 %v89, %v89
  %v123 = vpack.c.bf16 %v91, %v91
  %v124 = vpack.c.bf16 %v94, %v94
  %v125 = vpack.c.bf16 %v96, %v96
  %v126 = vpack.c.bf16 %v99, %v99
  %v127 = vpack.c.bf16 %v101, %v101
  %v128 = vpack.c.bf16 %v104, %v104
  %v129 = vpack.c.bf16 %v106, %v106
  %v130 = vpack.c.bf16 %v109, %v109
  %v131 = vpack.c.bf16 %v111, %v111
  %v132 = vpack.c.bf16 %v114, %v114
  %v133 = vpack.c.bf16 %v116, %v116
  %vm134 = vcmask 257024
  %135 = vst.msk [vmem:[%s2] sm:$0xf] %vm134, %v118
  %136 = vst.msk [vmem:[%s2 + $0x4] sm:$0xf] %vm134, %v119
  %137 = vst.msk [vmem:[%s2 + $0x8] sm:$0xf] %vm134, %v120
  %138 = vst.msk [vmem:[%s2 + $0xc] sm:$0xf] %vm134, %v121
  %139 = vst.msk [vmem:[%s2 + $0x10] sm:$0xf] %vm134, %v122
  %140 = vst.msk [vmem:[%s2 + $0x14] sm:$0xf] %vm134, %v123
  %141 = vst.msk [vmem:[%s2 + $0x18] sm:$0xf] %vm134, %v124
  %142 = vst.msk [vmem:[%s2 + $0x1c] sm:$0xf] %vm134, %v125
  %143 = vst.msk [vmem:[%s2 + $0x20] sm:$0xf] %vm134, %v126
  %144 = vst.msk [vmem:[%s2 + $0x24] sm:$0xf] %vm134, %v127
  %145 = vst.msk [vmem:[%s2 + $0x28] sm:$0xf] %vm134, %v128
  %146 = vst.msk [vmem:[%s2 + $0x2c] sm:$0xf] %vm134, %v129
  %147 = vst.msk [vmem:[%s2 + $0x30] sm:$0xf] %vm134, %v130
  %148 = vst.msk [vmem:[%s2 + $0x34] sm:$0xf] %vm134, %v131
  %149 = vst.msk [vmem:[%s2 + $0x38] sm:$0xf] %vm134, %v132
  %150 = vst.msk [vmem:[%s2 + $0x3c] sm:$0xf] %vm134, %v133
  %167 = vrot.lane.b32.xlu0 %v79, 96
  %v168 = vpop.permute.xlu0 %167
  %169 = vrot.lane.b32.xlu0 %v81, 96
  %v170 = vpop.permute.xlu0 %169
  %171 = vrot.lane.b32.xlu0 %v84, 96
  %v172 = vpop.permute.xlu0 %171
  %173 = vrot.lane.b32.xlu0 %v86, 96
  %v174 = vpop.permute.xlu0 %173
  %175 = vrot.lane.b32.xlu0 %v89, 96
  %v176 = vpop.permute.xlu0 %175
  %177 = vrot.lane.b32.xlu0 %v91, 96
  %v178 = vpop.permute.xlu0 %177
  %179 = vrot.lane.b32.xlu0 %v94, 96
  %v180 = vpop.permute.xlu0 %179
  %181 = vrot.lane.b32.xlu0 %v96, 96
  %v182 = vpop.permute.xlu0 %181
  %183 = vrot.lane.b32.xlu0 %v99, 96
  %v184 = vpop.permute.xlu0 %183
  %185 = vrot.lane.b32.xlu0 %v101, 96
  %v186 = vpop.permute.xlu0 %185
  %187 = vrot.lane.b32.xlu0 %v104, 96
  %v188 = vpop.permute.xlu0 %187
  %189 = vrot.lane.b32.xlu0 %v106, 96
  %v190 = vpop.permute.xlu0 %189
  %191 = vrot.lane.b32.xlu0 %v109, 96
  %v192 = vpop.permute.xlu0 %191
  %193 = vrot.lane.b32.xlu0 %v111, 96
  %v194 = vpop.permute.xlu0 %193
  %195 = vrot.lane.b32.xlu0 %v114, 96
  %v196 = vpop.permute.xlu0 %195
  %197 = vrot.lane.b32.xlu0 %v116, 96
  %v198 = vpop.permute.xlu0 %197
  %215 = vst.msk [vmem:[%s3] sm:$0xff] %vm40, %v168
  %216 = vst.msk [vmem:[%s3 + $0x8] sm:$0xff] %vm40, %v170
  %217 = vst.msk [vmem:[%s3 + $0x10] sm:$0xff] %vm40, %v172
  %218 = vst.msk [vmem:[%s3 + $0x18] sm:$0xff] %vm40, %v174
  %219 = vst.msk [vmem:[%s3 + $0x20] sm:$0xff] %vm40, %v176
  %220 = vst.msk [vmem:[%s3 + $0x28] sm:$0xff] %vm40, %v178
  %221 = vst.msk [vmem:[%s3 + $0x30] sm:$0xff] %vm40, %v180
  %222 = vst.msk [vmem:[%s3 + $0x38] sm:$0xff] %vm40, %v182
  %223 = vst.msk [vmem:[%s3 + $0x40] sm:$0xff] %vm40, %v184
  %224 = vst.msk [vmem:[%s3 + $0x48] sm:$0xff] %vm40, %v186
  %225 = vst.msk [vmem:[%s3 + $0x50] sm:$0xff] %vm40, %v188
  %226 = vst.msk [vmem:[%s3 + $0x58] sm:$0xff] %vm40, %v190
  %227 = vst.msk [vmem:[%s3 + $0x60] sm:$0xff] %vm40, %v192
  %228 = vst.msk [vmem:[%s3 + $0x68] sm:$0xff] %vm40, %v194
  %229 = vst.msk [vmem:[%s3 + $0x70] sm:$0xff] %vm40, %v196
  %230 = vst.msk [vmem:[%s3 + $0x78] sm:$0xff] %vm40, %v198
  // Predicated region
  $region10: #{_gat_forward.4} parent=0 // pred_check
    _
  $region11: #{_gat_forward.4} parent=0 // pred_check_branch
    %232 = sbr.rel (0) target = $region13
  $region12: #{_gat_forward.4} parent=0 // pred_region
    _
  $region13: #{_gat_forward.4} parent=0 // pred_fallthru
    _
  // Predicated region
  $region14: #{_gat_forward.4} parent=0 // pred_check
    _
  $region15: #{_gat_forward.4} parent=0 // pred_check_branch
    %234 = sbr.rel (0) target = $region17
  $region16: #{_gat_forward.4} parent=0 // pred_region
    _
  $region17: #{_gat_forward.4} parent=0 // pred_fallthru
    _
  // Predicated region
  $region18: #{_gat_forward.4} parent=0 // pred_check
    _
  $region19: #{_gat_forward.4} parent=0 // pred_check_branch
    %236 = sbr.rel (0) target = $region21
  $region20: #{_gat_forward.4} parent=0 // pred_region
    _
  $region21: #{_gat_forward.4} parent=0 // pred_fallthru
    _
  // Predicated region
  $region22: #{_gat_forward.4} parent=0 // pred_check
    _
  $region23: #{_gat_forward.4} parent=0 // pred_check_branch
    %238 = sbr.rel (0) target = $region25
  $region24: #{_gat_forward.4} parent=0 // pred_region
    _
  $region25: #{_gat_forward.4} parent=0 // pred_fallthru
    _

// kernel: _gat_forward.6
$region0: #{_gat_forward.6}
  #allocation0 [shape = 'u32[]', space=smem, size = 0x4, offset = 0x4, fixed_abs, tag = 'smem constant byte address 0x4 - core index']
  #allocation1 [shape = 'u32[72,128]{1,0:T(1,128)}', space=vmem, size = 0x9000, scoped, tag = 'internal scratch']
  %s0 = inlined_call_operand.vmem [shape: f32[128,32], index: 0, kind: input, shape index: {}]
  %s1 = inlined_call_operand.vmem [shape: f32[32,10], index: 1, kind: input, shape index: {}]
  %s2 = inlined_call_operand.vmem [shape: bf16[128,6], index: 2, kind: output, shape index: {0}]
  %s3 = inlined_call_operand.vmem [shape: f32[128,4], index: 3, kind: output, shape index: {1}]
  %4 = xla_tuple %s2, %s3
  %s5 = sld [smem:[#allocation0]]
  $region26: #{_gat_forward.6} parent=0
    _
  %s7 = ssub.s32 1, %s5
  %s8 = scalar_select 0, %s7, %s5
  // Predicated region
  $region2: #{_gat_forward.6} parent=0 // pred_check
    _
  $region3: #{_gat_forward.6} parent=0 // pred_check_branch
    %10 = sbr.rel (0) target = $region5
  $region4: #{_gat_forward.6} parent=0 // pred_region
    _
  $region5: #{_gat_forward.6} parent=0 // pred_fallthru
    _
  // Predicated region
  $region6: #{_gat_forward.6} parent=0 // pred_check
    _
  $region7: #{_gat_forward.6} parent=0 // pred_check_branch
    %12 = sbr.rel (0) target = $region9
  $region8: #{_gat_forward.6} parent=0 // pred_region
    _
  $region9: #{_gat_forward.6} parent=0 // pred_fallthru
    _
  %v14 = vld [vmem:[%s0] sm:$0xff]
  %v15 = vld [vmem:[%s0 + $0x8] sm:$0xff]
  %v16 = vld [vmem:[%s0 + $0x10] sm:$0xff]
  %v17 = vld [vmem:[%s0 + $0x18] sm:$0xff]
  %v18 = vld [vmem:[%s0 + $0x20] sm:$0xff]
  %v19 = vld [vmem:[%s0 + $0x28] sm:$0xff]
  %v20 = vld [vmem:[%s0 + $0x30] sm:$0xff]
  %v21 = vld [vmem:[%s0 + $0x38] sm:$0xff]
  %v22 = vld [vmem:[%s0 + $0x40] sm:$0xff]
  %v23 = vld [vmem:[%s0 + $0x48] sm:$0xff]
  %v24 = vld [vmem:[%s0 + $0x50] sm:$0xff]
  %v25 = vld [vmem:[%s0 + $0x58] sm:$0xff]
  %v26 = vld [vmem:[%s0 + $0x60] sm:$0xff]
  %v27 = vld [vmem:[%s0 + $0x68] sm:$0xff]
  %v28 = vld [vmem:[%s0 + $0x70] sm:$0xff]
  %v29 = vld [vmem:[%s0 + $0x78] sm:$0xff]
  %v30 = vld [vmem:[%s1] sm:$0xff]
  %v31 = vld [vmem:[%s1 + $0x8] sm:$0xff]
  %v32 = vld [vmem:[%s1 + $0x10] sm:$0xff]
  %v33 = vld [vmem:[%s1 + $0x18] sm:$0xff]
  %v34 = vpack.c.bf16 %v15, %v14
  %v35 = vpack.c.bf16 %v17, %v16
  %v36 = vpack.c.bf16 %v19, %v18
  %v37 = vpack.c.bf16 %v21, %v20
  %v38 = vpack.c.bf16 %v23, %v22
  %v39 = vpack.c.bf16 %v25, %v24
  %v40 = vpack.c.bf16 %v27, %v26
  %v41 = vpack.c.bf16 %v29, %v28
  %v42 = vpack.c.bf16 %v31, %v30
  %v43 = vpack.c.bf16 %v33, %v32
  %vm44 = vcmask 261120
  %v46 = vsel %vm44, %v34, 0
  %v49 = vsel %vm44, %v35, 0
  %v52 = vsel %vm44, %v36, 0
  %v55 = vsel %vm44, %v37, 0
  %v58 = vsel %vm44, %v38, 0
  %v61 = vsel %vm44, %v39, 0
  %v64 = vsel %vm44, %v40, 0
  %v67 = vsel %vm44, %v41, 0
  %69 = vmatpush.bf16.msra.mxu0 0
  %70 = vmatpush.bf16.msra.mxu0 0
  %71 = vmatpush.bf16.msra.mxu0 0
  %72 = vmatpush.bf16.msra.mxu0 0
  %73 = vmatpush.bf16.msra.mxu0 0
  %74 = vmatpush.bf16.msra.mxu0 0
  %75 = vmatpush.bf16.msra.mxu0 %v43
  %76 = vmatpush.bf16.msra.mxu0 %v42
  %77 = vmatmul.bf16.gmra.mxu0 %v46
  %v78 = vpop.f32.mrf.mxu0
  %v79 = vadd.f32 0.0, %v78
  %v80 = vpop.f32.mrf.mxu0
  %v81 = vadd.f32 0.0, %v80
  %82 = vmatmul.bf16.gmra.mxu0 %v49
  %v83 = vpop.f32.mrf.mxu0
  %v84 = vadd.f32 0.0, %v83
  %v85 = vpop.f32.mrf.mxu0
  %v86 = vadd.f32 0.0, %v85
  %87 = vmatmul.bf16.gmra.mxu0 %v52
  %v88 = vpop.f32.mrf.mxu0
  %v89 = vadd.f32 0.0, %v88
  %v90 = vpop.f32.mrf.mxu0
  %v91 = vadd.f32 0.0, %v90
  %92 = vmatmul.bf16.gmra.mxu0 %v55
  %v93 = vpop.f32.mrf.mxu0
  %v94 = vadd.f32 0.0, %v93
  %v95 = vpop.f32.mrf.mxu0
  %v96 = vadd.f32 0.0, %v95
  %97 = vmatmul.bf16.gmra.mxu0 %v58
  %v98 = vpop.f32.mrf.mxu0
  %v99 = vadd.f32 0.0, %v98
  %v100 = vpop.f32.mrf.mxu0
  %v101 = vadd.f32 0.0, %v100
  %102 = vmatmul.bf16.gmra.mxu0 %v61
  %v103 = vpop.f32.mrf.mxu0
  %v104 = vadd.f32 0.0, %v103
  %v105 = vpop.f32.mrf.mxu0
  %v106 = vadd.f32 0.0, %v105
  %107 = vmatmul.bf16.gmra.mxu0 %v64
  %v108 = vpop.f32.mrf.mxu0
  %v109 = vadd.f32 0.0, %v108
  %v110 = vpop.f32.mrf.mxu0
  %v111 = vadd.f32 0.0, %v110
  %112 = vmatmul.bf16.gmra.mxu0 %v67
  %v113 = vpop.f32.mrf.mxu0
  %v114 = vadd.f32 0.0, %v113
  %v115 = vpop.f32.mrf.mxu0
  %v116 = vadd.f32 0.0, %v115
  %117 = vdwg.mxu0
  %v118 = vpack.c.bf16 %v79, %v79
  %v119 = vpack.c.bf16 %v81, %v81
  %v120 = vpack.c.bf16 %v84, %v84
  %v121 = vpack.c.bf16 %v86, %v86
  %v122 = vpack.c.bf16 %v89, %v89
  %v123 = vpack.c.bf16 %v91, %v91
  %v124 = vpack.c.bf16 %v94, %v94
  %v125 = vpack.c.bf16 %v96, %v96
  %v126 = vpack.c.bf16 %v99, %v99
  %v127 = vpack.c.bf16 %v101, %v101
  %v128 = vpack.c.bf16 %v104, %v104
  %v129 = vpack.c.bf16 %v106, %v106
  %v130 = vpack.c.bf16 %v109, %v109
  %v131 = vpack.c.bf16 %v111, %v111
  %v132 = vpack.c.bf16 %v114, %v114
  %v133 = vpack.c.bf16 %v116, %v116
  %vm134 = vcmask 44032
  %135 = vst.msk [vmem:[%s2] sm:$0xf] %vm134, %v118
  %136 = vst.msk [vmem:[%s2 + $0x4] sm:$0xf] %vm134, %v119
  %137 = vst.msk [vmem:[%s2 + $0x8] sm:$0xf] %vm134, %v120
  %138 = vst.msk [vmem:[%s2 + $0xc] sm:$0xf] %vm134, %v121
  %139 = vst.msk [vmem:[%s2 + $0x10] sm:$0xf] %vm134, %v122
  %140 = vst.msk [vmem:[%s2 + $0x14] sm:$0xf] %vm134, %v123
  %141 = vst.msk [vmem:[%s2 + $0x18] sm:$0xf] %vm134, %v124
  %142 = vst.msk [vmem:[%s2 + $0x1c] sm:$0xf] %vm134, %v125
  %143 = vst.msk [vmem:[%s2 + $0x20] sm:$0xf] %vm134, %v126
  %144 = vst.msk [vmem:[%s2 + $0x24] sm:$0xf] %vm134, %v127
  %145 = vst.msk [vmem:[%s2 + $0x28] sm:$0xf] %vm134, %v128
  %146 = vst.msk [vmem:[%s2 + $0x2c] sm:$0xf] %vm134, %v129
  %147 = vst.msk [vmem:[%s2 + $0x30] sm:$0xf] %vm134, %v130
  %148 = vst.msk [vmem:[%s2 + $0x34] sm:$0xf] %vm134, %v131
  %149 = vst.msk [vmem:[%s2 + $0x38] sm:$0xf] %vm134, %v132
  %150 = vst.msk [vmem:[%s2 + $0x3c] sm:$0xf] %vm134, %v133
  %167 = vrot.lane.b32.xlu0 %v79, 122
  %v168 = vpop.permute.xlu0 %167
  %169 = vrot.lane.b32.xlu0 %v81, 122
  %v170 = vpop.permute.xlu0 %169
  %171 = vrot.lane.b32.xlu0 %v84, 122
  %v172 = vpop.permute.xlu0 %171
  %173 = vrot.lane.b32.xlu0 %v86, 122
  %v174 = vpop.permute.xlu0 %173
  %175 = vrot.lane.b32.xlu0 %v89, 122
  %v176 = vpop.permute.xlu0 %175
  %177 = vrot.lane.b32.xlu0 %v91, 122
  %v178 = vpop.permute.xlu0 %177
  %179 = vrot.lane.b32.xlu0 %v94, 122
  %v180 = vpop.permute.xlu0 %179
  %181 = vrot.lane.b32.xlu0 %v96, 122
  %v182 = vpop.permute.xlu0 %181
  %183 = vrot.lane.b32.xlu0 %v99, 122
  %v184 = vpop.permute.xlu0 %183
  %185 = vrot.lane.b32.xlu0 %v101, 122
  %v186 = vpop.permute.xlu0 %185
  %187 = vrot.lane.b32.xlu0 %v104, 122
  %v188 = vpop.permute.xlu0 %187
  %189 = vrot.lane.b32.xlu0 %v106, 122
  %v190 = vpop.permute.xlu0 %189
  %191 = vrot.lane.b32.xlu0 %v109, 122
  %v192 = vpop.permute.xlu0 %191
  %193 = vrot.lane.b32.xlu0 %v111, 122
  %v194 = vpop.permute.xlu0 %193
  %195 = vrot.lane.b32.xlu0 %v114, 122
  %v196 = vpop.permute.xlu0 %195
  %197 = vrot.lane.b32.xlu0 %v116, 122
  %v198 = vpop.permute.xlu0 %197
  %vm215 = vcmask 31744
  %216 = vst.msk [vmem:[%s3] sm:$0xff] %vm215, %v168
  %217 = vst.msk [vmem:[%s3 + $0x8] sm:$0xff] %vm215, %v170
  %218 = vst.msk [vmem:[%s3 + $0x10] sm:$0xff] %vm215, %v172
  %219 = vst.msk [vmem:[%s3 + $0x18] sm:$0xff] %vm215, %v174
  %220 = vst.msk [vmem:[%s3 + $0x20] sm:$0xff] %vm215, %v176
  %221 = vst.msk [vmem:[%s3 + $0x28] sm:$0xff] %vm215, %v178
  %222 = vst.msk [vmem:[%s3 + $0x30] sm:$0xff] %vm215, %v180
  %223 = vst.msk [vmem:[%s3 + $0x38] sm:$0xff] %vm215, %v182
  %224 = vst.msk [vmem:[%s3 + $0x40] sm:$0xff] %vm215, %v184
  %225 = vst.msk [vmem:[%s3 + $0x48] sm:$0xff] %vm215, %v186
  %226 = vst.msk [vmem:[%s3 + $0x50] sm:$0xff] %vm215, %v188
  %227 = vst.msk [vmem:[%s3 + $0x58] sm:$0xff] %vm215, %v190
  %228 = vst.msk [vmem:[%s3 + $0x60] sm:$0xff] %vm215, %v192
  %229 = vst.msk [vmem:[%s3 + $0x68] sm:$0xff] %vm215, %v194
  %230 = vst.msk [vmem:[%s3 + $0x70] sm:$0xff] %vm215, %v196
  %231 = vst.msk [vmem:[%s3 + $0x78] sm:$0xff] %vm215, %v198
  // Predicated region
  $region10: #{_gat_forward.6} parent=0 // pred_check
    _
  $region11: #{_gat_forward.6} parent=0 // pred_check_branch
    %233 = sbr.rel (0) target = $region13
  $region12: #{_gat_forward.6} parent=0 // pred_region
    _
  $region13: #{_gat_forward.6} parent=0 // pred_fallthru
    _
  // Predicated region
  $region14: #{_gat_forward.6} parent=0 // pred_check
    _
  $region15: #{_gat_forward.6} parent=0 // pred_check_branch
    %235 = sbr.rel (0) target = $region17
  $region16: #{_gat_forward.6} parent=0 // pred_region
    _
  $region17: #{_gat_forward.6} parent=0 // pred_fallthru
    _
  // Predicated region
  $region18: #{_gat_forward.6} parent=0 // pred_check
    _
  $region19: #{_gat_forward.6} parent=0 // pred_check_branch
    %237 = sbr.rel (0) target = $region21
  $region20: #{_gat_forward.6} parent=0 // pred_region
    _
  $region21: #{_gat_forward.6} parent=0 // pred_fallthru
    _
  // Predicated region
  $region22: #{_gat_forward.6} parent=0 // pred_check
    _
  $region23: #{_gat_forward.6} parent=0 // pred_check_branch
    %239 = sbr.rel (0) target = $region25
  $region24: #{_gat_forward.6} parent=0 // pred_region
    _
  $region25: #{_gat_forward.6} parent=0 // pred_fallthru
    _

// kernel: _gat_forward.7
$region0: #{_gat_forward.7}
  #allocation0 [shape = 'u32[]', space=smem, size = 0x4, offset = 0x4, fixed_abs, tag = 'smem constant byte address 0x4 - core index']
  #allocation1 [shape = 'u32[72,128]{1,0:T(1,128)}', space=vmem, size = 0x9000, scoped, tag = 'internal scratch']
  #allocation2 [shape = 'f32[128,6]{1,0:T(8,128)}', space=vmem, size = 0x10000, scoped, tag = 'scratch operand']
  #allocation3 [shape = 'f32[128,2]{1,0:T(8,128)}', space=vmem, size = 0x10000, scoped, tag = 'scratch operand']
  #allocation4 [shape = 'f32[128,2]{1,0:T(8,128)}', space=vmem, size = 0x10000, scoped, tag = 'scratch operand']
  #allocation5 [shape = 's32[1]{0}', space=sflag, size = 0x4, scoped, tag = 'scoped memory for _gat_forward.7']
  #allocation6 [shape = 's32[1]{0:T(128)S(6)}', space=smem, size = 0x200, scoped, tag = 'prefetched SMEM operand 0']
  %s0 = inlined_call_operand.<no memory space> [shape: s32[1], index: 0, kind: input, shape index: {}]
  %s1 = inlined_call_operand.vmem [shape: bf16[128,6], index: 1, kind: input, shape index: {}]
  %s2 = inlined_call_operand.vmem [shape: f32[2,128], index: 2, kind: input, shape index: {}]
  %s3 = inlined_call_operand.vmem [shape: f32[128,2], index: 3, kind: input, shape index: {}]
  %s4 = inlined_call_operand.vmem [shape: s8[128,128], index: 4, kind: input, shape index: {}]
  %s5 = inlined_call_operand.vmem [shape: f32[1,6], index: 5, kind: input, shape index: {}]
  %s6 = inlined_call_operand.vmem [shape: f32[128,6], index: 6, kind: output, shape index: {}]
  %s7 = sld [smem:[#allocation0]]
  $region42: #{_gat_forward.7} parent=0
    _
  %s9 = ssub.s32 1, %s7
  %s10 = scalar_select 0, %s9, %s7
  %11 = sst [smem:[#allocation6]] %s0
  // Predicated region
  $region2: #{_gat_forward.7} parent=0 // pred_check
    _
  $region3: #{_gat_forward.7} parent=0 // pred_check_branch
    %13 = sbr.rel (0) target = $region5
  $region4: #{_gat_forward.7} parent=0 // pred_region
    _
  $region5: #{_gat_forward.7} parent=0 // pred_fallthru
    _
  // Predicated region
  $region6: #{_gat_forward.7} parent=0 // pred_check
    _
  $region7: #{_gat_forward.7} parent=0 // pred_check_branch
    %15 = sbr.rel (0) target = $region9
  $region8: #{_gat_forward.7} parent=0 // pred_region
    _
  $region9: #{_gat_forward.7} parent=0 // pred_fallthru
    _
  // Predicated region
  $region10: #{_gat_forward.7} parent=0 // pred_check
    _
  $region11: #{_gat_forward.7} parent=0 // pred_check_branch
    %17 = sbr.rel (0) target = $region13
  $region12: #{_gat_forward.7} parent=0 // pred_region
    _
  $region13: #{_gat_forward.7} parent=0 // pred_fallthru
    _
  // Predicated region
  $region14: #{_gat_forward.7} parent=0 // pred_check
    _
  $region15: #{_gat_forward.7} parent=0 // pred_check_branch
    %19 = sbr.rel (0) target = $region17
  $region16: #{_gat_forward.7} parent=0 // pred_region
    _
  $region17: #{_gat_forward.7} parent=0 // pred_fallthru
    _
  // Predicated region
  $region18: #{_gat_forward.7} parent=0 // pred_check
    _
  $region19: #{_gat_forward.7} parent=0 // pred_check_branch
    %21 = sbr.rel (0) target = $region21
  $region20: #{_gat_forward.7} parent=0 // pred_region
    _
  $region21: #{_gat_forward.7} parent=0 // pred_fallthru
    _
  %p24 = scmp.eq.s32.totalorder 0, 0
  // Predicated region
  $region22: #{_gat_forward.7} parent=0 // pred_check
    %p25 = pneg %p24
  $region23: #{_gat_forward.7} parent=0 // pred_check_branch
    %27 = sbr.rel (%p25) target = $region25
  $region24: #{_gat_forward.7} parent=0 // pred_region
    %vm28 = vcmask 15360
    %29 = vst.msk [vmem:[#allocation3] sm:$0xff] %vm28, -1e+30
    %30 = vst.msk [vmem:[#allocation3 + $0x8] sm:$0xff] %vm28, -1e+30
    %31 = vst.msk [vmem:[#allocation3 + $0x10] sm:$0xff] %vm28, -1e+30
    %32 = vst.msk [vmem:[#allocation3 + $0x18] sm:$0xff] %vm28, -1e+30
    %33 = vst.msk [vmem:[#allocation3 + $0x20] sm:$0xff] %vm28, -1e+30
    %34 = vst.msk [vmem:[#allocation3 + $0x28] sm:$0xff] %vm28, -1e+30
    %35 = vst.msk [vmem:[#allocation3 + $0x30] sm:$0xff] %vm28, -1e+30
    %36 = vst.msk [vmem:[#allocation3 + $0x38] sm:$0xff] %vm28, -1e+30
    %37 = vst.msk [vmem:[#allocation3 + $0x40] sm:$0xff] %vm28, -1e+30
    %38 = vst.msk [vmem:[#allocation3 + $0x48] sm:$0xff] %vm28, -1e+30
    %39 = vst.msk [vmem:[#allocation3 + $0x50] sm:$0xff] %vm28, -1e+30
    %40 = vst.msk [vmem:[#allocation3 + $0x58] sm:$0xff] %vm28, -1e+30
    %41 = vst.msk [vmem:[#allocation3 + $0x60] sm:$0xff] %vm28, -1e+30
    %42 = vst.msk [vmem:[#allocation3 + $0x68] sm:$0xff] %vm28, -1e+30
    %43 = vst.msk [vmem:[#allocation3 + $0x70] sm:$0xff] %vm28, -1e+30
    %44 = vst.msk [vmem:[#allocation3 + $0x78] sm:$0xff] %vm28, -1e+30
    %45 = vst.msk [vmem:[#allocation4] sm:$0xff] %vm28, 0.0
    %46 = vst.msk [vmem:[#allocation4 + $0x8] sm:$0xff] %vm28, 0.0
    %47 = vst.msk [vmem:[#allocation4 + $0x10] sm:$0xff] %vm28, 0.0
    %48 = vst.msk [vmem:[#allocation4 + $0x18] sm:$0xff] %vm28, 0.0
    %49 = vst.msk [vmem:[#allocation4 + $0x20] sm:$0xff] %vm28, 0.0
    %50 = vst.msk [vmem:[#allocation4 + $0x28] sm:$0xff] %vm28, 0.0
    %51 = vst.msk [vmem:[#allocation4 + $0x30] sm:$0xff] %vm28, 0.0
    %52 = vst.msk [vmem:[#allocation4 + $0x38] sm:$0xff] %vm28, 0.0
    %53 = vst.msk [vmem:[#allocation4 + $0x40] sm:$0xff] %vm28, 0.0
    %54 = vst.msk [vmem:[#allocation4 + $0x48] sm:$0xff] %vm28, 0.0
    %55 = vst.msk [vmem:[#allocation4 + $0x50] sm:$0xff] %vm28, 0.0
    %56 = vst.msk [vmem:[#allocation4 + $0x58] sm:$0xff] %vm28, 0.0
    %57 = vst.msk [vmem:[#allocation4 + $0x60] sm:$0xff] %vm28, 0.0
    %58 = vst.msk [vmem:[#allocation4 + $0x68] sm:$0xff] %vm28, 0.0
    %59 = vst.msk [vmem:[#allocation4 + $0x70] sm:$0xff] %vm28, 0.0
    %60 = vst.msk [vmem:[#allocation4 + $0x78] sm:$0xff] %vm28, 0.0
    %vm61 = vcmask 48128
    %62 = vst.msk [vmem:[#allocation2] sm:$0xff] %vm61, 0.0
    %63 = vst.msk [vmem:[#allocation2 + $0x8] sm:$0xff] %vm61, 0.0
    %64 = vst.msk [vmem:[#allocation2 + $0x10] sm:$0xff] %vm61, 0.0
    %65 = vst.msk [vmem:[#allocation2 + $0x18] sm:$0xff] %vm61, 0.0
    %66 = vst.msk [vmem:[#allocation2 + $0x20] sm:$0xff] %vm61, 0.0
    %67 = vst.msk [vmem:[#allocation2 + $0x28] sm:$0xff] %vm61, 0.0
    %68 = vst.msk [vmem:[#allocation2 + $0x30] sm:$0xff] %vm61, 0.0
    %69 = vst.msk [vmem:[#allocation2 + $0x38] sm:$0xff] %vm61, 0.0
    %70 = vst.msk [vmem:[#allocation2 + $0x40] sm:$0xff] %vm61, 0.0
    %71 = vst.msk [vmem:[#allocation2 + $0x48] sm:$0xff] %vm61, 0.0
    %72 = vst.msk [vmem:[#allocation2 + $0x50] sm:$0xff] %vm61, 0.0
    %73 = vst.msk [vmem:[#allocation2 + $0x58] sm:$0xff] %vm61, 0.0
    %74 = vst.msk [vmem:[#allocation2 + $0x60] sm:$0xff] %vm61, 0.0
    %75 = vst.msk [vmem:[#allocation2 + $0x68] sm:$0xff] %vm61, 0.0
    %76 = vst.msk [vmem:[#allocation2 + $0x70] sm:$0xff] %vm61, 0.0
    %77 = vst.msk [vmem:[#allocation2 + $0x78] sm:$0xff] %vm61, 0.0
  $region25: #{_gat_forward.7} parent=0 // pred_fallthru
    _
  %s78 = sadd.s32 0, 0
  %s79 = sld [smem:[#allocation6 + %s78]]
  %p80 = scmp.ne.s32.totalorder %s79, 0
  // Predicated region
  $region26: #{_gat_forward.7} parent=0 // pred_check
    %p81 = pneg %p80
  $region27: #{_gat_forward.7} parent=0 // pred_check_branch
    %83 = sbr.rel (%p81) target = $region29
  $region28: #{_gat_forward.7} parent=0 // pred_region
    %v84 = vld [vmem:[%s4] sm:$0xff]
    %v85 = vld [vmem:[%s4 + $0x8] sm:$0xff]
    %v86 = vld [vmem:[%s4 + $0x10] sm:$0xff]
    %v87 = vld [vmem:[%s4 + $0x18] sm:$0xff]
    %vm88 = vnez %v84
    %vm89 = vnez %v85
    %vm90 = vnez %v86
    %vm91 = vnez %v87
    %v92 = vld [vmem:[%s1] sm:$0xf]
    %v93 = vld [vmem:[%s1 + $0x4] sm:$0xf]
    %v94 = vld [vmem:[%s1 + $0x8] sm:$0xf]
    %v95 = vld [vmem:[%s1 + $0xc] sm:$0xf]
    %v96 = vld [vmem:[%s1 + $0x10] sm:$0xf]
    %v97 = vld [vmem:[%s1 + $0x14] sm:$0xf]
    %v98 = vld [vmem:[%s1 + $0x18] sm:$0xf]
    %v99 = vld [vmem:[%s1 + $0x1c] sm:$0xf]
    %v100 = vld [vmem:[%s1 + $0x20] sm:$0xf]
    %v101 = vld [vmem:[%s1 + $0x24] sm:$0xf]
    %v102 = vld [vmem:[%s1 + $0x28] sm:$0xf]
    %v103 = vld [vmem:[%s1 + $0x2c] sm:$0xf]
    %v104 = vld [vmem:[%s1 + $0x30] sm:$0xf]
    %v105 = vld [vmem:[%s1 + $0x34] sm:$0xf]
    %v106 = vld [vmem:[%s1 + $0x38] sm:$0xf]
    %v107 = vld [vmem:[%s1 + $0x3c] sm:$0xf]
    %v108 = vld [vmem:[%s2] sm:$0x3]
    %v109 = vld [vmem:[%s3] sm:$0xff]
    %v110 = vld [vmem:[%s3 + $0x8] sm:$0xff]
    %v111 = vld [vmem:[%s3 + $0x10] sm:$0xff]
    %v112 = vld [vmem:[%s3 + $0x18] sm:$0xff]
    %v113 = vld [vmem:[%s3 + $0x20] sm:$0xff]
    %v114 = vld [vmem:[%s3 + $0x28] sm:$0xff]
    %v115 = vld [vmem:[%s3 + $0x30] sm:$0xff]
    %v116 = vld [vmem:[%s3 + $0x38] sm:$0xff]
    %v117 = vld [vmem:[%s3 + $0x40] sm:$0xff]
    %v118 = vld [vmem:[%s3 + $0x48] sm:$0xff]
    %v119 = vld [vmem:[%s3 + $0x50] sm:$0xff]
    %v120 = vld [vmem:[%s3 + $0x58] sm:$0xff]
    %v121 = vld [vmem:[%s3 + $0x60] sm:$0xff]
    %v122 = vld [vmem:[%s3 + $0x68] sm:$0xff]
    %v123 = vld [vmem:[%s3 + $0x70] sm:$0xff]
    %v124 = vld [vmem:[%s3 + $0x78] sm:$0xff]
    %126 = vset.pattern.permute.xlu0 0
    %127 = vperm.xlu0 %126, %v109
    %v128 = vpop.permute.xlu0 %127
    %131 = vset.pattern.permute.xlu0 0
    %132 = vperm.xlu0 %131, %v110
    %v133 = vpop.permute.xlu0 %132
    %136 = vset.pattern.permute.xlu0 0
    %137 = vperm.xlu0 %136, %v111
    %v138 = vpop.permute.xlu0 %137
    %141 = vset.pattern.permute.xlu0 0
    %142 = vperm.xlu0 %141, %v112
    %v143 = vpop.permute.xlu0 %142
    %146 = vset.pattern.permute.xlu0 0
    %147 = vperm.xlu0 %146, %v113
    %v148 = vpop.permute.xlu0 %147
    %151 = vset.pattern.permute.xlu0 0
    %152 = vperm.xlu0 %151, %v114
    %v153 = vpop.permute.xlu0 %152
    %156 = vset.pattern.permute.xlu0 0
    %157 = vperm.xlu0 %156, %v115
    %v158 = vpop.permute.xlu0 %157
    %161 = vset.pattern.permute.xlu0 0
    %162 = vperm.xlu0 %161, %v116
    %v163 = vpop.permute.xlu0 %162
    %166 = vset.pattern.permute.xlu0 0
    %167 = vperm.xlu0 %166, %v117
    %v168 = vpop.permute.xlu0 %167
    %171 = vset.pattern.permute.xlu0 0
    %172 = vperm.xlu0 %171, %v118
    %v173 = vpop.permute.xlu0 %172
    %176 = vset.pattern.permute.xlu0 0
    %177 = vperm.xlu0 %176, %v119
    %v178 = vpop.permute.xlu0 %177
    %181 = vset.pattern.permute.xlu0 0
    %182 = vperm.xlu0 %181, %v120
    %v183 = vpop.permute.xlu0 %182
    %186 = vset.pattern.permute.xlu0 0
    %187 = vperm.xlu0 %186, %v121
    %v188 = vpop.permute.xlu0 %187
    %191 = vset.pattern.permute.xlu0 0
    %192 = vperm.xlu0 %191, %v122
    %v193 = vpop.permute.xlu0 %192
    %196 = vset.pattern.permute.xlu0 0
    %197 = vperm.xlu0 %196, %v123
    %v198 = vpop.permute.xlu0 %197
    %201 = vset.pattern.permute.xlu0 0
    %202 = vperm.xlu0 %201, %v124
    %v203 = vpop.permute.xlu0 %202
    %v205 = vperm.slane %v108, 0
    %v206 = vadd.f32 %v128, %v205
    %v207 = vadd.f32 %v133, %v205
    %v208 = vadd.f32 %v138, %v205
    %v209 = vadd.f32 %v143, %v205
    %v210 = vadd.f32 %v148, %v205
    %v211 = vadd.f32 %v153, %v205
    %v212 = vadd.f32 %v158, %v205
    %v213 = vadd.f32 %v163, %v205
    %v214 = vadd.f32 %v168, %v205
    %v215 = vadd.f32 %v173, %v205
    %v216 = vadd.f32 %v178, %v205
    %v217 = vadd.f32 %v183, %v205
    %v218 = vadd.f32 %v188, %v205
    %v219 = vadd.f32 %v193, %v205
    %v220 = vadd.f32 %v198, %v205
    %v221 = vadd.f32 %v203, %v205
    %vm222 = vcmp.gt.f32.partialorder %v206, 0.0
    %vm223 = vcmp.gt.f32.partialorder %v207, 0.0
    %vm224 = vcmp.gt.f32.partialorder %v208, 0.0
    %vm225 = vcmp.gt.f32.partialorder %v209, 0.0
    %vm226 = vcmp.gt.f32.partialorder %v210, 0.0
    %vm227 = vcmp.gt.f32.partialorder %v211, 0.0
    %vm228 = vcmp.gt.f32.partialorder %v212, 0.0
    %vm229 = vcmp.gt.f32.partialorder %v213, 0.0
    %vm230 = vcmp.gt.f32.partialorder %v214, 0.0
    %vm231 = vcmp.gt.f32.partialorder %v215, 0.0
    %vm232 = vcmp.gt.f32.partialorder %v216, 0.0
    %vm233 = vcmp.gt.f32.partialorder %v217, 0.0
    %vm234 = vcmp.gt.f32.partialorder %v218, 0.0
    %vm235 = vcmp.gt.f32.partialorder %v219, 0.0
    %vm236 = vcmp.gt.f32.partialorder %v220, 0.0
    %vm237 = vcmp.gt.f32.partialorder %v221, 0.0
    %v238 = vmul.f32 %v206, 0.2
    %v239 = vmul.f32 %v207, 0.2
    %v240 = vmul.f32 %v208, 0.2
    %v241 = vmul.f32 %v209, 0.2
    %v242 = vmul.f32 %v210, 0.2
    %v243 = vmul.f32 %v211, 0.2
    %v244 = vmul.f32 %v212, 0.2
    %v245 = vmul.f32 %v213, 0.2
    %v246 = vmul.f32 %v214, 0.2
    %v247 = vmul.f32 %v215, 0.2
    %v248 = vmul.f32 %v216, 0.2
    %v249 = vmul.f32 %v217, 0.2
    %v250 = vmul.f32 %v218, 0.2
    %v251 = vmul.f32 %v219, 0.2
    %v252 = vmul.f32 %v220, 0.2
    %v253 = vmul.f32 %v221, 0.2
    %v254 = vsel %vm222, %v206, %v238
    %v255 = vsel %vm223, %v207, %v239
    %v256 = vsel %vm224, %v208, %v240
    %v257 = vsel %vm225, %v209, %v241
    %v258 = vsel %vm226, %v210, %v242
    %v259 = vsel %vm227, %v211, %v243
    %v260 = vsel %vm228, %v212, %v244
    %v261 = vsel %vm229, %v213, %v245
    %v262 = vsel %vm230, %v214, %v246
    %v263 = vsel %vm231, %v215, %v247
    %v264 = vsel %vm232, %v216, %v248
    %v265 = vsel %vm233, %v217, %v249
    %v266 = vsel %vm234, %v218, %v250
    %v267 = vsel %vm235, %v219, %v251
    %v268 = vsel %vm236, %v220, %v252
    %v269 = vsel %vm237, %v221, %v253
    %v270 = vsel %vm88, 16843009, 0
    %v271 = vsel %vm89, 16843009, 0
    %v272 = vsel %vm90, 16843009, 0
    %v273 = vsel %vm91, 16843009, 0
    %v274 = vunpack.c.0.s8 %v270
    %v275 = vunpack.c.1.s8 %v270
    %v276 = vunpack.c.2.s8 %v270
    %v277 = vunpack.c.3.s8 %v270
    %v278 = vunpack.c.0.s8 %v271
    %v279 = vunpack.c.1.s8 %v271
    %v280 = vunpack.c.2.s8 %v271
    %v281 = vunpack.c.3.s8 %v271
    %v282 = vunpack.c.0.s8 %v272
    %v283 = vunpack.c.1.s8 %v272
    %v284 = vunpack.c.2.s8 %v272
    %v285 = vunpack.c.3.s8 %v272
    %v286 = vunpack.c.0.s8 %v273
    %v287 = vunpack.c.1.s8 %v273
    %v288 = vunpack.c.2.s8 %v273
    %v289 = vunpack.c.3.s8 %v273
    %v290 = vpack.c.b16 %v274, %v274
    %v291 = vpack.c.b8 %v290, %v290
    %v292 = vpack.c.b16 %v275, %v275
    %v293 = vpack.c.b8 %v292, %v292
    %v294 = vpack.c.b16 %v276, %v276
    %v295 = vpack.c.b8 %v294, %v294
    %v296 = vpack.c.b16 %v277, %v277
    %v297 = vpack.c.b8 %v296, %v296
    %v298 = vpack.c.b16 %v278, %v278
    %v299 = vpack.c.b8 %v298, %v298
    %v300 = vpack.c.b16 %v279, %v279
    %v301 = vpack.c.b8 %v300, %v300
    %v302 = vpack.c.b16 %v280, %v280
    %v303 = vpack.c.b8 %v302, %v302
    %v304 = vpack.c.b16 %v281, %v281
    %v305 = vpack.c.b8 %v304, %v304
    %v306 = vpack.c.b16 %v282, %v282
    %v307 = vpack.c.b8 %v306, %v306
    %v308 = vpack.c.b16 %v283, %v283
    %v309 = vpack.c.b8 %v308, %v308
    %v310 = vpack.c.b16 %v284, %v284
    %v311 = vpack.c.b8 %v310, %v310
    %v312 = vpack.c.b16 %v285, %v285
    %v313 = vpack.c.b8 %v312, %v312
    %v314 = vpack.c.b16 %v286, %v286
    %v315 = vpack.c.b8 %v314, %v314
    %v316 = vpack.c.b16 %v287, %v287
    %v317 = vpack.c.b8 %v316, %v316
    %v318 = vpack.c.b16 %v288, %v288
    %v319 = vpack.c.b8 %v318, %v318
    %v320 = vpack.c.b16 %v289, %v289
    %v321 = vpack.c.b8 %v320, %v320
    %vm322 = vnez %v291
    %vm323 = vnez %v293
    %vm324 = vnez %v295
    %vm325 = vnez %v297
    %vm326 = vnez %v299
    %vm327 = vnez %v301
    %vm328 = vnez %v303
    %vm329 = vnez %v305
    %vm330 = vnez %v307
    %vm331 = vnez %v309
    %vm332 = vnez %v311
    %vm333 = vnez %v313
    %vm334 = vnez %v315
    %vm335 = vnez %v317
    %vm336 = vnez %v319
    %vm337 = vnez %v321
    %v338 = vsel %vm322, 16843009, 0
    %v339 = vsel %vm323, 16843009, 0
    %v340 = vsel %vm324, 16843009, 0
    %v341 = vsel %vm325, 16843009, 0
    %v342 = vsel %vm326, 16843009, 0
    %v343 = vsel %vm327, 16843009, 0
    %v344 = vsel %vm328, 16843009, 0
    %v345 = vsel %vm329, 16843009, 0
    %v346 = vsel %vm330, 16843009, 0
    %v347 = vsel %vm331, 16843009, 0
    %v348 = vsel %vm332, 16843009, 0
    %v349 = vsel %vm333, 16843009, 0
    %v350 = vsel %vm334, 16843009, 0
    %v351 = vsel %vm335, 16843009, 0
    %v352 = vsel %vm336, 16843009, 0
    %v353 = vsel %vm337, 16843009, 0
    %v354 = vunpack.c.0.s8 %v338
    %v355 = vunpack.c.0.s8 %v339
    %v356 = vunpack.c.0.s8 %v340
    %v357 = vunpack.c.0.s8 %v341
    %v358 = vunpack.c.0.s8 %v342
    %v359 = vunpack.c.0.s8 %v343
    %v360 = vunpack.c.0.s8 %v344
    %v361 = vunpack.c.0.s8 %v345
    %v362 = vunpack.c.0.s8 %v346
    %v363 = vunpack.c.0.s8 %v347
    %v364 = vunpack.c.0.s8 %v348
    %v365 = vunpack.c.0.s8 %v349
    %v366 = vunpack.c.0.s8 %v350
    %v367 = vunpack.c.0.s8 %v351
    %v368 = vunpack.c.0.s8 %v352
    %v369 = vunpack.c.0.s8 %v353
    %vm370 = vcmp.ne.s32.totalorder %v354, 0
    %vm371 = vcmp.ne.s32.totalorder %v355, 0
    %vm372 = vcmp.ne.s32.totalorder %v356, 0
    %vm373 = vcmp.ne.s32.totalorder %v357, 0
    %vm374 = vcmp.ne.s32.totalorder %v358, 0
    %vm375 = vcmp.ne.s32.totalorder %v359, 0
    %vm376 = vcmp.ne.s32.totalorder %v360, 0
    %vm377 = vcmp.ne.s32.totalorder %v361, 0
    %vm378 = vcmp.ne.s32.totalorder %v362, 0
    %vm379 = vcmp.ne.s32.totalorder %v363, 0
    %vm380 = vcmp.ne.s32.totalorder %v364, 0
    %vm381 = vcmp.ne.s32.totalorder %v365, 0
    %vm382 = vcmp.ne.s32.totalorder %v366, 0
    %vm383 = vcmp.ne.s32.totalorder %v367, 0
    %vm384 = vcmp.ne.s32.totalorder %v368, 0
    %vm385 = vcmp.ne.s32.totalorder %v369, 0
    %v386 = vsel %vm370, %v254, -1e+30
    %v387 = vsel %vm371, %v255, -1e+30
    %v388 = vsel %vm372, %v256, -1e+30
    %v389 = vsel %vm373, %v257, -1e+30
    %v390 = vsel %vm374, %v258, -1e+30
    %v391 = vsel %vm375, %v259, -1e+30
    %v392 = vsel %vm376, %v260, -1e+30
    %v393 = vsel %vm377, %v261, -1e+30
    %v394 = vsel %vm378, %v262, -1e+30
    %v395 = vsel %vm379, %v263, -1e+30
    %v396 = vsel %vm380, %v264, -1e+30
    %v397 = vsel %vm381, %v265, -1e+30
    %v398 = vsel %vm382, %v266, -1e+30
    %v399 = vsel %vm383, %v267, -1e+30
    %v400 = vsel %vm384, %v268, -1e+30
    %v401 = vsel %vm385, %v269, -1e+30
    %v402 = vld [vmem:[#allocation3] sm:$0xff]
    %v403 = vld [vmem:[#allocation3 + $0x8] sm:$0xff]
    %v404 = vld [vmem:[#allocation3 + $0x10] sm:$0xff]
    %v405 = vld [vmem:[#allocation3 + $0x18] sm:$0xff]
    %v406 = vld [vmem:[#allocation3 + $0x20] sm:$0xff]
    %v407 = vld [vmem:[#allocation3 + $0x28] sm:$0xff]
    %v408 = vld [vmem:[#allocation3 + $0x30] sm:$0xff]
    %v409 = vld [vmem:[#allocation3 + $0x38] sm:$0xff]
    %v410 = vld [vmem:[#allocation3 + $0x40] sm:$0xff]
    %v411 = vld [vmem:[#allocation3 + $0x48] sm:$0xff]
    %v412 = vld [vmem:[#allocation3 + $0x50] sm:$0xff]
    %v413 = vld [vmem:[#allocation3 + $0x58] sm:$0xff]
    %v414 = vld [vmem:[#allocation3 + $0x60] sm:$0xff]
    %v415 = vld [vmem:[#allocation3 + $0x68] sm:$0xff]
    %v416 = vld [vmem:[#allocation3 + $0x70] sm:$0xff]
    %v417 = vld [vmem:[#allocation3 + $0x78] sm:$0xff]
    %418 = vmax.xlane.f32.xlu0 %v386
    %v419 = vpop.xlane.xlu0 %418
    %420 = vmax.xlane.f32.xlu0 %v387
    %v421 = vpop.xlane.xlu0 %420
    %422 = vmax.xlane.f32.xlu0 %v388
    %v423 = vpop.xlane.xlu0 %422
    %424 = vmax.xlane.f32.xlu0 %v389
    %v425 = vpop.xlane.xlu0 %424
    %426 = vmax.xlane.f32.xlu0 %v390
    %v427 = vpop.xlane.xlu0 %426
    %428 = vmax.xlane.f32.xlu0 %v391
    %v429 = vpop.xlane.xlu0 %428
    %430 = vmax.xlane.f32.xlu0 %v392
    %v431 = vpop.xlane.xlu0 %430
    %432 = vmax.xlane.f32.xlu0 %v393
    %v433 = vpop.xlane.xlu0 %432
    %434 = vmax.xlane.f32.xlu0 %v394
    %v435 = vpop.xlane.xlu0 %434
    %436 = vmax.xlane.f32.xlu0 %v395
    %v437 = vpop.xlane.xlu0 %436
    %438 = vmax.xlane.f32.xlu0 %v396
    %v439 = vpop.xlane.xlu0 %438
    %440 = vmax.xlane.f32.xlu0 %v397
    %v441 = vpop.xlane.xlu0 %440
    %442 = vmax.xlane.f32.xlu0 %v398
    %v443 = vpop.xlane.xlu0 %442
    %444 = vmax.xlane.f32.xlu0 %v399
    %v445 = vpop.xlane.xlu0 %444
    %446 = vmax.xlane.f32.xlu0 %v400
    %v447 = vpop.xlane.xlu0 %446
    %448 = vmax.xlane.f32.xlu0 %v401
    %v449 = vpop.xlane.xlu0 %448
    %v450 = vmax.f32 %v402, %v419
    %v451 = vmax.f32 %v403, %v421
    %v452 = vmax.f32 %v404, %v423
    %v453 = vmax.f32 %v405, %v425
    %v454 = vmax.f32 %v406, %v427
    %v455 = vmax.f32 %v407, %v429
    %v456 = vmax.f32 %v408, %v431
    %v457 = vmax.f32 %v409, %v433
    %v458 = vmax.f32 %v410, %v435
    %v459 = vmax.f32 %v411, %v437
    %v460 = vmax.f32 %v412, %v439
    %v461 = vmax.f32 %v413, %v441
    %v462 = vmax.f32 %v414, %v443
    %v463 = vmax.f32 %v415, %v445
    %v464 = vmax.f32 %v416, %v447
    %v465 = vmax.f32 %v417, %v449
    %v466 = vsub.f32 %v402, %v450
    %v467 = vsub.f32 %v403, %v451
    %v468 = vsub.f32 %v404, %v452
    %v469 = vsub.f32 %v405, %v453
    %v470 = vsub.f32 %v406, %v454
    %v471 = vsub.f32 %v407, %v455
    %v472 = vsub.f32 %v408, %v456
    %v473 = vsub.f32 %v409, %v457
    %v474 = vsub.f32 %v410, %v458
    %v475 = vsub.f32 %v411, %v459
    %v476 = vsub.f32 %v412, %v460
    %v477 = vsub.f32 %v413, %v461
    %v478 = vsub.f32 %v414, %v462
    %v479 = vsub.f32 %v415, %v463
    %v480 = vsub.f32 %v416, %v464
    %v481 = vsub.f32 %v417, %v465
    %v482 = vmul.f32 %v466, 1.442695
    %v483 = vpow.pop %v482
    %v484 = vmul.f32 %v467, 1.442695
    %v485 = vpow.pop %v484
    %v486 = vmul.f32 %v468, 1.442695
    %v487 = vpow.pop %v486
    %v488 = vmul.f32 %v469, 1.442695
    %v489 = vpow.pop %v488
    %v490 = vmul.f32 %v470, 1.442695
    %v491 = vpow.pop %v490
    %v492 = vmul.f32 %v471, 1.442695
    %v493 = vpow.pop %v492
    %v494 = vmul.f32 %v472, 1.442695
    %v495 = vpow.pop %v494
    %v496 = vmul.f32 %v473, 1.442695
    %v497 = vpow.pop %v496
    %v498 = vmul.f32 %v474, 1.442695
    %v499 = vpow.pop %v498
    %v500 = vmul.f32 %v475, 1.442695
    %v501 = vpow.pop %v500
    %v502 = vmul.f32 %v476, 1.442695
    %v503 = vpow.pop %v502
    %v504 = vmul.f32 %v477, 1.442695
    %v505 = vpow.pop %v504
    %v506 = vmul.f32 %v478, 1.442695
    %v507 = vpow.pop %v506
    %v508 = vmul.f32 %v479, 1.442695
    %v509 = vpow.pop %v508
    %v510 = vmul.f32 %v480, 1.442695
    %v511 = vpow.pop %v510
    %v512 = vmul.f32 %v481, 1.442695
    %v513 = vpow.pop %v512
    %515 = vset.pattern.permute.xlu0 0
    %516 = vperm.xlu0 %515, %v450
    %v517 = vpop.permute.xlu0 %516
    %520 = vset.pattern.permute.xlu0 0
    %521 = vperm.xlu0 %520, %v451
    %v522 = vpop.permute.xlu0 %521
    %525 = vset.pattern.permute.xlu0 0
    %526 = vperm.xlu0 %525, %v452
    %v527 = vpop.permute.xlu0 %526
    %530 = vset.pattern.permute.xlu0 0
    %531 = vperm.xlu0 %530, %v453
    %v532 = vpop.permute.xlu0 %531
    %535 = vset.pattern.permute.xlu0 0
    %536 = vperm.xlu0 %535, %v454
    %v537 = vpop.permute.xlu0 %536
    %540 = vset.pattern.permute.xlu0 0
    %541 = vperm.xlu0 %540, %v455
    %v542 = vpop.permute.xlu0 %541
    %545 = vset.pattern.permute.xlu0 0
    %546 = vperm.xlu0 %545, %v456
    %v547 = vpop.permute.xlu0 %546
    %550 = vset.pattern.permute.xlu0 0
    %551 = vperm.xlu0 %550, %v457
    %v552 = vpop.permute.xlu0 %551
    %555 = vset.pattern.permute.xlu0 0
    %556 = vperm.xlu0 %555, %v458
    %v557 = vpop.permute.xlu0 %556
    %560 = vset.pattern.permute.xlu0 0
    %561 = vperm.xlu0 %560, %v459
    %v562 = vpop.permute.xlu0 %561
    %565 = vset.pattern.permute.xlu0 0
    %566 = vperm.xlu0 %565, %v460
    %v567 = vpop.permute.xlu0 %566
    %570 = vset.pattern.permute.xlu0 0
    %571 = vperm.xlu0 %570, %v461
    %v572 = vpop.permute.xlu0 %571
    %575 = vset.pattern.permute.xlu0 0
    %576 = vperm.xlu0 %575, %v462
    %v577 = vpop.permute.xlu0 %576
    %580 = vset.pattern.permute.xlu0 0
    %581 = vperm.xlu0 %580, %v463
    %v582 = vpop.permute.xlu0 %581
    %585 = vset.pattern.permute.xlu0 0
    %586 = vperm.xlu0 %585, %v464
    %v587 = vpop.permute.xlu0 %586
    %590 = vset.pattern.permute.xlu0 0
    %591 = vperm.xlu0 %590, %v465
    %v592 = vpop.permute.xlu0 %591
    %v594 = vsub.f32 %v386, %v517
    %v595 = vsub.f32 %v387, %v522
    %v596 = vsub.f32 %v388, %v527
    %v597 = vsub.f32 %v389, %v532
    %v598 = vsub.f32 %v390, %v537
    %v599 = vsub.f32 %v391, %v542
    %v600 = vsub.f32 %v392, %v547
    %v601 = vsub.f32 %v393, %v552
    %v602 = vsub.f32 %v394, %v557
    %v603 = vsub.f32 %v395, %v562
    %v604 = vsub.f32 %v396, %v567
    %v605 = vsub.f32 %v397, %v572
    %v606 = vsub.f32 %v398, %v577
    %v607 = vsub.f32 %v399, %v582
    %v608 = vsub.f32 %v400, %v587
    %v609 = vsub.f32 %v401, %v592
    %v610 = vpack.c.bf16 %v595, %v594
    %v611 = vpack.c.bf16 %v597, %v596
    %v612 = vpack.c.bf16 %v599, %v598
    %v613 = vpack.c.bf16 %v601, %v600
    %v614 = vpack.c.bf16 %v603, %v602
    %v615 = vpack.c.bf16 %v605, %v604
    %v616 = vpack.c.bf16 %v607, %v606
    %v617 = vpack.c.bf16 %v609, %v608
    %v618 = vunpack.c.l.bf16 %v610
    %v619 = vunpack.c.h.bf16 %v610
    %v620 = vunpack.c.l.bf16 %v611
    %v621 = vunpack.c.h.bf16 %v611
    %v622 = vunpack.c.l.bf16 %v612
    %v623 = vunpack.c.h.bf16 %v612
    %v624 = vunpack.c.l.bf16 %v613
    %v625 = vunpack.c.h.bf16 %v613
    %v626 = vunpack.c.l.bf16 %v614
    %v627 = vunpack.c.h.bf16 %v614
    %v628 = vunpack.c.l.bf16 %v615
    %v629 = vunpack.c.h.bf16 %v615
    %v630 = vunpack.c.l.bf16 %v616
    %v631 = vunpack.c.h.bf16 %v616
    %v632 = vunpack.c.l.bf16 %v617
    %v633 = vunpack.c.h.bf16 %v617
    %v634 = vmul.f32 %v618, 1.442695
    %v635 = vpow.pop %v634
    %v636 = vmul.f32 %v619, 1.442695
    %v637 = vpow.pop %v636
    %v638 = vmul.f32 %v620, 1.442695
    %v639 = vpow.pop %v638
    %v640 = vmul.f32 %v621, 1.442695
    %v641 = vpow.pop %v640
    %v642 = vmul.f32 %v622, 1.442695
    %v643 = vpow.pop %v642
    %v644 = vmul.f32 %v623, 1.442695
    %v645 = vpow.pop %v644
    %v646 = vmul.f32 %v624, 1.442695
    %v647 = vpow.pop %v646
    %v648 = vmul.f32 %v625, 1.442695
    %v649 = vpow.pop %v648
    %v650 = vmul.f32 %v626, 1.442695
    %v651 = vpow.pop %v650
    %v652 = vmul.f32 %v627, 1.442695
    %v653 = vpow.pop %v652
    %v654 = vmul.f32 %v628, 1.442695
    %v655 = vpow.pop %v654
    %v656 = vmul.f32 %v629, 1.442695
    %v657 = vpow.pop %v656
    %v658 = vmul.f32 %v630, 1.442695
    %v659 = vpow.pop %v658
    %v660 = vmul.f32 %v631, 1.442695
    %v661 = vpow.pop %v660
    %v662 = vmul.f32 %v632, 1.442695
    %v663 = vpow.pop %v662
    %v664 = vmul.f32 %v633, 1.442695
    %v665 = vpow.pop %v664
    %v666 = vpack.c.bf16 %v637, %v635
    %v667 = vpack.c.bf16 %v641, %v639
    %v668 = vpack.c.bf16 %v645, %v643
    %v669 = vpack.c.bf16 %v649, %v647
    %v670 = vpack.c.bf16 %v653, %v651
    %v671 = vpack.c.bf16 %v657, %v655
    %v672 = vpack.c.bf16 %v661, %v659
    %v673 = vpack.c.bf16 %v665, %v663
    %v674 = vunpack.c.l.bf16 %v666
    %v675 = vunpack.c.h.bf16 %v666
    %v676 = vunpack.c.l.bf16 %v667
    %v677 = vunpack.c.h.bf16 %v667
    %v678 = vunpack.c.l.bf16 %v668
    %v679 = vunpack.c.h.bf16 %v668
    %v680 = vunpack.c.l.bf16 %v669
    %v681 = vunpack.c.h.bf16 %v669
    %v682 = vunpack.c.l.bf16 %v670
    %v683 = vunpack.c.h.bf16 %v670
    %v684 = vunpack.c.l.bf16 %v671
    %v685 = vunpack.c.h.bf16 %v671
    %v686 = vunpack.c.l.bf16 %v672
    %v687 = vunpack.c.h.bf16 %v672
    %v688 = vunpack.c.l.bf16 %v673
    %v689 = vunpack.c.h.bf16 %v673
    %690 = vadd.xlane.f32.xlu0 %v674
    %v691 = vpop.xlane.xlu0 %690
    %692 = vadd.xlane.f32.xlu0 %v675
    %v693 = vpop.xlane.xlu0 %692
    %694 = vadd.xlane.f32.xlu0 %v676
    %v695 = vpop.xlane.xlu0 %694
    %696 = vadd.xlane.f32.xlu0 %v677
    %v697 = vpop.xlane.xlu0 %696
    %698 = vadd.xlane.f32.xlu0 %v678
    %v699 = vpop.xlane.xlu0 %698
    %700 = vadd.xlane.f32.xlu0 %v679
    %v701 = vpop.xlane.xlu0 %700
    %702 = vadd.xlane.f32.xlu0 %v680
    %v703 = vpop.xlane.xlu0 %702
    %704 = vadd.xlane.f32.xlu0 %v681
    %v705 = vpop.xlane.xlu0 %704
    %706 = vadd.xlane.f32.xlu0 %v682
    %v707 = vpop.xlane.xlu0 %706
    %708 = vadd.xlane.f32.xlu0 %v683
    %v709 = vpop.xlane.xlu0 %708
    %710 = vadd.xlane.f32.xlu0 %v684
    %v711 = vpop.xlane.xlu0 %710
    %712 = vadd.xlane.f32.xlu0 %v685
    %v713 = vpop.xlane.xlu0 %712
    %714 = vadd.xlane.f32.xlu0 %v686
    %v715 = vpop.xlane.xlu0 %714
    %716 = vadd.xlane.f32.xlu0 %v687
    %v717 = vpop.xlane.xlu0 %716
    %718 = vadd.xlane.f32.xlu0 %v688
    %v719 = vpop.xlane.xlu0 %718
    %720 = vadd.xlane.f32.xlu0 %v689
    %v721 = vpop.xlane.xlu0 %720
    %v738 = vunpack.c.l.b16 %v92
    %v739 = vunpack.c.l.b16 %v93
    %v740 = vunpack.c.l.b16 %v94
    %v741 = vunpack.c.l.b16 %v95
    %v742 = vunpack.c.l.b16 %v96
    %v743 = vunpack.c.l.b16 %v97
    %v744 = vunpack.c.l.b16 %v98
    %v745 = vunpack.c.l.b16 %v99
    %v746 = vunpack.c.l.b16 %v100
    %v747 = vunpack.c.l.b16 %v101
    %v748 = vunpack.c.l.b16 %v102
    %v749 = vunpack.c.l.b16 %v103
    %v750 = vunpack.c.l.b16 %v104
    %v751 = vunpack.c.l.b16 %v105
    %v752 = vunpack.c.l.b16 %v106
    %v753 = vunpack.c.l.b16 %v107
    %v754 = vpack.c.b16 %v739, %v738
    %v755 = vpack.c.b16 %v741, %v740
    %v756 = vpack.c.b16 %v743, %v742
    %v757 = vpack.c.b16 %v745, %v744
    %v758 = vpack.c.b16 %v747, %v746
    %v759 = vpack.c.b16 %v749, %v748
    %v760 = vpack.c.b16 %v751, %v750
    %v761 = vpack.c.b16 %v753, %v752
    %770 = vmatpush.bf16.msra.mxu0 %v761
    %771 = vmatpush.bf16.msra.mxu0 %v760
    %772 = vmatpush.bf16.msra.mxu0 %v759
    %773 = vmatpush.bf16.msra.mxu0 %v758
    %774 = vmatpush.bf16.msra.mxu0 %v757
    %775 = vmatpush.bf16.msra.mxu0 %v756
    %776 = vmatpush.bf16.msra.mxu0 %v755
    %777 = vmatpush.bf16.msra.mxu0 %v754
    %778 = vmatmul.bf16.gmra.mxu0 %v666
    %v779 = vpop.f32.mrf.mxu0
    %v780 = vadd.f32 0.0, %v779
    %v781 = vpop.f32.mrf.mxu0
    %v782 = vadd.f32 0.0, %v781
    %783 = vmatmul.bf16.gmra.mxu0 %v667
    %v784 = vpop.f32.mrf.mxu0
    %v785 = vadd.f32 0.0, %v784
    %v786 = vpop.f32.mrf.mxu0
    %v787 = vadd.f32 0.0, %v786
    %788 = vmatmul.bf16.gmra.mxu0 %v668
    %v789 = vpop.f32.mrf.mxu0
    %v790 = vadd.f32 0.0, %v789
    %v791 = vpop.f32.mrf.mxu0
    %v792 = vadd.f32 0.0, %v791
    %793 = vmatmul.bf16.gmra.mxu0 %v669
    %v794 = vpop.f32.mrf.mxu0
    %v795 = vadd.f32 0.0, %v794
    %v796 = vpop.f32.mrf.mxu0
    %v797 = vadd.f32 0.0, %v796
    %798 = vmatmul.bf16.gmra.mxu0 %v670
    %v799 = vpop.f32.mrf.mxu0
    %v800 = vadd.f32 0.0, %v799
    %v801 = vpop.f32.mrf.mxu0
    %v802 = vadd.f32 0.0, %v801
    %803 = vmatmul.bf16.gmra.mxu0 %v671
    %v804 = vpop.f32.mrf.mxu0
    %v805 = vadd.f32 0.0, %v804
    %v806 = vpop.f32.mrf.mxu0
    %v807 = vadd.f32 0.0, %v806
    %808 = vmatmul.bf16.gmra.mxu0 %v672
    %v809 = vpop.f32.mrf.mxu0
    %v810 = vadd.f32 0.0, %v809
    %v811 = vpop.f32.mrf.mxu0
    %v812 = vadd.f32 0.0, %v811
    %813 = vmatmul.bf16.gmra.mxu0 %v673
    %v814 = vpop.f32.mrf.mxu0
    %v815 = vadd.f32 0.0, %v814
    %v816 = vpop.f32.mrf.mxu0
    %v817 = vadd.f32 0.0, %v816
    %818 = vdwg.mxu0
    %v819 = vld [vmem:[#allocation4] sm:$0xff]
    %v820 = vld [vmem:[#allocation4 + $0x8] sm:$0xff]
    %v821 = vld [vmem:[#allocation4 + $0x10] sm:$0xff]
    %v822 = vld [vmem:[#allocation4 + $0x18] sm:$0xff]
    %v823 = vld [vmem:[#allocation4 + $0x20] sm:$0xff]
    %v824 = vld [vmem:[#allocation4 + $0x28] sm:$0xff]
    %v825 = vld [vmem:[#allocation4 + $0x30] sm:$0xff]
    %v826 = vld [vmem:[#allocation4 + $0x38] sm:$0xff]
    %v827 = vld [vmem:[#allocation4 + $0x40] sm:$0xff]
    %v828 = vld [vmem:[#allocation4 + $0x48] sm:$0xff]
    %v829 = vld [vmem:[#allocation4 + $0x50] sm:$0xff]
    %v830 = vld [vmem:[#allocation4 + $0x58] sm:$0xff]
    %v831 = vld [vmem:[#allocation4 + $0x60] sm:$0xff]
    %v832 = vld [vmem:[#allocation4 + $0x68] sm:$0xff]
    %v833 = vld [vmem:[#allocation4 + $0x70] sm:$0xff]
    %v834 = vld [vmem:[#allocation4 + $0x78] sm:$0xff]
    %v835 = vmul.f32 %v483, %v819
    %v836 = vmul.f32 %v485, %v820
    %v837 = vmul.f32 %v487, %v821
    %v838 = vmul.f32 %v489, %v822
    %v839 = vmul.f32 %v491, %v823
    %v840 = vmul.f32 %v493, %v824
    %v841 = vmul.f32 %v495, %v825
    %v842 = vmul.f32 %v497, %v826
    %v843 = vmul.f32 %v499, %v827
    %v844 = vmul.f32 %v501, %v828
    %v845 = vmul.f32 %v503, %v829
    %v846 = vmul.f32 %v505, %v830
    %v847 = vmul.f32 %v507, %v831
    %v848 = vmul.f32 %v509, %v832
    %v849 = vmul.f32 %v511, %v833
    %v850 = vmul.f32 %v513, %v834
    %v851 = vadd.f32 %v835, %v691
    %v852 = vadd.f32 %v836, %v693
    %v853 = vadd.f32 %v837, %v695
    %v854 = vadd.f32 %v838, %v697
    %v855 = vadd.f32 %v839, %v699
    %v856 = vadd.f32 %v840, %v701
    %v857 = vadd.f32 %v841, %v703
    %v858 = vadd.f32 %v842, %v705
    %v859 = vadd.f32 %v843, %v707
    %v860 = vadd.f32 %v844, %v709
    %v861 = vadd.f32 %v845, %v711
    %v862 = vadd.f32 %v846, %v713
    %v863 = vadd.f32 %v847, %v715
    %v864 = vadd.f32 %v848, %v717
    %v865 = vadd.f32 %v849, %v719
    %v866 = vadd.f32 %v850, %v721
    %vm867 = vcmask 7168
    %868 = vst.msk [vmem:[#allocation4] sm:$0xff] %vm867, %v851
    %869 = vst.msk [vmem:[#allocation4 + $0x8] sm:$0xff] %vm867, %v852
    %870 = vst.msk [vmem:[#allocation4 + $0x10] sm:$0xff] %vm867, %v853
    %871 = vst.msk [vmem:[#allocation4 + $0x18] sm:$0xff] %vm867, %v854
    %872 = vst.msk [vmem:[#allocation4 + $0x20] sm:$0xff] %vm867, %v855
    %873 = vst.msk [vmem:[#allocation4 + $0x28] sm:$0xff] %vm867, %v856
    %874 = vst.msk [vmem:[#allocation4 + $0x30] sm:$0xff] %vm867, %v857
    %875 = vst.msk [vmem:[#allocation4 + $0x38] sm:$0xff] %vm867, %v858
    %876 = vst.msk [vmem:[#allocation4 + $0x40] sm:$0xff] %vm867, %v859
    %877 = vst.msk [vmem:[#allocation4 + $0x48] sm:$0xff] %vm867, %v860
    %878 = vst.msk [vmem:[#allocation4 + $0x50] sm:$0xff] %vm867, %v861
    %879 = vst.msk [vmem:[#allocation4 + $0x58] sm:$0xff] %vm867, %v862
    %880 = vst.msk [vmem:[#allocation4 + $0x60] sm:$0xff] %vm867, %v863
    %881 = vst.msk [vmem:[#allocation4 + $0x68] sm:$0xff] %vm867, %v864
    %882 = vst.msk [vmem:[#allocation4 + $0x70] sm:$0xff] %vm867, %v865
    %883 = vst.msk [vmem:[#allocation4 + $0x78] sm:$0xff] %vm867, %v866
    %v884 = vld [vmem:[#allocation2] sm:$0xff]
    %v885 = vld [vmem:[#allocation2 + $0x8] sm:$0xff]
    %v886 = vld [vmem:[#allocation2 + $0x10] sm:$0xff]
    %v887 = vld [vmem:[#allocation2 + $0x18] sm:$0xff]
    %v888 = vld [vmem:[#allocation2 + $0x20] sm:$0xff]
    %v889 = vld [vmem:[#allocation2 + $0x28] sm:$0xff]
    %v890 = vld [vmem:[#allocation2 + $0x30] sm:$0xff]
    %v891 = vld [vmem:[#allocation2 + $0x38] sm:$0xff]
    %v892 = vld [vmem:[#allocation2 + $0x40] sm:$0xff]
    %v893 = vld [vmem:[#allocation2 + $0x48] sm:$0xff]
    %v894 = vld [vmem:[#allocation2 + $0x50] sm:$0xff]
    %v895 = vld [vmem:[#allocation2 + $0x58] sm:$0xff]
    %v896 = vld [vmem:[#allocation2 + $0x60] sm:$0xff]
    %v897 = vld [vmem:[#allocation2 + $0x68] sm:$0xff]
    %v898 = vld [vmem:[#allocation2 + $0x70] sm:$0xff]
    %v899 = vld [vmem:[#allocation2 + $0x78] sm:$0xff]
    %901 = vset.pattern.permute.xlu0 0
    %902 = vperm.xlu0 %901, %v483
    %v903 = vpop.permute.xlu0 %902
    %906 = vset.pattern.permute.xlu0 0
    %907 = vperm.xlu0 %906, %v485
    %v908 = vpop.permute.xlu0 %907
    %911 = vset.pattern.permute.xlu0 0
    %912 = vperm.xlu0 %911, %v487
    %v913 = vpop.permute.xlu0 %912
    %916 = vset.pattern.permute.xlu0 0
    %917 = vperm.xlu0 %916, %v489
    %v918 = vpop.permute.xlu0 %917
    %921 = vset.pattern.permute.xlu0 0
    %922 = vperm.xlu0 %921, %v491
    %v923 = vpop.permute.xlu0 %922
    %926 = vset.pattern.permute.xlu0 0
    %927 = vperm.xlu0 %926, %v493
    %v928 = vpop.permute.xlu0 %927
    %931 = vset.pattern.permute.xlu0 0
    %932 = vperm.xlu0 %931, %v495
    %v933 = vpop.permute.xlu0 %932
    %936 = vset.pattern.permute.xlu0 0
    %937 = vperm.xlu0 %936, %v497
    %v938 = vpop.permute.xlu0 %937
    %941 = vset.pattern.permute.xlu0 0
    %942 = vperm.xlu0 %941, %v499
    %v943 = vpop.permute.xlu0 %942
    %946 = vset.pattern.permute.xlu0 0
    %947 = vperm.xlu0 %946, %v501
    %v948 = vpop.permute.xlu0 %947
    %951 = vset.pattern.permute.xlu0 0
    %952 = vperm.xlu0 %951, %v503
    %v953 = vpop.permute.xlu0 %952
    %956 = vset.pattern.permute.xlu0 0
    %957 = vperm.xlu0 %956, %v505
    %v958 = vpop.permute.xlu0 %957
    %961 = vset.pattern.permute.xlu0 0
    %962 = vperm.xlu0 %961, %v507
    %v963 = vpop.permute.xlu0 %962
    %966 = vset.pattern.permute.xlu0 0
    %967 = vperm.xlu0 %966, %v509
    %v968 = vpop.permute.xlu0 %967
    %971 = vset.pattern.permute.xlu0 0
    %972 = vperm.xlu0 %971, %v511
    %v973 = vpop.permute.xlu0 %972
    %976 = vset.pattern.permute.xlu0 0
    %977 = vperm.xlu0 %976, %v513
    %v978 = vpop.permute.xlu0 %977
    %v980 = vmul.f32 %v903, %v884
    %v981 = vmul.f32 %v908, %v885
    %v982 = vmul.f32 %v913, %v886
    %v983 = vmul.f32 %v918, %v887
    %v984 = vmul.f32 %v923, %v888
    %v985 = vmul.f32 %v928, %v889
    %v986 = vmul.f32 %v933, %v890
    %v987 = vmul.f32 %v938, %v891
    %v988 = vmul.f32 %v943, %v892
    %v989 = vmul.f32 %v948, %v893
    %v990 = vmul.f32 %v953, %v894
    %v991 = vmul.f32 %v958, %v895
    %v992 = vmul.f32 %v963, %v896
    %v993 = vmul.f32 %v968, %v897
    %v994 = vmul.f32 %v973, %v898
    %v995 = vmul.f32 %v978, %v899
    %v996 = vadd.f32 %v980, %v780
    %v997 = vadd.f32 %v981, %v782
    %v998 = vadd.f32 %v982, %v785
    %v999 = vadd.f32 %v983, %v787
    %v1000 = vadd.f32 %v984, %v790
    %v1001 = vadd.f32 %v985, %v792
    %v1002 = vadd.f32 %v986, %v795
    %v1003 = vadd.f32 %v987, %v797
    %v1004 = vadd.f32 %v988, %v800
    %v1005 = vadd.f32 %v989, %v802
    %v1006 = vadd.f32 %v990, %v805
    %v1007 = vadd.f32 %v991, %v807
    %v1008 = vadd.f32 %v992, %v810
    %v1009 = vadd.f32 %v993, %v812
    %v1010 = vadd.f32 %v994, %v815
    %v1011 = vadd.f32 %v995, %v817
    %vm1012 = vcmask 23552
    %1013 = vst.msk [vmem:[#allocation2] sm:$0xff] %vm1012, %v996
    %1014 = vst.msk [vmem:[#allocation2 + $0x8] sm:$0xff] %vm1012, %v997
    %1015 = vst.msk [vmem:[#allocation2 + $0x10] sm:$0xff] %vm1012, %v998
    %1016 = vst.msk [vmem:[#allocation2 + $0x18] sm:$0xff] %vm1012, %v999
    %1017 = vst.msk [vmem:[#allocation2 + $0x20] sm:$0xff] %vm1012, %v1000
    %1018 = vst.msk [vmem:[#allocation2 + $0x28] sm:$0xff] %vm1012, %v1001
    %1019 = vst.msk [vmem:[#allocation2 + $0x30] sm:$0xff] %vm1012, %v1002
    %1020 = vst.msk [vmem:[#allocation2 + $0x38] sm:$0xff] %vm1012, %v1003
    %1021 = vst.msk [vmem:[#allocation2 + $0x40] sm:$0xff] %vm1012, %v1004
    %1022 = vst.msk [vmem:[#allocation2 + $0x48] sm:$0xff] %vm1012, %v1005
    %1023 = vst.msk [vmem:[#allocation2 + $0x50] sm:$0xff] %vm1012, %v1006
    %1024 = vst.msk [vmem:[#allocation2 + $0x58] sm:$0xff] %vm1012, %v1007
    %1025 = vst.msk [vmem:[#allocation2 + $0x60] sm:$0xff] %vm1012, %v1008
    %1026 = vst.msk [vmem:[#allocation2 + $0x68] sm:$0xff] %vm1012, %v1009
    %1027 = vst.msk [vmem:[#allocation2 + $0x70] sm:$0xff] %vm1012, %v1010
    %1028 = vst.msk [vmem:[#allocation2 + $0x78] sm:$0xff] %vm1012, %v1011
    %1029 = vst.msk [vmem:[#allocation3] sm:$0xff] %vm867, %v450
    %1030 = vst.msk [vmem:[#allocation3 + $0x8] sm:$0xff] %vm867, %v451
    %1031 = vst.msk [vmem:[#allocation3 + $0x10] sm:$0xff] %vm867, %v452
    %1032 = vst.msk [vmem:[#allocation3 + $0x18] sm:$0xff] %vm867, %v453
    %1033 = vst.msk [vmem:[#allocation3 + $0x20] sm:$0xff] %vm867, %v454
    %1034 = vst.msk [vmem:[#allocation3 + $0x28] sm:$0xff] %vm867, %v455
    %1035 = vst.msk [vmem:[#allocation3 + $0x30] sm:$0xff] %vm867, %v456
    %1036 = vst.msk [vmem:[#allocation3 + $0x38] sm:$0xff] %vm867, %v457
    %1037 = vst.msk [vmem:[#allocation3 + $0x40] sm:$0xff] %vm867, %v458
    %1038 = vst.msk [vmem:[#allocation3 + $0x48] sm:$0xff] %vm867, %v459
    %1039 = vst.msk [vmem:[#allocation3 + $0x50] sm:$0xff] %vm867, %v460
    %1040 = vst.msk [vmem:[#allocation3 + $0x58] sm:$0xff] %vm867, %v461
    %1041 = vst.msk [vmem:[#allocation3 + $0x60] sm:$0xff] %vm867, %v462
    %1042 = vst.msk [vmem:[#allocation3 + $0x68] sm:$0xff] %vm867, %v463
    %1043 = vst.msk [vmem:[#allocation3 + $0x70] sm:$0xff] %vm867, %v464
    %1044 = vst.msk [vmem:[#allocation3 + $0x78] sm:$0xff] %vm867, %v465
    %1045 = vset.pattern.permute.xlu0 1
    %1046 = vperm.xlu0 %1045, %v109
    %v1047 = vpop.permute.xlu0 %1046
    %1049 = vset.pattern.permute.xlu0 1
    %1050 = vperm.xlu0 %1049, %v110
    %v1051 = vpop.permute.xlu0 %1050
    %1053 = vset.pattern.permute.xlu0 1
    %1054 = vperm.xlu0 %1053, %v111
    %v1055 = vpop.permute.xlu0 %1054
    %1057 = vset.pattern.permute.xlu0 1
    %1058 = vperm.xlu0 %1057, %v112
    %v1059 = vpop.permute.xlu0 %1058
    %1061 = vset.pattern.permute.xlu0 1
    %1062 = vperm.xlu0 %1061, %v113
    %v1063 = vpop.permute.xlu0 %1062
    %1065 = vset.pattern.permute.xlu0 1
    %1066 = vperm.xlu0 %1065, %v114
    %v1067 = vpop.permute.xlu0 %1066
    %1069 = vset.pattern.permute.xlu0 1
    %1070 = vperm.xlu0 %1069, %v115
    %v1071 = vpop.permute.xlu0 %1070
    %1073 = vset.pattern.permute.xlu0 1
    %1074 = vperm.xlu0 %1073, %v116
    %v1075 = vpop.permute.xlu0 %1074
    %1077 = vset.pattern.permute.xlu0 1
    %1078 = vperm.xlu0 %1077, %v117
    %v1079 = vpop.permute.xlu0 %1078
    %1081 = vset.pattern.permute.xlu0 1
    %1082 = vperm.xlu0 %1081, %v118
    %v1083 = vpop.permute.xlu0 %1082
    %1085 = vset.pattern.permute.xlu0 1
    %1086 = vperm.xlu0 %1085, %v119
    %v1087 = vpop.permute.xlu0 %1086
    %1089 = vset.pattern.permute.xlu0 1
    %1090 = vperm.xlu0 %1089, %v120
    %v1091 = vpop.permute.xlu0 %1090
    %1093 = vset.pattern.permute.xlu0 1
    %1094 = vperm.xlu0 %1093, %v121
    %v1095 = vpop.permute.xlu0 %1094
    %1097 = vset.pattern.permute.xlu0 1
    %1098 = vperm.xlu0 %1097, %v122
    %v1099 = vpop.permute.xlu0 %1098
    %1101 = vset.pattern.permute.xlu0 1
    %1102 = vperm.xlu0 %1101, %v123
    %v1103 = vpop.permute.xlu0 %1102
    %1105 = vset.pattern.permute.xlu0 1
    %1106 = vperm.xlu0 %1105, %v124
    %v1107 = vpop.permute.xlu0 %1106
    %v1109 = vperm.slane %v108, 1
    %v1110 = vadd.f32 %v1047, %v1109
    %v1111 = vadd.f32 %v1051, %v1109
    %v1112 = vadd.f32 %v1055, %v1109
    %v1113 = vadd.f32 %v1059, %v1109
    %v1114 = vadd.f32 %v1063, %v1109
    %v1115 = vadd.f32 %v1067, %v1109
    %v1116 = vadd.f32 %v1071, %v1109
    %v1117 = vadd.f32 %v1075, %v1109
    %v1118 = vadd.f32 %v1079, %v1109
    %v1119 = vadd.f32 %v1083, %v1109
    %v1120 = vadd.f32 %v1087, %v1109
    %v1121 = vadd.f32 %v1091, %v1109
    %v1122 = vadd.f32 %v1095, %v1109
    %v1123 = vadd.f32 %v1099, %v1109
    %v1124 = vadd.f32 %v1103, %v1109
    %v1125 = vadd.f32 %v1107, %v1109
    %vm1126 = vcmp.gt.f32.partialorder %v1110, 0.0
    %vm1127 = vcmp.gt.f32.partialorder %v1111, 0.0
    %vm1128 = vcmp.gt.f32.partialorder %v1112, 0.0
    %vm1129 = vcmp.gt.f32.partialorder %v1113, 0.0
    %vm1130 = vcmp.gt.f32.partialorder %v1114, 0.0
    %vm1131 = vcmp.gt.f32.partialorder %v1115, 0.0
    %vm1132 = vcmp.gt.f32.partialorder %v1116, 0.0
    %vm1133 = vcmp.gt.f32.partialorder %v1117, 0.0
    %vm1134 = vcmp.gt.f32.partialorder %v1118, 0.0
    %vm1135 = vcmp.gt.f32.partialorder %v1119, 0.0
    %vm1136 = vcmp.gt.f32.partialorder %v1120, 0.0
    %vm1137 = vcmp.gt.f32.partialorder %v1121, 0.0
    %vm1138 = vcmp.gt.f32.partialorder %v1122, 0.0
    %vm1139 = vcmp.gt.f32.partialorder %v1123, 0.0
    %vm1140 = vcmp.gt.f32.partialorder %v1124, 0.0
    %vm1141 = vcmp.gt.f32.partialorder %v1125, 0.0
    %v1142 = vmul.f32 %v1110, 0.2
    %v1143 = vmul.f32 %v1111, 0.2
    %v1144 = vmul.f32 %v1112, 0.2
    %v1145 = vmul.f32 %v1113, 0.2
    %v1146 = vmul.f32 %v1114, 0.2
    %v1147 = vmul.f32 %v1115, 0.2
    %v1148 = vmul.f32 %v1116, 0.2
    %v1149 = vmul.f32 %v1117, 0.2
    %v1150 = vmul.f32 %v1118, 0.2
    %v1151 = vmul.f32 %v1119, 0.2
    %v1152 = vmul.f32 %v1120, 0.2
    %v1153 = vmul.f32 %v1121, 0.2
    %v1154 = vmul.f32 %v1122, 0.2
    %v1155 = vmul.f32 %v1123, 0.2
    %v1156 = vmul.f32 %v1124, 0.2
    %v1157 = vmul.f32 %v1125, 0.2
    %v1158 = vsel %vm1126, %v1110, %v1142
    %v1159 = vsel %vm1127, %v1111, %v1143
    %v1160 = vsel %vm1128, %v1112, %v1144
    %v1161 = vsel %vm1129, %v1113, %v1145
    %v1162 = vsel %vm1130, %v1114, %v1146
    %v1163 = vsel %vm1131, %v1115, %v1147
    %v1164 = vsel %vm1132, %v1116, %v1148
    %v1165 = vsel %vm1133, %v1117, %v1149
    %v1166 = vsel %vm1134, %v1118, %v1150
    %v1167 = vsel %vm1135, %v1119, %v1151
    %v1168 = vsel %vm1136, %v1120, %v1152
    %v1169 = vsel %vm1137, %v1121, %v1153
    %v1170 = vsel %vm1138, %v1122, %v1154
    %v1171 = vsel %vm1139, %v1123, %v1155
    %v1172 = vsel %vm1140, %v1124, %v1156
    %v1173 = vsel %vm1141, %v1125, %v1157
    %v1174 = vsel %vm370, %v1158, -1e+30
    %v1175 = vsel %vm371, %v1159, -1e+30
    %v1176 = vsel %vm372, %v1160, -1e+30
    %v1177 = vsel %vm373, %v1161, -1e+30
    %v1178 = vsel %vm374, %v1162, -1e+30
    %v1179 = vsel %vm375, %v1163, -1e+30
    %v1180 = vsel %vm376, %v1164, -1e+30
    %v1181 = vsel %vm377, %v1165, -1e+30
    %v1182 = vsel %vm378, %v1166, -1e+30
    %v1183 = vsel %vm379, %v1167, -1e+30
    %v1184 = vsel %vm380, %v1168, -1e+30
    %v1185 = vsel %vm381, %v1169, -1e+30
    %v1186 = vsel %vm382, %v1170, -1e+30
    %v1187 = vsel %vm383, %v1171, -1e+30
    %v1188 = vsel %vm384, %v1172, -1e+30
    %v1189 = vsel %vm385, %v1173, -1e+30
    %v1190 = vld [vmem:[#allocation3] sm:$0xff]
    %v1191 = vld [vmem:[#allocation3 + $0x8] sm:$0xff]
    %v1192 = vld [vmem:[#allocation3 + $0x10] sm:$0xff]
    %v1193 = vld [vmem:[#allocation3 + $0x18] sm:$0xff]
    %v1194 = vld [vmem:[#allocation3 + $0x20] sm:$0xff]
    %v1195 = vld [vmem:[#allocation3 + $0x28] sm:$0xff]
    %v1196 = vld [vmem:[#allocation3 + $0x30] sm:$0xff]
    %v1197 = vld [vmem:[#allocation3 + $0x38] sm:$0xff]
    %v1198 = vld [vmem:[#allocation3 + $0x40] sm:$0xff]
    %v1199 = vld [vmem:[#allocation3 + $0x48] sm:$0xff]
    %v1200 = vld [vmem:[#allocation3 + $0x50] sm:$0xff]
    %v1201 = vld [vmem:[#allocation3 + $0x58] sm:$0xff]
    %v1202 = vld [vmem:[#allocation3 + $0x60] sm:$0xff]
    %v1203 = vld [vmem:[#allocation3 + $0x68] sm:$0xff]
    %v1204 = vld [vmem:[#allocation3 + $0x70] sm:$0xff]
    %v1205 = vld [vmem:[#allocation3 + $0x78] sm:$0xff]
    %1206 = vmax.xlane.f32.xlu0 %v1174
    %v1207 = vpop.xlane.xlu0 %1206
    %1208 = vmax.xlane.f32.xlu0 %v1175
    %v1209 = vpop.xlane.xlu0 %1208
    %1210 = vmax.xlane.f32.xlu0 %v1176
    %v1211 = vpop.xlane.xlu0 %1210
    %1212 = vmax.xlane.f32.xlu0 %v1177
    %v1213 = vpop.xlane.xlu0 %1212
    %1214 = vmax.xlane.f32.xlu0 %v1178
    %v1215 = vpop.xlane.xlu0 %1214
    %1216 = vmax.xlane.f32.xlu0 %v1179
    %v1217 = vpop.xlane.xlu0 %1216
    %1218 = vmax.xlane.f32.xlu0 %v1180
    %v1219 = vpop.xlane.xlu0 %1218
    %1220 = vmax.xlane.f32.xlu0 %v1181
    %v1221 = vpop.xlane.xlu0 %1220
    %1222 = vmax.xlane.f32.xlu0 %v1182
    %v1223 = vpop.xlane.xlu0 %1222
    %1224 = vmax.xlane.f32.xlu0 %v1183
    %v1225 = vpop.xlane.xlu0 %1224
    %1226 = vmax.xlane.f32.xlu0 %v1184
    %v1227 = vpop.xlane.xlu0 %1226
    %1228 = vmax.xlane.f32.xlu0 %v1185
    %v1229 = vpop.xlane.xlu0 %1228
    %1230 = vmax.xlane.f32.xlu0 %v1186
    %v1231 = vpop.xlane.xlu0 %1230
    %1232 = vmax.xlane.f32.xlu0 %v1187
    %v1233 = vpop.xlane.xlu0 %1232
    %1234 = vmax.xlane.f32.xlu0 %v1188
    %v1235 = vpop.xlane.xlu0 %1234
    %1236 = vmax.xlane.f32.xlu0 %v1189
    %v1237 = vpop.xlane.xlu0 %1236
    %v1238 = vmax.f32 %v1190, %v1207
    %v1239 = vmax.f32 %v1191, %v1209
    %v1240 = vmax.f32 %v1192, %v1211
    %v1241 = vmax.f32 %v1193, %v1213
    %v1242 = vmax.f32 %v1194, %v1215
    %v1243 = vmax.f32 %v1195, %v1217
    %v1244 = vmax.f32 %v1196, %v1219
    %v1245 = vmax.f32 %v1197, %v1221
    %v1246 = vmax.f32 %v1198, %v1223
    %v1247 = vmax.f32 %v1199, %v1225
    %v1248 = vmax.f32 %v1200, %v1227
    %v1249 = vmax.f32 %v1201, %v1229
    %v1250 = vmax.f32 %v1202, %v1231
    %v1251 = vmax.f32 %v1203, %v1233
    %v1252 = vmax.f32 %v1204, %v1235
    %v1253 = vmax.f32 %v1205, %v1237
    %v1254 = vsub.f32 %v1190, %v1238
    %v1255 = vsub.f32 %v1191, %v1239
    %v1256 = vsub.f32 %v1192, %v1240
    %v1257 = vsub.f32 %v1193, %v1241
    %v1258 = vsub.f32 %v1194, %v1242
    %v1259 = vsub.f32 %v1195, %v1243
    %v1260 = vsub.f32 %v1196, %v1244
    %v1261 = vsub.f32 %v1197, %v1245
    %v1262 = vsub.f32 %v1198, %v1246
    %v1263 = vsub.f32 %v1199, %v1247
    %v1264 = vsub.f32 %v1200, %v1248
    %v1265 = vsub.f32 %v1201, %v1249
    %v1266 = vsub.f32 %v1202, %v1250
    %v1267 = vsub.f32 %v1203, %v1251
    %v1268 = vsub.f32 %v1204, %v1252
    %v1269 = vsub.f32 %v1205, %v1253
    %v1270 = vmul.f32 %v1254, 1.442695
    %v1271 = vpow.pop %v1270
    %v1272 = vmul.f32 %v1255, 1.442695
    %v1273 = vpow.pop %v1272
    %v1274 = vmul.f32 %v1256, 1.442695
    %v1275 = vpow.pop %v1274
    %v1276 = vmul.f32 %v1257, 1.442695
    %v1277 = vpow.pop %v1276
    %v1278 = vmul.f32 %v1258, 1.442695
    %v1279 = vpow.pop %v1278
    %v1280 = vmul.f32 %v1259, 1.442695
    %v1281 = vpow.pop %v1280
    %v1282 = vmul.f32 %v1260, 1.442695
    %v1283 = vpow.pop %v1282
    %v1284 = vmul.f32 %v1261, 1.442695
    %v1285 = vpow.pop %v1284
    %v1286 = vmul.f32 %v1262, 1.442695
    %v1287 = vpow.pop %v1286
    %v1288 = vmul.f32 %v1263, 1.442695
    %v1289 = vpow.pop %v1288
    %v1290 = vmul.f32 %v1264, 1.442695
    %v1291 = vpow.pop %v1290
    %v1292 = vmul.f32 %v1265, 1.442695
    %v1293 = vpow.pop %v1292
    %v1294 = vmul.f32 %v1266, 1.442695
    %v1295 = vpow.pop %v1294
    %v1296 = vmul.f32 %v1267, 1.442695
    %v1297 = vpow.pop %v1296
    %v1298 = vmul.f32 %v1268, 1.442695
    %v1299 = vpow.pop %v1298
    %v1300 = vmul.f32 %v1269, 1.442695
    %v1301 = vpow.pop %v1300
    %1303 = vset.pattern.permute.xlu0 1
    %1304 = vperm.xlu0 %1303, %v1238
    %v1305 = vpop.permute.xlu0 %1304
    %1308 = vset.pattern.permute.xlu0 1
    %1309 = vperm.xlu0 %1308, %v1239
    %v1310 = vpop.permute.xlu0 %1309
    %1313 = vset.pattern.permute.xlu0 1
    %1314 = vperm.xlu0 %1313, %v1240
    %v1315 = vpop.permute.xlu0 %1314
    %1318 = vset.pattern.permute.xlu0 1
    %1319 = vperm.xlu0 %1318, %v1241
    %v1320 = vpop.permute.xlu0 %1319
    %1323 = vset.pattern.permute.xlu0 1
    %1324 = vperm.xlu0 %1323, %v1242
    %v1325 = vpop.permute.xlu0 %1324
    %1328 = vset.pattern.permute.xlu0 1
    %1329 = vperm.xlu0 %1328, %v1243
    %v1330 = vpop.permute.xlu0 %1329
    %1333 = vset.pattern.permute.xlu0 1
    %1334 = vperm.xlu0 %1333, %v1244
    %v1335 = vpop.permute.xlu0 %1334
    %1338 = vset.pattern.permute.xlu0 1
    %1339 = vperm.xlu0 %1338, %v1245
    %v1340 = vpop.permute.xlu0 %1339
    %1343 = vset.pattern.permute.xlu0 1
    %1344 = vperm.xlu0 %1343, %v1246
    %v1345 = vpop.permute.xlu0 %1344
    %1348 = vset.pattern.permute.xlu0 1
    %1349 = vperm.xlu0 %1348, %v1247
    %v1350 = vpop.permute.xlu0 %1349
    %1353 = vset.pattern.permute.xlu0 1
    %1354 = vperm.xlu0 %1353, %v1248
    %v1355 = vpop.permute.xlu0 %1354
    %1358 = vset.pattern.permute.xlu0 1
    %1359 = vperm.xlu0 %1358, %v1249
    %v1360 = vpop.permute.xlu0 %1359
    %1363 = vset.pattern.permute.xlu0 1
    %1364 = vperm.xlu0 %1363, %v1250
    %v1365 = vpop.permute.xlu0 %1364
    %1368 = vset.pattern.permute.xlu0 1
    %1369 = vperm.xlu0 %1368, %v1251
    %v1370 = vpop.permute.xlu0 %1369
    %1373 = vset.pattern.permute.xlu0 1
    %1374 = vperm.xlu0 %1373, %v1252
    %v1375 = vpop.permute.xlu0 %1374
    %1378 = vset.pattern.permute.xlu0 1
    %1379 = vperm.xlu0 %1378, %v1253
    %v1380 = vpop.permute.xlu0 %1379
    %v1382 = vsub.f32 %v1174, %v1305
    %v1383 = vsub.f32 %v1175, %v1310
    %v1384 = vsub.f32 %v1176, %v1315
    %v1385 = vsub.f32 %v1177, %v1320
    %v1386 = vsub.f32 %v1178, %v1325
    %v1387 = vsub.f32 %v1179, %v1330
    %v1388 = vsub.f32 %v1180, %v1335
    %v1389 = vsub.f32 %v1181, %v1340
    %v1390 = vsub.f32 %v1182, %v1345
    %v1391 = vsub.f32 %v1183, %v1350
    %v1392 = vsub.f32 %v1184, %v1355
    %v1393 = vsub.f32 %v1185, %v1360
    %v1394 = vsub.f32 %v1186, %v1365
    %v1395 = vsub.f32 %v1187, %v1370
    %v1396 = vsub.f32 %v1188, %v1375
    %v1397 = vsub.f32 %v1189, %v1380
    %v1398 = vpack.c.bf16 %v1383, %v1382
    %v1399 = vpack.c.bf16 %v1385, %v1384
    %v1400 = vpack.c.bf16 %v1387, %v1386
    %v1401 = vpack.c.bf16 %v1389, %v1388
    %v1402 = vpack.c.bf16 %v1391, %v1390
    %v1403 = vpack.c.bf16 %v1393, %v1392
    %v1404 = vpack.c.bf16 %v1395, %v1394
    %v1405 = vpack.c.bf16 %v1397, %v1396
    %v1406 = vunpack.c.l.bf16 %v1398
    %v1407 = vunpack.c.h.bf16 %v1398
    %v1408 = vunpack.c.l.bf16 %v1399
    %v1409 = vunpack.c.h.bf16 %v1399
    %v1410 = vunpack.c.l.bf16 %v1400
    %v1411 = vunpack.c.h.bf16 %v1400
    %v1412 = vunpack.c.l.bf16 %v1401
    %v1413 = vunpack.c.h.bf16 %v1401
    %v1414 = vunpack.c.l.bf16 %v1402
    %v1415 = vunpack.c.h.bf16 %v1402
    %v1416 = vunpack.c.l.bf16 %v1403
    %v1417 = vunpack.c.h.bf16 %v1403
    %v1418 = vunpack.c.l.bf16 %v1404
    %v1419 = vunpack.c.h.bf16 %v1404
    %v1420 = vunpack.c.l.bf16 %v1405
    %v1421 = vunpack.c.h.bf16 %v1405
    %v1422 = vmul.f32 %v1406, 1.442695
    %v1423 = vpow.pop %v1422
    %v1424 = vmul.f32 %v1407, 1.442695
    %v1425 = vpow.pop %v1424
    %v1426 = vmul.f32 %v1408, 1.442695
    %v1427 = vpow.pop %v1426
    %v1428 = vmul.f32 %v1409, 1.442695
    %v1429 = vpow.pop %v1428
    %v1430 = vmul.f32 %v1410, 1.442695
    %v1431 = vpow.pop %v1430
    %v1432 = vmul.f32 %v1411, 1.442695
    %v1433 = vpow.pop %v1432
    %v1434 = vmul.f32 %v1412, 1.442695
    %v1435 = vpow.pop %v1434
    %v1436 = vmul.f32 %v1413, 1.442695
    %v1437 = vpow.pop %v1436
    %v1438 = vmul.f32 %v1414, 1.442695
    %v1439 = vpow.pop %v1438
    %v1440 = vmul.f32 %v1415, 1.442695
    %v1441 = vpow.pop %v1440
    %v1442 = vmul.f32 %v1416, 1.442695
    %v1443 = vpow.pop %v1442
    %v1444 = vmul.f32 %v1417, 1.442695
    %v1445 = vpow.pop %v1444
    %v1446 = vmul.f32 %v1418, 1.442695
    %v1447 = vpow.pop %v1446
    %v1448 = vmul.f32 %v1419, 1.442695
    %v1449 = vpow.pop %v1448
    %v1450 = vmul.f32 %v1420, 1.442695
    %v1451 = vpow.pop %v1450
    %v1452 = vmul.f32 %v1421, 1.442695
    %v1453 = vpow.pop %v1452
    %v1454 = vpack.c.bf16 %v1425, %v1423
    %v1455 = vpack.c.bf16 %v1429, %v1427
    %v1456 = vpack.c.bf16 %v1433, %v1431
    %v1457 = vpack.c.bf16 %v1437, %v1435
    %v1458 = vpack.c.bf16 %v1441, %v1439
    %v1459 = vpack.c.bf16 %v1445, %v1443
    %v1460 = vpack.c.bf16 %v1449, %v1447
    %v1461 = vpack.c.bf16 %v1453, %v1451
    %v1462 = vunpack.c.l.bf16 %v1454
    %v1463 = vunpack.c.h.bf16 %v1454
    %v1464 = vunpack.c.l.bf16 %v1455
    %v1465 = vunpack.c.h.bf16 %v1455
    %v1466 = vunpack.c.l.bf16 %v1456
    %v1467 = vunpack.c.h.bf16 %v1456
    %v1468 = vunpack.c.l.bf16 %v1457
    %v1469 = vunpack.c.h.bf16 %v1457
    %v1470 = vunpack.c.l.bf16 %v1458
    %v1471 = vunpack.c.h.bf16 %v1458
    %v1472 = vunpack.c.l.bf16 %v1459
    %v1473 = vunpack.c.h.bf16 %v1459
    %v1474 = vunpack.c.l.bf16 %v1460
    %v1475 = vunpack.c.h.bf16 %v1460
    %v1476 = vunpack.c.l.bf16 %v1461
    %v1477 = vunpack.c.h.bf16 %v1461
    %1478 = vadd.xlane.f32.xlu0 %v1462
    %v1479 = vpop.xlane.xlu0 %1478
    %1480 = vadd.xlane.f32.xlu0 %v1463
    %v1481 = vpop.xlane.xlu0 %1480
    %1482 = vadd.xlane.f32.xlu0 %v1464
    %v1483 = vpop.xlane.xlu0 %1482
    %1484 = vadd.xlane.f32.xlu0 %v1465
    %v1485 = vpop.xlane.xlu0 %1484
    %1486 = vadd.xlane.f32.xlu0 %v1466
    %v1487 = vpop.xlane.xlu0 %1486
    %1488 = vadd.xlane.f32.xlu0 %v1467
    %v1489 = vpop.xlane.xlu0 %1488
    %1490 = vadd.xlane.f32.xlu0 %v1468
    %v1491 = vpop.xlane.xlu0 %1490
    %1492 = vadd.xlane.f32.xlu0 %v1469
    %v1493 = vpop.xlane.xlu0 %1492
    %1494 = vadd.xlane.f32.xlu0 %v1470
    %v1495 = vpop.xlane.xlu0 %1494
    %1496 = vadd.xlane.f32.xlu0 %v1471
    %v1497 = vpop.xlane.xlu0 %1496
    %1498 = vadd.xlane.f32.xlu0 %v1472
    %v1499 = vpop.xlane.xlu0 %1498
    %1500 = vadd.xlane.f32.xlu0 %v1473
    %v1501 = vpop.xlane.xlu0 %1500
    %1502 = vadd.xlane.f32.xlu0 %v1474
    %v1503 = vpop.xlane.xlu0 %1502
    %1504 = vadd.xlane.f32.xlu0 %v1475
    %v1505 = vpop.xlane.xlu0 %1504
    %1506 = vadd.xlane.f32.xlu0 %v1476
    %v1507 = vpop.xlane.xlu0 %1506
    %1508 = vadd.xlane.f32.xlu0 %v1477
    %v1509 = vpop.xlane.xlu0 %1508
    %1510 = vrot.lane.b32.xlu0 %v754, 125
    %v1511 = vpop.permute.xlu0 %1510
    %1512 = vrot.lane.b32.xlu0 %v755, 125
    %v1513 = vpop.permute.xlu0 %1512
    %1514 = vrot.lane.b32.xlu0 %v756, 125
    %v1515 = vpop.permute.xlu0 %1514
    %1516 = vrot.lane.b32.xlu0 %v757, 125
    %v1517 = vpop.permute.xlu0 %1516
    %1518 = vrot.lane.b32.xlu0 %v758, 125
    %v1519 = vpop.permute.xlu0 %1518
    %1520 = vrot.lane.b32.xlu0 %v759, 125
    %v1521 = vpop.permute.xlu0 %1520
    %1522 = vrot.lane.b32.xlu0 %v760, 125
    %v1523 = vpop.permute.xlu0 %1522
    %1524 = vrot.lane.b32.xlu0 %v761, 125
    %v1525 = vpop.permute.xlu0 %1524
    %1534 = vmatpush.bf16.msra.mxu0 %v1525
    %1535 = vmatpush.bf16.msra.mxu0 %v1523
    %1536 = vmatpush.bf16.msra.mxu0 %v1521
    %1537 = vmatpush.bf16.msra.mxu0 %v1519
    %1538 = vmatpush.bf16.msra.mxu0 %v1517
    %1539 = vmatpush.bf16.msra.mxu0 %v1515
    %1540 = vmatpush.bf16.msra.mxu0 %v1513
    %1541 = vmatpush.bf16.msra.mxu0 %v1511
    %1542 = vmatmul.bf16.gmra.mxu0 %v1454
    %v1543 = vpop.f32.mrf.mxu0
    %v1544 = vadd.f32 0.0, %v1543
    %v1545 = vpop.f32.mrf.mxu0
    %v1546 = vadd.f32 0.0, %v1545
    %1547 = vmatmul.bf16.gmra.mxu0 %v1455
    %v1548 = vpop.f32.mrf.mxu0
    %v1549 = vadd.f32 0.0, %v1548
    %v1550 = vpop.f32.mrf.mxu0
    %v1551 = vadd.f32 0.0, %v1550
    %1552 = vmatmul.bf16.gmra.mxu0 %v1456
    %v1553 = vpop.f32.mrf.mxu0
    %v1554 = vadd.f32 0.0, %v1553
    %v1555 = vpop.f32.mrf.mxu0
    %v1556 = vadd.f32 0.0, %v1555
    %1557 = vmatmul.bf16.gmra.mxu0 %v1457
    %v1558 = vpop.f32.mrf.mxu0
    %v1559 = vadd.f32 0.0, %v1558
    %v1560 = vpop.f32.mrf.mxu0
    %v1561 = vadd.f32 0.0, %v1560
    %1562 = vmatmul.bf16.gmra.mxu0 %v1458
    %v1563 = vpop.f32.mrf.mxu0
    %v1564 = vadd.f32 0.0, %v1563
    %v1565 = vpop.f32.mrf.mxu0
    %v1566 = vadd.f32 0.0, %v1565
    %1567 = vmatmul.bf16.gmra.mxu0 %v1459
    %v1568 = vpop.f32.mrf.mxu0
    %v1569 = vadd.f32 0.0, %v1568
    %v1570 = vpop.f32.mrf.mxu0
    %v1571 = vadd.f32 0.0, %v1570
    %1572 = vmatmul.bf16.gmra.mxu0 %v1460
    %v1573 = vpop.f32.mrf.mxu0
    %v1574 = vadd.f32 0.0, %v1573
    %v1575 = vpop.f32.mrf.mxu0
    %v1576 = vadd.f32 0.0, %v1575
    %1577 = vmatmul.bf16.gmra.mxu0 %v1461
    %v1578 = vpop.f32.mrf.mxu0
    %v1579 = vadd.f32 0.0, %v1578
    %v1580 = vpop.f32.mrf.mxu0
    %v1581 = vadd.f32 0.0, %v1580
    %1582 = vdwg.mxu0
    %v1583 = vld [vmem:[#allocation4] sm:$0xff]
    %v1584 = vld [vmem:[#allocation4 + $0x8] sm:$0xff]
    %v1585 = vld [vmem:[#allocation4 + $0x10] sm:$0xff]
    %v1586 = vld [vmem:[#allocation4 + $0x18] sm:$0xff]
    %v1587 = vld [vmem:[#allocation4 + $0x20] sm:$0xff]
    %v1588 = vld [vmem:[#allocation4 + $0x28] sm:$0xff]
    %v1589 = vld [vmem:[#allocation4 + $0x30] sm:$0xff]
    %v1590 = vld [vmem:[#allocation4 + $0x38] sm:$0xff]
    %v1591 = vld [vmem:[#allocation4 + $0x40] sm:$0xff]
    %v1592 = vld [vmem:[#allocation4 + $0x48] sm:$0xff]
    %v1593 = vld [vmem:[#allocation4 + $0x50] sm:$0xff]
    %v1594 = vld [vmem:[#allocation4 + $0x58] sm:$0xff]
    %v1595 = vld [vmem:[#allocation4 + $0x60] sm:$0xff]
    %v1596 = vld [vmem:[#allocation4 + $0x68] sm:$0xff]
    %v1597 = vld [vmem:[#allocation4 + $0x70] sm:$0xff]
    %v1598 = vld [vmem:[#allocation4 + $0x78] sm:$0xff]
    %v1599 = vmul.f32 %v1271, %v1583
    %v1600 = vmul.f32 %v1273, %v1584
    %v1601 = vmul.f32 %v1275, %v1585
    %v1602 = vmul.f32 %v1277, %v1586
    %v1603 = vmul.f32 %v1279, %v1587
    %v1604 = vmul.f32 %v1281, %v1588
    %v1605 = vmul.f32 %v1283, %v1589
    %v1606 = vmul.f32 %v1285, %v1590
    %v1607 = vmul.f32 %v1287, %v1591
    %v1608 = vmul.f32 %v1289, %v1592
    %v1609 = vmul.f32 %v1291, %v1593
    %v1610 = vmul.f32 %v1293, %v1594
    %v1611 = vmul.f32 %v1295, %v1595
    %v1612 = vmul.f32 %v1297, %v1596
    %v1613 = vmul.f32 %v1299, %v1597
    %v1614 = vmul.f32 %v1301, %v1598
    %v1615 = vadd.f32 %v1599, %v1479
    %v1616 = vadd.f32 %v1600, %v1481
    %v1617 = vadd.f32 %v1601, %v1483
    %v1618 = vadd.f32 %v1602, %v1485
    %v1619 = vadd.f32 %v1603, %v1487
    %v1620 = vadd.f32 %v1604, %v1489
    %v1621 = vadd.f32 %v1605, %v1491
    %v1622 = vadd.f32 %v1606, %v1493
    %v1623 = vadd.f32 %v1607, %v1495
    %v1624 = vadd.f32 %v1608, %v1497
    %v1625 = vadd.f32 %v1609, %v1499
    %v1626 = vadd.f32 %v1610, %v1501
    %v1627 = vadd.f32 %v1611, %v1503
    %v1628 = vadd.f32 %v1612, %v1505
    %v1629 = vadd.f32 %v1613, %v1507
    %v1630 = vadd.f32 %v1614, %v1509
    %vm1631 = vcmask 15368
    %1632 = vst.msk [vmem:[#allocation4] sm:$0xff] %vm1631, %v1615
    %1633 = vst.msk [vmem:[#allocation4 + $0x8] sm:$0xff] %vm1631, %v1616
    %1634 = vst.msk [vmem:[#allocation4 + $0x10] sm:$0xff] %vm1631, %v1617
    %1635 = vst.msk [vmem:[#allocation4 + $0x18] sm:$0xff] %vm1631, %v1618
    %1636 = vst.msk [vmem:[#allocation4 + $0x20] sm:$0xff] %vm1631, %v1619
    %1637 = vst.msk [vmem:[#allocation4 + $0x28] sm:$0xff] %vm1631, %v1620
    %1638 = vst.msk [vmem:[#allocation4 + $0x30] sm:$0xff] %vm1631, %v1621
    %1639 = vst.msk [vmem:[#allocation4 + $0x38] sm:$0xff] %vm1631, %v1622
    %1640 = vst.msk [vmem:[#allocation4 + $0x40] sm:$0xff] %vm1631, %v1623
    %1641 = vst.msk [vmem:[#allocation4 + $0x48] sm:$0xff] %vm1631, %v1624
    %1642 = vst.msk [vmem:[#allocation4 + $0x50] sm:$0xff] %vm1631, %v1625
    %1643 = vst.msk [vmem:[#allocation4 + $0x58] sm:$0xff] %vm1631, %v1626
    %1644 = vst.msk [vmem:[#allocation4 + $0x60] sm:$0xff] %vm1631, %v1627
    %1645 = vst.msk [vmem:[#allocation4 + $0x68] sm:$0xff] %vm1631, %v1628
    %1646 = vst.msk [vmem:[#allocation4 + $0x70] sm:$0xff] %vm1631, %v1629
    %1647 = vst.msk [vmem:[#allocation4 + $0x78] sm:$0xff] %vm1631, %v1630
    %v1648 = vld [vmem:[#allocation2] sm:$0xff]
    %v1649 = vld [vmem:[#allocation2 + $0x8] sm:$0xff]
    %v1650 = vld [vmem:[#allocation2 + $0x10] sm:$0xff]
    %v1651 = vld [vmem:[#allocation2 + $0x18] sm:$0xff]
    %v1652 = vld [vmem:[#allocation2 + $0x20] sm:$0xff]
    %v1653 = vld [vmem:[#allocation2 + $0x28] sm:$0xff]
    %v1654 = vld [vmem:[#allocation2 + $0x30] sm:$0xff]
    %v1655 = vld [vmem:[#allocation2 + $0x38] sm:$0xff]
    %v1656 = vld [vmem:[#allocation2 + $0x40] sm:$0xff]
    %v1657 = vld [vmem:[#allocation2 + $0x48] sm:$0xff]
    %v1658 = vld [vmem:[#allocation2 + $0x50] sm:$0xff]
    %v1659 = vld [vmem:[#allocation2 + $0x58] sm:$0xff]
    %v1660 = vld [vmem:[#allocation2 + $0x60] sm:$0xff]
    %v1661 = vld [vmem:[#allocation2 + $0x68] sm:$0xff]
    %v1662 = vld [vmem:[#allocation2 + $0x70] sm:$0xff]
    %v1663 = vld [vmem:[#allocation2 + $0x78] sm:$0xff]
    %1665 = vset.pattern.permute.xlu0 1
    %1666 = vperm.xlu0 %1665, %v1271
    %v1667 = vpop.permute.xlu0 %1666
    %1670 = vset.pattern.permute.xlu0 1
    %1671 = vperm.xlu0 %1670, %v1273
    %v1672 = vpop.permute.xlu0 %1671
    %1675 = vset.pattern.permute.xlu0 1
    %1676 = vperm.xlu0 %1675, %v1275
    %v1677 = vpop.permute.xlu0 %1676
    %1680 = vset.pattern.permute.xlu0 1
    %1681 = vperm.xlu0 %1680, %v1277
    %v1682 = vpop.permute.xlu0 %1681
    %1685 = vset.pattern.permute.xlu0 1
    %1686 = vperm.xlu0 %1685, %v1279
    %v1687 = vpop.permute.xlu0 %1686
    %1690 = vset.pattern.permute.xlu0 1
    %1691 = vperm.xlu0 %1690, %v1281
    %v1692 = vpop.permute.xlu0 %1691
    %1695 = vset.pattern.permute.xlu0 1
    %1696 = vperm.xlu0 %1695, %v1283
    %v1697 = vpop.permute.xlu0 %1696
    %1700 = vset.pattern.permute.xlu0 1
    %1701 = vperm.xlu0 %1700, %v1285
    %v1702 = vpop.permute.xlu0 %1701
    %1705 = vset.pattern.permute.xlu0 1
    %1706 = vperm.xlu0 %1705, %v1287
    %v1707 = vpop.permute.xlu0 %1706
    %1710 = vset.pattern.permute.xlu0 1
    %1711 = vperm.xlu0 %1710, %v1289
    %v1712 = vpop.permute.xlu0 %1711
    %1715 = vset.pattern.permute.xlu0 1
    %1716 = vperm.xlu0 %1715, %v1291
    %v1717 = vpop.permute.xlu0 %1716
    %1720 = vset.pattern.permute.xlu0 1
    %1721 = vperm.xlu0 %1720, %v1293
    %v1722 = vpop.permute.xlu0 %1721
    %1725 = vset.pattern.permute.xlu0 1
    %1726 = vperm.xlu0 %1725, %v1295
    %v1727 = vpop.permute.xlu0 %1726
    %1730 = vset.pattern.permute.xlu0 1
    %1731 = vperm.xlu0 %1730, %v1297
    %v1732 = vpop.permute.xlu0 %1731
    %1735 = vset.pattern.permute.xlu0 1
    %1736 = vperm.xlu0 %1735, %v1299
    %v1737 = vpop.permute.xlu0 %1736
    %1740 = vset.pattern.permute.xlu0 1
    %1741 = vperm.xlu0 %1740, %v1301
    %v1742 = vpop.permute.xlu0 %1741
    %v1744 = vmul.f32 %v1667, %v1648
    %v1745 = vmul.f32 %v1672, %v1649
    %v1746 = vmul.f32 %v1677, %v1650
    %v1747 = vmul.f32 %v1682, %v1651
    %v1748 = vmul.f32 %v1687, %v1652
    %v1749 = vmul.f32 %v1692, %v1653
    %v1750 = vmul.f32 %v1697, %v1654
    %v1751 = vmul.f32 %v1702, %v1655
    %v1752 = vmul.f32 %v1707, %v1656
    %v1753 = vmul.f32 %v1712, %v1657
    %v1754 = vmul.f32 %v1717, %v1658
    %v1755 = vmul.f32 %v1722, %v1659
    %v1756 = vmul.f32 %v1727, %v1660
    %v1757 = vmul.f32 %v1732, %v1661
    %v1758 = vmul.f32 %v1737, %v1662
    %v1759 = vmul.f32 %v1742, %v1663
    %1776 = vrot.lane.b32.xlu0 %v1544, 3
    %v1777 = vpop.permute.xlu0 %1776
    %1778 = vrot.lane.b32.xlu0 %v1546, 3
    %v1779 = vpop.permute.xlu0 %1778
    %1780 = vrot.lane.b32.xlu0 %v1549, 3
    %v1781 = vpop.permute.xlu0 %1780
    %1782 = vrot.lane.b32.xlu0 %v1551, 3
    %v1783 = vpop.permute.xlu0 %1782
    %1784 = vrot.lane.b32.xlu0 %v1554, 3
    %v1785 = vpop.permute.xlu0 %1784
    %1786 = vrot.lane.b32.xlu0 %v1556, 3
    %v1787 = vpop.permute.xlu0 %1786
    %1788 = vrot.lane.b32.xlu0 %v1559, 3
    %v1789 = vpop.permute.xlu0 %1788
    %1790 = vrot.lane.b32.xlu0 %v1561, 3
    %v1791 = vpop.permute.xlu0 %1790
    %1792 = vrot.lane.b32.xlu0 %v1564, 3
    %v1793 = vpop.permute.xlu0 %1792
    %1794 = vrot.lane.b32.xlu0 %v1566, 3
    %v1795 = vpop.permute.xlu0 %1794
    %1796 = vrot.lane.b32.xlu0 %v1569, 3
    %v1797 = vpop.permute.xlu0 %1796
    %1798 = vrot.lane.b32.xlu0 %v1571, 3
    %v1799 = vpop.permute.xlu0 %1798
    %1800 = vrot.lane.b32.xlu0 %v1574, 3
    %v1801 = vpop.permute.xlu0 %1800
    %1802 = vrot.lane.b32.xlu0 %v1576, 3
    %v1803 = vpop.permute.xlu0 %1802
    %1804 = vrot.lane.b32.xlu0 %v1579, 3
    %v1805 = vpop.permute.xlu0 %1804
    %1806 = vrot.lane.b32.xlu0 %v1581, 3
    %v1807 = vpop.permute.xlu0 %1806
    %v1824 = vadd.f32 %v1744, %v1777
    %v1825 = vadd.f32 %v1745, %v1779
    %v1826 = vadd.f32 %v1746, %v1781
    %v1827 = vadd.f32 %v1747, %v1783
    %v1828 = vadd.f32 %v1748, %v1785
    %v1829 = vadd.f32 %v1749, %v1787
    %v1830 = vadd.f32 %v1750, %v1789
    %v1831 = vadd.f32 %v1751, %v1791
    %v1832 = vadd.f32 %v1752, %v1793
    %v1833 = vadd.f32 %v1753, %v1795
    %v1834 = vadd.f32 %v1754, %v1797
    %v1835 = vadd.f32 %v1755, %v1799
    %v1836 = vadd.f32 %v1756, %v1801
    %v1837 = vadd.f32 %v1757, %v1803
    %v1838 = vadd.f32 %v1758, %v1805
    %v1839 = vadd.f32 %v1759, %v1807
    %vm1840 = vcmask 48152
    %1841 = vst.msk [vmem:[#allocation2] sm:$0xff] %vm1840, %v1824
    %1842 = vst.msk [vmem:[#allocation2 + $0x8] sm:$0xff] %vm1840, %v1825
    %1843 = vst.msk [vmem:[#allocation2 + $0x10] sm:$0xff] %vm1840, %v1826
    %1844 = vst.msk [vmem:[#allocation2 + $0x18] sm:$0xff] %vm1840, %v1827
    %1845 = vst.msk [vmem:[#allocation2 + $0x20] sm:$0xff] %vm1840, %v1828
    %1846 = vst.msk [vmem:[#allocation2 + $0x28] sm:$0xff] %vm1840, %v1829
    %1847 = vst.msk [vmem:[#allocation2 + $0x30] sm:$0xff] %vm1840, %v1830
    %1848 = vst.msk [vmem:[#allocation2 + $0x38] sm:$0xff] %vm1840, %v1831
    %1849 = vst.msk [vmem:[#allocation2 + $0x40] sm:$0xff] %vm1840, %v1832
    %1850 = vst.msk [vmem:[#allocation2 + $0x48] sm:$0xff] %vm1840, %v1833
    %1851 = vst.msk [vmem:[#allocation2 + $0x50] sm:$0xff] %vm1840, %v1834
    %1852 = vst.msk [vmem:[#allocation2 + $0x58] sm:$0xff] %vm1840, %v1835
    %1853 = vst.msk [vmem:[#allocation2 + $0x60] sm:$0xff] %vm1840, %v1836
    %1854 = vst.msk [vmem:[#allocation2 + $0x68] sm:$0xff] %vm1840, %v1837
    %1855 = vst.msk [vmem:[#allocation2 + $0x70] sm:$0xff] %vm1840, %v1838
    %1856 = vst.msk [vmem:[#allocation2 + $0x78] sm:$0xff] %vm1840, %v1839
    %1857 = vst.msk [vmem:[#allocation3] sm:$0xff] %vm1631, %v1238
    %1858 = vst.msk [vmem:[#allocation3 + $0x8] sm:$0xff] %vm1631, %v1239
    %1859 = vst.msk [vmem:[#allocation3 + $0x10] sm:$0xff] %vm1631, %v1240
    %1860 = vst.msk [vmem:[#allocation3 + $0x18] sm:$0xff] %vm1631, %v1241
    %1861 = vst.msk [vmem:[#allocation3 + $0x20] sm:$0xff] %vm1631, %v1242
    %1862 = vst.msk [vmem:[#allocation3 + $0x28] sm:$0xff] %vm1631, %v1243
    %1863 = vst.msk [vmem:[#allocation3 + $0x30] sm:$0xff] %vm1631, %v1244
    %1864 = vst.msk [vmem:[#allocation3 + $0x38] sm:$0xff] %vm1631, %v1245
    %1865 = vst.msk [vmem:[#allocation3 + $0x40] sm:$0xff] %vm1631, %v1246
    %1866 = vst.msk [vmem:[#allocation3 + $0x48] sm:$0xff] %vm1631, %v1247
    %1867 = vst.msk [vmem:[#allocation3 + $0x50] sm:$0xff] %vm1631, %v1248
    %1868 = vst.msk [vmem:[#allocation3 + $0x58] sm:$0xff] %vm1631, %v1249
    %1869 = vst.msk [vmem:[#allocation3 + $0x60] sm:$0xff] %vm1631, %v1250
    %1870 = vst.msk [vmem:[#allocation3 + $0x68] sm:$0xff] %vm1631, %v1251
    %1871 = vst.msk [vmem:[#allocation3 + $0x70] sm:$0xff] %vm1631, %v1252
    %1872 = vst.msk [vmem:[#allocation3 + $0x78] sm:$0xff] %vm1631, %v1253
  $region29: #{_gat_forward.7} parent=0 // pred_fallthru
    _
  // Predicated region
  $region30: #{_gat_forward.7} parent=0 // pred_check
    %p1873 = pneg %p24
  $region31: #{_gat_forward.7} parent=0 // pred_check_branch
    %1875 = sbr.rel (%p1873) target = $region33
  $region32: #{_gat_forward.7} parent=0 // pred_region
    %v1876 = vld [vmem:[#allocation4] sm:$0xff]
    %v1877 = vld [vmem:[#allocation4 + $0x8] sm:$0xff]
    %v1878 = vld [vmem:[#allocation4 + $0x10] sm:$0xff]
    %v1879 = vld [vmem:[#allocation4 + $0x18] sm:$0xff]
    %v1880 = vld [vmem:[#allocation4 + $0x20] sm:$0xff]
    %v1881 = vld [vmem:[#allocation4 + $0x28] sm:$0xff]
    %v1882 = vld [vmem:[#allocation4 + $0x30] sm:$0xff]
    %v1883 = vld [vmem:[#allocation4 + $0x38] sm:$0xff]
    %v1884 = vld [vmem:[#allocation4 + $0x40] sm:$0xff]
    %v1885 = vld [vmem:[#allocation4 + $0x48] sm:$0xff]
    %v1886 = vld [vmem:[#allocation4 + $0x50] sm:$0xff]
    %v1887 = vld [vmem:[#allocation4 + $0x58] sm:$0xff]
    %v1888 = vld [vmem:[#allocation4 + $0x60] sm:$0xff]
    %v1889 = vld [vmem:[#allocation4 + $0x68] sm:$0xff]
    %v1890 = vld [vmem:[#allocation4 + $0x70] sm:$0xff]
    %v1891 = vld [vmem:[#allocation4 + $0x78] sm:$0xff]
    %v1892 = vrcp.pop %v1876
    %v1893 = vrcp.pop %v1877
    %v1894 = vrcp.pop %v1878
    %v1895 = vrcp.pop %v1879
    %v1896 = vrcp.pop %v1880
    %v1897 = vrcp.pop %v1881
    %v1898 = vrcp.pop %v1882
    %v1899 = vrcp.pop %v1883
    %v1900 = vrcp.pop %v1884
    %v1901 = vrcp.pop %v1885
    %v1902 = vrcp.pop %v1886
    %v1903 = vrcp.pop %v1887
    %v1904 = vrcp.pop %v1888
    %v1905 = vrcp.pop %v1889
    %v1906 = vrcp.pop %v1890
    %v1907 = vrcp.pop %v1891
    %v1908 = vld [vmem:[%s5] sm:$0x1]
    %v1909 = vld [vmem:[#allocation2] sm:$0xff]
    %v1910 = vld [vmem:[#allocation2 + $0x8] sm:$0xff]
    %v1911 = vld [vmem:[#allocation2 + $0x10] sm:$0xff]
    %v1912 = vld [vmem:[#allocation2 + $0x18] sm:$0xff]
    %v1913 = vld [vmem:[#allocation2 + $0x20] sm:$0xff]
    %v1914 = vld [vmem:[#allocation2 + $0x28] sm:$0xff]
    %v1915 = vld [vmem:[#allocation2 + $0x30] sm:$0xff]
    %v1916 = vld [vmem:[#allocation2 + $0x38] sm:$0xff]
    %v1917 = vld [vmem:[#allocation2 + $0x40] sm:$0xff]
    %v1918 = vld [vmem:[#allocation2 + $0x48] sm:$0xff]
    %v1919 = vld [vmem:[#allocation2 + $0x50] sm:$0xff]
    %v1920 = vld [vmem:[#allocation2 + $0x58] sm:$0xff]
    %v1921 = vld [vmem:[#allocation2 + $0x60] sm:$0xff]
    %v1922 = vld [vmem:[#allocation2 + $0x68] sm:$0xff]
    %v1923 = vld [vmem:[#allocation2 + $0x70] sm:$0xff]
    %v1924 = vld [vmem:[#allocation2 + $0x78] sm:$0xff]
    %1926 = vset.pattern.permute.xlu0 0
    %1927 = vperm.xlu0 %1926, %v1892
    %v1928 = vpop.permute.xlu0 %1927
    %1931 = vset.pattern.permute.xlu0 0
    %1932 = vperm.xlu0 %1931, %v1893
    %v1933 = vpop.permute.xlu0 %1932
    %1936 = vset.pattern.permute.xlu0 0
    %1937 = vperm.xlu0 %1936, %v1894
    %v1938 = vpop.permute.xlu0 %1937
    %1941 = vset.pattern.permute.xlu0 0
    %1942 = vperm.xlu0 %1941, %v1895
    %v1943 = vpop.permute.xlu0 %1942
    %1946 = vset.pattern.permute.xlu0 0
    %1947 = vperm.xlu0 %1946, %v1896
    %v1948 = vpop.permute.xlu0 %1947
    %1951 = vset.pattern.permute.xlu0 0
    %1952 = vperm.xlu0 %1951, %v1897
    %v1953 = vpop.permute.xlu0 %1952
    %1956 = vset.pattern.permute.xlu0 0
    %1957 = vperm.xlu0 %1956, %v1898
    %v1958 = vpop.permute.xlu0 %1957
    %1961 = vset.pattern.permute.xlu0 0
    %1962 = vperm.xlu0 %1961, %v1899
    %v1963 = vpop.permute.xlu0 %1962
    %1966 = vset.pattern.permute.xlu0 0
    %1967 = vperm.xlu0 %1966, %v1900
    %v1968 = vpop.permute.xlu0 %1967
    %1971 = vset.pattern.permute.xlu0 0
    %1972 = vperm.xlu0 %1971, %v1901
    %v1973 = vpop.permute.xlu0 %1972
    %1976 = vset.pattern.permute.xlu0 0
    %1977 = vperm.xlu0 %1976, %v1902
    %v1978 = vpop.permute.xlu0 %1977
    %1981 = vset.pattern.permute.xlu0 0
    %1982 = vperm.xlu0 %1981, %v1903
    %v1983 = vpop.permute.xlu0 %1982
    %1986 = vset.pattern.permute.xlu0 0
    %1987 = vperm.xlu0 %1986, %v1904
    %v1988 = vpop.permute.xlu0 %1987
    %1991 = vset.pattern.permute.xlu0 0
    %1992 = vperm.xlu0 %1991, %v1905
    %v1993 = vpop.permute.xlu0 %1992
    %1996 = vset.pattern.permute.xlu0 0
    %1997 = vperm.xlu0 %1996, %v1906
    %v1998 = vpop.permute.xlu0 %1997
    %2001 = vset.pattern.permute.xlu0 0
    %2002 = vperm.xlu0 %2001, %v1907
    %v2003 = vpop.permute.xlu0 %2002
    %v2005 = vmul.f32 %v1909, %v1928
    %v2006 = vmul.f32 %v1910, %v1933
    %v2007 = vmul.f32 %v1911, %v1938
    %v2008 = vmul.f32 %v1912, %v1943
    %v2009 = vmul.f32 %v1913, %v1948
    %v2010 = vmul.f32 %v1914, %v1953
    %v2011 = vmul.f32 %v1915, %v1958
    %v2012 = vmul.f32 %v1916, %v1963
    %v2013 = vmul.f32 %v1917, %v1968
    %v2014 = vmul.f32 %v1918, %v1973
    %v2015 = vmul.f32 %v1919, %v1978
    %v2016 = vmul.f32 %v1920, %v1983
    %v2017 = vmul.f32 %v1921, %v1988
    %v2018 = vmul.f32 %v1922, %v1993
    %v2019 = vmul.f32 %v1923, %v1998
    %v2020 = vmul.f32 %v1924, %v2003
    %v2022 = vperm.slane %v1908, 0
    %v2024 = vadd.f32 %v2005, %v2022
    %v2025 = vadd.f32 %v2006, %v2022
    %v2026 = vadd.f32 %v2007, %v2022
    %v2027 = vadd.f32 %v2008, %v2022
    %v2028 = vadd.f32 %v2009, %v2022
    %v2029 = vadd.f32 %v2010, %v2022
    %v2030 = vadd.f32 %v2011, %v2022
    %v2031 = vadd.f32 %v2012, %v2022
    %v2032 = vadd.f32 %v2013, %v2022
    %v2033 = vadd.f32 %v2014, %v2022
    %v2034 = vadd.f32 %v2015, %v2022
    %v2035 = vadd.f32 %v2016, %v2022
    %v2036 = vadd.f32 %v2017, %v2022
    %v2037 = vadd.f32 %v2018, %v2022
    %v2038 = vadd.f32 %v2019, %v2022
    %v2039 = vadd.f32 %v2020, %v2022
    %vm2040 = vcmask 23552
    %2041 = vst.msk [vmem:[%s6] sm:$0xff] %vm2040, %v2024
    %2042 = vst.msk [vmem:[%s6 + $0x8] sm:$0xff] %vm2040, %v2025
    %2043 = vst.msk [vmem:[%s6 + $0x10] sm:$0xff] %vm2040, %v2026
    %2044 = vst.msk [vmem:[%s6 + $0x18] sm:$0xff] %vm2040, %v2027
    %2045 = vst.msk [vmem:[%s6 + $0x20] sm:$0xff] %vm2040, %v2028
    %2046 = vst.msk [vmem:[%s6 + $0x28] sm:$0xff] %vm2040, %v2029
    %2047 = vst.msk [vmem:[%s6 + $0x30] sm:$0xff] %vm2040, %v2030
    %2048 = vst.msk [vmem:[%s6 + $0x38] sm:$0xff] %vm2040, %v2031
    %2049 = vst.msk [vmem:[%s6 + $0x40] sm:$0xff] %vm2040, %v2032
    %2050 = vst.msk [vmem:[%s6 + $0x48] sm:$0xff] %vm2040, %v2033
    %2051 = vst.msk [vmem:[%s6 + $0x50] sm:$0xff] %vm2040, %v2034
    %2052 = vst.msk [vmem:[%s6 + $0x58] sm:$0xff] %vm2040, %v2035
    %2053 = vst.msk [vmem:[%s6 + $0x60] sm:$0xff] %vm2040, %v2036
    %2054 = vst.msk [vmem:[%s6 + $0x68] sm:$0xff] %vm2040, %v2037
    %2055 = vst.msk [vmem:[%s6 + $0x70] sm:$0xff] %vm2040, %v2038
    %2056 = vst.msk [vmem:[%s6 + $0x78] sm:$0xff] %vm2040, %v2039
    %2057 = vset.pattern.permute.xlu0 1
    %2058 = vperm.xlu0 %2057, %v1892
    %v2059 = vpop.permute.xlu0 %2058
    %2061 = vset.pattern.permute.xlu0 1
    %2062 = vperm.xlu0 %2061, %v1893
    %v2063 = vpop.permute.xlu0 %2062
    %2065 = vset.pattern.permute.xlu0 1
    %2066 = vperm.xlu0 %2065, %v1894
    %v2067 = vpop.permute.xlu0 %2066
    %2069 = vset.pattern.permute.xlu0 1
    %2070 = vperm.xlu0 %2069, %v1895
    %v2071 = vpop.permute.xlu0 %2070
    %2073 = vset.pattern.permute.xlu0 1
    %2074 = vperm.xlu0 %2073, %v1896
    %v2075 = vpop.permute.xlu0 %2074
    %2077 = vset.pattern.permute.xlu0 1
    %2078 = vperm.xlu0 %2077, %v1897
    %v2079 = vpop.permute.xlu0 %2078
    %2081 = vset.pattern.permute.xlu0 1
    %2082 = vperm.xlu0 %2081, %v1898
    %v2083 = vpop.permute.xlu0 %2082
    %2085 = vset.pattern.permute.xlu0 1
    %2086 = vperm.xlu0 %2085, %v1899
    %v2087 = vpop.permute.xlu0 %2086
    %2089 = vset.pattern.permute.xlu0 1
    %2090 = vperm.xlu0 %2089, %v1900
    %v2091 = vpop.permute.xlu0 %2090
    %2093 = vset.pattern.permute.xlu0 1
    %2094 = vperm.xlu0 %2093, %v1901
    %v2095 = vpop.permute.xlu0 %2094
    %2097 = vset.pattern.permute.xlu0 1
    %2098 = vperm.xlu0 %2097, %v1902
    %v2099 = vpop.permute.xlu0 %2098
    %2101 = vset.pattern.permute.xlu0 1
    %2102 = vperm.xlu0 %2101, %v1903
    %v2103 = vpop.permute.xlu0 %2102
    %2105 = vset.pattern.permute.xlu0 1
    %2106 = vperm.xlu0 %2105, %v1904
    %v2107 = vpop.permute.xlu0 %2106
    %2109 = vset.pattern.permute.xlu0 1
    %2110 = vperm.xlu0 %2109, %v1905
    %v2111 = vpop.permute.xlu0 %2110
    %2113 = vset.pattern.permute.xlu0 1
    %2114 = vperm.xlu0 %2113, %v1906
    %v2115 = vpop.permute.xlu0 %2114
    %2117 = vset.pattern.permute.xlu0 1
    %2118 = vperm.xlu0 %2117, %v1907
    %v2119 = vpop.permute.xlu0 %2118
    %v2121 = vmul.f32 %v1909, %v2059
    %v2122 = vmul.f32 %v1910, %v2063
    %v2123 = vmul.f32 %v1911, %v2067
    %v2124 = vmul.f32 %v1912, %v2071
    %v2125 = vmul.f32 %v1913, %v2075
    %v2126 = vmul.f32 %v1914, %v2079
    %v2127 = vmul.f32 %v1915, %v2083
    %v2128 = vmul.f32 %v1916, %v2087
    %v2129 = vmul.f32 %v1917, %v2091
    %v2130 = vmul.f32 %v1918, %v2095
    %v2131 = vmul.f32 %v1919, %v2099
    %v2132 = vmul.f32 %v1920, %v2103
    %v2133 = vmul.f32 %v1921, %v2107
    %v2134 = vmul.f32 %v1922, %v2111
    %v2135 = vmul.f32 %v1923, %v2115
    %v2136 = vmul.f32 %v1924, %v2119
    %v2137 = vadd.f32 %v2121, %v2022
    %v2138 = vadd.f32 %v2122, %v2022
    %v2139 = vadd.f32 %v2123, %v2022
    %v2140 = vadd.f32 %v2124, %v2022
    %v2141 = vadd.f32 %v2125, %v2022
    %v2142 = vadd.f32 %v2126, %v2022
    %v2143 = vadd.f32 %v2127, %v2022
    %v2144 = vadd.f32 %v2128, %v2022
    %v2145 = vadd.f32 %v2129, %v2022
    %v2146 = vadd.f32 %v2130, %v2022
    %v2147 = vadd.f32 %v2131, %v2022
    %v2148 = vadd.f32 %v2132, %v2022
    %v2149 = vadd.f32 %v2133, %v2022
    %v2150 = vadd.f32 %v2134, %v2022
    %v2151 = vadd.f32 %v2135, %v2022
    %v2152 = vadd.f32 %v2136, %v2022
    %vm2153 = vcmask 48152
    %2154 = vst.msk [vmem:[%s6] sm:$0xff] %vm2153, %v2137
    %2155 = vst.msk [vmem:[%s6 + $0x8] sm:$0xff] %vm2153, %v2138
    %2156 = vst.msk [vmem:[%s6 + $0x10] sm:$0xff] %vm2153, %v2139
    %2157 = vst.msk [vmem:[%s6 + $0x18] sm:$0xff] %vm2153, %v2140
    %2158 = vst.msk [vmem:[%s6 + $0x20] sm:$0xff] %vm2153, %v2141
    %2159 = vst.msk [vmem:[%s6 + $0x28] sm:$0xff] %vm2153, %v2142
    %2160 = vst.msk [vmem:[%s6 + $0x30] sm:$0xff] %vm2153, %v2143
    %2161 = vst.msk [vmem:[%s6 + $0x38] sm:$0xff] %vm2153, %v2144
    %2162 = vst.msk [vmem:[%s6 + $0x40] sm:$0xff] %vm2153, %v2145
    %2163 = vst.msk [vmem:[%s6 + $0x48] sm:$0xff] %vm2153, %v2146
    %2164 = vst.msk [vmem:[%s6 + $0x50] sm:$0xff] %vm2153, %v2147
    %2165 = vst.msk [vmem:[%s6 + $0x58] sm:$0xff] %vm2153, %v2148
    %2166 = vst.msk [vmem:[%s6 + $0x60] sm:$0xff] %vm2153, %v2149
    %2167 = vst.msk [vmem:[%s6 + $0x68] sm:$0xff] %vm2153, %v2150
    %2168 = vst.msk [vmem:[%s6 + $0x70] sm:$0xff] %vm2153, %v2151
    %2169 = vst.msk [vmem:[%s6 + $0x78] sm:$0xff] %vm2153, %v2152
  $region33: #{_gat_forward.7} parent=0 // pred_fallthru
    _
  // Predicated region
  $region34: #{_gat_forward.7} parent=0 // pred_check
    _
  $region35: #{_gat_forward.7} parent=0 // pred_check_branch
    %2171 = sbr.rel (0) target = $region37
  $region36: #{_gat_forward.7} parent=0 // pred_region
    _
  $region37: #{_gat_forward.7} parent=0 // pred_fallthru
    _
  // Predicated region
  $region38: #{_gat_forward.7} parent=0 // pred_check
    _
  $region39: #{_gat_forward.7} parent=0 // pred_check_branch
    %2173 = sbr.rel (0) target = $region41
  $region40: #{_gat_forward.7} parent=0 // pred_region
    _
  $region41: #{_gat_forward.7} parent=0 // pred_fallthru
    _

// kernel: _gat_forward.5
$region0: #{_gat_forward.5}
  #allocation0 [shape = 'u32[]', space=smem, size = 0x4, offset = 0x4, fixed_abs, tag = 'smem constant byte address 0x4 - core index']
  #allocation1 [shape = 'u32[72,128]{1,0:T(1,128)}', space=vmem, size = 0x9000, scoped, tag = 'internal scratch']
  #allocation2 [shape = 'f32[128,32]{1,0:T(8,128)}', space=vmem, size = 0x10000, scoped, tag = 'scratch operand']
  #allocation3 [shape = 'f32[128,4]{1,0:T(8,128)}', space=vmem, size = 0x10000, scoped, tag = 'scratch operand']
  #allocation4 [shape = 'f32[128,4]{1,0:T(8,128)}', space=vmem, size = 0x10000, scoped, tag = 'scratch operand']
  #allocation5 [shape = 's32[1]{0}', space=sflag, size = 0x4, scoped, tag = 'scoped memory for _gat_forward.5']
  #allocation6 [shape = 's32[1]{0:T(128)S(6)}', space=smem, size = 0x200, scoped, tag = 'prefetched SMEM operand 0']
  %s0 = inlined_call_operand.<no memory space> [shape: s32[1], index: 0, kind: input, shape index: {}]
  %s1 = inlined_call_operand.vmem [shape: bf16[128,32], index: 1, kind: input, shape index: {}]
  %s2 = inlined_call_operand.vmem [shape: f32[4,128], index: 2, kind: input, shape index: {}]
  %s3 = inlined_call_operand.vmem [shape: f32[128,4], index: 3, kind: input, shape index: {}]
  %s4 = inlined_call_operand.vmem [shape: s8[128,128], index: 4, kind: input, shape index: {}]
  %s5 = inlined_call_operand.vmem [shape: f32[1,32], index: 5, kind: input, shape index: {}]
  %s6 = inlined_call_operand.vmem [shape: f32[128,32], index: 6, kind: output, shape index: {}]
  %s7 = sld [smem:[#allocation0]]
  $region42: #{_gat_forward.5} parent=0
    _
  %s9 = ssub.s32 1, %s7
  %s10 = scalar_select 0, %s9, %s7
  %11 = sst [smem:[#allocation6]] %s0
  // Predicated region
  $region2: #{_gat_forward.5} parent=0 // pred_check
    _
  $region3: #{_gat_forward.5} parent=0 // pred_check_branch
    %13 = sbr.rel (0) target = $region5
  $region4: #{_gat_forward.5} parent=0 // pred_region
    _
  $region5: #{_gat_forward.5} parent=0 // pred_fallthru
    _
  // Predicated region
  $region6: #{_gat_forward.5} parent=0 // pred_check
    _
  $region7: #{_gat_forward.5} parent=0 // pred_check_branch
    %15 = sbr.rel (0) target = $region9
  $region8: #{_gat_forward.5} parent=0 // pred_region
    _
  $region9: #{_gat_forward.5} parent=0 // pred_fallthru
    _
  // Predicated region
  $region10: #{_gat_forward.5} parent=0 // pred_check
    _
  $region11: #{_gat_forward.5} parent=0 // pred_check_branch
    %17 = sbr.rel (0) target = $region13
  $region12: #{_gat_forward.5} parent=0 // pred_region
    _
  $region13: #{_gat_forward.5} parent=0 // pred_fallthru
    _
  // Predicated region
  $region14: #{_gat_forward.5} parent=0 // pred_check
    _
  $region15: #{_gat_forward.5} parent=0 // pred_check_branch
    %19 = sbr.rel (0) target = $region17
  $region16: #{_gat_forward.5} parent=0 // pred_region
    _
  $region17: #{_gat_forward.5} parent=0 // pred_fallthru
    _
  // Predicated region
  $region18: #{_gat_forward.5} parent=0 // pred_check
    _
  $region19: #{_gat_forward.5} parent=0 // pred_check_branch
    %21 = sbr.rel (0) target = $region21
  $region20: #{_gat_forward.5} parent=0 // pred_region
    _
  $region21: #{_gat_forward.5} parent=0 // pred_fallthru
    _
  %p24 = scmp.eq.s32.totalorder 0, 0
  // Predicated region
  $region22: #{_gat_forward.5} parent=0 // pred_check
    %p25 = pneg %p24
  $region23: #{_gat_forward.5} parent=0 // pred_check_branch
    %27 = sbr.rel (%p25) target = $region25
  $region24: #{_gat_forward.5} parent=0 // pred_region
    %vm28 = vcmask 31744
    %29 = vst.msk [vmem:[#allocation3] sm:$0xff] %vm28, -1e+30
    %30 = vst.msk [vmem:[#allocation3 + $0x8] sm:$0xff] %vm28, -1e+30
    %31 = vst.msk [vmem:[#allocation3 + $0x10] sm:$0xff] %vm28, -1e+30
    %32 = vst.msk [vmem:[#allocation3 + $0x18] sm:$0xff] %vm28, -1e+30
    %33 = vst.msk [vmem:[#allocation3 + $0x20] sm:$0xff] %vm28, -1e+30
    %34 = vst.msk [vmem:[#allocation3 + $0x28] sm:$0xff] %vm28, -1e+30
    %35 = vst.msk [vmem:[#allocation3 + $0x30] sm:$0xff] %vm28, -1e+30
    %36 = vst.msk [vmem:[#allocation3 + $0x38] sm:$0xff] %vm28, -1e+30
    %37 = vst.msk [vmem:[#allocation3 + $0x40] sm:$0xff] %vm28, -1e+30
    %38 = vst.msk [vmem:[#allocation3 + $0x48] sm:$0xff] %vm28, -1e+30
    %39 = vst.msk [vmem:[#allocation3 + $0x50] sm:$0xff] %vm28, -1e+30
    %40 = vst.msk [vmem:[#allocation3 + $0x58] sm:$0xff] %vm28, -1e+30
    %41 = vst.msk [vmem:[#allocation3 + $0x60] sm:$0xff] %vm28, -1e+30
    %42 = vst.msk [vmem:[#allocation3 + $0x68] sm:$0xff] %vm28, -1e+30
    %43 = vst.msk [vmem:[#allocation3 + $0x70] sm:$0xff] %vm28, -1e+30
    %44 = vst.msk [vmem:[#allocation3 + $0x78] sm:$0xff] %vm28, -1e+30
    %45 = vst.msk [vmem:[#allocation4] sm:$0xff] %vm28, 0.0
    %46 = vst.msk [vmem:[#allocation4 + $0x8] sm:$0xff] %vm28, 0.0
    %47 = vst.msk [vmem:[#allocation4 + $0x10] sm:$0xff] %vm28, 0.0
    %48 = vst.msk [vmem:[#allocation4 + $0x18] sm:$0xff] %vm28, 0.0
    %49 = vst.msk [vmem:[#allocation4 + $0x20] sm:$0xff] %vm28, 0.0
    %50 = vst.msk [vmem:[#allocation4 + $0x28] sm:$0xff] %vm28, 0.0
    %51 = vst.msk [vmem:[#allocation4 + $0x30] sm:$0xff] %vm28, 0.0
    %52 = vst.msk [vmem:[#allocation4 + $0x38] sm:$0xff] %vm28, 0.0
    %53 = vst.msk [vmem:[#allocation4 + $0x40] sm:$0xff] %vm28, 0.0
    %54 = vst.msk [vmem:[#allocation4 + $0x48] sm:$0xff] %vm28, 0.0
    %55 = vst.msk [vmem:[#allocation4 + $0x50] sm:$0xff] %vm28, 0.0
    %56 = vst.msk [vmem:[#allocation4 + $0x58] sm:$0xff] %vm28, 0.0
    %57 = vst.msk [vmem:[#allocation4 + $0x60] sm:$0xff] %vm28, 0.0
    %58 = vst.msk [vmem:[#allocation4 + $0x68] sm:$0xff] %vm28, 0.0
    %59 = vst.msk [vmem:[#allocation4 + $0x70] sm:$0xff] %vm28, 0.0
    %60 = vst.msk [vmem:[#allocation4 + $0x78] sm:$0xff] %vm28, 0.0
    %vm61 = vcmask 261120
    %62 = vst.msk [vmem:[#allocation2] sm:$0xff] %vm61, 0.0
    %63 = vst.msk [vmem:[#allocation2 + $0x8] sm:$0xff] %vm61, 0.0
    %64 = vst.msk [vmem:[#allocation2 + $0x10] sm:$0xff] %vm61, 0.0
    %65 = vst.msk [vmem:[#allocation2 + $0x18] sm:$0xff] %vm61, 0.0
    %66 = vst.msk [vmem:[#allocation2 + $0x20] sm:$0xff] %vm61, 0.0
    %67 = vst.msk [vmem:[#allocation2 + $0x28] sm:$0xff] %vm61, 0.0
    %68 = vst.msk [vmem:[#allocation2 + $0x30] sm:$0xff] %vm61, 0.0
    %69 = vst.msk [vmem:[#allocation2 + $0x38] sm:$0xff] %vm61, 0.0
    %70 = vst.msk [vmem:[#allocation2 + $0x40] sm:$0xff] %vm61, 0.0
    %71 = vst.msk [vmem:[#allocation2 + $0x48] sm:$0xff] %vm61, 0.0
    %72 = vst.msk [vmem:[#allocation2 + $0x50] sm:$0xff] %vm61, 0.0
    %73 = vst.msk [vmem:[#allocation2 + $0x58] sm:$0xff] %vm61, 0.0
    %74 = vst.msk [vmem:[#allocation2 + $0x60] sm:$0xff] %vm61, 0.0
    %75 = vst.msk [vmem:[#allocation2 + $0x68] sm:$0xff] %vm61, 0.0
    %76 = vst.msk [vmem:[#allocation2 + $0x70] sm:$0xff] %vm61, 0.0
    %77 = vst.msk [vmem:[#allocation2 + $0x78] sm:$0xff] %vm61, 0.0
  $region25: #{_gat_forward.5} parent=0 // pred_fallthru
    _
  %s78 = sadd.s32 0, 0
  %s79 = sld [smem:[#allocation6 + %s78]]
  %p80 = scmp.ne.s32.totalorder %s79, 0
  // Predicated region
  $region26: #{_gat_forward.5} parent=0 // pred_check
    %p81 = pneg %p80
  $region27: #{_gat_forward.5} parent=0 // pred_check_branch
    %83 = sbr.rel (%p81) target = $region29
  $region28: #{_gat_forward.5} parent=0 // pred_region
    %v84 = vld [vmem:[%s4] sm:$0xff]
    %v85 = vld [vmem:[%s4 + $0x8] sm:$0xff]
    %v86 = vld [vmem:[%s4 + $0x10] sm:$0xff]
    %v87 = vld [vmem:[%s4 + $0x18] sm:$0xff]
    %vm88 = vnez %v84
    %vm89 = vnez %v85
    %vm90 = vnez %v86
    %vm91 = vnez %v87
    %v92 = vld [vmem:[%s1] sm:$0xf]
    %v93 = vld [vmem:[%s1 + $0x4] sm:$0xf]
    %v94 = vld [vmem:[%s1 + $0x8] sm:$0xf]
    %v95 = vld [vmem:[%s1 + $0xc] sm:$0xf]
    %v96 = vld [vmem:[%s1 + $0x10] sm:$0xf]
    %v97 = vld [vmem:[%s1 + $0x14] sm:$0xf]
    %v98 = vld [vmem:[%s1 + $0x18] sm:$0xf]
    %v99 = vld [vmem:[%s1 + $0x1c] sm:$0xf]
    %v100 = vld [vmem:[%s1 + $0x20] sm:$0xf]
    %v101 = vld [vmem:[%s1 + $0x24] sm:$0xf]
    %v102 = vld [vmem:[%s1 + $0x28] sm:$0xf]
    %v103 = vld [vmem:[%s1 + $0x2c] sm:$0xf]
    %v104 = vld [vmem:[%s1 + $0x30] sm:$0xf]
    %v105 = vld [vmem:[%s1 + $0x34] sm:$0xf]
    %v106 = vld [vmem:[%s1 + $0x38] sm:$0xf]
    %v107 = vld [vmem:[%s1 + $0x3c] sm:$0xf]
    %v108 = vld [vmem:[%s2] sm:$0xf]
    %v109 = vld [vmem:[%s3] sm:$0xff]
    %v110 = vld [vmem:[%s3 + $0x8] sm:$0xff]
    %v111 = vld [vmem:[%s3 + $0x10] sm:$0xff]
    %v112 = vld [vmem:[%s3 + $0x18] sm:$0xff]
    %v113 = vld [vmem:[%s3 + $0x20] sm:$0xff]
    %v114 = vld [vmem:[%s3 + $0x28] sm:$0xff]
    %v115 = vld [vmem:[%s3 + $0x30] sm:$0xff]
    %v116 = vld [vmem:[%s3 + $0x38] sm:$0xff]
    %v117 = vld [vmem:[%s3 + $0x40] sm:$0xff]
    %v118 = vld [vmem:[%s3 + $0x48] sm:$0xff]
    %v119 = vld [vmem:[%s3 + $0x50] sm:$0xff]
    %v120 = vld [vmem:[%s3 + $0x58] sm:$0xff]
    %v121 = vld [vmem:[%s3 + $0x60] sm:$0xff]
    %v122 = vld [vmem:[%s3 + $0x68] sm:$0xff]
    %v123 = vld [vmem:[%s3 + $0x70] sm:$0xff]
    %v124 = vld [vmem:[%s3 + $0x78] sm:$0xff]
    %126 = vset.pattern.permute.xlu0 0
    %127 = vperm.xlu0 %126, %v109
    %v128 = vpop.permute.xlu0 %127
    %131 = vset.pattern.permute.xlu0 0
    %132 = vperm.xlu0 %131, %v110
    %v133 = vpop.permute.xlu0 %132
    %136 = vset.pattern.permute.xlu0 0
    %137 = vperm.xlu0 %136, %v111
    %v138 = vpop.permute.xlu0 %137
    %141 = vset.pattern.permute.xlu0 0
    %142 = vperm.xlu0 %141, %v112
    %v143 = vpop.permute.xlu0 %142
    %146 = vset.pattern.permute.xlu0 0
    %147 = vperm.xlu0 %146, %v113
    %v148 = vpop.permute.xlu0 %147
    %151 = vset.pattern.permute.xlu0 0
    %152 = vperm.xlu0 %151, %v114
    %v153 = vpop.permute.xlu0 %152
    %156 = vset.pattern.permute.xlu0 0
    %157 = vperm.xlu0 %156, %v115
    %v158 = vpop.permute.xlu0 %157
    %161 = vset.pattern.permute.xlu0 0
    %162 = vperm.xlu0 %161, %v116
    %v163 = vpop.permute.xlu0 %162
    %166 = vset.pattern.permute.xlu0 0
    %167 = vperm.xlu0 %166, %v117
    %v168 = vpop.permute.xlu0 %167
    %171 = vset.pattern.permute.xlu0 0
    %172 = vperm.xlu0 %171, %v118
    %v173 = vpop.permute.xlu0 %172
    %176 = vset.pattern.permute.xlu0 0
    %177 = vperm.xlu0 %176, %v119
    %v178 = vpop.permute.xlu0 %177
    %181 = vset.pattern.permute.xlu0 0
    %182 = vperm.xlu0 %181, %v120
    %v183 = vpop.permute.xlu0 %182
    %186 = vset.pattern.permute.xlu0 0
    %187 = vperm.xlu0 %186, %v121
    %v188 = vpop.permute.xlu0 %187
    %191 = vset.pattern.permute.xlu0 0
    %192 = vperm.xlu0 %191, %v122
    %v193 = vpop.permute.xlu0 %192
    %196 = vset.pattern.permute.xlu0 0
    %197 = vperm.xlu0 %196, %v123
    %v198 = vpop.permute.xlu0 %197
    %201 = vset.pattern.permute.xlu0 0
    %202 = vperm.xlu0 %201, %v124
    %v203 = vpop.permute.xlu0 %202
    %v205 = vperm.slane %v108, 0
    %v206 = vadd.f32 %v128, %v205
    %v207 = vadd.f32 %v133, %v205
    %v208 = vadd.f32 %v138, %v205
    %v209 = vadd.f32 %v143, %v205
    %v210 = vadd.f32 %v148, %v205
    %v211 = vadd.f32 %v153, %v205
    %v212 = vadd.f32 %v158, %v205
    %v213 = vadd.f32 %v163, %v205
    %v214 = vadd.f32 %v168, %v205
    %v215 = vadd.f32 %v173, %v205
    %v216 = vadd.f32 %v178, %v205
    %v217 = vadd.f32 %v183, %v205
    %v218 = vadd.f32 %v188, %v205
    %v219 = vadd.f32 %v193, %v205
    %v220 = vadd.f32 %v198, %v205
    %v221 = vadd.f32 %v203, %v205
    %vm222 = vcmp.gt.f32.partialorder %v206, 0.0
    %vm223 = vcmp.gt.f32.partialorder %v207, 0.0
    %vm224 = vcmp.gt.f32.partialorder %v208, 0.0
    %vm225 = vcmp.gt.f32.partialorder %v209, 0.0
    %vm226 = vcmp.gt.f32.partialorder %v210, 0.0
    %vm227 = vcmp.gt.f32.partialorder %v211, 0.0
    %vm228 = vcmp.gt.f32.partialorder %v212, 0.0
    %vm229 = vcmp.gt.f32.partialorder %v213, 0.0
    %vm230 = vcmp.gt.f32.partialorder %v214, 0.0
    %vm231 = vcmp.gt.f32.partialorder %v215, 0.0
    %vm232 = vcmp.gt.f32.partialorder %v216, 0.0
    %vm233 = vcmp.gt.f32.partialorder %v217, 0.0
    %vm234 = vcmp.gt.f32.partialorder %v218, 0.0
    %vm235 = vcmp.gt.f32.partialorder %v219, 0.0
    %vm236 = vcmp.gt.f32.partialorder %v220, 0.0
    %vm237 = vcmp.gt.f32.partialorder %v221, 0.0
    %v238 = vmul.f32 %v206, 0.2
    %v239 = vmul.f32 %v207, 0.2
    %v240 = vmul.f32 %v208, 0.2
    %v241 = vmul.f32 %v209, 0.2
    %v242 = vmul.f32 %v210, 0.2
    %v243 = vmul.f32 %v211, 0.2
    %v244 = vmul.f32 %v212, 0.2
    %v245 = vmul.f32 %v213, 0.2
    %v246 = vmul.f32 %v214, 0.2
    %v247 = vmul.f32 %v215, 0.2
    %v248 = vmul.f32 %v216, 0.2
    %v249 = vmul.f32 %v217, 0.2
    %v250 = vmul.f32 %v218, 0.2
    %v251 = vmul.f32 %v219, 0.2
    %v252 = vmul.f32 %v220, 0.2
    %v253 = vmul.f32 %v221, 0.2
    %v254 = vsel %vm222, %v206, %v238
    %v255 = vsel %vm223, %v207, %v239
    %v256 = vsel %vm224, %v208, %v240
    %v257 = vsel %vm225, %v209, %v241
    %v258 = vsel %vm226, %v210, %v242
    %v259 = vsel %vm227, %v211, %v243
    %v260 = vsel %vm228, %v212, %v244
    %v261 = vsel %vm229, %v213, %v245
    %v262 = vsel %vm230, %v214, %v246
    %v263 = vsel %vm231, %v215, %v247
    %v264 = vsel %vm232, %v216, %v248
    %v265 = vsel %vm233, %v217, %v249
    %v266 = vsel %vm234, %v218, %v250
    %v267 = vsel %vm235, %v219, %v251
    %v268 = vsel %vm236, %v220, %v252
    %v269 = vsel %vm237, %v221, %v253
    %v270 = vsel %vm88, 16843009, 0
    %v271 = vsel %vm89, 16843009, 0
    %v272 = vsel %vm90, 16843009, 0
    %v273 = vsel %vm91, 16843009, 0
    %v274 = vunpack.c.0.s8 %v270
    %v275 = vunpack.c.1.s8 %v270
    %v276 = vunpack.c.2.s8 %v270
    %v277 = vunpack.c.3.s8 %v270
    %v278 = vunpack.c.0.s8 %v271
    %v279 = vunpack.c.1.s8 %v271
    %v280 = vunpack.c.2.s8 %v271
    %v281 = vunpack.c.3.s8 %v271
    %v282 = vunpack.c.0.s8 %v272
    %v283 = vunpack.c.1.s8 %v272
    %v284 = vunpack.c.2.s8 %v272
    %v285 = vunpack.c.3.s8 %v272
    %v286 = vunpack.c.0.s8 %v273
    %v287 = vunpack.c.1.s8 %v273
    %v288 = vunpack.c.2.s8 %v273
    %v289 = vunpack.c.3.s8 %v273
    %v290 = vpack.c.b16 %v274, %v274
    %v291 = vpack.c.b8 %v290, %v290
    %v292 = vpack.c.b16 %v275, %v275
    %v293 = vpack.c.b8 %v292, %v292
    %v294 = vpack.c.b16 %v276, %v276
    %v295 = vpack.c.b8 %v294, %v294
    %v296 = vpack.c.b16 %v277, %v277
    %v297 = vpack.c.b8 %v296, %v296
    %v298 = vpack.c.b16 %v278, %v278
    %v299 = vpack.c.b8 %v298, %v298
    %v300 = vpack.c.b16 %v279, %v279
    %v301 = vpack.c.b8 %v300, %v300
    %v302 = vpack.c.b16 %v280, %v280
    %v303 = vpack.c.b8 %v302, %v302
    %v304 = vpack.c.b16 %v281, %v281
    %v305 = vpack.c.b8 %v304, %v304
    %v306 = vpack.c.b16 %v282, %v282
    %v307 = vpack.c.b8 %v306, %v306
    %v308 = vpack.c.b16 %v283, %v283
    %v309 = vpack.c.b8 %v308, %v308
    %v310 = vpack.c.b16 %v284, %v284
    %v311 = vpack.c.b8 %v310, %v310
    %v312 = vpack.c.b16 %v285, %v285
    %v313 = vpack.c.b8 %v312, %v312
    %v314 = vpack.c.b16 %v286, %v286
    %v315 = vpack.c.b8 %v314, %v314
    %v316 = vpack.c.b16 %v287, %v287
    %v317 = vpack.c.b8 %v316, %v316
    %v318 = vpack.c.b16 %v288, %v288
    %v319 = vpack.c.b8 %v318, %v318
    %v320 = vpack.c.b16 %v289, %v289
    %v321 = vpack.c.b8 %v320, %v320
    %vm322 = vnez %v291
    %vm323 = vnez %v293
    %vm324 = vnez %v295
    %vm325 = vnez %v297
    %vm326 = vnez %v299
    %vm327 = vnez %v301
    %vm328 = vnez %v303
    %vm329 = vnez %v305
    %vm330 = vnez %v307
    %vm331 = vnez %v309
    %vm332 = vnez %v311
    %vm333 = vnez %v313
    %vm334 = vnez %v315
    %vm335 = vnez %v317
    %vm336 = vnez %v319
    %vm337 = vnez %v321
    %v338 = vsel %vm322, 16843009, 0
    %v339 = vsel %vm323, 16843009, 0
    %v340 = vsel %vm324, 16843009, 0
    %v341 = vsel %vm325, 16843009, 0
    %v342 = vsel %vm326, 16843009, 0
    %v343 = vsel %vm327, 16843009, 0
    %v344 = vsel %vm328, 16843009, 0
    %v345 = vsel %vm329, 16843009, 0
    %v346 = vsel %vm330, 16843009, 0
    %v347 = vsel %vm331, 16843009, 0
    %v348 = vsel %vm332, 16843009, 0
    %v349 = vsel %vm333, 16843009, 0
    %v350 = vsel %vm334, 16843009, 0
    %v351 = vsel %vm335, 16843009, 0
    %v352 = vsel %vm336, 16843009, 0
    %v353 = vsel %vm337, 16843009, 0
    %v354 = vunpack.c.0.s8 %v338
    %v355 = vunpack.c.0.s8 %v339
    %v356 = vunpack.c.0.s8 %v340
    %v357 = vunpack.c.0.s8 %v341
    %v358 = vunpack.c.0.s8 %v342
    %v359 = vunpack.c.0.s8 %v343
    %v360 = vunpack.c.0.s8 %v344
    %v361 = vunpack.c.0.s8 %v345
    %v362 = vunpack.c.0.s8 %v346
    %v363 = vunpack.c.0.s8 %v347
    %v364 = vunpack.c.0.s8 %v348
    %v365 = vunpack.c.0.s8 %v349
    %v366 = vunpack.c.0.s8 %v350
    %v367 = vunpack.c.0.s8 %v351
    %v368 = vunpack.c.0.s8 %v352
    %v369 = vunpack.c.0.s8 %v353
    %vm370 = vcmp.ne.s32.totalorder %v354, 0
    %vm371 = vcmp.ne.s32.totalorder %v355, 0
    %vm372 = vcmp.ne.s32.totalorder %v356, 0
    %vm373 = vcmp.ne.s32.totalorder %v357, 0
    %vm374 = vcmp.ne.s32.totalorder %v358, 0
    %vm375 = vcmp.ne.s32.totalorder %v359, 0
    %vm376 = vcmp.ne.s32.totalorder %v360, 0
    %vm377 = vcmp.ne.s32.totalorder %v361, 0
    %vm378 = vcmp.ne.s32.totalorder %v362, 0
    %vm379 = vcmp.ne.s32.totalorder %v363, 0
    %vm380 = vcmp.ne.s32.totalorder %v364, 0
    %vm381 = vcmp.ne.s32.totalorder %v365, 0
    %vm382 = vcmp.ne.s32.totalorder %v366, 0
    %vm383 = vcmp.ne.s32.totalorder %v367, 0
    %vm384 = vcmp.ne.s32.totalorder %v368, 0
    %vm385 = vcmp.ne.s32.totalorder %v369, 0
    %v386 = vsel %vm370, %v254, -1e+30
    %v387 = vsel %vm371, %v255, -1e+30
    %v388 = vsel %vm372, %v256, -1e+30
    %v389 = vsel %vm373, %v257, -1e+30
    %v390 = vsel %vm374, %v258, -1e+30
    %v391 = vsel %vm375, %v259, -1e+30
    %v392 = vsel %vm376, %v260, -1e+30
    %v393 = vsel %vm377, %v261, -1e+30
    %v394 = vsel %vm378, %v262, -1e+30
    %v395 = vsel %vm379, %v263, -1e+30
    %v396 = vsel %vm380, %v264, -1e+30
    %v397 = vsel %vm381, %v265, -1e+30
    %v398 = vsel %vm382, %v266, -1e+30
    %v399 = vsel %vm383, %v267, -1e+30
    %v400 = vsel %vm384, %v268, -1e+30
    %v401 = vsel %vm385, %v269, -1e+30
    %v402 = vld [vmem:[#allocation3] sm:$0xff]
    %v403 = vld [vmem:[#allocation3 + $0x8] sm:$0xff]
    %v404 = vld [vmem:[#allocation3 + $0x10] sm:$0xff]
    %v405 = vld [vmem:[#allocation3 + $0x18] sm:$0xff]
    %v406 = vld [vmem:[#allocation3 + $0x20] sm:$0xff]
    %v407 = vld [vmem:[#allocation3 + $0x28] sm:$0xff]
    %v408 = vld [vmem:[#allocation3 + $0x30] sm:$0xff]
    %v409 = vld [vmem:[#allocation3 + $0x38] sm:$0xff]
    %v410 = vld [vmem:[#allocation3 + $0x40] sm:$0xff]
    %v411 = vld [vmem:[#allocation3 + $0x48] sm:$0xff]
    %v412 = vld [vmem:[#allocation3 + $0x50] sm:$0xff]
    %v413 = vld [vmem:[#allocation3 + $0x58] sm:$0xff]
    %v414 = vld [vmem:[#allocation3 + $0x60] sm:$0xff]
    %v415 = vld [vmem:[#allocation3 + $0x68] sm:$0xff]
    %v416 = vld [vmem:[#allocation3 + $0x70] sm:$0xff]
    %v417 = vld [vmem:[#allocation3 + $0x78] sm:$0xff]
    %418 = vmax.xlane.f32.xlu0 %v386
    %v419 = vpop.xlane.xlu0 %418
    %420 = vmax.xlane.f32.xlu0 %v387
    %v421 = vpop.xlane.xlu0 %420
    %422 = vmax.xlane.f32.xlu0 %v388
    %v423 = vpop.xlane.xlu0 %422
    %424 = vmax.xlane.f32.xlu0 %v389
    %v425 = vpop.xlane.xlu0 %424
    %426 = vmax.xlane.f32.xlu0 %v390
    %v427 = vpop.xlane.xlu0 %426
    %428 = vmax.xlane.f32.xlu0 %v391
    %v429 = vpop.xlane.xlu0 %428
    %430 = vmax.xlane.f32.xlu0 %v392
    %v431 = vpop.xlane.xlu0 %430
    %432 = vmax.xlane.f32.xlu0 %v393
    %v433 = vpop.xlane.xlu0 %432
    %434 = vmax.xlane.f32.xlu0 %v394
    %v435 = vpop.xlane.xlu0 %434
    %436 = vmax.xlane.f32.xlu0 %v395
    %v437 = vpop.xlane.xlu0 %436
    %438 = vmax.xlane.f32.xlu0 %v396
    %v439 = vpop.xlane.xlu0 %438
    %440 = vmax.xlane.f32.xlu0 %v397
    %v441 = vpop.xlane.xlu0 %440
    %442 = vmax.xlane.f32.xlu0 %v398
    %v443 = vpop.xlane.xlu0 %442
    %444 = vmax.xlane.f32.xlu0 %v399
    %v445 = vpop.xlane.xlu0 %444
    %446 = vmax.xlane.f32.xlu0 %v400
    %v447 = vpop.xlane.xlu0 %446
    %448 = vmax.xlane.f32.xlu0 %v401
    %v449 = vpop.xlane.xlu0 %448
    %v450 = vmax.f32 %v402, %v419
    %v451 = vmax.f32 %v403, %v421
    %v452 = vmax.f32 %v404, %v423
    %v453 = vmax.f32 %v405, %v425
    %v454 = vmax.f32 %v406, %v427
    %v455 = vmax.f32 %v407, %v429
    %v456 = vmax.f32 %v408, %v431
    %v457 = vmax.f32 %v409, %v433
    %v458 = vmax.f32 %v410, %v435
    %v459 = vmax.f32 %v411, %v437
    %v460 = vmax.f32 %v412, %v439
    %v461 = vmax.f32 %v413, %v441
    %v462 = vmax.f32 %v414, %v443
    %v463 = vmax.f32 %v415, %v445
    %v464 = vmax.f32 %v416, %v447
    %v465 = vmax.f32 %v417, %v449
    %v466 = vsub.f32 %v402, %v450
    %v467 = vsub.f32 %v403, %v451
    %v468 = vsub.f32 %v404, %v452
    %v469 = vsub.f32 %v405, %v453
    %v470 = vsub.f32 %v406, %v454
    %v471 = vsub.f32 %v407, %v455
    %v472 = vsub.f32 %v408, %v456
    %v473 = vsub.f32 %v409, %v457
    %v474 = vsub.f32 %v410, %v458
    %v475 = vsub.f32 %v411, %v459
    %v476 = vsub.f32 %v412, %v460
    %v477 = vsub.f32 %v413, %v461
    %v478 = vsub.f32 %v414, %v462
    %v479 = vsub.f32 %v415, %v463
    %v480 = vsub.f32 %v416, %v464
    %v481 = vsub.f32 %v417, %v465
    %v482 = vmul.f32 %v466, 1.442695
    %v483 = vpow.pop %v482
    %v484 = vmul.f32 %v467, 1.442695
    %v485 = vpow.pop %v484
    %v486 = vmul.f32 %v468, 1.442695
    %v487 = vpow.pop %v486
    %v488 = vmul.f32 %v469, 1.442695
    %v489 = vpow.pop %v488
    %v490 = vmul.f32 %v470, 1.442695
    %v491 = vpow.pop %v490
    %v492 = vmul.f32 %v471, 1.442695
    %v493 = vpow.pop %v492
    %v494 = vmul.f32 %v472, 1.442695
    %v495 = vpow.pop %v494
    %v496 = vmul.f32 %v473, 1.442695
    %v497 = vpow.pop %v496
    %v498 = vmul.f32 %v474, 1.442695
    %v499 = vpow.pop %v498
    %v500 = vmul.f32 %v475, 1.442695
    %v501 = vpow.pop %v500
    %v502 = vmul.f32 %v476, 1.442695
    %v503 = vpow.pop %v502
    %v504 = vmul.f32 %v477, 1.442695
    %v505 = vpow.pop %v504
    %v506 = vmul.f32 %v478, 1.442695
    %v507 = vpow.pop %v506
    %v508 = vmul.f32 %v479, 1.442695
    %v509 = vpow.pop %v508
    %v510 = vmul.f32 %v480, 1.442695
    %v511 = vpow.pop %v510
    %v512 = vmul.f32 %v481, 1.442695
    %v513 = vpow.pop %v512
    %515 = vset.pattern.permute.xlu0 0
    %516 = vperm.xlu0 %515, %v450
    %v517 = vpop.permute.xlu0 %516
    %520 = vset.pattern.permute.xlu0 0
    %521 = vperm.xlu0 %520, %v451
    %v522 = vpop.permute.xlu0 %521
    %525 = vset.pattern.permute.xlu0 0
    %526 = vperm.xlu0 %525, %v452
    %v527 = vpop.permute.xlu0 %526
    %530 = vset.pattern.permute.xlu0 0
    %531 = vperm.xlu0 %530, %v453
    %v532 = vpop.permute.xlu0 %531
    %535 = vset.pattern.permute.xlu0 0
    %536 = vperm.xlu0 %535, %v454
    %v537 = vpop.permute.xlu0 %536
    %540 = vset.pattern.permute.xlu0 0
    %541 = vperm.xlu0 %540, %v455
    %v542 = vpop.permute.xlu0 %541
    %545 = vset.pattern.permute.xlu0 0
    %546 = vperm.xlu0 %545, %v456
    %v547 = vpop.permute.xlu0 %546
    %550 = vset.pattern.permute.xlu0 0
    %551 = vperm.xlu0 %550, %v457
    %v552 = vpop.permute.xlu0 %551
    %555 = vset.pattern.permute.xlu0 0
    %556 = vperm.xlu0 %555, %v458
    %v557 = vpop.permute.xlu0 %556
    %560 = vset.pattern.permute.xlu0 0
    %561 = vperm.xlu0 %560, %v459
    %v562 = vpop.permute.xlu0 %561
    %565 = vset.pattern.permute.xlu0 0
    %566 = vperm.xlu0 %565, %v460
    %v567 = vpop.permute.xlu0 %566
    %570 = vset.pattern.permute.xlu0 0
    %571 = vperm.xlu0 %570, %v461
    %v572 = vpop.permute.xlu0 %571
    %575 = vset.pattern.permute.xlu0 0
    %576 = vperm.xlu0 %575, %v462
    %v577 = vpop.permute.xlu0 %576
    %580 = vset.pattern.permute.xlu0 0
    %581 = vperm.xlu0 %580, %v463
    %v582 = vpop.permute.xlu0 %581
    %585 = vset.pattern.permute.xlu0 0
    %586 = vperm.xlu0 %585, %v464
    %v587 = vpop.permute.xlu0 %586
    %590 = vset.pattern.permute.xlu0 0
    %591 = vperm.xlu0 %590, %v465
    %v592 = vpop.permute.xlu0 %591
    %v594 = vsub.f32 %v386, %v517
    %v595 = vsub.f32 %v387, %v522
    %v596 = vsub.f32 %v388, %v527
    %v597 = vsub.f32 %v389, %v532
    %v598 = vsub.f32 %v390, %v537
    %v599 = vsub.f32 %v391, %v542
    %v600 = vsub.f32 %v392, %v547
    %v601 = vsub.f32 %v393, %v552
    %v602 = vsub.f32 %v394, %v557
    %v603 = vsub.f32 %v395, %v562
    %v604 = vsub.f32 %v396, %v567
    %v605 = vsub.f32 %v397, %v572
    %v606 = vsub.f32 %v398, %v577
    %v607 = vsub.f32 %v399, %v582
    %v608 = vsub.f32 %v400, %v587
    %v609 = vsub.f32 %v401, %v592
    %v610 = vpack.c.bf16 %v595, %v594
    %v611 = vpack.c.bf16 %v597, %v596
    %v612 = vpack.c.bf16 %v599, %v598
    %v613 = vpack.c.bf16 %v601, %v600
    %v614 = vpack.c.bf16 %v603, %v602
    %v615 = vpack.c.bf16 %v605, %v604
    %v616 = vpack.c.bf16 %v607, %v606
    %v617 = vpack.c.bf16 %v609, %v608
    %v618 = vunpack.c.l.bf16 %v610
    %v619 = vunpack.c.h.bf16 %v610
    %v620 = vunpack.c.l.bf16 %v611
    %v621 = vunpack.c.h.bf16 %v611
    %v622 = vunpack.c.l.bf16 %v612
    %v623 = vunpack.c.h.bf16 %v612
    %v624 = vunpack.c.l.bf16 %v613
    %v625 = vunpack.c.h.bf16 %v613
    %v626 = vunpack.c.l.bf16 %v614
    %v627 = vunpack.c.h.bf16 %v614
    %v628 = vunpack.c.l.bf16 %v615
    %v629 = vunpack.c.h.bf16 %v615
    %v630 = vunpack.c.l.bf16 %v616
    %v631 = vunpack.c.h.bf16 %v616
    %v632 = vunpack.c.l.bf16 %v617
    %v633 = vunpack.c.h.bf16 %v617
    %v634 = vmul.f32 %v618, 1.442695
    %v635 = vpow.pop %v634
    %v636 = vmul.f32 %v619, 1.442695
    %v637 = vpow.pop %v636
    %v638 = vmul.f32 %v620, 1.442695
    %v639 = vpow.pop %v638
    %v640 = vmul.f32 %v621, 1.442695
    %v641 = vpow.pop %v640
    %v642 = vmul.f32 %v622, 1.442695
    %v643 = vpow.pop %v642
    %v644 = vmul.f32 %v623, 1.442695
    %v645 = vpow.pop %v644
    %v646 = vmul.f32 %v624, 1.442695
    %v647 = vpow.pop %v646
    %v648 = vmul.f32 %v625, 1.442695
    %v649 = vpow.pop %v648
    %v650 = vmul.f32 %v626, 1.442695
    %v651 = vpow.pop %v650
    %v652 = vmul.f32 %v627, 1.442695
    %v653 = vpow.pop %v652
    %v654 = vmul.f32 %v628, 1.442695
    %v655 = vpow.pop %v654
    %v656 = vmul.f32 %v629, 1.442695
    %v657 = vpow.pop %v656
    %v658 = vmul.f32 %v630, 1.442695
    %v659 = vpow.pop %v658
    %v660 = vmul.f32 %v631, 1.442695
    %v661 = vpow.pop %v660
    %v662 = vmul.f32 %v632, 1.442695
    %v663 = vpow.pop %v662
    %v664 = vmul.f32 %v633, 1.442695
    %v665 = vpow.pop %v664
    %v666 = vpack.c.bf16 %v637, %v635
    %v667 = vpack.c.bf16 %v641, %v639
    %v668 = vpack.c.bf16 %v645, %v643
    %v669 = vpack.c.bf16 %v649, %v647
    %v670 = vpack.c.bf16 %v653, %v651
    %v671 = vpack.c.bf16 %v657, %v655
    %v672 = vpack.c.bf16 %v661, %v659
    %v673 = vpack.c.bf16 %v665, %v663
    %v674 = vunpack.c.l.bf16 %v666
    %v675 = vunpack.c.h.bf16 %v666
    %v676 = vunpack.c.l.bf16 %v667
    %v677 = vunpack.c.h.bf16 %v667
    %v678 = vunpack.c.l.bf16 %v668
    %v679 = vunpack.c.h.bf16 %v668
    %v680 = vunpack.c.l.bf16 %v669
    %v681 = vunpack.c.h.bf16 %v669
    %v682 = vunpack.c.l.bf16 %v670
    %v683 = vunpack.c.h.bf16 %v670
    %v684 = vunpack.c.l.bf16 %v671
    %v685 = vunpack.c.h.bf16 %v671
    %v686 = vunpack.c.l.bf16 %v672
    %v687 = vunpack.c.h.bf16 %v672
    %v688 = vunpack.c.l.bf16 %v673
    %v689 = vunpack.c.h.bf16 %v673
    %690 = vadd.xlane.f32.xlu0 %v674
    %v691 = vpop.xlane.xlu0 %690
    %692 = vadd.xlane.f32.xlu0 %v675
    %v693 = vpop.xlane.xlu0 %692
    %694 = vadd.xlane.f32.xlu0 %v676
    %v695 = vpop.xlane.xlu0 %694
    %696 = vadd.xlane.f32.xlu0 %v677
    %v697 = vpop.xlane.xlu0 %696
    %698 = vadd.xlane.f32.xlu0 %v678
    %v699 = vpop.xlane.xlu0 %698
    %700 = vadd.xlane.f32.xlu0 %v679
    %v701 = vpop.xlane.xlu0 %700
    %702 = vadd.xlane.f32.xlu0 %v680
    %v703 = vpop.xlane.xlu0 %702
    %704 = vadd.xlane.f32.xlu0 %v681
    %v705 = vpop.xlane.xlu0 %704
    %706 = vadd.xlane.f32.xlu0 %v682
    %v707 = vpop.xlane.xlu0 %706
    %708 = vadd.xlane.f32.xlu0 %v683
    %v709 = vpop.xlane.xlu0 %708
    %710 = vadd.xlane.f32.xlu0 %v684
    %v711 = vpop.xlane.xlu0 %710
    %712 = vadd.xlane.f32.xlu0 %v685
    %v713 = vpop.xlane.xlu0 %712
    %714 = vadd.xlane.f32.xlu0 %v686
    %v715 = vpop.xlane.xlu0 %714
    %716 = vadd.xlane.f32.xlu0 %v687
    %v717 = vpop.xlane.xlu0 %716
    %718 = vadd.xlane.f32.xlu0 %v688
    %v719 = vpop.xlane.xlu0 %718
    %720 = vadd.xlane.f32.xlu0 %v689
    %v721 = vpop.xlane.xlu0 %720
    %v738 = vunpack.c.l.b16 %v92
    %v739 = vunpack.c.l.b16 %v93
    %v740 = vunpack.c.l.b16 %v94
    %v741 = vunpack.c.l.b16 %v95
    %v742 = vunpack.c.l.b16 %v96
    %v743 = vunpack.c.l.b16 %v97
    %v744 = vunpack.c.l.b16 %v98
    %v745 = vunpack.c.l.b16 %v99
    %v746 = vunpack.c.l.b16 %v100
    %v747 = vunpack.c.l.b16 %v101
    %v748 = vunpack.c.l.b16 %v102
    %v749 = vunpack.c.l.b16 %v103
    %v750 = vunpack.c.l.b16 %v104
    %v751 = vunpack.c.l.b16 %v105
    %v752 = vunpack.c.l.b16 %v106
    %v753 = vunpack.c.l.b16 %v107
    %v754 = vpack.c.b16 %v739, %v738
    %v755 = vpack.c.b16 %v741, %v740
    %v756 = vpack.c.b16 %v743, %v742
    %v757 = vpack.c.b16 %v745, %v744
    %v758 = vpack.c.b16 %v747, %v746
    %v759 = vpack.c.b16 %v749, %v748
    %v760 = vpack.c.b16 %v751, %v750
    %v761 = vpack.c.b16 %v753, %v752
    %770 = vmatpush.bf16.msra.mxu0 %v761
    %771 = vmatpush.bf16.msra.mxu0 %v760
    %772 = vmatpush.bf16.msra.mxu0 %v759
    %773 = vmatpush.bf16.msra.mxu0 %v758
    %774 = vmatpush.bf16.msra.mxu0 %v757
    %775 = vmatpush.bf16.msra.mxu0 %v756
    %776 = vmatpush.bf16.msra.mxu0 %v755
    %777 = vmatpush.bf16.msra.mxu0 %v754
    %778 = vmatmul.bf16.gmra.mxu0 %v666
    %v779 = vpop.f32.mrf.mxu0
    %v780 = vadd.f32 0.0, %v779
    %v781 = vpop.f32.mrf.mxu0
    %v782 = vadd.f32 0.0, %v781
    %783 = vmatmul.bf16.gmra.mxu0 %v667
    %v784 = vpop.f32.mrf.mxu0
    %v785 = vadd.f32 0.0, %v784
    %v786 = vpop.f32.mrf.mxu0
    %v787 = vadd.f32 0.0, %v786
    %788 = vmatmul.bf16.gmra.mxu0 %v668
    %v789 = vpop.f32.mrf.mxu0
    %v790 = vadd.f32 0.0, %v789
    %v791 = vpop.f32.mrf.mxu0
    %v792 = vadd.f32 0.0, %v791
    %793 = vmatmul.bf16.gmra.mxu0 %v669
    %v794 = vpop.f32.mrf.mxu0
    %v795 = vadd.f32 0.0, %v794
    %v796 = vpop.f32.mrf.mxu0
    %v797 = vadd.f32 0.0, %v796
    %798 = vmatmul.bf16.gmra.mxu0 %v670
    %v799 = vpop.f32.mrf.mxu0
    %v800 = vadd.f32 0.0, %v799
    %v801 = vpop.f32.mrf.mxu0
    %v802 = vadd.f32 0.0, %v801
    %803 = vmatmul.bf16.gmra.mxu0 %v671
    %v804 = vpop.f32.mrf.mxu0
    %v805 = vadd.f32 0.0, %v804
    %v806 = vpop.f32.mrf.mxu0
    %v807 = vadd.f32 0.0, %v806
    %808 = vmatmul.bf16.gmra.mxu0 %v672
    %v809 = vpop.f32.mrf.mxu0
    %v810 = vadd.f32 0.0, %v809
    %v811 = vpop.f32.mrf.mxu0
    %v812 = vadd.f32 0.0, %v811
    %813 = vmatmul.bf16.gmra.mxu0 %v673
    %v814 = vpop.f32.mrf.mxu0
    %v815 = vadd.f32 0.0, %v814
    %v816 = vpop.f32.mrf.mxu0
    %v817 = vadd.f32 0.0, %v816
    %818 = vdwg.mxu0
    %v819 = vld [vmem:[#allocation4] sm:$0xff]
    %v820 = vld [vmem:[#allocation4 + $0x8] sm:$0xff]
    %v821 = vld [vmem:[#allocation4 + $0x10] sm:$0xff]
    %v822 = vld [vmem:[#allocation4 + $0x18] sm:$0xff]
    %v823 = vld [vmem:[#allocation4 + $0x20] sm:$0xff]
    %v824 = vld [vmem:[#allocation4 + $0x28] sm:$0xff]
    %v825 = vld [vmem:[#allocation4 + $0x30] sm:$0xff]
    %v826 = vld [vmem:[#allocation4 + $0x38] sm:$0xff]
    %v827 = vld [vmem:[#allocation4 + $0x40] sm:$0xff]
    %v828 = vld [vmem:[#allocation4 + $0x48] sm:$0xff]
    %v829 = vld [vmem:[#allocation4 + $0x50] sm:$0xff]
    %v830 = vld [vmem:[#allocation4 + $0x58] sm:$0xff]
    %v831 = vld [vmem:[#allocation4 + $0x60] sm:$0xff]
    %v832 = vld [vmem:[#allocation4 + $0x68] sm:$0xff]
    %v833 = vld [vmem:[#allocation4 + $0x70] sm:$0xff]
    %v834 = vld [vmem:[#allocation4 + $0x78] sm:$0xff]
    %v835 = vmul.f32 %v483, %v819
    %v836 = vmul.f32 %v485, %v820
    %v837 = vmul.f32 %v487, %v821
    %v838 = vmul.f32 %v489, %v822
    %v839 = vmul.f32 %v491, %v823
    %v840 = vmul.f32 %v493, %v824
    %v841 = vmul.f32 %v495, %v825
    %v842 = vmul.f32 %v497, %v826
    %v843 = vmul.f32 %v499, %v827
    %v844 = vmul.f32 %v501, %v828
    %v845 = vmul.f32 %v503, %v829
    %v846 = vmul.f32 %v505, %v830
    %v847 = vmul.f32 %v507, %v831
    %v848 = vmul.f32 %v509, %v832
    %v849 = vmul.f32 %v511, %v833
    %v850 = vmul.f32 %v513, %v834
    %v851 = vadd.f32 %v835, %v691
    %v852 = vadd.f32 %v836, %v693
    %v853 = vadd.f32 %v837, %v695
    %v854 = vadd.f32 %v838, %v697
    %v855 = vadd.f32 %v839, %v699
    %v856 = vadd.f32 %v840, %v701
    %v857 = vadd.f32 %v841, %v703
    %v858 = vadd.f32 %v842, %v705
    %v859 = vadd.f32 %v843, %v707
    %v860 = vadd.f32 %v844, %v709
    %v861 = vadd.f32 %v845, %v711
    %v862 = vadd.f32 %v846, %v713
    %v863 = vadd.f32 %v847, %v715
    %v864 = vadd.f32 %v848, %v717
    %v865 = vadd.f32 %v849, %v719
    %v866 = vadd.f32 %v850, %v721
    %vm867 = vcmask 7168
    %868 = vst.msk [vmem:[#allocation4] sm:$0xff] %vm867, %v851
    %869 = vst.msk [vmem:[#allocation4 + $0x8] sm:$0xff] %vm867, %v852
    %870 = vst.msk [vmem:[#allocation4 + $0x10] sm:$0xff] %vm867, %v853
    %871 = vst.msk [vmem:[#allocation4 + $0x18] sm:$0xff] %vm867, %v854
    %872 = vst.msk [vmem:[#allocation4 + $0x20] sm:$0xff] %vm867, %v855
    %873 = vst.msk [vmem:[#allocation4 + $0x28] sm:$0xff] %vm867, %v856
    %874 = vst.msk [vmem:[#allocation4 + $0x30] sm:$0xff] %vm867, %v857
    %875 = vst.msk [vmem:[#allocation4 + $0x38] sm:$0xff] %vm867, %v858
    %876 = vst.msk [vmem:[#allocation4 + $0x40] sm:$0xff] %vm867, %v859
    %877 = vst.msk [vmem:[#allocation4 + $0x48] sm:$0xff] %vm867, %v860
    %878 = vst.msk [vmem:[#allocation4 + $0x50] sm:$0xff] %vm867, %v861
    %879 = vst.msk [vmem:[#allocation4 + $0x58] sm:$0xff] %vm867, %v862
    %880 = vst.msk [vmem:[#allocation4 + $0x60] sm:$0xff] %vm867, %v863
    %881 = vst.msk [vmem:[#allocation4 + $0x68] sm:$0xff] %vm867, %v864
    %882 = vst.msk [vmem:[#allocation4 + $0x70] sm:$0xff] %vm867, %v865
    %883 = vst.msk [vmem:[#allocation4 + $0x78] sm:$0xff] %vm867, %v866
    %v884 = vld [vmem:[#allocation2] sm:$0xff]
    %v885 = vld [vmem:[#allocation2 + $0x8] sm:$0xff]
    %v886 = vld [vmem:[#allocation2 + $0x10] sm:$0xff]
    %v887 = vld [vmem:[#allocation2 + $0x18] sm:$0xff]
    %v888 = vld [vmem:[#allocation2 + $0x20] sm:$0xff]
    %v889 = vld [vmem:[#allocation2 + $0x28] sm:$0xff]
    %v890 = vld [vmem:[#allocation2 + $0x30] sm:$0xff]
    %v891 = vld [vmem:[#allocation2 + $0x38] sm:$0xff]
    %v892 = vld [vmem:[#allocation2 + $0x40] sm:$0xff]
    %v893 = vld [vmem:[#allocation2 + $0x48] sm:$0xff]
    %v894 = vld [vmem:[#allocation2 + $0x50] sm:$0xff]
    %v895 = vld [vmem:[#allocation2 + $0x58] sm:$0xff]
    %v896 = vld [vmem:[#allocation2 + $0x60] sm:$0xff]
    %v897 = vld [vmem:[#allocation2 + $0x68] sm:$0xff]
    %v898 = vld [vmem:[#allocation2 + $0x70] sm:$0xff]
    %v899 = vld [vmem:[#allocation2 + $0x78] sm:$0xff]
    %901 = vset.pattern.permute.xlu0 0
    %902 = vperm.xlu0 %901, %v483
    %v903 = vpop.permute.xlu0 %902
    %906 = vset.pattern.permute.xlu0 0
    %907 = vperm.xlu0 %906, %v485
    %v908 = vpop.permute.xlu0 %907
    %911 = vset.pattern.permute.xlu0 0
    %912 = vperm.xlu0 %911, %v487
    %v913 = vpop.permute.xlu0 %912
    %916 = vset.pattern.permute.xlu0 0
    %917 = vperm.xlu0 %916, %v489
    %v918 = vpop.permute.xlu0 %917
    %921 = vset.pattern.permute.xlu0 0
    %922 = vperm.xlu0 %921, %v491
    %v923 = vpop.permute.xlu0 %922
    %926 = vset.pattern.permute.xlu0 0
    %927 = vperm.xlu0 %926, %v493
    %v928 = vpop.permute.xlu0 %927
    %931 = vset.pattern.permute.xlu0 0
    %932 = vperm.xlu0 %931, %v495
    %v933 = vpop.permute.xlu0 %932
    %936 = vset.pattern.permute.xlu0 0
    %937 = vperm.xlu0 %936, %v497
    %v938 = vpop.permute.xlu0 %937
    %941 = vset.pattern.permute.xlu0 0
    %942 = vperm.xlu0 %941, %v499
    %v943 = vpop.permute.xlu0 %942
    %946 = vset.pattern.permute.xlu0 0
    %947 = vperm.xlu0 %946, %v501
    %v948 = vpop.permute.xlu0 %947
    %951 = vset.pattern.permute.xlu0 0
    %952 = vperm.xlu0 %951, %v503
    %v953 = vpop.permute.xlu0 %952
    %956 = vset.pattern.permute.xlu0 0
    %957 = vperm.xlu0 %956, %v505
    %v958 = vpop.permute.xlu0 %957
    %961 = vset.pattern.permute.xlu0 0
    %962 = vperm.xlu0 %961, %v507
    %v963 = vpop.permute.xlu0 %962
    %966 = vset.pattern.permute.xlu0 0
    %967 = vperm.xlu0 %966, %v509
    %v968 = vpop.permute.xlu0 %967
    %971 = vset.pattern.permute.xlu0 0
    %972 = vperm.xlu0 %971, %v511
    %v973 = vpop.permute.xlu0 %972
    %976 = vset.pattern.permute.xlu0 0
    %977 = vperm.xlu0 %976, %v513
    %v978 = vpop.permute.xlu0 %977
    %v980 = vmul.f32 %v903, %v884
    %v981 = vmul.f32 %v908, %v885
    %v982 = vmul.f32 %v913, %v886
    %v983 = vmul.f32 %v918, %v887
    %v984 = vmul.f32 %v923, %v888
    %v985 = vmul.f32 %v928, %v889
    %v986 = vmul.f32 %v933, %v890
    %v987 = vmul.f32 %v938, %v891
    %v988 = vmul.f32 %v943, %v892
    %v989 = vmul.f32 %v948, %v893
    %v990 = vmul.f32 %v953, %v894
    %v991 = vmul.f32 %v958, %v895
    %v992 = vmul.f32 %v963, %v896
    %v993 = vmul.f32 %v968, %v897
    %v994 = vmul.f32 %v973, %v898
    %v995 = vmul.f32 %v978, %v899
    %v996 = vadd.f32 %v980, %v780
    %v997 = vadd.f32 %v981, %v782
    %v998 = vadd.f32 %v982, %v785
    %v999 = vadd.f32 %v983, %v787
    %v1000 = vadd.f32 %v984, %v790
    %v1001 = vadd.f32 %v985, %v792
    %v1002 = vadd.f32 %v986, %v795
    %v1003 = vadd.f32 %v987, %v797
    %v1004 = vadd.f32 %v988, %v800
    %v1005 = vadd.f32 %v989, %v802
    %v1006 = vadd.f32 %v990, %v805
    %v1007 = vadd.f32 %v991, %v807
    %v1008 = vadd.f32 %v992, %v810
    %v1009 = vadd.f32 %v993, %v812
    %v1010 = vadd.f32 %v994, %v815
    %v1011 = vadd.f32 %v995, %v817
    %vm1012 = vcmask 64512
    %1013 = vst.msk [vmem:[#allocation2] sm:$0xff] %vm1012, %v996
    %1014 = vst.msk [vmem:[#allocation2 + $0x8] sm:$0xff] %vm1012, %v997
    %1015 = vst.msk [vmem:[#allocation2 + $0x10] sm:$0xff] %vm1012, %v998
    %1016 = vst.msk [vmem:[#allocation2 + $0x18] sm:$0xff] %vm1012, %v999
    %1017 = vst.msk [vmem:[#allocation2 + $0x20] sm:$0xff] %vm1012, %v1000
    %1018 = vst.msk [vmem:[#allocation2 + $0x28] sm:$0xff] %vm1012, %v1001
    %1019 = vst.msk [vmem:[#allocation2 + $0x30] sm:$0xff] %vm1012, %v1002
    %1020 = vst.msk [vmem:[#allocation2 + $0x38] sm:$0xff] %vm1012, %v1003
    %1021 = vst.msk [vmem:[#allocation2 + $0x40] sm:$0xff] %vm1012, %v1004
    %1022 = vst.msk [vmem:[#allocation2 + $0x48] sm:$0xff] %vm1012, %v1005
    %1023 = vst.msk [vmem:[#allocation2 + $0x50] sm:$0xff] %vm1012, %v1006
    %1024 = vst.msk [vmem:[#allocation2 + $0x58] sm:$0xff] %vm1012, %v1007
    %1025 = vst.msk [vmem:[#allocation2 + $0x60] sm:$0xff] %vm1012, %v1008
    %1026 = vst.msk [vmem:[#allocation2 + $0x68] sm:$0xff] %vm1012, %v1009
    %1027 = vst.msk [vmem:[#allocation2 + $0x70] sm:$0xff] %vm1012, %v1010
    %1028 = vst.msk [vmem:[#allocation2 + $0x78] sm:$0xff] %vm1012, %v1011
    %1029 = vst.msk [vmem:[#allocation3] sm:$0xff] %vm867, %v450
    %1030 = vst.msk [vmem:[#allocation3 + $0x8] sm:$0xff] %vm867, %v451
    %1031 = vst.msk [vmem:[#allocation3 + $0x10] sm:$0xff] %vm867, %v452
    %1032 = vst.msk [vmem:[#allocation3 + $0x18] sm:$0xff] %vm867, %v453
    %1033 = vst.msk [vmem:[#allocation3 + $0x20] sm:$0xff] %vm867, %v454
    %1034 = vst.msk [vmem:[#allocation3 + $0x28] sm:$0xff] %vm867, %v455
    %1035 = vst.msk [vmem:[#allocation3 + $0x30] sm:$0xff] %vm867, %v456
    %1036 = vst.msk [vmem:[#allocation3 + $0x38] sm:$0xff] %vm867, %v457
    %1037 = vst.msk [vmem:[#allocation3 + $0x40] sm:$0xff] %vm867, %v458
    %1038 = vst.msk [vmem:[#allocation3 + $0x48] sm:$0xff] %vm867, %v459
    %1039 = vst.msk [vmem:[#allocation3 + $0x50] sm:$0xff] %vm867, %v460
    %1040 = vst.msk [vmem:[#allocation3 + $0x58] sm:$0xff] %vm867, %v461
    %1041 = vst.msk [vmem:[#allocation3 + $0x60] sm:$0xff] %vm867, %v462
    %1042 = vst.msk [vmem:[#allocation3 + $0x68] sm:$0xff] %vm867, %v463
    %1043 = vst.msk [vmem:[#allocation3 + $0x70] sm:$0xff] %vm867, %v464
    %1044 = vst.msk [vmem:[#allocation3 + $0x78] sm:$0xff] %vm867, %v465
    %1045 = vset.pattern.permute.xlu0 1
    %1046 = vperm.xlu0 %1045, %v109
    %v1047 = vpop.permute.xlu0 %1046
    %1049 = vset.pattern.permute.xlu0 1
    %1050 = vperm.xlu0 %1049, %v110
    %v1051 = vpop.permute.xlu0 %1050
    %1053 = vset.pattern.permute.xlu0 1
    %1054 = vperm.xlu0 %1053, %v111
    %v1055 = vpop.permute.xlu0 %1054
    %1057 = vset.pattern.permute.xlu0 1
    %1058 = vperm.xlu0 %1057, %v112
    %v1059 = vpop.permute.xlu0 %1058
    %1061 = vset.pattern.permute.xlu0 1
    %1062 = vperm.xlu0 %1061, %v113
    %v1063 = vpop.permute.xlu0 %1062
    %1065 = vset.pattern.permute.xlu0 1
    %1066 = vperm.xlu0 %1065, %v114
    %v1067 = vpop.permute.xlu0 %1066
    %1069 = vset.pattern.permute.xlu0 1
    %1070 = vperm.xlu0 %1069, %v115
    %v1071 = vpop.permute.xlu0 %1070
    %1073 = vset.pattern.permute.xlu0 1
    %1074 = vperm.xlu0 %1073, %v116
    %v1075 = vpop.permute.xlu0 %1074
    %1077 = vset.pattern.permute.xlu0 1
    %1078 = vperm.xlu0 %1077, %v117
    %v1079 = vpop.permute.xlu0 %1078
    %1081 = vset.pattern.permute.xlu0 1
    %1082 = vperm.xlu0 %1081, %v118
    %v1083 = vpop.permute.xlu0 %1082
    %1085 = vset.pattern.permute.xlu0 1
    %1086 = vperm.xlu0 %1085, %v119
    %v1087 = vpop.permute.xlu0 %1086
    %1089 = vset.pattern.permute.xlu0 1
    %1090 = vperm.xlu0 %1089, %v120
    %v1091 = vpop.permute.xlu0 %1090
    %1093 = vset.pattern.permute.xlu0 1
    %1094 = vperm.xlu0 %1093, %v121
    %v1095 = vpop.permute.xlu0 %1094
    %1097 = vset.pattern.permute.xlu0 1
    %1098 = vperm.xlu0 %1097, %v122
    %v1099 = vpop.permute.xlu0 %1098
    %1101 = vset.pattern.permute.xlu0 1
    %1102 = vperm.xlu0 %1101, %v123
    %v1103 = vpop.permute.xlu0 %1102
    %1105 = vset.pattern.permute.xlu0 1
    %1106 = vperm.xlu0 %1105, %v124
    %v1107 = vpop.permute.xlu0 %1106
    %v1109 = vperm.slane %v108, 1
    %v1110 = vadd.f32 %v1047, %v1109
    %v1111 = vadd.f32 %v1051, %v1109
    %v1112 = vadd.f32 %v1055, %v1109
    %v1113 = vadd.f32 %v1059, %v1109
    %v1114 = vadd.f32 %v1063, %v1109
    %v1115 = vadd.f32 %v1067, %v1109
    %v1116 = vadd.f32 %v1071, %v1109
    %v1117 = vadd.f32 %v1075, %v1109
    %v1118 = vadd.f32 %v1079, %v1109
    %v1119 = vadd.f32 %v1083, %v1109
    %v1120 = vadd.f32 %v1087, %v1109
    %v1121 = vadd.f32 %v1091, %v1109
    %v1122 = vadd.f32 %v1095, %v1109
    %v1123 = vadd.f32 %v1099, %v1109
    %v1124 = vadd.f32 %v1103, %v1109
    %v1125 = vadd.f32 %v1107, %v1109
    %vm1126 = vcmp.gt.f32.partialorder %v1110, 0.0
    %vm1127 = vcmp.gt.f32.partialorder %v1111, 0.0
    %vm1128 = vcmp.gt.f32.partialorder %v1112, 0.0
    %vm1129 = vcmp.gt.f32.partialorder %v1113, 0.0
    %vm1130 = vcmp.gt.f32.partialorder %v1114, 0.0
    %vm1131 = vcmp.gt.f32.partialorder %v1115, 0.0
    %vm1132 = vcmp.gt.f32.partialorder %v1116, 0.0
    %vm1133 = vcmp.gt.f32.partialorder %v1117, 0.0
    %vm1134 = vcmp.gt.f32.partialorder %v1118, 0.0
    %vm1135 = vcmp.gt.f32.partialorder %v1119, 0.0
    %vm1136 = vcmp.gt.f32.partialorder %v1120, 0.0
    %vm1137 = vcmp.gt.f32.partialorder %v1121, 0.0
    %vm1138 = vcmp.gt.f32.partialorder %v1122, 0.0
    %vm1139 = vcmp.gt.f32.partialorder %v1123, 0.0
    %vm1140 = vcmp.gt.f32.partialorder %v1124, 0.0
    %vm1141 = vcmp.gt.f32.partialorder %v1125, 0.0
    %v1142 = vmul.f32 %v1110, 0.2
    %v1143 = vmul.f32 %v1111, 0.2
    %v1144 = vmul.f32 %v1112, 0.2
    %v1145 = vmul.f32 %v1113, 0.2
    %v1146 = vmul.f32 %v1114, 0.2
    %v1147 = vmul.f32 %v1115, 0.2
    %v1148 = vmul.f32 %v1116, 0.2
    %v1149 = vmul.f32 %v1117, 0.2
    %v1150 = vmul.f32 %v1118, 0.2
    %v1151 = vmul.f32 %v1119, 0.2
    %v1152 = vmul.f32 %v1120, 0.2
    %v1153 = vmul.f32 %v1121, 0.2
    %v1154 = vmul.f32 %v1122, 0.2
    %v1155 = vmul.f32 %v1123, 0.2
    %v1156 = vmul.f32 %v1124, 0.2
    %v1157 = vmul.f32 %v1125, 0.2
    %v1158 = vsel %vm1126, %v1110, %v1142
    %v1159 = vsel %vm1127, %v1111, %v1143
    %v1160 = vsel %vm1128, %v1112, %v1144
    %v1161 = vsel %vm1129, %v1113, %v1145
    %v1162 = vsel %vm1130, %v1114, %v1146
    %v1163 = vsel %vm1131, %v1115, %v1147
    %v1164 = vsel %vm1132, %v1116, %v1148
    %v1165 = vsel %vm1133, %v1117, %v1149
    %v1166 = vsel %vm1134, %v1118, %v1150
    %v1167 = vsel %vm1135, %v1119, %v1151
    %v1168 = vsel %vm1136, %v1120, %v1152
    %v1169 = vsel %vm1137, %v1121, %v1153
    %v1170 = vsel %vm1138, %v1122, %v1154
    %v1171 = vsel %vm1139, %v1123, %v1155
    %v1172 = vsel %vm1140, %v1124, %v1156
    %v1173 = vsel %vm1141, %v1125, %v1157
    %v1174 = vsel %vm370, %v1158, -1e+30
    %v1175 = vsel %vm371, %v1159, -1e+30
    %v1176 = vsel %vm372, %v1160, -1e+30
    %v1177 = vsel %vm373, %v1161, -1e+30
    %v1178 = vsel %vm374, %v1162, -1e+30
    %v1179 = vsel %vm375, %v1163, -1e+30
    %v1180 = vsel %vm376, %v1164, -1e+30
    %v1181 = vsel %vm377, %v1165, -1e+30
    %v1182 = vsel %vm378, %v1166, -1e+30
    %v1183 = vsel %vm379, %v1167, -1e+30
    %v1184 = vsel %vm380, %v1168, -1e+30
    %v1185 = vsel %vm381, %v1169, -1e+30
    %v1186 = vsel %vm382, %v1170, -1e+30
    %v1187 = vsel %vm383, %v1171, -1e+30
    %v1188 = vsel %vm384, %v1172, -1e+30
    %v1189 = vsel %vm385, %v1173, -1e+30
    %v1190 = vld [vmem:[#allocation3] sm:$0xff]
    %v1191 = vld [vmem:[#allocation3 + $0x8] sm:$0xff]
    %v1192 = vld [vmem:[#allocation3 + $0x10] sm:$0xff]
    %v1193 = vld [vmem:[#allocation3 + $0x18] sm:$0xff]
    %v1194 = vld [vmem:[#allocation3 + $0x20] sm:$0xff]
    %v1195 = vld [vmem:[#allocation3 + $0x28] sm:$0xff]
    %v1196 = vld [vmem:[#allocation3 + $0x30] sm:$0xff]
    %v1197 = vld [vmem:[#allocation3 + $0x38] sm:$0xff]
    %v1198 = vld [vmem:[#allocation3 + $0x40] sm:$0xff]
    %v1199 = vld [vmem:[#allocation3 + $0x48] sm:$0xff]
    %v1200 = vld [vmem:[#allocation3 + $0x50] sm:$0xff]
    %v1201 = vld [vmem:[#allocation3 + $0x58] sm:$0xff]
    %v1202 = vld [vmem:[#allocation3 + $0x60] sm:$0xff]
    %v1203 = vld [vmem:[#allocation3 + $0x68] sm:$0xff]
    %v1204 = vld [vmem:[#allocation3 + $0x70] sm:$0xff]
    %v1205 = vld [vmem:[#allocation3 + $0x78] sm:$0xff]
    %1206 = vmax.xlane.f32.xlu0 %v1174
    %v1207 = vpop.xlane.xlu0 %1206
    %1208 = vmax.xlane.f32.xlu0 %v1175
    %v1209 = vpop.xlane.xlu0 %1208
    %1210 = vmax.xlane.f32.xlu0 %v1176
    %v1211 = vpop.xlane.xlu0 %1210
    %1212 = vmax.xlane.f32.xlu0 %v1177
    %v1213 = vpop.xlane.xlu0 %1212
    %1214 = vmax.xlane.f32.xlu0 %v1178
    %v1215 = vpop.xlane.xlu0 %1214
    %1216 = vmax.xlane.f32.xlu0 %v1179
    %v1217 = vpop.xlane.xlu0 %1216
    %1218 = vmax.xlane.f32.xlu0 %v1180
    %v1219 = vpop.xlane.xlu0 %1218
    %1220 = vmax.xlane.f32.xlu0 %v1181
    %v1221 = vpop.xlane.xlu0 %1220
    %1222 = vmax.xlane.f32.xlu0 %v1182
    %v1223 = vpop.xlane.xlu0 %1222
    %1224 = vmax.xlane.f32.xlu0 %v1183
    %v1225 = vpop.xlane.xlu0 %1224
    %1226 = vmax.xlane.f32.xlu0 %v1184
    %v1227 = vpop.xlane.xlu0 %1226
    %1228 = vmax.xlane.f32.xlu0 %v1185
    %v1229 = vpop.xlane.xlu0 %1228
    %1230 = vmax.xlane.f32.xlu0 %v1186
    %v1231 = vpop.xlane.xlu0 %1230
    %1232 = vmax.xlane.f32.xlu0 %v1187
    %v1233 = vpop.xlane.xlu0 %1232
    %1234 = vmax.xlane.f32.xlu0 %v1188
    %v1235 = vpop.xlane.xlu0 %1234
    %1236 = vmax.xlane.f32.xlu0 %v1189
    %v1237 = vpop.xlane.xlu0 %1236
    %v1238 = vmax.f32 %v1190, %v1207
    %v1239 = vmax.f32 %v1191, %v1209
    %v1240 = vmax.f32 %v1192, %v1211
    %v1241 = vmax.f32 %v1193, %v1213
    %v1242 = vmax.f32 %v1194, %v1215
    %v1243 = vmax.f32 %v1195, %v1217
    %v1244 = vmax.f32 %v1196, %v1219
    %v1245 = vmax.f32 %v1197, %v1221
    %v1246 = vmax.f32 %v1198, %v1223
    %v1247 = vmax.f32 %v1199, %v1225
    %v1248 = vmax.f32 %v1200, %v1227
    %v1249 = vmax.f32 %v1201, %v1229
    %v1250 = vmax.f32 %v1202, %v1231
    %v1251 = vmax.f32 %v1203, %v1233
    %v1252 = vmax.f32 %v1204, %v1235
    %v1253 = vmax.f32 %v1205, %v1237
    %v1254 = vsub.f32 %v1190, %v1238
    %v1255 = vsub.f32 %v1191, %v1239
    %v1256 = vsub.f32 %v1192, %v1240
    %v1257 = vsub.f32 %v1193, %v1241
    %v1258 = vsub.f32 %v1194, %v1242
    %v1259 = vsub.f32 %v1195, %v1243
    %v1260 = vsub.f32 %v1196, %v1244
    %v1261 = vsub.f32 %v1197, %v1245
    %v1262 = vsub.f32 %v1198, %v1246
    %v1263 = vsub.f32 %v1199, %v1247
    %v1264 = vsub.f32 %v1200, %v1248
    %v1265 = vsub.f32 %v1201, %v1249
    %v1266 = vsub.f32 %v1202, %v1250
    %v1267 = vsub.f32 %v1203, %v1251
    %v1268 = vsub.f32 %v1204, %v1252
    %v1269 = vsub.f32 %v1205, %v1253
    %v1270 = vmul.f32 %v1254, 1.442695
    %v1271 = vpow.pop %v1270
    %v1272 = vmul.f32 %v1255, 1.442695
    %v1273 = vpow.pop %v1272
    %v1274 = vmul.f32 %v1256, 1.442695
    %v1275 = vpow.pop %v1274
    %v1276 = vmul.f32 %v1257, 1.442695
    %v1277 = vpow.pop %v1276
    %v1278 = vmul.f32 %v1258, 1.442695
    %v1279 = vpow.pop %v1278
    %v1280 = vmul.f32 %v1259, 1.442695
    %v1281 = vpow.pop %v1280
    %v1282 = vmul.f32 %v1260, 1.442695
    %v1283 = vpow.pop %v1282
    %v1284 = vmul.f32 %v1261, 1.442695
    %v1285 = vpow.pop %v1284
    %v1286 = vmul.f32 %v1262, 1.442695
    %v1287 = vpow.pop %v1286
    %v1288 = vmul.f32 %v1263, 1.442695
    %v1289 = vpow.pop %v1288
    %v1290 = vmul.f32 %v1264, 1.442695
    %v1291 = vpow.pop %v1290
    %v1292 = vmul.f32 %v1265, 1.442695
    %v1293 = vpow.pop %v1292
    %v1294 = vmul.f32 %v1266, 1.442695
    %v1295 = vpow.pop %v1294
    %v1296 = vmul.f32 %v1267, 1.442695
    %v1297 = vpow.pop %v1296
    %v1298 = vmul.f32 %v1268, 1.442695
    %v1299 = vpow.pop %v1298
    %v1300 = vmul.f32 %v1269, 1.442695
    %v1301 = vpow.pop %v1300
    %1303 = vset.pattern.permute.xlu0 1
    %1304 = vperm.xlu0 %1303, %v1238
    %v1305 = vpop.permute.xlu0 %1304
    %1308 = vset.pattern.permute.xlu0 1
    %1309 = vperm.xlu0 %1308, %v1239
    %v1310 = vpop.permute.xlu0 %1309
    %1313 = vset.pattern.permute.xlu0 1
    %1314 = vperm.xlu0 %1313, %v1240
    %v1315 = vpop.permute.xlu0 %1314
    %1318 = vset.pattern.permute.xlu0 1
    %1319 = vperm.xlu0 %1318, %v1241
    %v1320 = vpop.permute.xlu0 %1319
    %1323 = vset.pattern.permute.xlu0 1
    %1324 = vperm.xlu0 %1323, %v1242
    %v1325 = vpop.permute.xlu0 %1324
    %1328 = vset.pattern.permute.xlu0 1
    %1329 = vperm.xlu0 %1328, %v1243
    %v1330 = vpop.permute.xlu0 %1329
    %1333 = vset.pattern.permute.xlu0 1
    %1334 = vperm.xlu0 %1333, %v1244
    %v1335 = vpop.permute.xlu0 %1334
    %1338 = vset.pattern.permute.xlu0 1
    %1339 = vperm.xlu0 %1338, %v1245
    %v1340 = vpop.permute.xlu0 %1339
    %1343 = vset.pattern.permute.xlu0 1
    %1344 = vperm.xlu0 %1343, %v1246
    %v1345 = vpop.permute.xlu0 %1344
    %1348 = vset.pattern.permute.xlu0 1
    %1349 = vperm.xlu0 %1348, %v1247
    %v1350 = vpop.permute.xlu0 %1349
    %1353 = vset.pattern.permute.xlu0 1
    %1354 = vperm.xlu0 %1353, %v1248
    %v1355 = vpop.permute.xlu0 %1354
    %1358 = vset.pattern.permute.xlu0 1
    %1359 = vperm.xlu0 %1358, %v1249
    %v1360 = vpop.permute.xlu0 %1359
    %1363 = vset.pattern.permute.xlu0 1
    %1364 = vperm.xlu0 %1363, %v1250
    %v1365 = vpop.permute.xlu0 %1364
    %1368 = vset.pattern.permute.xlu0 1
    %1369 = vperm.xlu0 %1368, %v1251
    %v1370 = vpop.permute.xlu0 %1369
    %1373 = vset.pattern.permute.xlu0 1
    %1374 = vperm.xlu0 %1373, %v1252
    %v1375 = vpop.permute.xlu0 %1374
    %1378 = vset.pattern.permute.xlu0 1
    %1379 = vperm.xlu0 %1378, %v1253
    %v1380 = vpop.permute.xlu0 %1379
    %v1382 = vsub.f32 %v1174, %v1305
    %v1383 = vsub.f32 %v1175, %v1310
    %v1384 = vsub.f32 %v1176, %v1315
    %v1385 = vsub.f32 %v1177, %v1320
    %v1386 = vsub.f32 %v1178, %v1325
    %v1387 = vsub.f32 %v1179, %v1330
    %v1388 = vsub.f32 %v1180, %v1335
    %v1389 = vsub.f32 %v1181, %v1340
    %v1390 = vsub.f32 %v1182, %v1345
    %v1391 = vsub.f32 %v1183, %v1350
    %v1392 = vsub.f32 %v1184, %v1355
    %v1393 = vsub.f32 %v1185, %v1360
    %v1394 = vsub.f32 %v1186, %v1365
    %v1395 = vsub.f32 %v1187, %v1370
    %v1396 = vsub.f32 %v1188, %v1375
    %v1397 = vsub.f32 %v1189, %v1380
    %v1398 = vpack.c.bf16 %v1383, %v1382
    %v1399 = vpack.c.bf16 %v1385, %v1384
    %v1400 = vpack.c.bf16 %v1387, %v1386
    %v1401 = vpack.c.bf16 %v1389, %v1388
    %v1402 = vpack.c.bf16 %v1391, %v1390
    %v1403 = vpack.c.bf16 %v1393, %v1392
    %v1404 = vpack.c.bf16 %v1395, %v1394
    %v1405 = vpack.c.bf16 %v1397, %v1396
    %v1406 = vunpack.c.l.bf16 %v1398
    %v1407 = vunpack.c.h.bf16 %v1398
    %v1408 = vunpack.c.l.bf16 %v1399
    %v1409 = vunpack.c.h.bf16 %v1399
    %v1410 = vunpack.c.l.bf16 %v1400
    %v1411 = vunpack.c.h.bf16 %v1400
    %v1412 = vunpack.c.l.bf16 %v1401
    %v1413 = vunpack.c.h.bf16 %v1401
    %v1414 = vunpack.c.l.bf16 %v1402
    %v1415 = vunpack.c.h.bf16 %v1402
    %v1416 = vunpack.c.l.bf16 %v1403
    %v1417 = vunpack.c.h.bf16 %v1403
    %v1418 = vunpack.c.l.bf16 %v1404
    %v1419 = vunpack.c.h.bf16 %v1404
    %v1420 = vunpack.c.l.bf16 %v1405
    %v1421 = vunpack.c.h.bf16 %v1405
    %v1422 = vmul.f32 %v1406, 1.442695
    %v1423 = vpow.pop %v1422
    %v1424 = vmul.f32 %v1407, 1.442695
    %v1425 = vpow.pop %v1424
    %v1426 = vmul.f32 %v1408, 1.442695
    %v1427 = vpow.pop %v1426
    %v1428 = vmul.f32 %v1409, 1.442695
    %v1429 = vpow.pop %v1428
    %v1430 = vmul.f32 %v1410, 1.442695
    %v1431 = vpow.pop %v1430
    %v1432 = vmul.f32 %v1411, 1.442695
    %v1433 = vpow.pop %v1432
    %v1434 = vmul.f32 %v1412, 1.442695
    %v1435 = vpow.pop %v1434
    %v1436 = vmul.f32 %v1413, 1.442695
    %v1437 = vpow.pop %v1436
    %v1438 = vmul.f32 %v1414, 1.442695
    %v1439 = vpow.pop %v1438
    %v1440 = vmul.f32 %v1415, 1.442695
    %v1441 = vpow.pop %v1440
    %v1442 = vmul.f32 %v1416, 1.442695
    %v1443 = vpow.pop %v1442
    %v1444 = vmul.f32 %v1417, 1.442695
    %v1445 = vpow.pop %v1444
    %v1446 = vmul.f32 %v1418, 1.442695
    %v1447 = vpow.pop %v1446
    %v1448 = vmul.f32 %v1419, 1.442695
    %v1449 = vpow.pop %v1448
    %v1450 = vmul.f32 %v1420, 1.442695
    %v1451 = vpow.pop %v1450
    %v1452 = vmul.f32 %v1421, 1.442695
    %v1453 = vpow.pop %v1452
    %v1454 = vpack.c.bf16 %v1425, %v1423
    %v1455 = vpack.c.bf16 %v1429, %v1427
    %v1456 = vpack.c.bf16 %v1433, %v1431
    %v1457 = vpack.c.bf16 %v1437, %v1435
    %v1458 = vpack.c.bf16 %v1441, %v1439
    %v1459 = vpack.c.bf16 %v1445, %v1443
    %v1460 = vpack.c.bf16 %v1449, %v1447
    %v1461 = vpack.c.bf16 %v1453, %v1451
    %v1462 = vunpack.c.l.bf16 %v1454
    %v1463 = vunpack.c.h.bf16 %v1454
    %v1464 = vunpack.c.l.bf16 %v1455
    %v1465 = vunpack.c.h.bf16 %v1455
    %v1466 = vunpack.c.l.bf16 %v1456
    %v1467 = vunpack.c.h.bf16 %v1456
    %v1468 = vunpack.c.l.bf16 %v1457
    %v1469 = vunpack.c.h.bf16 %v1457
    %v1470 = vunpack.c.l.bf16 %v1458
    %v1471 = vunpack.c.h.bf16 %v1458
    %v1472 = vunpack.c.l.bf16 %v1459
    %v1473 = vunpack.c.h.bf16 %v1459
    %v1474 = vunpack.c.l.bf16 %v1460
    %v1475 = vunpack.c.h.bf16 %v1460
    %v1476 = vunpack.c.l.bf16 %v1461
    %v1477 = vunpack.c.h.bf16 %v1461
    %1478 = vadd.xlane.f32.xlu0 %v1462
    %v1479 = vpop.xlane.xlu0 %1478
    %1480 = vadd.xlane.f32.xlu0 %v1463
    %v1481 = vpop.xlane.xlu0 %1480
    %1482 = vadd.xlane.f32.xlu0 %v1464
    %v1483 = vpop.xlane.xlu0 %1482
    %1484 = vadd.xlane.f32.xlu0 %v1465
    %v1485 = vpop.xlane.xlu0 %1484
    %1486 = vadd.xlane.f32.xlu0 %v1466
    %v1487 = vpop.xlane.xlu0 %1486
    %1488 = vadd.xlane.f32.xlu0 %v1467
    %v1489 = vpop.xlane.xlu0 %1488
    %1490 = vadd.xlane.f32.xlu0 %v1468
    %v1491 = vpop.xlane.xlu0 %1490
    %1492 = vadd.xlane.f32.xlu0 %v1469
    %v1493 = vpop.xlane.xlu0 %1492
    %1494 = vadd.xlane.f32.xlu0 %v1470
    %v1495 = vpop.xlane.xlu0 %1494
    %1496 = vadd.xlane.f32.xlu0 %v1471
    %v1497 = vpop.xlane.xlu0 %1496
    %1498 = vadd.xlane.f32.xlu0 %v1472
    %v1499 = vpop.xlane.xlu0 %1498
    %1500 = vadd.xlane.f32.xlu0 %v1473
    %v1501 = vpop.xlane.xlu0 %1500
    %1502 = vadd.xlane.f32.xlu0 %v1474
    %v1503 = vpop.xlane.xlu0 %1502
    %1504 = vadd.xlane.f32.xlu0 %v1475
    %v1505 = vpop.xlane.xlu0 %1504
    %1506 = vadd.xlane.f32.xlu0 %v1476
    %v1507 = vpop.xlane.xlu0 %1506
    %1508 = vadd.xlane.f32.xlu0 %v1477
    %v1509 = vpop.xlane.xlu0 %1508
    %1510 = vrot.lane.b32.xlu0 %v754, 120
    %v1511 = vpop.permute.xlu0 %1510
    %1512 = vrot.lane.b32.xlu0 %v755, 120
    %v1513 = vpop.permute.xlu0 %1512
    %1514 = vrot.lane.b32.xlu0 %v756, 120
    %v1515 = vpop.permute.xlu0 %1514
    %1516 = vrot.lane.b32.xlu0 %v757, 120
    %v1517 = vpop.permute.xlu0 %1516
    %1518 = vrot.lane.b32.xlu0 %v758, 120
    %v1519 = vpop.permute.xlu0 %1518
    %1520 = vrot.lane.b32.xlu0 %v759, 120
    %v1521 = vpop.permute.xlu0 %1520
    %1522 = vrot.lane.b32.xlu0 %v760, 120
    %v1523 = vpop.permute.xlu0 %1522
    %1524 = vrot.lane.b32.xlu0 %v761, 120
    %v1525 = vpop.permute.xlu0 %1524
    %1534 = vmatpush.bf16.msra.mxu0 %v1525
    %1535 = vmatpush.bf16.msra.mxu0 %v1523
    %1536 = vmatpush.bf16.msra.mxu0 %v1521
    %1537 = vmatpush.bf16.msra.mxu0 %v1519
    %1538 = vmatpush.bf16.msra.mxu0 %v1517
    %1539 = vmatpush.bf16.msra.mxu0 %v1515
    %1540 = vmatpush.bf16.msra.mxu0 %v1513
    %1541 = vmatpush.bf16.msra.mxu0 %v1511
    %1542 = vmatmul.bf16.gmra.mxu0 %v1454
    %v1543 = vpop.f32.mrf.mxu0
    %v1544 = vadd.f32 0.0, %v1543
    %v1545 = vpop.f32.mrf.mxu0
    %v1546 = vadd.f32 0.0, %v1545
    %1547 = vmatmul.bf16.gmra.mxu0 %v1455
    %v1548 = vpop.f32.mrf.mxu0
    %v1549 = vadd.f32 0.0, %v1548
    %v1550 = vpop.f32.mrf.mxu0
    %v1551 = vadd.f32 0.0, %v1550
    %1552 = vmatmul.bf16.gmra.mxu0 %v1456
    %v1553 = vpop.f32.mrf.mxu0
    %v1554 = vadd.f32 0.0, %v1553
    %v1555 = vpop.f32.mrf.mxu0
    %v1556 = vadd.f32 0.0, %v1555
    %1557 = vmatmul.bf16.gmra.mxu0 %v1457
    %v1558 = vpop.f32.mrf.mxu0
    %v1559 = vadd.f32 0.0, %v1558
    %v1560 = vpop.f32.mrf.mxu0
    %v1561 = vadd.f32 0.0, %v1560
    %1562 = vmatmul.bf16.gmra.mxu0 %v1458
    %v1563 = vpop.f32.mrf.mxu0
    %v1564 = vadd.f32 0.0, %v1563
    %v1565 = vpop.f32.mrf.mxu0
    %v1566 = vadd.f32 0.0, %v1565
    %1567 = vmatmul.bf16.gmra.mxu0 %v1459
    %v1568 = vpop.f32.mrf.mxu0
    %v1569 = vadd.f32 0.0, %v1568
    %v1570 = vpop.f32.mrf.mxu0
    %v1571 = vadd.f32 0.0, %v1570
    %1572 = vmatmul.bf16.gmra.mxu0 %v1460
    %v1573 = vpop.f32.mrf.mxu0
    %v1574 = vadd.f32 0.0, %v1573
    %v1575 = vpop.f32.mrf.mxu0
    %v1576 = vadd.f32 0.0, %v1575
    %1577 = vmatmul.bf16.gmra.mxu0 %v1461
    %v1578 = vpop.f32.mrf.mxu0
    %v1579 = vadd.f32 0.0, %v1578
    %v1580 = vpop.f32.mrf.mxu0
    %v1581 = vadd.f32 0.0, %v1580
    %1582 = vdwg.mxu0
    %v1583 = vld [vmem:[#allocation4] sm:$0xff]
    %v1584 = vld [vmem:[#allocation4 + $0x8] sm:$0xff]
    %v1585 = vld [vmem:[#allocation4 + $0x10] sm:$0xff]
    %v1586 = vld [vmem:[#allocation4 + $0x18] sm:$0xff]
    %v1587 = vld [vmem:[#allocation4 + $0x20] sm:$0xff]
    %v1588 = vld [vmem:[#allocation4 + $0x28] sm:$0xff]
    %v1589 = vld [vmem:[#allocation4 + $0x30] sm:$0xff]
    %v1590 = vld [vmem:[#allocation4 + $0x38] sm:$0xff]
    %v1591 = vld [vmem:[#allocation4 + $0x40] sm:$0xff]
    %v1592 = vld [vmem:[#allocation4 + $0x48] sm:$0xff]
    %v1593 = vld [vmem:[#allocation4 + $0x50] sm:$0xff]
    %v1594 = vld [vmem:[#allocation4 + $0x58] sm:$0xff]
    %v1595 = vld [vmem:[#allocation4 + $0x60] sm:$0xff]
    %v1596 = vld [vmem:[#allocation4 + $0x68] sm:$0xff]
    %v1597 = vld [vmem:[#allocation4 + $0x70] sm:$0xff]
    %v1598 = vld [vmem:[#allocation4 + $0x78] sm:$0xff]
    %v1599 = vmul.f32 %v1271, %v1583
    %v1600 = vmul.f32 %v1273, %v1584
    %v1601 = vmul.f32 %v1275, %v1585
    %v1602 = vmul.f32 %v1277, %v1586
    %v1603 = vmul.f32 %v1279, %v1587
    %v1604 = vmul.f32 %v1281, %v1588
    %v1605 = vmul.f32 %v1283, %v1589
    %v1606 = vmul.f32 %v1285, %v1590
    %v1607 = vmul.f32 %v1287, %v1591
    %v1608 = vmul.f32 %v1289, %v1592
    %v1609 = vmul.f32 %v1291, %v1593
    %v1610 = vmul.f32 %v1293, %v1594
    %v1611 = vmul.f32 %v1295, %v1595
    %v1612 = vmul.f32 %v1297, %v1596
    %v1613 = vmul.f32 %v1299, %v1597
    %v1614 = vmul.f32 %v1301, %v1598
    %v1615 = vadd.f32 %v1599, %v1479
    %v1616 = vadd.f32 %v1600, %v1481
    %v1617 = vadd.f32 %v1601, %v1483
    %v1618 = vadd.f32 %v1602, %v1485
    %v1619 = vadd.f32 %v1603, %v1487
    %v1620 = vadd.f32 %v1604, %v1489
    %v1621 = vadd.f32 %v1605, %v1491
    %v1622 = vadd.f32 %v1606, %v1493
    %v1623 = vadd.f32 %v1607, %v1495
    %v1624 = vadd.f32 %v1608, %v1497
    %v1625 = vadd.f32 %v1609, %v1499
    %v1626 = vadd.f32 %v1610, %v1501
    %v1627 = vadd.f32 %v1611, %v1503
    %v1628 = vadd.f32 %v1612, %v1505
    %v1629 = vadd.f32 %v1613, %v1507
    %v1630 = vadd.f32 %v1614, %v1509
    %vm1631 = vcmask 15368
    %1632 = vst.msk [vmem:[#allocation4] sm:$0xff] %vm1631, %v1615
    %1633 = vst.msk [vmem:[#allocation4 + $0x8] sm:$0xff] %vm1631, %v1616
    %1634 = vst.msk [vmem:[#allocation4 + $0x10] sm:$0xff] %vm1631, %v1617
    %1635 = vst.msk [vmem:[#allocation4 + $0x18] sm:$0xff] %vm1631, %v1618
    %1636 = vst.msk [vmem:[#allocation4 + $0x20] sm:$0xff] %vm1631, %v1619
    %1637 = vst.msk [vmem:[#allocation4 + $0x28] sm:$0xff] %vm1631, %v1620
    %1638 = vst.msk [vmem:[#allocation4 + $0x30] sm:$0xff] %vm1631, %v1621
    %1639 = vst.msk [vmem:[#allocation4 + $0x38] sm:$0xff] %vm1631, %v1622
    %1640 = vst.msk [vmem:[#allocation4 + $0x40] sm:$0xff] %vm1631, %v1623
    %1641 = vst.msk [vmem:[#allocation4 + $0x48] sm:$0xff] %vm1631, %v1624
    %1642 = vst.msk [vmem:[#allocation4 + $0x50] sm:$0xff] %vm1631, %v1625
    %1643 = vst.msk [vmem:[#allocation4 + $0x58] sm:$0xff] %vm1631, %v1626
    %1644 = vst.msk [vmem:[#allocation4 + $0x60] sm:$0xff] %vm1631, %v1627
    %1645 = vst.msk [vmem:[#allocation4 + $0x68] sm:$0xff] %vm1631, %v1628
    %1646 = vst.msk [vmem:[#allocation4 + $0x70] sm:$0xff] %vm1631, %v1629
    %1647 = vst.msk [vmem:[#allocation4 + $0x78] sm:$0xff] %vm1631, %v1630
    %v1648 = vld [vmem:[#allocation2] sm:$0xff]
    %v1649 = vld [vmem:[#allocation2 + $0x8] sm:$0xff]
    %v1650 = vld [vmem:[#allocation2 + $0x10] sm:$0xff]
    %v1651 = vld [vmem:[#allocation2 + $0x18] sm:$0xff]
    %v1652 = vld [vmem:[#allocation2 + $0x20] sm:$0xff]
    %v1653 = vld [vmem:[#allocation2 + $0x28] sm:$0xff]
    %v1654 = vld [vmem:[#allocation2 + $0x30] sm:$0xff]
    %v1655 = vld [vmem:[#allocation2 + $0x38] sm:$0xff]
    %v1656 = vld [vmem:[#allocation2 + $0x40] sm:$0xff]
    %v1657 = vld [vmem:[#allocation2 + $0x48] sm:$0xff]
    %v1658 = vld [vmem:[#allocation2 + $0x50] sm:$0xff]
    %v1659 = vld [vmem:[#allocation2 + $0x58] sm:$0xff]
    %v1660 = vld [vmem:[#allocation2 + $0x60] sm:$0xff]
    %v1661 = vld [vmem:[#allocation2 + $0x68] sm:$0xff]
    %v1662 = vld [vmem:[#allocation2 + $0x70] sm:$0xff]
    %v1663 = vld [vmem:[#allocation2 + $0x78] sm:$0xff]
    %1665 = vset.pattern.permute.xlu0 1
    %1666 = vperm.xlu0 %1665, %v1271
    %v1667 = vpop.permute.xlu0 %1666
    %1670 = vset.pattern.permute.xlu0 1
    %1671 = vperm.xlu0 %1670, %v1273
    %v1672 = vpop.permute.xlu0 %1671
    %1675 = vset.pattern.permute.xlu0 1
    %1676 = vperm.xlu0 %1675, %v1275
    %v1677 = vpop.permute.xlu0 %1676
    %1680 = vset.pattern.permute.xlu0 1
    %1681 = vperm.xlu0 %1680, %v1277
    %v1682 = vpop.permute.xlu0 %1681
    %1685 = vset.pattern.permute.xlu0 1
    %1686 = vperm.xlu0 %1685, %v1279
    %v1687 = vpop.permute.xlu0 %1686
    %1690 = vset.pattern.permute.xlu0 1
    %1691 = vperm.xlu0 %1690, %v1281
    %v1692 = vpop.permute.xlu0 %1691
    %1695 = vset.pattern.permute.xlu0 1
    %1696 = vperm.xlu0 %1695, %v1283
    %v1697 = vpop.permute.xlu0 %1696
    %1700 = vset.pattern.permute.xlu0 1
    %1701 = vperm.xlu0 %1700, %v1285
    %v1702 = vpop.permute.xlu0 %1701
    %1705 = vset.pattern.permute.xlu0 1
    %1706 = vperm.xlu0 %1705, %v1287
    %v1707 = vpop.permute.xlu0 %1706
    %1710 = vset.pattern.permute.xlu0 1
    %1711 = vperm.xlu0 %1710, %v1289
    %v1712 = vpop.permute.xlu0 %1711
    %1715 = vset.pattern.permute.xlu0 1
    %1716 = vperm.xlu0 %1715, %v1291
    %v1717 = vpop.permute.xlu0 %1716
    %1720 = vset.pattern.permute.xlu0 1
    %1721 = vperm.xlu0 %1720, %v1293
    %v1722 = vpop.permute.xlu0 %1721
    %1725 = vset.pattern.permute.xlu0 1
    %1726 = vperm.xlu0 %1725, %v1295
    %v1727 = vpop.permute.xlu0 %1726
    %1730 = vset.pattern.permute.xlu0 1
    %1731 = vperm.xlu0 %1730, %v1297
    %v1732 = vpop.permute.xlu0 %1731
    %1735 = vset.pattern.permute.xlu0 1
    %1736 = vperm.xlu0 %1735, %v1299
    %v1737 = vpop.permute.xlu0 %1736
    %1740 = vset.pattern.permute.xlu0 1
    %1741 = vperm.xlu0 %1740, %v1301
    %v1742 = vpop.permute.xlu0 %1741
    %v1744 = vmul.f32 %v1667, %v1648
    %v1745 = vmul.f32 %v1672, %v1649
    %v1746 = vmul.f32 %v1677, %v1650
    %v1747 = vmul.f32 %v1682, %v1651
    %v1748 = vmul.f32 %v1687, %v1652
    %v1749 = vmul.f32 %v1692, %v1653
    %v1750 = vmul.f32 %v1697, %v1654
    %v1751 = vmul.f32 %v1702, %v1655
    %v1752 = vmul.f32 %v1707, %v1656
    %v1753 = vmul.f32 %v1712, %v1657
    %v1754 = vmul.f32 %v1717, %v1658
    %v1755 = vmul.f32 %v1722, %v1659
    %v1756 = vmul.f32 %v1727, %v1660
    %v1757 = vmul.f32 %v1732, %v1661
    %v1758 = vmul.f32 %v1737, %v1662
    %v1759 = vmul.f32 %v1742, %v1663
    %1776 = vrot.lane.b32.xlu0 %v1544, 8
    %v1777 = vpop.permute.xlu0 %1776
    %1778 = vrot.lane.b32.xlu0 %v1546, 8
    %v1779 = vpop.permute.xlu0 %1778
    %1780 = vrot.lane.b32.xlu0 %v1549, 8
    %v1781 = vpop.permute.xlu0 %1780
    %1782 = vrot.lane.b32.xlu0 %v1551, 8
    %v1783 = vpop.permute.xlu0 %1782
    %1784 = vrot.lane.b32.xlu0 %v1554, 8
    %v1785 = vpop.permute.xlu0 %1784
    %1786 = vrot.lane.b32.xlu0 %v1556, 8
    %v1787 = vpop.permute.xlu0 %1786
    %1788 = vrot.lane.b32.xlu0 %v1559, 8
    %v1789 = vpop.permute.xlu0 %1788
    %1790 = vrot.lane.b32.xlu0 %v1561, 8
    %v1791 = vpop.permute.xlu0 %1790
    %1792 = vrot.lane.b32.xlu0 %v1564, 8
    %v1793 = vpop.permute.xlu0 %1792
    %1794 = vrot.lane.b32.xlu0 %v1566, 8
    %v1795 = vpop.permute.xlu0 %1794
    %1796 = vrot.lane.b32.xlu0 %v1569, 8
    %v1797 = vpop.permute.xlu0 %1796
    %1798 = vrot.lane.b32.xlu0 %v1571, 8
    %v1799 = vpop.permute.xlu0 %1798
    %1800 = vrot.lane.b32.xlu0 %v1574, 8
    %v1801 = vpop.permute.xlu0 %1800
    %1802 = vrot.lane.b32.xlu0 %v1576, 8
    %v1803 = vpop.permute.xlu0 %1802
    %1804 = vrot.lane.b32.xlu0 %v1579, 8
    %v1805 = vpop.permute.xlu0 %1804
    %1806 = vrot.lane.b32.xlu0 %v1581, 8
    %v1807 = vpop.permute.xlu0 %1806
    %v1824 = vadd.f32 %v1744, %v1777
    %v1825 = vadd.f32 %v1745, %v1779
    %v1826 = vadd.f32 %v1746, %v1781
    %v1827 = vadd.f32 %v1747, %v1783
    %v1828 = vadd.f32 %v1748, %v1785
    %v1829 = vadd.f32 %v1749, %v1787
    %v1830 = vadd.f32 %v1750, %v1789
    %v1831 = vadd.f32 %v1751, %v1791
    %v1832 = vadd.f32 %v1752, %v1793
    %v1833 = vadd.f32 %v1753, %v1795
    %v1834 = vadd.f32 %v1754, %v1797
    %v1835 = vadd.f32 %v1755, %v1799
    %v1836 = vadd.f32 %v1756, %v1801
    %v1837 = vadd.f32 %v1757, %v1803
    %v1838 = vadd.f32 %v1758, %v1805
    %v1839 = vadd.f32 %v1759, %v1807
    %vm1840 = vcmask 130112
    %1841 = vst.msk [vmem:[#allocation2] sm:$0xff] %vm1840, %v1824
    %1842 = vst.msk [vmem:[#allocation2 + $0x8] sm:$0xff] %vm1840, %v1825
    %1843 = vst.msk [vmem:[#allocation2 + $0x10] sm:$0xff] %vm1840, %v1826
    %1844 = vst.msk [vmem:[#allocation2 + $0x18] sm:$0xff] %vm1840, %v1827
    %1845 = vst.msk [vmem:[#allocation2 + $0x20] sm:$0xff] %vm1840, %v1828
    %1846 = vst.msk [vmem:[#allocation2 + $0x28] sm:$0xff] %vm1840, %v1829
    %1847 = vst.msk [vmem:[#allocation2 + $0x30] sm:$0xff] %vm1840, %v1830
    %1848 = vst.msk [vmem:[#allocation2 + $0x38] sm:$0xff] %vm1840, %v1831
    %1849 = vst.msk [vmem:[#allocation2 + $0x40] sm:$0xff] %vm1840, %v1832
    %1850 = vst.msk [vmem:[#allocation2 + $0x48] sm:$0xff] %vm1840, %v1833
    %1851 = vst.msk [vmem:[#allocation2 + $0x50] sm:$0xff] %vm1840, %v1834
    %1852 = vst.msk [vmem:[#allocation2 + $0x58] sm:$0xff] %vm1840, %v1835
    %1853 = vst.msk [vmem:[#allocation2 + $0x60] sm:$0xff] %vm1840, %v1836
    %1854 = vst.msk [vmem:[#allocation2 + $0x68] sm:$0xff] %vm1840, %v1837
    %1855 = vst.msk [vmem:[#allocation2 + $0x70] sm:$0xff] %vm1840, %v1838
    %1856 = vst.msk [vmem:[#allocation2 + $0x78] sm:$0xff] %vm1840, %v1839
    %1857 = vst.msk [vmem:[#allocation3] sm:$0xff] %vm1631, %v1238
    %1858 = vst.msk [vmem:[#allocation3 + $0x8] sm:$0xff] %vm1631, %v1239
    %1859 = vst.msk [vmem:[#allocation3 + $0x10] sm:$0xff] %vm1631, %v1240
    %1860 = vst.msk [vmem:[#allocation3 + $0x18] sm:$0xff] %vm1631, %v1241
    %1861 = vst.msk [vmem:[#allocation3 + $0x20] sm:$0xff] %vm1631, %v1242
    %1862 = vst.msk [vmem:[#allocation3 + $0x28] sm:$0xff] %vm1631, %v1243
    %1863 = vst.msk [vmem:[#allocation3 + $0x30] sm:$0xff] %vm1631, %v1244
    %1864 = vst.msk [vmem:[#allocation3 + $0x38] sm:$0xff] %vm1631, %v1245
    %1865 = vst.msk [vmem:[#allocation3 + $0x40] sm:$0xff] %vm1631, %v1246
    %1866 = vst.msk [vmem:[#allocation3 + $0x48] sm:$0xff] %vm1631, %v1247
    %1867 = vst.msk [vmem:[#allocation3 + $0x50] sm:$0xff] %vm1631, %v1248
    %1868 = vst.msk [vmem:[#allocation3 + $0x58] sm:$0xff] %vm1631, %v1249
    %1869 = vst.msk [vmem:[#allocation3 + $0x60] sm:$0xff] %vm1631, %v1250
    %1870 = vst.msk [vmem:[#allocation3 + $0x68] sm:$0xff] %vm1631, %v1251
    %1871 = vst.msk [vmem:[#allocation3 + $0x70] sm:$0xff] %vm1631, %v1252
    %1872 = vst.msk [vmem:[#allocation3 + $0x78] sm:$0xff] %vm1631, %v1253
    %1873 = vset.pattern.permute.xlu0 2
    %1874 = vperm.xlu0 %1873, %v109
    %v1875 = vpop.permute.xlu0 %1874
    %1877 = vset.pattern.permute.xlu0 2
    %1878 = vperm.xlu0 %1877, %v110
    %v1879 = vpop.permute.xlu0 %1878
    %1881 = vset.pattern.permute.xlu0 2
    %1882 = vperm.xlu0 %1881, %v111
    %v1883 = vpop.permute.xlu0 %1882
    %1885 = vset.pattern.permute.xlu0 2
    %1886 = vperm.xlu0 %1885, %v112
    %v1887 = vpop.permute.xlu0 %1886
    %1889 = vset.pattern.permute.xlu0 2
    %1890 = vperm.xlu0 %1889, %v113
    %v1891 = vpop.permute.xlu0 %1890
    %1893 = vset.pattern.permute.xlu0 2
    %1894 = vperm.xlu0 %1893, %v114
    %v1895 = vpop.permute.xlu0 %1894
    %1897 = vset.pattern.permute.xlu0 2
    %1898 = vperm.xlu0 %1897, %v115
    %v1899 = vpop.permute.xlu0 %1898
    %1901 = vset.pattern.permute.xlu0 2
    %1902 = vperm.xlu0 %1901, %v116
    %v1903 = vpop.permute.xlu0 %1902
    %1905 = vset.pattern.permute.xlu0 2
    %1906 = vperm.xlu0 %1905, %v117
    %v1907 = vpop.permute.xlu0 %1906
    %1909 = vset.pattern.permute.xlu0 2
    %1910 = vperm.xlu0 %1909, %v118
    %v1911 = vpop.permute.xlu0 %1910
    %1913 = vset.pattern.permute.xlu0 2
    %1914 = vperm.xlu0 %1913, %v119
    %v1915 = vpop.permute.xlu0 %1914
    %1917 = vset.pattern.permute.xlu0 2
    %1918 = vperm.xlu0 %1917, %v120
    %v1919 = vpop.permute.xlu0 %1918
    %1921 = vset.pattern.permute.xlu0 2
    %1922 = vperm.xlu0 %1921, %v121
    %v1923 = vpop.permute.xlu0 %1922
    %1925 = vset.pattern.permute.xlu0 2
    %1926 = vperm.xlu0 %1925, %v122
    %v1927 = vpop.permute.xlu0 %1926
    %1929 = vset.pattern.permute.xlu0 2
    %1930 = vperm.xlu0 %1929, %v123
    %v1931 = vpop.permute.xlu0 %1930
    %1933 = vset.pattern.permute.xlu0 2
    %1934 = vperm.xlu0 %1933, %v124
    %v1935 = vpop.permute.xlu0 %1934
    %v1937 = vperm.slane %v108, 2
    %v1938 = vadd.f32 %v1875, %v1937
    %v1939 = vadd.f32 %v1879, %v1937
    %v1940 = vadd.f32 %v1883, %v1937
    %v1941 = vadd.f32 %v1887, %v1937
    %v1942 = vadd.f32 %v1891, %v1937
    %v1943 = vadd.f32 %v1895, %v1937
    %v1944 = vadd.f32 %v1899, %v1937
    %v1945 = vadd.f32 %v1903, %v1937
    %v1946 = vadd.f32 %v1907, %v1937
    %v1947 = vadd.f32 %v1911, %v1937
    %v1948 = vadd.f32 %v1915, %v1937
    %v1949 = vadd.f32 %v1919, %v1937
    %v1950 = vadd.f32 %v1923, %v1937
    %v1951 = vadd.f32 %v1927, %v1937
    %v1952 = vadd.f32 %v1931, %v1937
    %v1953 = vadd.f32 %v1935, %v1937
    %vm1954 = vcmp.gt.f32.partialorder %v1938, 0.0
    %vm1955 = vcmp.gt.f32.partialorder %v1939, 0.0
    %vm1956 = vcmp.gt.f32.partialorder %v1940, 0.0
    %vm1957 = vcmp.gt.f32.partialorder %v1941, 0.0
    %vm1958 = vcmp.gt.f32.partialorder %v1942, 0.0
    %vm1959 = vcmp.gt.f32.partialorder %v1943, 0.0
    %vm1960 = vcmp.gt.f32.partialorder %v1944, 0.0
    %vm1961 = vcmp.gt.f32.partialorder %v1945, 0.0
    %vm1962 = vcmp.gt.f32.partialorder %v1946, 0.0
    %vm1963 = vcmp.gt.f32.partialorder %v1947, 0.0
    %vm1964 = vcmp.gt.f32.partialorder %v1948, 0.0
    %vm1965 = vcmp.gt.f32.partialorder %v1949, 0.0
    %vm1966 = vcmp.gt.f32.partialorder %v1950, 0.0
    %vm1967 = vcmp.gt.f32.partialorder %v1951, 0.0
    %vm1968 = vcmp.gt.f32.partialorder %v1952, 0.0
    %vm1969 = vcmp.gt.f32.partialorder %v1953, 0.0
    %v1970 = vmul.f32 %v1938, 0.2
    %v1971 = vmul.f32 %v1939, 0.2
    %v1972 = vmul.f32 %v1940, 0.2
    %v1973 = vmul.f32 %v1941, 0.2
    %v1974 = vmul.f32 %v1942, 0.2
    %v1975 = vmul.f32 %v1943, 0.2
    %v1976 = vmul.f32 %v1944, 0.2
    %v1977 = vmul.f32 %v1945, 0.2
    %v1978 = vmul.f32 %v1946, 0.2
    %v1979 = vmul.f32 %v1947, 0.2
    %v1980 = vmul.f32 %v1948, 0.2
    %v1981 = vmul.f32 %v1949, 0.2
    %v1982 = vmul.f32 %v1950, 0.2
    %v1983 = vmul.f32 %v1951, 0.2
    %v1984 = vmul.f32 %v1952, 0.2
    %v1985 = vmul.f32 %v1953, 0.2
    %v1986 = vsel %vm1954, %v1938, %v1970
    %v1987 = vsel %vm1955, %v1939, %v1971
    %v1988 = vsel %vm1956, %v1940, %v1972
    %v1989 = vsel %vm1957, %v1941, %v1973
    %v1990 = vsel %vm1958, %v1942, %v1974
    %v1991 = vsel %vm1959, %v1943, %v1975
    %v1992 = vsel %vm1960, %v1944, %v1976
    %v1993 = vsel %vm1961, %v1945, %v1977
    %v1994 = vsel %vm1962, %v1946, %v1978
    %v1995 = vsel %vm1963, %v1947, %v1979
    %v1996 = vsel %vm1964, %v1948, %v1980
    %v1997 = vsel %vm1965, %v1949, %v1981
    %v1998 = vsel %vm1966, %v1950, %v1982
    %v1999 = vsel %vm1967, %v1951, %v1983
    %v2000 = vsel %vm1968, %v1952, %v1984
    %v2001 = vsel %vm1969, %v1953, %v1985
    %v2002 = vsel %vm370, %v1986, -1e+30
    %v2003 = vsel %vm371, %v1987, -1e+30
    %v2004 = vsel %vm372, %v1988, -1e+30
    %v2005 = vsel %vm373, %v1989, -1e+30
    %v2006 = vsel %vm374, %v1990, -1e+30
    %v2007 = vsel %vm375, %v1991, -1e+30
    %v2008 = vsel %vm376, %v1992, -1e+30
    %v2009 = vsel %vm377, %v1993, -1e+30
    %v2010 = vsel %vm378, %v1994, -1e+30
    %v2011 = vsel %vm379, %v1995, -1e+30
    %v2012 = vsel %vm380, %v1996, -1e+30
    %v2013 = vsel %vm381, %v1997, -1e+30
    %v2014 = vsel %vm382, %v1998, -1e+30
    %v2015 = vsel %vm383, %v1999, -1e+30
    %v2016 = vsel %vm384, %v2000, -1e+30
    %v2017 = vsel %vm385, %v2001, -1e+30
    %v2018 = vld [vmem:[#allocation3] sm:$0xff]
    %v2019 = vld [vmem:[#allocation3 + $0x8] sm:$0xff]
    %v2020 = vld [vmem:[#allocation3 + $0x10] sm:$0xff]
    %v2021 = vld [vmem:[#allocation3 + $0x18] sm:$0xff]
    %v2022 = vld [vmem:[#allocation3 + $0x20] sm:$0xff]
    %v2023 = vld [vmem:[#allocation3 + $0x28] sm:$0xff]
    %v2024 = vld [vmem:[#allocation3 + $0x30] sm:$0xff]
    %v2025 = vld [vmem:[#allocation3 + $0x38] sm:$0xff]
    %v2026 = vld [vmem:[#allocation3 + $0x40] sm:$0xff]
    %v2027 = vld [vmem:[#allocation3 + $0x48] sm:$0xff]
    %v2028 = vld [vmem:[#allocation3 + $0x50] sm:$0xff]
    %v2029 = vld [vmem:[#allocation3 + $0x58] sm:$0xff]
    %v2030 = vld [vmem:[#allocation3 + $0x60] sm:$0xff]
    %v2031 = vld [vmem:[#allocation3 + $0x68] sm:$0xff]
    %v2032 = vld [vmem:[#allocation3 + $0x70] sm:$0xff]
    %v2033 = vld [vmem:[#allocation3 + $0x78] sm:$0xff]
    %2034 = vmax.xlane.f32.xlu0 %v2002
    %v2035 = vpop.xlane.xlu0 %2034
    %2036 = vmax.xlane.f32.xlu0 %v2003
    %v2037 = vpop.xlane.xlu0 %2036
    %2038 = vmax.xlane.f32.xlu0 %v2004
    %v2039 = vpop.xlane.xlu0 %2038
    %2040 = vmax.xlane.f32.xlu0 %v2005
    %v2041 = vpop.xlane.xlu0 %2040
    %2042 = vmax.xlane.f32.xlu0 %v2006
    %v2043 = vpop.xlane.xlu0 %2042
    %2044 = vmax.xlane.f32.xlu0 %v2007
    %v2045 = vpop.xlane.xlu0 %2044
    %2046 = vmax.xlane.f32.xlu0 %v2008
    %v2047 = vpop.xlane.xlu0 %2046
    %2048 = vmax.xlane.f32.xlu0 %v2009
    %v2049 = vpop.xlane.xlu0 %2048
    %2050 = vmax.xlane.f32.xlu0 %v2010
    %v2051 = vpop.xlane.xlu0 %2050
    %2052 = vmax.xlane.f32.xlu0 %v2011
    %v2053 = vpop.xlane.xlu0 %2052
    %2054 = vmax.xlane.f32.xlu0 %v2012
    %v2055 = vpop.xlane.xlu0 %2054
    %2056 = vmax.xlane.f32.xlu0 %v2013
    %v2057 = vpop.xlane.xlu0 %2056
    %2058 = vmax.xlane.f32.xlu0 %v2014
    %v2059 = vpop.xlane.xlu0 %2058
    %2060 = vmax.xlane.f32.xlu0 %v2015
    %v2061 = vpop.xlane.xlu0 %2060
    %2062 = vmax.xlane.f32.xlu0 %v2016
    %v2063 = vpop.xlane.xlu0 %2062
    %2064 = vmax.xlane.f32.xlu0 %v2017
    %v2065 = vpop.xlane.xlu0 %2064
    %v2066 = vmax.f32 %v2018, %v2035
    %v2067 = vmax.f32 %v2019, %v2037
    %v2068 = vmax.f32 %v2020, %v2039
    %v2069 = vmax.f32 %v2021, %v2041
    %v2070 = vmax.f32 %v2022, %v2043
    %v2071 = vmax.f32 %v2023, %v2045
    %v2072 = vmax.f32 %v2024, %v2047
    %v2073 = vmax.f32 %v2025, %v2049
    %v2074 = vmax.f32 %v2026, %v2051
    %v2075 = vmax.f32 %v2027, %v2053
    %v2076 = vmax.f32 %v2028, %v2055
    %v2077 = vmax.f32 %v2029, %v2057
    %v2078 = vmax.f32 %v2030, %v2059
    %v2079 = vmax.f32 %v2031, %v2061
    %v2080 = vmax.f32 %v2032, %v2063
    %v2081 = vmax.f32 %v2033, %v2065
    %v2082 = vsub.f32 %v2018, %v2066
    %v2083 = vsub.f32 %v2019, %v2067
    %v2084 = vsub.f32 %v2020, %v2068
    %v2085 = vsub.f32 %v2021, %v2069
    %v2086 = vsub.f32 %v2022, %v2070
    %v2087 = vsub.f32 %v2023, %v2071
    %v2088 = vsub.f32 %v2024, %v2072
    %v2089 = vsub.f32 %v2025, %v2073
    %v2090 = vsub.f32 %v2026, %v2074
    %v2091 = vsub.f32 %v2027, %v2075
    %v2092 = vsub.f32 %v2028, %v2076
    %v2093 = vsub.f32 %v2029, %v2077
    %v2094 = vsub.f32 %v2030, %v2078
    %v2095 = vsub.f32 %v2031, %v2079
    %v2096 = vsub.f32 %v2032, %v2080
    %v2097 = vsub.f32 %v2033, %v2081
    %v2098 = vmul.f32 %v2082, 1.442695
    %v2099 = vpow.pop %v2098
    %v2100 = vmul.f32 %v2083, 1.442695
    %v2101 = vpow.pop %v2100
    %v2102 = vmul.f32 %v2084, 1.442695
    %v2103 = vpow.pop %v2102
    %v2104 = vmul.f32 %v2085, 1.442695
    %v2105 = vpow.pop %v2104
    %v2106 = vmul.f32 %v2086, 1.442695
    %v2107 = vpow.pop %v2106
    %v2108 = vmul.f32 %v2087, 1.442695
    %v2109 = vpow.pop %v2108
    %v2110 = vmul.f32 %v2088, 1.442695
    %v2111 = vpow.pop %v2110
    %v2112 = vmul.f32 %v2089, 1.442695
    %v2113 = vpow.pop %v2112
    %v2114 = vmul.f32 %v2090, 1.442695
    %v2115 = vpow.pop %v2114
    %v2116 = vmul.f32 %v2091, 1.442695
    %v2117 = vpow.pop %v2116
    %v2118 = vmul.f32 %v2092, 1.442695
    %v2119 = vpow.pop %v2118
    %v2120 = vmul.f32 %v2093, 1.442695
    %v2121 = vpow.pop %v2120
    %v2122 = vmul.f32 %v2094, 1.442695
    %v2123 = vpow.pop %v2122
    %v2124 = vmul.f32 %v2095, 1.442695
    %v2125 = vpow.pop %v2124
    %v2126 = vmul.f32 %v2096, 1.442695
    %v2127 = vpow.pop %v2126
    %v2128 = vmul.f32 %v2097, 1.442695
    %v2129 = vpow.pop %v2128
    %2131 = vset.pattern.permute.xlu0 2
    %2132 = vperm.xlu0 %2131, %v2066
    %v2133 = vpop.permute.xlu0 %2132
    %2136 = vset.pattern.permute.xlu0 2
    %2137 = vperm.xlu0 %2136, %v2067
    %v2138 = vpop.permute.xlu0 %2137
    %2141 = vset.pattern.permute.xlu0 2
    %2142 = vperm.xlu0 %2141, %v2068
    %v2143 = vpop.permute.xlu0 %2142
    %2146 = vset.pattern.permute.xlu0 2
    %2147 = vperm.xlu0 %2146, %v2069
    %v2148 = vpop.permute.xlu0 %2147
    %2151 = vset.pattern.permute.xlu0 2
    %2152 = vperm.xlu0 %2151, %v2070
    %v2153 = vpop.permute.xlu0 %2152
    %2156 = vset.pattern.permute.xlu0 2
    %2157 = vperm.xlu0 %2156, %v2071
    %v2158 = vpop.permute.xlu0 %2157
    %2161 = vset.pattern.permute.xlu0 2
    %2162 = vperm.xlu0 %2161, %v2072
    %v2163 = vpop.permute.xlu0 %2162
    %2166 = vset.pattern.permute.xlu0 2
    %2167 = vperm.xlu0 %2166, %v2073
    %v2168 = vpop.permute.xlu0 %2167
    %2171 = vset.pattern.permute.xlu0 2
    %2172 = vperm.xlu0 %2171, %v2074
    %v2173 = vpop.permute.xlu0 %2172
    %2176 = vset.pattern.permute.xlu0 2
    %2177 = vperm.xlu0 %2176, %v2075
    %v2178 = vpop.permute.xlu0 %2177
    %2181 = vset.pattern.permute.xlu0 2
    %2182 = vperm.xlu0 %2181, %v2076
    %v2183 = vpop.permute.xlu0 %2182
    %2186 = vset.pattern.permute.xlu0 2
    %2187 = vperm.xlu0 %2186, %v2077
    %v2188 = vpop.permute.xlu0 %2187
    %2191 = vset.pattern.permute.xlu0 2
    %2192 = vperm.xlu0 %2191, %v2078
    %v2193 = vpop.permute.xlu0 %2192
    %2196 = vset.pattern.permute.xlu0 2
    %2197 = vperm.xlu0 %2196, %v2079
    %v2198 = vpop.permute.xlu0 %2197
    %2201 = vset.pattern.permute.xlu0 2
    %2202 = vperm.xlu0 %2201, %v2080
    %v2203 = vpop.permute.xlu0 %2202
    %2206 = vset.pattern.permute.xlu0 2
    %2207 = vperm.xlu0 %2206, %v2081
    %v2208 = vpop.permute.xlu0 %2207
    %v2210 = vsub.f32 %v2002, %v2133
    %v2211 = vsub.f32 %v2003, %v2138
    %v2212 = vsub.f32 %v2004, %v2143
    %v2213 = vsub.f32 %v2005, %v2148
    %v2214 = vsub.f32 %v2006, %v2153
    %v2215 = vsub.f32 %v2007, %v2158
    %v2216 = vsub.f32 %v2008, %v2163
    %v2217 = vsub.f32 %v2009, %v2168
    %v2218 = vsub.f32 %v2010, %v2173
    %v2219 = vsub.f32 %v2011, %v2178
    %v2220 = vsub.f32 %v2012, %v2183
    %v2221 = vsub.f32 %v2013, %v2188
    %v2222 = vsub.f32 %v2014, %v2193
    %v2223 = vsub.f32 %v2015, %v2198
    %v2224 = vsub.f32 %v2016, %v2203
    %v2225 = vsub.f32 %v2017, %v2208
    %v2226 = vpack.c.bf16 %v2211, %v2210
    %v2227 = vpack.c.bf16 %v2213, %v2212
    %v2228 = vpack.c.bf16 %v2215, %v2214
    %v2229 = vpack.c.bf16 %v2217, %v2216
    %v2230 = vpack.c.bf16 %v2219, %v2218
    %v2231 = vpack.c.bf16 %v2221, %v2220
    %v2232 = vpack.c.bf16 %v2223, %v2222
    %v2233 = vpack.c.bf16 %v2225, %v2224
    %v2234 = vunpack.c.l.bf16 %v2226
    %v2235 = vunpack.c.h.bf16 %v2226
    %v2236 = vunpack.c.l.bf16 %v2227
    %v2237 = vunpack.c.h.bf16 %v2227
    %v2238 = vunpack.c.l.bf16 %v2228
    %v2239 = vunpack.c.h.bf16 %v2228
    %v2240 = vunpack.c.l.bf16 %v2229
    %v2241 = vunpack.c.h.bf16 %v2229
    %v2242 = vunpack.c.l.bf16 %v2230
    %v2243 = vunpack.c.h.bf16 %v2230
    %v2244 = vunpack.c.l.bf16 %v2231
    %v2245 = vunpack.c.h.bf16 %v2231
    %v2246 = vunpack.c.l.bf16 %v2232
    %v2247 = vunpack.c.h.bf16 %v2232
    %v2248 = vunpack.c.l.bf16 %v2233
    %v2249 = vunpack.c.h.bf16 %v2233
    %v2250 = vmul.f32 %v2234, 1.442695
    %v2251 = vpow.pop %v2250
    %v2252 = vmul.f32 %v2235, 1.442695
    %v2253 = vpow.pop %v2252
    %v2254 = vmul.f32 %v2236, 1.442695
    %v2255 = vpow.pop %v2254
    %v2256 = vmul.f32 %v2237, 1.442695
    %v2257 = vpow.pop %v2256
    %v2258 = vmul.f32 %v2238, 1.442695
    %v2259 = vpow.pop %v2258
    %v2260 = vmul.f32 %v2239, 1.442695
    %v2261 = vpow.pop %v2260
    %v2262 = vmul.f32 %v2240, 1.442695
    %v2263 = vpow.pop %v2262
    %v2264 = vmul.f32 %v2241, 1.442695
    %v2265 = vpow.pop %v2264
    %v2266 = vmul.f32 %v2242, 1.442695
    %v2267 = vpow.pop %v2266
    %v2268 = vmul.f32 %v2243, 1.442695
    %v2269 = vpow.pop %v2268
    %v2270 = vmul.f32 %v2244, 1.442695
    %v2271 = vpow.pop %v2270
    %v2272 = vmul.f32 %v2245, 1.442695
    %v2273 = vpow.pop %v2272
    %v2274 = vmul.f32 %v2246, 1.442695
    %v2275 = vpow.pop %v2274
    %v2276 = vmul.f32 %v2247, 1.442695
    %v2277 = vpow.pop %v2276
    %v2278 = vmul.f32 %v2248, 1.442695
    %v2279 = vpow.pop %v2278
    %v2280 = vmul.f32 %v2249, 1.442695
    %v2281 = vpow.pop %v2280
    %v2282 = vpack.c.bf16 %v2253, %v2251
    %v2283 = vpack.c.bf16 %v2257, %v2255
    %v2284 = vpack.c.bf16 %v2261, %v2259
    %v2285 = vpack.c.bf16 %v2265, %v2263
    %v2286 = vpack.c.bf16 %v2269, %v2267
    %v2287 = vpack.c.bf16 %v2273, %v2271
    %v2288 = vpack.c.bf16 %v2277, %v2275
    %v2289 = vpack.c.bf16 %v2281, %v2279
    %v2290 = vunpack.c.l.bf16 %v2282
    %v2291 = vunpack.c.h.bf16 %v2282
    %v2292 = vunpack.c.l.bf16 %v2283
    %v2293 = vunpack.c.h.bf16 %v2283
    %v2294 = vunpack.c.l.bf16 %v2284
    %v2295 = vunpack.c.h.bf16 %v2284
    %v2296 = vunpack.c.l.bf16 %v2285
    %v2297 = vunpack.c.h.bf16 %v2285
    %v2298 = vunpack.c.l.bf16 %v2286
    %v2299 = vunpack.c.h.bf16 %v2286
    %v2300 = vunpack.c.l.bf16 %v2287
    %v2301 = vunpack.c.h.bf16 %v2287
    %v2302 = vunpack.c.l.bf16 %v2288
    %v2303 = vunpack.c.h.bf16 %v2288
    %v2304 = vunpack.c.l.bf16 %v2289
    %v2305 = vunpack.c.h.bf16 %v2289
    %2306 = vadd.xlane.f32.xlu0 %v2290
    %v2307 = vpop.xlane.xlu0 %2306
    %2308 = vadd.xlane.f32.xlu0 %v2291
    %v2309 = vpop.xlane.xlu0 %2308
    %2310 = vadd.xlane.f32.xlu0 %v2292
    %v2311 = vpop.xlane.xlu0 %2310
    %2312 = vadd.xlane.f32.xlu0 %v2293
    %v2313 = vpop.xlane.xlu0 %2312
    %2314 = vadd.xlane.f32.xlu0 %v2294
    %v2315 = vpop.xlane.xlu0 %2314
    %2316 = vadd.xlane.f32.xlu0 %v2295
    %v2317 = vpop.xlane.xlu0 %2316
    %2318 = vadd.xlane.f32.xlu0 %v2296
    %v2319 = vpop.xlane.xlu0 %2318
    %2320 = vadd.xlane.f32.xlu0 %v2297
    %v2321 = vpop.xlane.xlu0 %2320
    %2322 = vadd.xlane.f32.xlu0 %v2298
    %v2323 = vpop.xlane.xlu0 %2322
    %2324 = vadd.xlane.f32.xlu0 %v2299
    %v2325 = vpop.xlane.xlu0 %2324
    %2326 = vadd.xlane.f32.xlu0 %v2300
    %v2327 = vpop.xlane.xlu0 %2326
    %2328 = vadd.xlane.f32.xlu0 %v2301
    %v2329 = vpop.xlane.xlu0 %2328
    %2330 = vadd.xlane.f32.xlu0 %v2302
    %v2331 = vpop.xlane.xlu0 %2330
    %2332 = vadd.xlane.f32.xlu0 %v2303
    %v2333 = vpop.xlane.xlu0 %2332
    %2334 = vadd.xlane.f32.xlu0 %v2304
    %v2335 = vpop.xlane.xlu0 %2334
    %2336 = vadd.xlane.f32.xlu0 %v2305
    %v2337 = vpop.xlane.xlu0 %2336
    %2338 = vrot.lane.b32.xlu0 %v754, 112
    %v2339 = vpop.permute.xlu0 %2338
    %2340 = vrot.lane.b32.xlu0 %v755, 112
    %v2341 = vpop.permute.xlu0 %2340
    %2342 = vrot.lane.b32.xlu0 %v756, 112
    %v2343 = vpop.permute.xlu0 %2342
    %2344 = vrot.lane.b32.xlu0 %v757, 112
    %v2345 = vpop.permute.xlu0 %2344
    %2346 = vrot.lane.b32.xlu0 %v758, 112
    %v2347 = vpop.permute.xlu0 %2346
    %2348 = vrot.lane.b32.xlu0 %v759, 112
    %v2349 = vpop.permute.xlu0 %2348
    %2350 = vrot.lane.b32.xlu0 %v760, 112
    %v2351 = vpop.permute.xlu0 %2350
    %2352 = vrot.lane.b32.xlu0 %v761, 112
    %v2353 = vpop.permute.xlu0 %2352
    %2362 = vmatpush.bf16.msra.mxu0 %v2353
    %2363 = vmatpush.bf16.msra.mxu0 %v2351
    %2364 = vmatpush.bf16.msra.mxu0 %v2349
    %2365 = vmatpush.bf16.msra.mxu0 %v2347
    %2366 = vmatpush.bf16.msra.mxu0 %v2345
    %2367 = vmatpush.bf16.msra.mxu0 %v2343
    %2368 = vmatpush.bf16.msra.mxu0 %v2341
    %2369 = vmatpush.bf16.msra.mxu0 %v2339
    %2370 = vmatmul.bf16.gmra.mxu0 %v2282
    %v2371 = vpop.f32.mrf.mxu0
    %v2372 = vadd.f32 0.0, %v2371
    %v2373 = vpop.f32.mrf.mxu0
    %v2374 = vadd.f32 0.0, %v2373
    %2375 = vmatmul.bf16.gmra.mxu0 %v2283
    %v2376 = vpop.f32.mrf.mxu0
    %v2377 = vadd.f32 0.0, %v2376
    %v2378 = vpop.f32.mrf.mxu0
    %v2379 = vadd.f32 0.0, %v2378
    %2380 = vmatmul.bf16.gmra.mxu0 %v2284
    %v2381 = vpop.f32.mrf.mxu0
    %v2382 = vadd.f32 0.0, %v2381
    %v2383 = vpop.f32.mrf.mxu0
    %v2384 = vadd.f32 0.0, %v2383
    %2385 = vmatmul.bf16.gmra.mxu0 %v2285
    %v2386 = vpop.f32.mrf.mxu0
    %v2387 = vadd.f32 0.0, %v2386
    %v2388 = vpop.f32.mrf.mxu0
    %v2389 = vadd.f32 0.0, %v2388
    %2390 = vmatmul.bf16.gmra.mxu0 %v2286
    %v2391 = vpop.f32.mrf.mxu0
    %v2392 = vadd.f32 0.0, %v2391
    %v2393 = vpop.f32.mrf.mxu0
    %v2394 = vadd.f32 0.0, %v2393
    %2395 = vmatmul.bf16.gmra.mxu0 %v2287
    %v2396 = vpop.f32.mrf.mxu0
    %v2397 = vadd.f32 0.0, %v2396
    %v2398 = vpop.f32.mrf.mxu0
    %v2399 = vadd.f32 0.0, %v2398
    %2400 = vmatmul.bf16.gmra.mxu0 %v2288
    %v2401 = vpop.f32.mrf.mxu0
    %v2402 = vadd.f32 0.0, %v2401
    %v2403 = vpop.f32.mrf.mxu0
    %v2404 = vadd.f32 0.0, %v2403
    %2405 = vmatmul.bf16.gmra.mxu0 %v2289
    %v2406 = vpop.f32.mrf.mxu0
    %v2407 = vadd.f32 0.0, %v2406
    %v2408 = vpop.f32.mrf.mxu0
    %v2409 = vadd.f32 0.0, %v2408
    %2410 = vdwg.mxu0
    %v2411 = vld [vmem:[#allocation4] sm:$0xff]
    %v2412 = vld [vmem:[#allocation4 + $0x8] sm:$0xff]
    %v2413 = vld [vmem:[#allocation4 + $0x10] sm:$0xff]
    %v2414 = vld [vmem:[#allocation4 + $0x18] sm:$0xff]
    %v2415 = vld [vmem:[#allocation4 + $0x20] sm:$0xff]
    %v2416 = vld [vmem:[#allocation4 + $0x28] sm:$0xff]
    %v2417 = vld [vmem:[#allocation4 + $0x30] sm:$0xff]
    %v2418 = vld [vmem:[#allocation4 + $0x38] sm:$0xff]
    %v2419 = vld [vmem:[#allocation4 + $0x40] sm:$0xff]
    %v2420 = vld [vmem:[#allocation4 + $0x48] sm:$0xff]
    %v2421 = vld [vmem:[#allocation4 + $0x50] sm:$0xff]
    %v2422 = vld [vmem:[#allocation4 + $0x58] sm:$0xff]
    %v2423 = vld [vmem:[#allocation4 + $0x60] sm:$0xff]
    %v2424 = vld [vmem:[#allocation4 + $0x68] sm:$0xff]
    %v2425 = vld [vmem:[#allocation4 + $0x70] sm:$0xff]
    %v2426 = vld [vmem:[#allocation4 + $0x78] sm:$0xff]
    %v2427 = vmul.f32 %v2099, %v2411
    %v2428 = vmul.f32 %v2101, %v2412
    %v2429 = vmul.f32 %v2103, %v2413
    %v2430 = vmul.f32 %v2105, %v2414
    %v2431 = vmul.f32 %v2107, %v2415
    %v2432 = vmul.f32 %v2109, %v2416
    %v2433 = vmul.f32 %v2111, %v2417
    %v2434 = vmul.f32 %v2113, %v2418
    %v2435 = vmul.f32 %v2115, %v2419
    %v2436 = vmul.f32 %v2117, %v2420
    %v2437 = vmul.f32 %v2119, %v2421
    %v2438 = vmul.f32 %v2121, %v2422
    %v2439 = vmul.f32 %v2123, %v2423
    %v2440 = vmul.f32 %v2125, %v2424
    %v2441 = vmul.f32 %v2127, %v2425
    %v2442 = vmul.f32 %v2129, %v2426
    %v2443 = vadd.f32 %v2427, %v2307
    %v2444 = vadd.f32 %v2428, %v2309
    %v2445 = vadd.f32 %v2429, %v2311
    %v2446 = vadd.f32 %v2430, %v2313
    %v2447 = vadd.f32 %v2431, %v2315
    %v2448 = vadd.f32 %v2432, %v2317
    %v2449 = vadd.f32 %v2433, %v2319
    %v2450 = vadd.f32 %v2434, %v2321
    %v2451 = vadd.f32 %v2435, %v2323
    %v2452 = vadd.f32 %v2436, %v2325
    %v2453 = vadd.f32 %v2437, %v2327
    %v2454 = vadd.f32 %v2438, %v2329
    %v2455 = vadd.f32 %v2439, %v2331
    %v2456 = vadd.f32 %v2440, %v2333
    %v2457 = vadd.f32 %v2441, %v2335
    %v2458 = vadd.f32 %v2442, %v2337
    %vm2459 = vcmask 23568
    %2460 = vst.msk [vmem:[#allocation4] sm:$0xff] %vm2459, %v2443
    %2461 = vst.msk [vmem:[#allocation4 + $0x8] sm:$0xff] %vm2459, %v2444
    %2462 = vst.msk [vmem:[#allocation4 + $0x10] sm:$0xff] %vm2459, %v2445
    %2463 = vst.msk [vmem:[#allocation4 + $0x18] sm:$0xff] %vm2459, %v2446
    %2464 = vst.msk [vmem:[#allocation4 + $0x20] sm:$0xff] %vm2459, %v2447
    %2465 = vst.msk [vmem:[#allocation4 + $0x28] sm:$0xff] %vm2459, %v2448
    %2466 = vst.msk [vmem:[#allocation4 + $0x30] sm:$0xff] %vm2459, %v2449
    %2467 = vst.msk [vmem:[#allocation4 + $0x38] sm:$0xff] %vm2459, %v2450
    %2468 = vst.msk [vmem:[#allocation4 + $0x40] sm:$0xff] %vm2459, %v2451
    %2469 = vst.msk [vmem:[#allocation4 + $0x48] sm:$0xff] %vm2459, %v2452
    %2470 = vst.msk [vmem:[#allocation4 + $0x50] sm:$0xff] %vm2459, %v2453
    %2471 = vst.msk [vmem:[#allocation4 + $0x58] sm:$0xff] %vm2459, %v2454
    %2472 = vst.msk [vmem:[#allocation4 + $0x60] sm:$0xff] %vm2459, %v2455
    %2473 = vst.msk [vmem:[#allocation4 + $0x68] sm:$0xff] %vm2459, %v2456
    %2474 = vst.msk [vmem:[#allocation4 + $0x70] sm:$0xff] %vm2459, %v2457
    %2475 = vst.msk [vmem:[#allocation4 + $0x78] sm:$0xff] %vm2459, %v2458
    %v2476 = vld [vmem:[#allocation2] sm:$0xff]
    %v2477 = vld [vmem:[#allocation2 + $0x8] sm:$0xff]
    %v2478 = vld [vmem:[#allocation2 + $0x10] sm:$0xff]
    %v2479 = vld [vmem:[#allocation2 + $0x18] sm:$0xff]
    %v2480 = vld [vmem:[#allocation2 + $0x20] sm:$0xff]
    %v2481 = vld [vmem:[#allocation2 + $0x28] sm:$0xff]
    %v2482 = vld [vmem:[#allocation2 + $0x30] sm:$0xff]
    %v2483 = vld [vmem:[#allocation2 + $0x38] sm:$0xff]
    %v2484 = vld [vmem:[#allocation2 + $0x40] sm:$0xff]
    %v2485 = vld [vmem:[#allocation2 + $0x48] sm:$0xff]
    %v2486 = vld [vmem:[#allocation2 + $0x50] sm:$0xff]
    %v2487 = vld [vmem:[#allocation2 + $0x58] sm:$0xff]
    %v2488 = vld [vmem:[#allocation2 + $0x60] sm:$0xff]
    %v2489 = vld [vmem:[#allocation2 + $0x68] sm:$0xff]
    %v2490 = vld [vmem:[#allocation2 + $0x70] sm:$0xff]
    %v2491 = vld [vmem:[#allocation2 + $0x78] sm:$0xff]
    %2493 = vset.pattern.permute.xlu0 2
    %2494 = vperm.xlu0 %2493, %v2099
    %v2495 = vpop.permute.xlu0 %2494
    %2498 = vset.pattern.permute.xlu0 2
    %2499 = vperm.xlu0 %2498, %v2101
    %v2500 = vpop.permute.xlu0 %2499
    %2503 = vset.pattern.permute.xlu0 2
    %2504 = vperm.xlu0 %2503, %v2103
    %v2505 = vpop.permute.xlu0 %2504
    %2508 = vset.pattern.permute.xlu0 2
    %2509 = vperm.xlu0 %2508, %v2105
    %v2510 = vpop.permute.xlu0 %2509
    %2513 = vset.pattern.permute.xlu0 2
    %2514 = vperm.xlu0 %2513, %v2107
    %v2515 = vpop.permute.xlu0 %2514
    %2518 = vset.pattern.permute.xlu0 2
    %2519 = vperm.xlu0 %2518, %v2109
    %v2520 = vpop.permute.xlu0 %2519
    %2523 = vset.pattern.permute.xlu0 2
    %2524 = vperm.xlu0 %2523, %v2111
    %v2525 = vpop.permute.xlu0 %2524
    %2528 = vset.pattern.permute.xlu0 2
    %2529 = vperm.xlu0 %2528, %v2113
    %v2530 = vpop.permute.xlu0 %2529
    %2533 = vset.pattern.permute.xlu0 2
    %2534 = vperm.xlu0 %2533, %v2115
    %v2535 = vpop.permute.xlu0 %2534
    %2538 = vset.pattern.permute.xlu0 2
    %2539 = vperm.xlu0 %2538, %v2117
    %v2540 = vpop.permute.xlu0 %2539
    %2543 = vset.pattern.permute.xlu0 2
    %2544 = vperm.xlu0 %2543, %v2119
    %v2545 = vpop.permute.xlu0 %2544
    %2548 = vset.pattern.permute.xlu0 2
    %2549 = vperm.xlu0 %2548, %v2121
    %v2550 = vpop.permute.xlu0 %2549
    %2553 = vset.pattern.permute.xlu0 2
    %2554 = vperm.xlu0 %2553, %v2123
    %v2555 = vpop.permute.xlu0 %2554
    %2558 = vset.pattern.permute.xlu0 2
    %2559 = vperm.xlu0 %2558, %v2125
    %v2560 = vpop.permute.xlu0 %2559
    %2563 = vset.pattern.permute.xlu0 2
    %2564 = vperm.xlu0 %2563, %v2127
    %v2565 = vpop.permute.xlu0 %2564
    %2568 = vset.pattern.permute.xlu0 2
    %2569 = vperm.xlu0 %2568, %v2129
    %v2570 = vpop.permute.xlu0 %2569
    %v2572 = vmul.f32 %v2495, %v2476
    %v2573 = vmul.f32 %v2500, %v2477
    %v2574 = vmul.f32 %v2505, %v2478
    %v2575 = vmul.f32 %v2510, %v2479
    %v2576 = vmul.f32 %v2515, %v2480
    %v2577 = vmul.f32 %v2520, %v2481
    %v2578 = vmul.f32 %v2525, %v2482
    %v2579 = vmul.f32 %v2530, %v2483
    %v2580 = vmul.f32 %v2535, %v2484
    %v2581 = vmul.f32 %v2540, %v2485
    %v2582 = vmul.f32 %v2545, %v2486
    %v2583 = vmul.f32 %v2550, %v2487
    %v2584 = vmul.f32 %v2555, %v2488
    %v2585 = vmul.f32 %v2560, %v2489
    %v2586 = vmul.f32 %v2565, %v2490
    %v2587 = vmul.f32 %v2570, %v2491
    %2604 = vrot.lane.b32.xlu0 %v2372, 16
    %v2605 = vpop.permute.xlu0 %2604
    %2606 = vrot.lane.b32.xlu0 %v2374, 16
    %v2607 = vpop.permute.xlu0 %2606
    %2608 = vrot.lane.b32.xlu0 %v2377, 16
    %v2609 = vpop.permute.xlu0 %2608
    %2610 = vrot.lane.b32.xlu0 %v2379, 16
    %v2611 = vpop.permute.xlu0 %2610
    %2612 = vrot.lane.b32.xlu0 %v2382, 16
    %v2613 = vpop.permute.xlu0 %2612
    %2614 = vrot.lane.b32.xlu0 %v2384, 16
    %v2615 = vpop.permute.xlu0 %2614
    %2616 = vrot.lane.b32.xlu0 %v2387, 16
    %v2617 = vpop.permute.xlu0 %2616
    %2618 = vrot.lane.b32.xlu0 %v2389, 16
    %v2619 = vpop.permute.xlu0 %2618
    %2620 = vrot.lane.b32.xlu0 %v2392, 16
    %v2621 = vpop.permute.xlu0 %2620
    %2622 = vrot.lane.b32.xlu0 %v2394, 16
    %v2623 = vpop.permute.xlu0 %2622
    %2624 = vrot.lane.b32.xlu0 %v2397, 16
    %v2625 = vpop.permute.xlu0 %2624
    %2626 = vrot.lane.b32.xlu0 %v2399, 16
    %v2627 = vpop.permute.xlu0 %2626
    %2628 = vrot.lane.b32.xlu0 %v2402, 16
    %v2629 = vpop.permute.xlu0 %2628
    %2630 = vrot.lane.b32.xlu0 %v2404, 16
    %v2631 = vpop.permute.xlu0 %2630
    %2632 = vrot.lane.b32.xlu0 %v2407, 16
    %v2633 = vpop.permute.xlu0 %2632
    %2634 = vrot.lane.b32.xlu0 %v2409, 16
    %v2635 = vpop.permute.xlu0 %2634
    %v2652 = vadd.f32 %v2572, %v2605
    %v2653 = vadd.f32 %v2573, %v2607
    %v2654 = vadd.f32 %v2574, %v2609
    %v2655 = vadd.f32 %v2575, %v2611
    %v2656 = vadd.f32 %v2576, %v2613
    %v2657 = vadd.f32 %v2577, %v2615
    %v2658 = vadd.f32 %v2578, %v2617
    %v2659 = vadd.f32 %v2579, %v2619
    %v2660 = vadd.f32 %v2580, %v2621
    %v2661 = vadd.f32 %v2581, %v2623
    %v2662 = vadd.f32 %v2582, %v2625
    %v2663 = vadd.f32 %v2583, %v2627
    %v2664 = vadd.f32 %v2584, %v2629
    %v2665 = vadd.f32 %v2585, %v2631
    %v2666 = vadd.f32 %v2586, %v2633
    %v2667 = vadd.f32 %v2587, %v2635
    %vm2668 = vcmask 195712
    %2669 = vst.msk [vmem:[#allocation2] sm:$0xff] %vm2668, %v2652
    %2670 = vst.msk [vmem:[#allocation2 + $0x8] sm:$0xff] %vm2668, %v2653
    %2671 = vst.msk [vmem:[#allocation2 + $0x10] sm:$0xff] %vm2668, %v2654
    %2672 = vst.msk [vmem:[#allocation2 + $0x18] sm:$0xff] %vm2668, %v2655
    %2673 = vst.msk [vmem:[#allocation2 + $0x20] sm:$0xff] %vm2668, %v2656
    %2674 = vst.msk [vmem:[#allocation2 + $0x28] sm:$0xff] %vm2668, %v2657
    %2675 = vst.msk [vmem:[#allocation2 + $0x30] sm:$0xff] %vm2668, %v2658
    %2676 = vst.msk [vmem:[#allocation2 + $0x38] sm:$0xff] %vm2668, %v2659
    %2677 = vst.msk [vmem:[#allocation2 + $0x40] sm:$0xff] %vm2668, %v2660
    %2678 = vst.msk [vmem:[#allocation2 + $0x48] sm:$0xff] %vm2668, %v2661
    %2679 = vst.msk [vmem:[#allocation2 + $0x50] sm:$0xff] %vm2668, %v2662
    %2680 = vst.msk [vmem:[#allocation2 + $0x58] sm:$0xff] %vm2668, %v2663
    %2681 = vst.msk [vmem:[#allocation2 + $0x60] sm:$0xff] %vm2668, %v2664
    %2682 = vst.msk [vmem:[#allocation2 + $0x68] sm:$0xff] %vm2668, %v2665
    %2683 = vst.msk [vmem:[#allocation2 + $0x70] sm:$0xff] %vm2668, %v2666
    %2684 = vst.msk [vmem:[#allocation2 + $0x78] sm:$0xff] %vm2668, %v2667
    %2685 = vst.msk [vmem:[#allocation3] sm:$0xff] %vm2459, %v2066
    %2686 = vst.msk [vmem:[#allocation3 + $0x8] sm:$0xff] %vm2459, %v2067
    %2687 = vst.msk [vmem:[#allocation3 + $0x10] sm:$0xff] %vm2459, %v2068
    %2688 = vst.msk [vmem:[#allocation3 + $0x18] sm:$0xff] %vm2459, %v2069
    %2689 = vst.msk [vmem:[#allocation3 + $0x20] sm:$0xff] %vm2459, %v2070
    %2690 = vst.msk [vmem:[#allocation3 + $0x28] sm:$0xff] %vm2459, %v2071
    %2691 = vst.msk [vmem:[#allocation3 + $0x30] sm:$0xff] %vm2459, %v2072
    %2692 = vst.msk [vmem:[#allocation3 + $0x38] sm:$0xff] %vm2459, %v2073
    %2693 = vst.msk [vmem:[#allocation3 + $0x40] sm:$0xff] %vm2459, %v2074
    %2694 = vst.msk [vmem:[#allocation3 + $0x48] sm:$0xff] %vm2459, %v2075
    %2695 = vst.msk [vmem:[#allocation3 + $0x50] sm:$0xff] %vm2459, %v2076
    %2696 = vst.msk [vmem:[#allocation3 + $0x58] sm:$0xff] %vm2459, %v2077
    %2697 = vst.msk [vmem:[#allocation3 + $0x60] sm:$0xff] %vm2459, %v2078
    %2698 = vst.msk [vmem:[#allocation3 + $0x68] sm:$0xff] %vm2459, %v2079
    %2699 = vst.msk [vmem:[#allocation3 + $0x70] sm:$0xff] %vm2459, %v2080
    %2700 = vst.msk [vmem:[#allocation3 + $0x78] sm:$0xff] %vm2459, %v2081
    %2701 = vset.pattern.permute.xlu0 3
    %2702 = vperm.xlu0 %2701, %v109
    %v2703 = vpop.permute.xlu0 %2702
    %2705 = vset.pattern.permute.xlu0 3
    %2706 = vperm.xlu0 %2705, %v110
    %v2707 = vpop.permute.xlu0 %2706
    %2709 = vset.pattern.permute.xlu0 3
    %2710 = vperm.xlu0 %2709, %v111
    %v2711 = vpop.permute.xlu0 %2710
    %2713 = vset.pattern.permute.xlu0 3
    %2714 = vperm.xlu0 %2713, %v112
    %v2715 = vpop.permute.xlu0 %2714
    %2717 = vset.pattern.permute.xlu0 3
    %2718 = vperm.xlu0 %2717, %v113
    %v2719 = vpop.permute.xlu0 %2718
    %2721 = vset.pattern.permute.xlu0 3
    %2722 = vperm.xlu0 %2721, %v114
    %v2723 = vpop.permute.xlu0 %2722
    %2725 = vset.pattern.permute.xlu0 3
    %2726 = vperm.xlu0 %2725, %v115
    %v2727 = vpop.permute.xlu0 %2726
    %2729 = vset.pattern.permute.xlu0 3
    %2730 = vperm.xlu0 %2729, %v116
    %v2731 = vpop.permute.xlu0 %2730
    %2733 = vset.pattern.permute.xlu0 3
    %2734 = vperm.xlu0 %2733, %v117
    %v2735 = vpop.permute.xlu0 %2734
    %2737 = vset.pattern.permute.xlu0 3
    %2738 = vperm.xlu0 %2737, %v118
    %v2739 = vpop.permute.xlu0 %2738
    %2741 = vset.pattern.permute.xlu0 3
    %2742 = vperm.xlu0 %2741, %v119
    %v2743 = vpop.permute.xlu0 %2742
    %2745 = vset.pattern.permute.xlu0 3
    %2746 = vperm.xlu0 %2745, %v120
    %v2747 = vpop.permute.xlu0 %2746
    %2749 = vset.pattern.permute.xlu0 3
    %2750 = vperm.xlu0 %2749, %v121
    %v2751 = vpop.permute.xlu0 %2750
    %2753 = vset.pattern.permute.xlu0 3
    %2754 = vperm.xlu0 %2753, %v122
    %v2755 = vpop.permute.xlu0 %2754
    %2757 = vset.pattern.permute.xlu0 3
    %2758 = vperm.xlu0 %2757, %v123
    %v2759 = vpop.permute.xlu0 %2758
    %2761 = vset.pattern.permute.xlu0 3
    %2762 = vperm.xlu0 %2761, %v124
    %v2763 = vpop.permute.xlu0 %2762
    %v2765 = vperm.slane %v108, 3
    %v2766 = vadd.f32 %v2703, %v2765
    %v2767 = vadd.f32 %v2707, %v2765
    %v2768 = vadd.f32 %v2711, %v2765
    %v2769 = vadd.f32 %v2715, %v2765
    %v2770 = vadd.f32 %v2719, %v2765
    %v2771 = vadd.f32 %v2723, %v2765
    %v2772 = vadd.f32 %v2727, %v2765
    %v2773 = vadd.f32 %v2731, %v2765
    %v2774 = vadd.f32 %v2735, %v2765
    %v2775 = vadd.f32 %v2739, %v2765
    %v2776 = vadd.f32 %v2743, %v2765
    %v2777 = vadd.f32 %v2747, %v2765
    %v2778 = vadd.f32 %v2751, %v2765
    %v2779 = vadd.f32 %v2755, %v2765
    %v2780 = vadd.f32 %v2759, %v2765
    %v2781 = vadd.f32 %v2763, %v2765
    %vm2782 = vcmp.gt.f32.partialorder %v2766, 0.0
    %vm2783 = vcmp.gt.f32.partialorder %v2767, 0.0
    %vm2784 = vcmp.gt.f32.partialorder %v2768, 0.0
    %vm2785 = vcmp.gt.f32.partialorder %v2769, 0.0
    %vm2786 = vcmp.gt.f32.partialorder %v2770, 0.0
    %vm2787 = vcmp.gt.f32.partialorder %v2771, 0.0
    %vm2788 = vcmp.gt.f32.partialorder %v2772, 0.0
    %vm2789 = vcmp.gt.f32.partialorder %v2773, 0.0
    %vm2790 = vcmp.gt.f32.partialorder %v2774, 0.0
    %vm2791 = vcmp.gt.f32.partialorder %v2775, 0.0
    %vm2792 = vcmp.gt.f32.partialorder %v2776, 0.0
    %vm2793 = vcmp.gt.f32.partialorder %v2777, 0.0
    %vm2794 = vcmp.gt.f32.partialorder %v2778, 0.0
    %vm2795 = vcmp.gt.f32.partialorder %v2779, 0.0
    %vm2796 = vcmp.gt.f32.partialorder %v2780, 0.0
    %vm2797 = vcmp.gt.f32.partialorder %v2781, 0.0
    %v2798 = vmul.f32 %v2766, 0.2
    %v2799 = vmul.f32 %v2767, 0.2
    %v2800 = vmul.f32 %v2768, 0.2
    %v2801 = vmul.f32 %v2769, 0.2
    %v2802 = vmul.f32 %v2770, 0.2
    %v2803 = vmul.f32 %v2771, 0.2
    %v2804 = vmul.f32 %v2772, 0.2
    %v2805 = vmul.f32 %v2773, 0.2
    %v2806 = vmul.f32 %v2774, 0.2
    %v2807 = vmul.f32 %v2775, 0.2
    %v2808 = vmul.f32 %v2776, 0.2
    %v2809 = vmul.f32 %v2777, 0.2
    %v2810 = vmul.f32 %v2778, 0.2
    %v2811 = vmul.f32 %v2779, 0.2
    %v2812 = vmul.f32 %v2780, 0.2
    %v2813 = vmul.f32 %v2781, 0.2
    %v2814 = vsel %vm2782, %v2766, %v2798
    %v2815 = vsel %vm2783, %v2767, %v2799
    %v2816 = vsel %vm2784, %v2768, %v2800
    %v2817 = vsel %vm2785, %v2769, %v2801
    %v2818 = vsel %vm2786, %v2770, %v2802
    %v2819 = vsel %vm2787, %v2771, %v2803
    %v2820 = vsel %vm2788, %v2772, %v2804
    %v2821 = vsel %vm2789, %v2773, %v2805
    %v2822 = vsel %vm2790, %v2774, %v2806
    %v2823 = vsel %vm2791, %v2775, %v2807
    %v2824 = vsel %vm2792, %v2776, %v2808
    %v2825 = vsel %vm2793, %v2777, %v2809
    %v2826 = vsel %vm2794, %v2778, %v2810
    %v2827 = vsel %vm2795, %v2779, %v2811
    %v2828 = vsel %vm2796, %v2780, %v2812
    %v2829 = vsel %vm2797, %v2781, %v2813
    %v2830 = vsel %vm370, %v2814, -1e+30
    %v2831 = vsel %vm371, %v2815, -1e+30
    %v2832 = vsel %vm372, %v2816, -1e+30
    %v2833 = vsel %vm373, %v2817, -1e+30
    %v2834 = vsel %vm374, %v2818, -1e+30
    %v2835 = vsel %vm375, %v2819, -1e+30
    %v2836 = vsel %vm376, %v2820, -1e+30
    %v2837 = vsel %vm377, %v2821, -1e+30
    %v2838 = vsel %vm378, %v2822, -1e+30
    %v2839 = vsel %vm379, %v2823, -1e+30
    %v2840 = vsel %vm380, %v2824, -1e+30
    %v2841 = vsel %vm381, %v2825, -1e+30
    %v2842 = vsel %vm382, %v2826, -1e+30
    %v2843 = vsel %vm383, %v2827, -1e+30
    %v2844 = vsel %vm384, %v2828, -1e+30
    %v2845 = vsel %vm385, %v2829, -1e+30
    %v2846 = vld [vmem:[#allocation3] sm:$0xff]
    %v2847 = vld [vmem:[#allocation3 + $0x8] sm:$0xff]
    %v2848 = vld [vmem:[#allocation3 + $0x10] sm:$0xff]
    %v2849 = vld [vmem:[#allocation3 + $0x18] sm:$0xff]
    %v2850 = vld [vmem:[#allocation3 + $0x20] sm:$0xff]
    %v2851 = vld [vmem:[#allocation3 + $0x28] sm:$0xff]
    %v2852 = vld [vmem:[#allocation3 + $0x30] sm:$0xff]
    %v2853 = vld [vmem:[#allocation3 + $0x38] sm:$0xff]
    %v2854 = vld [vmem:[#allocation3 + $0x40] sm:$0xff]
    %v2855 = vld [vmem:[#allocation3 + $0x48] sm:$0xff]
    %v2856 = vld [vmem:[#allocation3 + $0x50] sm:$0xff]
    %v2857 = vld [vmem:[#allocation3 + $0x58] sm:$0xff]
    %v2858 = vld [vmem:[#allocation3 + $0x60] sm:$0xff]
    %v2859 = vld [vmem:[#allocation3 + $0x68] sm:$0xff]
    %v2860 = vld [vmem:[#allocation3 + $0x70] sm:$0xff]
    %v2861 = vld [vmem:[#allocation3 + $0x78] sm:$0xff]
    %2862 = vmax.xlane.f32.xlu0 %v2830
    %v2863 = vpop.xlane.xlu0 %2862
    %2864 = vmax.xlane.f32.xlu0 %v2831
    %v2865 = vpop.xlane.xlu0 %2864
    %2866 = vmax.xlane.f32.xlu0 %v2832
    %v2867 = vpop.xlane.xlu0 %2866
    %2868 = vmax.xlane.f32.xlu0 %v2833
    %v2869 = vpop.xlane.xlu0 %2868
    %2870 = vmax.xlane.f32.xlu0 %v2834
    %v2871 = vpop.xlane.xlu0 %2870
    %2872 = vmax.xlane.f32.xlu0 %v2835
    %v2873 = vpop.xlane.xlu0 %2872
    %2874 = vmax.xlane.f32.xlu0 %v2836
    %v2875 = vpop.xlane.xlu0 %2874
    %2876 = vmax.xlane.f32.xlu0 %v2837
    %v2877 = vpop.xlane.xlu0 %2876
    %2878 = vmax.xlane.f32.xlu0 %v2838
    %v2879 = vpop.xlane.xlu0 %2878
    %2880 = vmax.xlane.f32.xlu0 %v2839
    %v2881 = vpop.xlane.xlu0 %2880
    %2882 = vmax.xlane.f32.xlu0 %v2840
    %v2883 = vpop.xlane.xlu0 %2882
    %2884 = vmax.xlane.f32.xlu0 %v2841
    %v2885 = vpop.xlane.xlu0 %2884
    %2886 = vmax.xlane.f32.xlu0 %v2842
    %v2887 = vpop.xlane.xlu0 %2886
    %2888 = vmax.xlane.f32.xlu0 %v2843
    %v2889 = vpop.xlane.xlu0 %2888
    %2890 = vmax.xlane.f32.xlu0 %v2844
    %v2891 = vpop.xlane.xlu0 %2890
    %2892 = vmax.xlane.f32.xlu0 %v2845
    %v2893 = vpop.xlane.xlu0 %2892
    %v2894 = vmax.f32 %v2846, %v2863
    %v2895 = vmax.f32 %v2847, %v2865
    %v2896 = vmax.f32 %v2848, %v2867
    %v2897 = vmax.f32 %v2849, %v2869
    %v2898 = vmax.f32 %v2850, %v2871
    %v2899 = vmax.f32 %v2851, %v2873
    %v2900 = vmax.f32 %v2852, %v2875
    %v2901 = vmax.f32 %v2853, %v2877
    %v2902 = vmax.f32 %v2854, %v2879
    %v2903 = vmax.f32 %v2855, %v2881
    %v2904 = vmax.f32 %v2856, %v2883
    %v2905 = vmax.f32 %v2857, %v2885
    %v2906 = vmax.f32 %v2858, %v2887
    %v2907 = vmax.f32 %v2859, %v2889
    %v2908 = vmax.f32 %v2860, %v2891
    %v2909 = vmax.f32 %v2861, %v2893
    %v2910 = vsub.f32 %v2846, %v2894
    %v2911 = vsub.f32 %v2847, %v2895
    %v2912 = vsub.f32 %v2848, %v2896
    %v2913 = vsub.f32 %v2849, %v2897
    %v2914 = vsub.f32 %v2850, %v2898
    %v2915 = vsub.f32 %v2851, %v2899
    %v2916 = vsub.f32 %v2852, %v2900
    %v2917 = vsub.f32 %v2853, %v2901
    %v2918 = vsub.f32 %v2854, %v2902
    %v2919 = vsub.f32 %v2855, %v2903
    %v2920 = vsub.f32 %v2856, %v2904
    %v2921 = vsub.f32 %v2857, %v2905
    %v2922 = vsub.f32 %v2858, %v2906
    %v2923 = vsub.f32 %v2859, %v2907
    %v2924 = vsub.f32 %v2860, %v2908
    %v2925 = vsub.f32 %v2861, %v2909
    %v2926 = vmul.f32 %v2910, 1.442695
    %v2927 = vpow.pop %v2926
    %v2928 = vmul.f32 %v2911, 1.442695
    %v2929 = vpow.pop %v2928
    %v2930 = vmul.f32 %v2912, 1.442695
    %v2931 = vpow.pop %v2930
    %v2932 = vmul.f32 %v2913, 1.442695
    %v2933 = vpow.pop %v2932
    %v2934 = vmul.f32 %v2914, 1.442695
    %v2935 = vpow.pop %v2934
    %v2936 = vmul.f32 %v2915, 1.442695
    %v2937 = vpow.pop %v2936
    %v2938 = vmul.f32 %v2916, 1.442695
    %v2939 = vpow.pop %v2938
    %v2940 = vmul.f32 %v2917, 1.442695
    %v2941 = vpow.pop %v2940
    %v2942 = vmul.f32 %v2918, 1.442695
    %v2943 = vpow.pop %v2942
    %v2944 = vmul.f32 %v2919, 1.442695
    %v2945 = vpow.pop %v2944
    %v2946 = vmul.f32 %v2920, 1.442695
    %v2947 = vpow.pop %v2946
    %v2948 = vmul.f32 %v2921, 1.442695
    %v2949 = vpow.pop %v2948
    %v2950 = vmul.f32 %v2922, 1.442695
    %v2951 = vpow.pop %v2950
    %v2952 = vmul.f32 %v2923, 1.442695
    %v2953 = vpow.pop %v2952
    %v2954 = vmul.f32 %v2924, 1.442695
    %v2955 = vpow.pop %v2954
    %v2956 = vmul.f32 %v2925, 1.442695
    %v2957 = vpow.pop %v2956
    %2959 = vset.pattern.permute.xlu0 3
    %2960 = vperm.xlu0 %2959, %v2894
    %v2961 = vpop.permute.xlu0 %2960
    %2964 = vset.pattern.permute.xlu0 3
    %2965 = vperm.xlu0 %2964, %v2895
    %v2966 = vpop.permute.xlu0 %2965
    %2969 = vset.pattern.permute.xlu0 3
    %2970 = vperm.xlu0 %2969, %v2896
    %v2971 = vpop.permute.xlu0 %2970
    %2974 = vset.pattern.permute.xlu0 3
    %2975 = vperm.xlu0 %2974, %v2897
    %v2976 = vpop.permute.xlu0 %2975
    %2979 = vset.pattern.permute.xlu0 3
    %2980 = vperm.xlu0 %2979, %v2898
    %v2981 = vpop.permute.xlu0 %2980
    %2984 = vset.pattern.permute.xlu0 3
    %2985 = vperm.xlu0 %2984, %v2899
    %v2986 = vpop.permute.xlu0 %2985
    %2989 = vset.pattern.permute.xlu0 3
    %2990 = vperm.xlu0 %2989, %v2900
    %v2991 = vpop.permute.xlu0 %2990
    %2994 = vset.pattern.permute.xlu0 3
    %2995 = vperm.xlu0 %2994, %v2901
    %v2996 = vpop.permute.xlu0 %2995
    %2999 = vset.pattern.permute.xlu0 3
    %3000 = vperm.xlu0 %2999, %v2902
    %v3001 = vpop.permute.xlu0 %3000
    %3004 = vset.pattern.permute.xlu0 3
    %3005 = vperm.xlu0 %3004, %v2903
    %v3006 = vpop.permute.xlu0 %3005
    %3009 = vset.pattern.permute.xlu0 3
    %3010 = vperm.xlu0 %3009, %v2904
    %v3011 = vpop.permute.xlu0 %3010
    %3014 = vset.pattern.permute.xlu0 3
    %3015 = vperm.xlu0 %3014, %v2905
    %v3016 = vpop.permute.xlu0 %3015
    %3019 = vset.pattern.permute.xlu0 3
    %3020 = vperm.xlu0 %3019, %v2906
    %v3021 = vpop.permute.xlu0 %3020
    %3024 = vset.pattern.permute.xlu0 3
    %3025 = vperm.xlu0 %3024, %v2907
    %v3026 = vpop.permute.xlu0 %3025
    %3029 = vset.pattern.permute.xlu0 3
    %3030 = vperm.xlu0 %3029, %v2908
    %v3031 = vpop.permute.xlu0 %3030
    %3034 = vset.pattern.permute.xlu0 3
    %3035 = vperm.xlu0 %3034, %v2909
    %v3036 = vpop.permute.xlu0 %3035
    %v3038 = vsub.f32 %v2830, %v2961
    %v3039 = vsub.f32 %v2831, %v2966
    %v3040 = vsub.f32 %v2832, %v2971
    %v3041 = vsub.f32 %v2833, %v2976
    %v3042 = vsub.f32 %v2834, %v2981
    %v3043 = vsub.f32 %v2835, %v2986
    %v3044 = vsub.f32 %v2836, %v2991
    %v3045 = vsub.f32 %v2837, %v2996
    %v3046 = vsub.f32 %v2838, %v3001
    %v3047 = vsub.f32 %v2839, %v3006
    %v3048 = vsub.f32 %v2840, %v3011
    %v3049 = vsub.f32 %v2841, %v3016
    %v3050 = vsub.f32 %v2842, %v3021
    %v3051 = vsub.f32 %v2843, %v3026
    %v3052 = vsub.f32 %v2844, %v3031
    %v3053 = vsub.f32 %v2845, %v3036
    %v3054 = vpack.c.bf16 %v3039, %v3038
    %v3055 = vpack.c.bf16 %v3041, %v3040
    %v3056 = vpack.c.bf16 %v3043, %v3042
    %v3057 = vpack.c.bf16 %v3045, %v3044
    %v3058 = vpack.c.bf16 %v3047, %v3046
    %v3059 = vpack.c.bf16 %v3049, %v3048
    %v3060 = vpack.c.bf16 %v3051, %v3050
    %v3061 = vpack.c.bf16 %v3053, %v3052
    %v3062 = vunpack.c.l.bf16 %v3054
    %v3063 = vunpack.c.h.bf16 %v3054
    %v3064 = vunpack.c.l.bf16 %v3055
    %v3065 = vunpack.c.h.bf16 %v3055
    %v3066 = vunpack.c.l.bf16 %v3056
    %v3067 = vunpack.c.h.bf16 %v3056
    %v3068 = vunpack.c.l.bf16 %v3057
    %v3069 = vunpack.c.h.bf16 %v3057
    %v3070 = vunpack.c.l.bf16 %v3058
    %v3071 = vunpack.c.h.bf16 %v3058
    %v3072 = vunpack.c.l.bf16 %v3059
    %v3073 = vunpack.c.h.bf16 %v3059
    %v3074 = vunpack.c.l.bf16 %v3060
    %v3075 = vunpack.c.h.bf16 %v3060
    %v3076 = vunpack.c.l.bf16 %v3061
    %v3077 = vunpack.c.h.bf16 %v3061
    %v3078 = vmul.f32 %v3062, 1.442695
    %v3079 = vpow.pop %v3078
    %v3080 = vmul.f32 %v3063, 1.442695
    %v3081 = vpow.pop %v3080
    %v3082 = vmul.f32 %v3064, 1.442695
    %v3083 = vpow.pop %v3082
    %v3084 = vmul.f32 %v3065, 1.442695
    %v3085 = vpow.pop %v3084
    %v3086 = vmul.f32 %v3066, 1.442695
    %v3087 = vpow.pop %v3086
    %v3088 = vmul.f32 %v3067, 1.442695
    %v3089 = vpow.pop %v3088
    %v3090 = vmul.f32 %v3068, 1.442695
    %v3091 = vpow.pop %v3090
    %v3092 = vmul.f32 %v3069, 1.442695
    %v3093 = vpow.pop %v3092
    %v3094 = vmul.f32 %v3070, 1.442695
    %v3095 = vpow.pop %v3094
    %v3096 = vmul.f32 %v3071, 1.442695
    %v3097 = vpow.pop %v3096
    %v3098 = vmul.f32 %v3072, 1.442695
    %v3099 = vpow.pop %v3098
    %v3100 = vmul.f32 %v3073, 1.442695
    %v3101 = vpow.pop %v3100
    %v3102 = vmul.f32 %v3074, 1.442695
    %v3103 = vpow.pop %v3102
    %v3104 = vmul.f32 %v3075, 1.442695
    %v3105 = vpow.pop %v3104
    %v3106 = vmul.f32 %v3076, 1.442695
    %v3107 = vpow.pop %v3106
    %v3108 = vmul.f32 %v3077, 1.442695
    %v3109 = vpow.pop %v3108
    %v3110 = vpack.c.bf16 %v3081, %v3079
    %v3111 = vpack.c.bf16 %v3085, %v3083
    %v3112 = vpack.c.bf16 %v3089, %v3087
    %v3113 = vpack.c.bf16 %v3093, %v3091
    %v3114 = vpack.c.bf16 %v3097, %v3095
    %v3115 = vpack.c.bf16 %v3101, %v3099
    %v3116 = vpack.c.bf16 %v3105, %v3103
    %v3117 = vpack.c.bf16 %v3109, %v3107
    %v3118 = vunpack.c.l.bf16 %v3110
    %v3119 = vunpack.c.h.bf16 %v3110
    %v3120 = vunpack.c.l.bf16 %v3111
    %v3121 = vunpack.c.h.bf16 %v3111
    %v3122 = vunpack.c.l.bf16 %v3112
    %v3123 = vunpack.c.h.bf16 %v3112
    %v3124 = vunpack.c.l.bf16 %v3113
    %v3125 = vunpack.c.h.bf16 %v3113
    %v3126 = vunpack.c.l.bf16 %v3114
    %v3127 = vunpack.c.h.bf16 %v3114
    %v3128 = vunpack.c.l.bf16 %v3115
    %v3129 = vunpack.c.h.bf16 %v3115
    %v3130 = vunpack.c.l.bf16 %v3116
    %v3131 = vunpack.c.h.bf16 %v3116
    %v3132 = vunpack.c.l.bf16 %v3117
    %v3133 = vunpack.c.h.bf16 %v3117
    %3134 = vadd.xlane.f32.xlu0 %v3118
    %v3135 = vpop.xlane.xlu0 %3134
    %3136 = vadd.xlane.f32.xlu0 %v3119
    %v3137 = vpop.xlane.xlu0 %3136
    %3138 = vadd.xlane.f32.xlu0 %v3120
    %v3139 = vpop.xlane.xlu0 %3138
    %3140 = vadd.xlane.f32.xlu0 %v3121
    %v3141 = vpop.xlane.xlu0 %3140
    %3142 = vadd.xlane.f32.xlu0 %v3122
    %v3143 = vpop.xlane.xlu0 %3142
    %3144 = vadd.xlane.f32.xlu0 %v3123
    %v3145 = vpop.xlane.xlu0 %3144
    %3146 = vadd.xlane.f32.xlu0 %v3124
    %v3147 = vpop.xlane.xlu0 %3146
    %3148 = vadd.xlane.f32.xlu0 %v3125
    %v3149 = vpop.xlane.xlu0 %3148
    %3150 = vadd.xlane.f32.xlu0 %v3126
    %v3151 = vpop.xlane.xlu0 %3150
    %3152 = vadd.xlane.f32.xlu0 %v3127
    %v3153 = vpop.xlane.xlu0 %3152
    %3154 = vadd.xlane.f32.xlu0 %v3128
    %v3155 = vpop.xlane.xlu0 %3154
    %3156 = vadd.xlane.f32.xlu0 %v3129
    %v3157 = vpop.xlane.xlu0 %3156
    %3158 = vadd.xlane.f32.xlu0 %v3130
    %v3159 = vpop.xlane.xlu0 %3158
    %3160 = vadd.xlane.f32.xlu0 %v3131
    %v3161 = vpop.xlane.xlu0 %3160
    %3162 = vadd.xlane.f32.xlu0 %v3132
    %v3163 = vpop.xlane.xlu0 %3162
    %3164 = vadd.xlane.f32.xlu0 %v3133
    %v3165 = vpop.xlane.xlu0 %3164
    %3166 = vrot.lane.b32.xlu0 %v754, 104
    %v3167 = vpop.permute.xlu0 %3166
    %3168 = vrot.lane.b32.xlu0 %v755, 104
    %v3169 = vpop.permute.xlu0 %3168
    %3170 = vrot.lane.b32.xlu0 %v756, 104
    %v3171 = vpop.permute.xlu0 %3170
    %3172 = vrot.lane.b32.xlu0 %v757, 104
    %v3173 = vpop.permute.xlu0 %3172
    %3174 = vrot.lane.b32.xlu0 %v758, 104
    %v3175 = vpop.permute.xlu0 %3174
    %3176 = vrot.lane.b32.xlu0 %v759, 104
    %v3177 = vpop.permute.xlu0 %3176
    %3178 = vrot.lane.b32.xlu0 %v760, 104
    %v3179 = vpop.permute.xlu0 %3178
    %3180 = vrot.lane.b32.xlu0 %v761, 104
    %v3181 = vpop.permute.xlu0 %3180
    %3190 = vmatpush.bf16.msra.mxu0 %v3181
    %3191 = vmatpush.bf16.msra.mxu0 %v3179
    %3192 = vmatpush.bf16.msra.mxu0 %v3177
    %3193 = vmatpush.bf16.msra.mxu0 %v3175
    %3194 = vmatpush.bf16.msra.mxu0 %v3173
    %3195 = vmatpush.bf16.msra.mxu0 %v3171
    %3196 = vmatpush.bf16.msra.mxu0 %v3169
    %3197 = vmatpush.bf16.msra.mxu0 %v3167
    %3198 = vmatmul.bf16.gmra.mxu0 %v3110
    %v3199 = vpop.f32.mrf.mxu0
    %v3200 = vadd.f32 0.0, %v3199
    %v3201 = vpop.f32.mrf.mxu0
    %v3202 = vadd.f32 0.0, %v3201
    %3203 = vmatmul.bf16.gmra.mxu0 %v3111
    %v3204 = vpop.f32.mrf.mxu0
    %v3205 = vadd.f32 0.0, %v3204
    %v3206 = vpop.f32.mrf.mxu0
    %v3207 = vadd.f32 0.0, %v3206
    %3208 = vmatmul.bf16.gmra.mxu0 %v3112
    %v3209 = vpop.f32.mrf.mxu0
    %v3210 = vadd.f32 0.0, %v3209
    %v3211 = vpop.f32.mrf.mxu0
    %v3212 = vadd.f32 0.0, %v3211
    %3213 = vmatmul.bf16.gmra.mxu0 %v3113
    %v3214 = vpop.f32.mrf.mxu0
    %v3215 = vadd.f32 0.0, %v3214
    %v3216 = vpop.f32.mrf.mxu0
    %v3217 = vadd.f32 0.0, %v3216
    %3218 = vmatmul.bf16.gmra.mxu0 %v3114
    %v3219 = vpop.f32.mrf.mxu0
    %v3220 = vadd.f32 0.0, %v3219
    %v3221 = vpop.f32.mrf.mxu0
    %v3222 = vadd.f32 0.0, %v3221
    %3223 = vmatmul.bf16.gmra.mxu0 %v3115
    %v3224 = vpop.f32.mrf.mxu0
    %v3225 = vadd.f32 0.0, %v3224
    %v3226 = vpop.f32.mrf.mxu0
    %v3227 = vadd.f32 0.0, %v3226
    %3228 = vmatmul.bf16.gmra.mxu0 %v3116
    %v3229 = vpop.f32.mrf.mxu0
    %v3230 = vadd.f32 0.0, %v3229
    %v3231 = vpop.f32.mrf.mxu0
    %v3232 = vadd.f32 0.0, %v3231
    %3233 = vmatmul.bf16.gmra.mxu0 %v3117
    %v3234 = vpop.f32.mrf.mxu0
    %v3235 = vadd.f32 0.0, %v3234
    %v3236 = vpop.f32.mrf.mxu0
    %v3237 = vadd.f32 0.0, %v3236
    %3238 = vdwg.mxu0
    %v3239 = vld [vmem:[#allocation4] sm:$0xff]
    %v3240 = vld [vmem:[#allocation4 + $0x8] sm:$0xff]
    %v3241 = vld [vmem:[#allocation4 + $0x10] sm:$0xff]
    %v3242 = vld [vmem:[#allocation4 + $0x18] sm:$0xff]
    %v3243 = vld [vmem:[#allocation4 + $0x20] sm:$0xff]
    %v3244 = vld [vmem:[#allocation4 + $0x28] sm:$0xff]
    %v3245 = vld [vmem:[#allocation4 + $0x30] sm:$0xff]
    %v3246 = vld [vmem:[#allocation4 + $0x38] sm:$0xff]
    %v3247 = vld [vmem:[#allocation4 + $0x40] sm:$0xff]
    %v3248 = vld [vmem:[#allocation4 + $0x48] sm:$0xff]
    %v3249 = vld [vmem:[#allocation4 + $0x50] sm:$0xff]
    %v3250 = vld [vmem:[#allocation4 + $0x58] sm:$0xff]
    %v3251 = vld [vmem:[#allocation4 + $0x60] sm:$0xff]
    %v3252 = vld [vmem:[#allocation4 + $0x68] sm:$0xff]
    %v3253 = vld [vmem:[#allocation4 + $0x70] sm:$0xff]
    %v3254 = vld [vmem:[#allocation4 + $0x78] sm:$0xff]
    %v3255 = vmul.f32 %v2927, %v3239
    %v3256 = vmul.f32 %v2929, %v3240
    %v3257 = vmul.f32 %v2931, %v3241
    %v3258 = vmul.f32 %v2933, %v3242
    %v3259 = vmul.f32 %v2935, %v3243
    %v3260 = vmul.f32 %v2937, %v3244
    %v3261 = vmul.f32 %v2939, %v3245
    %v3262 = vmul.f32 %v2941, %v3246
    %v3263 = vmul.f32 %v2943, %v3247
    %v3264 = vmul.f32 %v2945, %v3248
    %v3265 = vmul.f32 %v2947, %v3249
    %v3266 = vmul.f32 %v2949, %v3250
    %v3267 = vmul.f32 %v2951, %v3251
    %v3268 = vmul.f32 %v2953, %v3252
    %v3269 = vmul.f32 %v2955, %v3253
    %v3270 = vmul.f32 %v2957, %v3254
    %v3271 = vadd.f32 %v3255, %v3135
    %v3272 = vadd.f32 %v3256, %v3137
    %v3273 = vadd.f32 %v3257, %v3139
    %v3274 = vadd.f32 %v3258, %v3141
    %v3275 = vadd.f32 %v3259, %v3143
    %v3276 = vadd.f32 %v3260, %v3145
    %v3277 = vadd.f32 %v3261, %v3147
    %v3278 = vadd.f32 %v3262, %v3149
    %v3279 = vadd.f32 %v3263, %v3151
    %v3280 = vadd.f32 %v3264, %v3153
    %v3281 = vadd.f32 %v3265, %v3155
    %v3282 = vadd.f32 %v3266, %v3157
    %v3283 = vadd.f32 %v3267, %v3159
    %v3284 = vadd.f32 %v3268, %v3161
    %v3285 = vadd.f32 %v3269, %v3163
    %v3286 = vadd.f32 %v3270, %v3165
    %vm3287 = vcmask 31768
    %3288 = vst.msk [vmem:[#allocation4] sm:$0xff] %vm3287, %v3271
    %3289 = vst.msk [vmem:[#allocation4 + $0x8] sm:$0xff] %vm3287, %v3272
    %3290 = vst.msk [vmem:[#allocation4 + $0x10] sm:$0xff] %vm3287, %v3273
    %3291 = vst.msk [vmem:[#allocation4 + $0x18] sm:$0xff] %vm3287, %v3274
    %3292 = vst.msk [vmem:[#allocation4 + $0x20] sm:$0xff] %vm3287, %v3275
    %3293 = vst.msk [vmem:[#allocation4 + $0x28] sm:$0xff] %vm3287, %v3276
    %3294 = vst.msk [vmem:[#allocation4 + $0x30] sm:$0xff] %vm3287, %v3277
    %3295 = vst.msk [vmem:[#allocation4 + $0x38] sm:$0xff] %vm3287, %v3278
    %3296 = vst.msk [vmem:[#allocation4 + $0x40] sm:$0xff] %vm3287, %v3279
    %3297 = vst.msk [vmem:[#allocation4 + $0x48] sm:$0xff] %vm3287, %v3280
    %3298 = vst.msk [vmem:[#allocation4 + $0x50] sm:$0xff] %vm3287, %v3281
    %3299 = vst.msk [vmem:[#allocation4 + $0x58] sm:$0xff] %vm3287, %v3282
    %3300 = vst.msk [vmem:[#allocation4 + $0x60] sm:$0xff] %vm3287, %v3283
    %3301 = vst.msk [vmem:[#allocation4 + $0x68] sm:$0xff] %vm3287, %v3284
    %3302 = vst.msk [vmem:[#allocation4 + $0x70] sm:$0xff] %vm3287, %v3285
    %3303 = vst.msk [vmem:[#allocation4 + $0x78] sm:$0xff] %vm3287, %v3286
    %v3304 = vld [vmem:[#allocation2] sm:$0xff]
    %v3305 = vld [vmem:[#allocation2 + $0x8] sm:$0xff]
    %v3306 = vld [vmem:[#allocation2 + $0x10] sm:$0xff]
    %v3307 = vld [vmem:[#allocation2 + $0x18] sm:$0xff]
    %v3308 = vld [vmem:[#allocation2 + $0x20] sm:$0xff]
    %v3309 = vld [vmem:[#allocation2 + $0x28] sm:$0xff]
    %v3310 = vld [vmem:[#allocation2 + $0x30] sm:$0xff]
    %v3311 = vld [vmem:[#allocation2 + $0x38] sm:$0xff]
    %v3312 = vld [vmem:[#allocation2 + $0x40] sm:$0xff]
    %v3313 = vld [vmem:[#allocation2 + $0x48] sm:$0xff]
    %v3314 = vld [vmem:[#allocation2 + $0x50] sm:$0xff]
    %v3315 = vld [vmem:[#allocation2 + $0x58] sm:$0xff]
    %v3316 = vld [vmem:[#allocation2 + $0x60] sm:$0xff]
    %v3317 = vld [vmem:[#allocation2 + $0x68] sm:$0xff]
    %v3318 = vld [vmem:[#allocation2 + $0x70] sm:$0xff]
    %v3319 = vld [vmem:[#allocation2 + $0x78] sm:$0xff]
    %3321 = vset.pattern.permute.xlu0 3
    %3322 = vperm.xlu0 %3321, %v2927
    %v3323 = vpop.permute.xlu0 %3322
    %3326 = vset.pattern.permute.xlu0 3
    %3327 = vperm.xlu0 %3326, %v2929
    %v3328 = vpop.permute.xlu0 %3327
    %3331 = vset.pattern.permute.xlu0 3
    %3332 = vperm.xlu0 %3331, %v2931
    %v3333 = vpop.permute.xlu0 %3332
    %3336 = vset.pattern.permute.xlu0 3
    %3337 = vperm.xlu0 %3336, %v2933
    %v3338 = vpop.permute.xlu0 %3337
    %3341 = vset.pattern.permute.xlu0 3
    %3342 = vperm.xlu0 %3341, %v2935
    %v3343 = vpop.permute.xlu0 %3342
    %3346 = vset.pattern.permute.xlu0 3
    %3347 = vperm.xlu0 %3346, %v2937
    %v3348 = vpop.permute.xlu0 %3347
    %3351 = vset.pattern.permute.xlu0 3
    %3352 = vperm.xlu0 %3351, %v2939
    %v3353 = vpop.permute.xlu0 %3352
    %3356 = vset.pattern.permute.xlu0 3
    %3357 = vperm.xlu0 %3356, %v2941
    %v3358 = vpop.permute.xlu0 %3357
    %3361 = vset.pattern.permute.xlu0 3
    %3362 = vperm.xlu0 %3361, %v2943
    %v3363 = vpop.permute.xlu0 %3362
    %3366 = vset.pattern.permute.xlu0 3
    %3367 = vperm.xlu0 %3366, %v2945
    %v3368 = vpop.permute.xlu0 %3367
    %3371 = vset.pattern.permute.xlu0 3
    %3372 = vperm.xlu0 %3371, %v2947
    %v3373 = vpop.permute.xlu0 %3372
    %3376 = vset.pattern.permute.xlu0 3
    %3377 = vperm.xlu0 %3376, %v2949
    %v3378 = vpop.permute.xlu0 %3377
    %3381 = vset.pattern.permute.xlu0 3
    %3382 = vperm.xlu0 %3381, %v2951
    %v3383 = vpop.permute.xlu0 %3382
    %3386 = vset.pattern.permute.xlu0 3
    %3387 = vperm.xlu0 %3386, %v2953
    %v3388 = vpop.permute.xlu0 %3387
    %3391 = vset.pattern.permute.xlu0 3
    %3392 = vperm.xlu0 %3391, %v2955
    %v3393 = vpop.permute.xlu0 %3392
    %3396 = vset.pattern.permute.xlu0 3
    %3397 = vperm.xlu0 %3396, %v2957
    %v3398 = vpop.permute.xlu0 %3397
    %v3400 = vmul.f32 %v3323, %v3304
    %v3401 = vmul.f32 %v3328, %v3305
    %v3402 = vmul.f32 %v3333, %v3306
    %v3403 = vmul.f32 %v3338, %v3307
    %v3404 = vmul.f32 %v3343, %v3308
    %v3405 = vmul.f32 %v3348, %v3309
    %v3406 = vmul.f32 %v3353, %v3310
    %v3407 = vmul.f32 %v3358, %v3311
    %v3408 = vmul.f32 %v3363, %v3312
    %v3409 = vmul.f32 %v3368, %v3313
    %v3410 = vmul.f32 %v3373, %v3314
    %v3411 = vmul.f32 %v3378, %v3315
    %v3412 = vmul.f32 %v3383, %v3316
    %v3413 = vmul.f32 %v3388, %v3317
    %v3414 = vmul.f32 %v3393, %v3318
    %v3415 = vmul.f32 %v3398, %v3319
    %3432 = vrot.lane.b32.xlu0 %v3200, 24
    %v3433 = vpop.permute.xlu0 %3432
    %3434 = vrot.lane.b32.xlu0 %v3202, 24
    %v3435 = vpop.permute.xlu0 %3434
    %3436 = vrot.lane.b32.xlu0 %v3205, 24
    %v3437 = vpop.permute.xlu0 %3436
    %3438 = vrot.lane.b32.xlu0 %v3207, 24
    %v3439 = vpop.permute.xlu0 %3438
    %3440 = vrot.lane.b32.xlu0 %v3210, 24
    %v3441 = vpop.permute.xlu0 %3440
    %3442 = vrot.lane.b32.xlu0 %v3212, 24
    %v3443 = vpop.permute.xlu0 %3442
    %3444 = vrot.lane.b32.xlu0 %v3215, 24
    %v3445 = vpop.permute.xlu0 %3444
    %3446 = vrot.lane.b32.xlu0 %v3217, 24
    %v3447 = vpop.permute.xlu0 %3446
    %3448 = vrot.lane.b32.xlu0 %v3220, 24
    %v3449 = vpop.permute.xlu0 %3448
    %3450 = vrot.lane.b32.xlu0 %v3222, 24
    %v3451 = vpop.permute.xlu0 %3450
    %3452 = vrot.lane.b32.xlu0 %v3225, 24
    %v3453 = vpop.permute.xlu0 %3452
    %3454 = vrot.lane.b32.xlu0 %v3227, 24
    %v3455 = vpop.permute.xlu0 %3454
    %3456 = vrot.lane.b32.xlu0 %v3230, 24
    %v3457 = vpop.permute.xlu0 %3456
    %3458 = vrot.lane.b32.xlu0 %v3232, 24
    %v3459 = vpop.permute.xlu0 %3458
    %3460 = vrot.lane.b32.xlu0 %v3235, 24
    %v3461 = vpop.permute.xlu0 %3460
    %3462 = vrot.lane.b32.xlu0 %v3237, 24
    %v3463 = vpop.permute.xlu0 %3462
    %v3480 = vadd.f32 %v3400, %v3433
    %v3481 = vadd.f32 %v3401, %v3435
    %v3482 = vadd.f32 %v3402, %v3437
    %v3483 = vadd.f32 %v3403, %v3439
    %v3484 = vadd.f32 %v3404, %v3441
    %v3485 = vadd.f32 %v3405, %v3443
    %v3486 = vadd.f32 %v3406, %v3445
    %v3487 = vadd.f32 %v3407, %v3447
    %v3488 = vadd.f32 %v3408, %v3449
    %v3489 = vadd.f32 %v3409, %v3451
    %v3490 = vadd.f32 %v3410, %v3453
    %v3491 = vadd.f32 %v3411, %v3455
    %v3492 = vadd.f32 %v3412, %v3457
    %v3493 = vadd.f32 %v3413, %v3459
    %v3494 = vadd.f32 %v3414, %v3461
    %v3495 = vadd.f32 %v3415, %v3463
    %vm3496 = vcmask 261312
    %3497 = vst.msk [vmem:[#allocation2] sm:$0xff] %vm3496, %v3480
    %3498 = vst.msk [vmem:[#allocation2 + $0x8] sm:$0xff] %vm3496, %v3481
    %3499 = vst.msk [vmem:[#allocation2 + $0x10] sm:$0xff] %vm3496, %v3482
    %3500 = vst.msk [vmem:[#allocation2 + $0x18] sm:$0xff] %vm3496, %v3483
    %3501 = vst.msk [vmem:[#allocation2 + $0x20] sm:$0xff] %vm3496, %v3484
    %3502 = vst.msk [vmem:[#allocation2 + $0x28] sm:$0xff] %vm3496, %v3485
    %3503 = vst.msk [vmem:[#allocation2 + $0x30] sm:$0xff] %vm3496, %v3486
    %3504 = vst.msk [vmem:[#allocation2 + $0x38] sm:$0xff] %vm3496, %v3487
    %3505 = vst.msk [vmem:[#allocation2 + $0x40] sm:$0xff] %vm3496, %v3488
    %3506 = vst.msk [vmem:[#allocation2 + $0x48] sm:$0xff] %vm3496, %v3489
    %3507 = vst.msk [vmem:[#allocation2 + $0x50] sm:$0xff] %vm3496, %v3490
    %3508 = vst.msk [vmem:[#allocation2 + $0x58] sm:$0xff] %vm3496, %v3491
    %3509 = vst.msk [vmem:[#allocation2 + $0x60] sm:$0xff] %vm3496, %v3492
    %3510 = vst.msk [vmem:[#allocation2 + $0x68] sm:$0xff] %vm3496, %v3493
    %3511 = vst.msk [vmem:[#allocation2 + $0x70] sm:$0xff] %vm3496, %v3494
    %3512 = vst.msk [vmem:[#allocation2 + $0x78] sm:$0xff] %vm3496, %v3495
    %3513 = vst.msk [vmem:[#allocation3] sm:$0xff] %vm3287, %v2894
    %3514 = vst.msk [vmem:[#allocation3 + $0x8] sm:$0xff] %vm3287, %v2895
    %3515 = vst.msk [vmem:[#allocation3 + $0x10] sm:$0xff] %vm3287, %v2896
    %3516 = vst.msk [vmem:[#allocation3 + $0x18] sm:$0xff] %vm3287, %v2897
    %3517 = vst.msk [vmem:[#allocation3 + $0x20] sm:$0xff] %vm3287, %v2898
    %3518 = vst.msk [vmem:[#allocation3 + $0x28] sm:$0xff] %vm3287, %v2899
    %3519 = vst.msk [vmem:[#allocation3 + $0x30] sm:$0xff] %vm3287, %v2900
    %3520 = vst.msk [vmem:[#allocation3 + $0x38] sm:$0xff] %vm3287, %v2901
    %3521 = vst.msk [vmem:[#allocation3 + $0x40] sm:$0xff] %vm3287, %v2902
    %3522 = vst.msk [vmem:[#allocation3 + $0x48] sm:$0xff] %vm3287, %v2903
    %3523 = vst.msk [vmem:[#allocation3 + $0x50] sm:$0xff] %vm3287, %v2904
    %3524 = vst.msk [vmem:[#allocation3 + $0x58] sm:$0xff] %vm3287, %v2905
    %3525 = vst.msk [vmem:[#allocation3 + $0x60] sm:$0xff] %vm3287, %v2906
    %3526 = vst.msk [vmem:[#allocation3 + $0x68] sm:$0xff] %vm3287, %v2907
    %3527 = vst.msk [vmem:[#allocation3 + $0x70] sm:$0xff] %vm3287, %v2908
    %3528 = vst.msk [vmem:[#allocation3 + $0x78] sm:$0xff] %vm3287, %v2909
  $region29: #{_gat_forward.5} parent=0 // pred_fallthru
    _
  // Predicated region
  $region30: #{_gat_forward.5} parent=0 // pred_check
    %p3529 = pneg %p24
  $region31: #{_gat_forward.5} parent=0 // pred_check_branch
    %3531 = sbr.rel (%p3529) target = $region33
  $region32: #{_gat_forward.5} parent=0 // pred_region
    %v3532 = vld [vmem:[#allocation4] sm:$0xff]
    %v3533 = vld [vmem:[#allocation4 + $0x8] sm:$0xff]
    %v3534 = vld [vmem:[#allocation4 + $0x10] sm:$0xff]
    %v3535 = vld [vmem:[#allocation4 + $0x18] sm:$0xff]
    %v3536 = vld [vmem:[#allocation4 + $0x20] sm:$0xff]
    %v3537 = vld [vmem:[#allocation4 + $0x28] sm:$0xff]
    %v3538 = vld [vmem:[#allocation4 + $0x30] sm:$0xff]
    %v3539 = vld [vmem:[#allocation4 + $0x38] sm:$0xff]
    %v3540 = vld [vmem:[#allocation4 + $0x40] sm:$0xff]
    %v3541 = vld [vmem:[#allocation4 + $0x48] sm:$0xff]
    %v3542 = vld [vmem:[#allocation4 + $0x50] sm:$0xff]
    %v3543 = vld [vmem:[#allocation4 + $0x58] sm:$0xff]
    %v3544 = vld [vmem:[#allocation4 + $0x60] sm:$0xff]
    %v3545 = vld [vmem:[#allocation4 + $0x68] sm:$0xff]
    %v3546 = vld [vmem:[#allocation4 + $0x70] sm:$0xff]
    %v3547 = vld [vmem:[#allocation4 + $0x78] sm:$0xff]
    %v3548 = vrcp.pop %v3532
    %v3549 = vrcp.pop %v3533
    %v3550 = vrcp.pop %v3534
    %v3551 = vrcp.pop %v3535
    %v3552 = vrcp.pop %v3536
    %v3553 = vrcp.pop %v3537
    %v3554 = vrcp.pop %v3538
    %v3555 = vrcp.pop %v3539
    %v3556 = vrcp.pop %v3540
    %v3557 = vrcp.pop %v3541
    %v3558 = vrcp.pop %v3542
    %v3559 = vrcp.pop %v3543
    %v3560 = vrcp.pop %v3544
    %v3561 = vrcp.pop %v3545
    %v3562 = vrcp.pop %v3546
    %v3563 = vrcp.pop %v3547
    %v3564 = vld [vmem:[%s5] sm:$0x1]
    %v3565 = vld [vmem:[#allocation2] sm:$0xff]
    %v3566 = vld [vmem:[#allocation2 + $0x8] sm:$0xff]
    %v3567 = vld [vmem:[#allocation2 + $0x10] sm:$0xff]
    %v3568 = vld [vmem:[#allocation2 + $0x18] sm:$0xff]
    %v3569 = vld [vmem:[#allocation2 + $0x20] sm:$0xff]
    %v3570 = vld [vmem:[#allocation2 + $0x28] sm:$0xff]
    %v3571 = vld [vmem:[#allocation2 + $0x30] sm:$0xff]
    %v3572 = vld [vmem:[#allocation2 + $0x38] sm:$0xff]
    %v3573 = vld [vmem:[#allocation2 + $0x40] sm:$0xff]
    %v3574 = vld [vmem:[#allocation2 + $0x48] sm:$0xff]
    %v3575 = vld [vmem:[#allocation2 + $0x50] sm:$0xff]
    %v3576 = vld [vmem:[#allocation2 + $0x58] sm:$0xff]
    %v3577 = vld [vmem:[#allocation2 + $0x60] sm:$0xff]
    %v3578 = vld [vmem:[#allocation2 + $0x68] sm:$0xff]
    %v3579 = vld [vmem:[#allocation2 + $0x70] sm:$0xff]
    %v3580 = vld [vmem:[#allocation2 + $0x78] sm:$0xff]
    %3582 = vset.pattern.permute.xlu0 0
    %3583 = vperm.xlu0 %3582, %v3548
    %v3584 = vpop.permute.xlu0 %3583
    %3587 = vset.pattern.permute.xlu0 0
    %3588 = vperm.xlu0 %3587, %v3549
    %v3589 = vpop.permute.xlu0 %3588
    %3592 = vset.pattern.permute.xlu0 0
    %3593 = vperm.xlu0 %3592, %v3550
    %v3594 = vpop.permute.xlu0 %3593
    %3597 = vset.pattern.permute.xlu0 0
    %3598 = vperm.xlu0 %3597, %v3551
    %v3599 = vpop.permute.xlu0 %3598
    %3602 = vset.pattern.permute.xlu0 0
    %3603 = vperm.xlu0 %3602, %v3552
    %v3604 = vpop.permute.xlu0 %3603
    %3607 = vset.pattern.permute.xlu0 0
    %3608 = vperm.xlu0 %3607, %v3553
    %v3609 = vpop.permute.xlu0 %3608
    %3612 = vset.pattern.permute.xlu0 0
    %3613 = vperm.xlu0 %3612, %v3554
    %v3614 = vpop.permute.xlu0 %3613
    %3617 = vset.pattern.permute.xlu0 0
    %3618 = vperm.xlu0 %3617, %v3555
    %v3619 = vpop.permute.xlu0 %3618
    %3622 = vset.pattern.permute.xlu0 0
    %3623 = vperm.xlu0 %3622, %v3556
    %v3624 = vpop.permute.xlu0 %3623
    %3627 = vset.pattern.permute.xlu0 0
    %3628 = vperm.xlu0 %3627, %v3557
    %v3629 = vpop.permute.xlu0 %3628
    %3632 = vset.pattern.permute.xlu0 0
    %3633 = vperm.xlu0 %3632, %v3558
    %v3634 = vpop.permute.xlu0 %3633
    %3637 = vset.pattern.permute.xlu0 0
    %3638 = vperm.xlu0 %3637, %v3559
    %v3639 = vpop.permute.xlu0 %3638
    %3642 = vset.pattern.permute.xlu0 0
    %3643 = vperm.xlu0 %3642, %v3560
    %v3644 = vpop.permute.xlu0 %3643
    %3647 = vset.pattern.permute.xlu0 0
    %3648 = vperm.xlu0 %3647, %v3561
    %v3649 = vpop.permute.xlu0 %3648
    %3652 = vset.pattern.permute.xlu0 0
    %3653 = vperm.xlu0 %3652, %v3562
    %v3654 = vpop.permute.xlu0 %3653
    %3657 = vset.pattern.permute.xlu0 0
    %3658 = vperm.xlu0 %3657, %v3563
    %v3659 = vpop.permute.xlu0 %3658
    %v3661 = vmul.f32 %v3565, %v3584
    %v3662 = vmul.f32 %v3566, %v3589
    %v3663 = vmul.f32 %v3567, %v3594
    %v3664 = vmul.f32 %v3568, %v3599
    %v3665 = vmul.f32 %v3569, %v3604
    %v3666 = vmul.f32 %v3570, %v3609
    %v3667 = vmul.f32 %v3571, %v3614
    %v3668 = vmul.f32 %v3572, %v3619
    %v3669 = vmul.f32 %v3573, %v3624
    %v3670 = vmul.f32 %v3574, %v3629
    %v3671 = vmul.f32 %v3575, %v3634
    %v3672 = vmul.f32 %v3576, %v3639
    %v3673 = vmul.f32 %v3577, %v3644
    %v3674 = vmul.f32 %v3578, %v3649
    %v3675 = vmul.f32 %v3579, %v3654
    %v3676 = vmul.f32 %v3580, %v3659
    %v3678 = vperm.slane %v3564, 0
    %v3680 = vadd.f32 %v3661, %v3678
    %v3681 = vadd.f32 %v3662, %v3678
    %v3682 = vadd.f32 %v3663, %v3678
    %v3683 = vadd.f32 %v3664, %v3678
    %v3684 = vadd.f32 %v3665, %v3678
    %v3685 = vadd.f32 %v3666, %v3678
    %v3686 = vadd.f32 %v3667, %v3678
    %v3687 = vadd.f32 %v3668, %v3678
    %v3688 = vadd.f32 %v3669, %v3678
    %v3689 = vadd.f32 %v3670, %v3678
    %v3690 = vadd.f32 %v3671, %v3678
    %v3691 = vadd.f32 %v3672, %v3678
    %v3692 = vadd.f32 %v3673, %v3678
    %v3693 = vadd.f32 %v3674, %v3678
    %v3694 = vadd.f32 %v3675, %v3678
    %v3695 = vadd.f32 %v3676, %v3678
    %vm3696 = vcmp.gt.f32.partialorder %v3680, 0.0
    %vm3697 = vcmp.gt.f32.partialorder %v3681, 0.0
    %vm3698 = vcmp.gt.f32.partialorder %v3682, 0.0
    %vm3699 = vcmp.gt.f32.partialorder %v3683, 0.0
    %vm3700 = vcmp.gt.f32.partialorder %v3684, 0.0
    %vm3701 = vcmp.gt.f32.partialorder %v3685, 0.0
    %vm3702 = vcmp.gt.f32.partialorder %v3686, 0.0
    %vm3703 = vcmp.gt.f32.partialorder %v3687, 0.0
    %vm3704 = vcmp.gt.f32.partialorder %v3688, 0.0
    %vm3705 = vcmp.gt.f32.partialorder %v3689, 0.0
    %vm3706 = vcmp.gt.f32.partialorder %v3690, 0.0
    %vm3707 = vcmp.gt.f32.partialorder %v3691, 0.0
    %vm3708 = vcmp.gt.f32.partialorder %v3692, 0.0
    %vm3709 = vcmp.gt.f32.partialorder %v3693, 0.0
    %vm3710 = vcmp.gt.f32.partialorder %v3694, 0.0
    %vm3711 = vcmp.gt.f32.partialorder %v3695, 0.0
    %v3712 = vmin.f32 %v3680, 0.0
    %v3713 = vmin.f32 %v3681, 0.0
    %v3714 = vmin.f32 %v3682, 0.0
    %v3715 = vmin.f32 %v3683, 0.0
    %v3716 = vmin.f32 %v3684, 0.0
    %v3717 = vmin.f32 %v3685, 0.0
    %v3718 = vmin.f32 %v3686, 0.0
    %v3719 = vmin.f32 %v3687, 0.0
    %v3720 = vmin.f32 %v3688, 0.0
    %v3721 = vmin.f32 %v3689, 0.0
    %v3722 = vmin.f32 %v3690, 0.0
    %v3723 = vmin.f32 %v3691, 0.0
    %v3724 = vmin.f32 %v3692, 0.0
    %v3725 = vmin.f32 %v3693, 0.0
    %v3726 = vmin.f32 %v3694, 0.0
    %v3727 = vmin.f32 %v3695, 0.0
    %v3728 = vmul.f32 %v3712, 1.442695
    %v3729 = vpow.pop %v3728
    %v3730 = vmul.f32 %v3713, 1.442695
    %v3731 = vpow.pop %v3730
    %v3732 = vmul.f32 %v3714, 1.442695
    %v3733 = vpow.pop %v3732
    %v3734 = vmul.f32 %v3715, 1.442695
    %v3735 = vpow.pop %v3734
    %v3736 = vmul.f32 %v3716, 1.442695
    %v3737 = vpow.pop %v3736
    %v3738 = vmul.f32 %v3717, 1.442695
    %v3739 = vpow.pop %v3738
    %v3740 = vmul.f32 %v3718, 1.442695
    %v3741 = vpow.pop %v3740
    %v3742 = vmul.f32 %v3719, 1.442695
    %v3743 = vpow.pop %v3742
    %v3744 = vmul.f32 %v3720, 1.442695
    %v3745 = vpow.pop %v3744
    %v3746 = vmul.f32 %v3721, 1.442695
    %v3747 = vpow.pop %v3746
    %v3748 = vmul.f32 %v3722, 1.442695
    %v3749 = vpow.pop %v3748
    %v3750 = vmul.f32 %v3723, 1.442695
    %v3751 = vpow.pop %v3750
    %v3752 = vmul.f32 %v3724, 1.442695
    %v3753 = vpow.pop %v3752
    %v3754 = vmul.f32 %v3725, 1.442695
    %v3755 = vpow.pop %v3754
    %v3756 = vmul.f32 %v3726, 1.442695
    %v3757 = vpow.pop %v3756
    %v3758 = vmul.f32 %v3727, 1.442695
    %v3759 = vpow.pop %v3758
    %v3760 = vsub.f32 %v3729, 1.0
    %v3761 = vsub.f32 %v3731, 1.0
    %v3762 = vsub.f32 %v3733, 1.0
    %v3763 = vsub.f32 %v3735, 1.0
    %v3764 = vsub.f32 %v3737, 1.0
    %v3765 = vsub.f32 %v3739, 1.0
    %v3766 = vsub.f32 %v3741, 1.0
    %v3767 = vsub.f32 %v3743, 1.0
    %v3768 = vsub.f32 %v3745, 1.0
    %v3769 = vsub.f32 %v3747, 1.0
    %v3770 = vsub.f32 %v3749, 1.0
    %v3771 = vsub.f32 %v3751, 1.0
    %v3772 = vsub.f32 %v3753, 1.0
    %v3773 = vsub.f32 %v3755, 1.0
    %v3774 = vsub.f32 %v3757, 1.0
    %v3775 = vsub.f32 %v3759, 1.0
    %v3776 = vsel %vm3696, %v3680, %v3760
    %v3777 = vsel %vm3697, %v3681, %v3761
    %v3778 = vsel %vm3698, %v3682, %v3762
    %v3779 = vsel %vm3699, %v3683, %v3763
    %v3780 = vsel %vm3700, %v3684, %v3764
    %v3781 = vsel %vm3701, %v3685, %v3765
    %v3782 = vsel %vm3702, %v3686, %v3766
    %v3783 = vsel %vm3703, %v3687, %v3767
    %v3784 = vsel %vm3704, %v3688, %v3768
    %v3785 = vsel %vm3705, %v3689, %v3769
    %v3786 = vsel %vm3706, %v3690, %v3770
    %v3787 = vsel %vm3707, %v3691, %v3771
    %v3788 = vsel %vm3708, %v3692, %v3772
    %v3789 = vsel %vm3709, %v3693, %v3773
    %v3790 = vsel %vm3710, %v3694, %v3774
    %v3791 = vsel %vm3711, %v3695, %v3775
    %vm3792 = vcmask 64512
    %3793 = vst.msk [vmem:[%s6] sm:$0xff] %vm3792, %v3776
    %3794 = vst.msk [vmem:[%s6 + $0x8] sm:$0xff] %vm3792, %v3777
    %3795 = vst.msk [vmem:[%s6 + $0x10] sm:$0xff] %vm3792, %v3778
    %3796 = vst.msk [vmem:[%s6 + $0x18] sm:$0xff] %vm3792, %v3779
    %3797 = vst.msk [vmem:[%s6 + $0x20] sm:$0xff] %vm3792, %v3780
    %3798 = vst.msk [vmem:[%s6 + $0x28] sm:$0xff] %vm3792, %v3781
    %3799 = vst.msk [vmem:[%s6 + $0x30] sm:$0xff] %vm3792, %v3782
    %3800 = vst.msk [vmem:[%s6 + $0x38] sm:$0xff] %vm3792, %v3783
    %3801 = vst.msk [vmem:[%s6 + $0x40] sm:$0xff] %vm3792, %v3784
    %3802 = vst.msk [vmem:[%s6 + $0x48] sm:$0xff] %vm3792, %v3785
    %3803 = vst.msk [vmem:[%s6 + $0x50] sm:$0xff] %vm3792, %v3786
    %3804 = vst.msk [vmem:[%s6 + $0x58] sm:$0xff] %vm3792, %v3787
    %3805 = vst.msk [vmem:[%s6 + $0x60] sm:$0xff] %vm3792, %v3788
    %3806 = vst.msk [vmem:[%s6 + $0x68] sm:$0xff] %vm3792, %v3789
    %3807 = vst.msk [vmem:[%s6 + $0x70] sm:$0xff] %vm3792, %v3790
    %3808 = vst.msk [vmem:[%s6 + $0x78] sm:$0xff] %vm3792, %v3791
    %3809 = vset.pattern.permute.xlu0 1
    %3810 = vperm.xlu0 %3809, %v3548
    %v3811 = vpop.permute.xlu0 %3810
    %3813 = vset.pattern.permute.xlu0 1
    %3814 = vperm.xlu0 %3813, %v3549
    %v3815 = vpop.permute.xlu0 %3814
    %3817 = vset.pattern.permute.xlu0 1
    %3818 = vperm.xlu0 %3817, %v3550
    %v3819 = vpop.permute.xlu0 %3818
    %3821 = vset.pattern.permute.xlu0 1
    %3822 = vperm.xlu0 %3821, %v3551
    %v3823 = vpop.permute.xlu0 %3822
    %3825 = vset.pattern.permute.xlu0 1
    %3826 = vperm.xlu0 %3825, %v3552
    %v3827 = vpop.permute.xlu0 %3826
    %3829 = vset.pattern.permute.xlu0 1
    %3830 = vperm.xlu0 %3829, %v3553
    %v3831 = vpop.permute.xlu0 %3830
    %3833 = vset.pattern.permute.xlu0 1
    %3834 = vperm.xlu0 %3833, %v3554
    %v3835 = vpop.permute.xlu0 %3834
    %3837 = vset.pattern.permute.xlu0 1
    %3838 = vperm.xlu0 %3837, %v3555
    %v3839 = vpop.permute.xlu0 %3838
    %3841 = vset.pattern.permute.xlu0 1
    %3842 = vperm.xlu0 %3841, %v3556
    %v3843 = vpop.permute.xlu0 %3842
    %3845 = vset.pattern.permute.xlu0 1
    %3846 = vperm.xlu0 %3845, %v3557
    %v3847 = vpop.permute.xlu0 %3846
    %3849 = vset.pattern.permute.xlu0 1
    %3850 = vperm.xlu0 %3849, %v3558
    %v3851 = vpop.permute.xlu0 %3850
    %3853 = vset.pattern.permute.xlu0 1
    %3854 = vperm.xlu0 %3853, %v3559
    %v3855 = vpop.permute.xlu0 %3854
    %3857 = vset.pattern.permute.xlu0 1
    %3858 = vperm.xlu0 %3857, %v3560
    %v3859 = vpop.permute.xlu0 %3858
    %3861 = vset.pattern.permute.xlu0 1
    %3862 = vperm.xlu0 %3861, %v3561
    %v3863 = vpop.permute.xlu0 %3862
    %3865 = vset.pattern.permute.xlu0 1
    %3866 = vperm.xlu0 %3865, %v3562
    %v3867 = vpop.permute.xlu0 %3866
    %3869 = vset.pattern.permute.xlu0 1
    %3870 = vperm.xlu0 %3869, %v3563
    %v3871 = vpop.permute.xlu0 %3870
    %v3873 = vmul.f32 %v3565, %v3811
    %v3874 = vmul.f32 %v3566, %v3815
    %v3875 = vmul.f32 %v3567, %v3819
    %v3876 = vmul.f32 %v3568, %v3823
    %v3877 = vmul.f32 %v3569, %v3827
    %v3878 = vmul.f32 %v3570, %v3831
    %v3879 = vmul.f32 %v3571, %v3835
    %v3880 = vmul.f32 %v3572, %v3839
    %v3881 = vmul.f32 %v3573, %v3843
    %v3882 = vmul.f32 %v3574, %v3847
    %v3883 = vmul.f32 %v3575, %v3851
    %v3884 = vmul.f32 %v3576, %v3855
    %v3885 = vmul.f32 %v3577, %v3859
    %v3886 = vmul.f32 %v3578, %v3863
    %v3887 = vmul.f32 %v3579, %v3867
    %v3888 = vmul.f32 %v3580, %v3871
    %v3889 = vadd.f32 %v3873, %v3678
    %v3890 = vadd.f32 %v3874, %v3678
    %v3891 = vadd.f32 %v3875, %v3678
    %v3892 = vadd.f32 %v3876, %v3678
    %v3893 = vadd.f32 %v3877, %v3678
    %v3894 = vadd.f32 %v3878, %v3678
    %v3895 = vadd.f32 %v3879, %v3678
    %v3896 = vadd.f32 %v3880, %v3678
    %v3897 = vadd.f32 %v3881, %v3678
    %v3898 = vadd.f32 %v3882, %v3678
    %v3899 = vadd.f32 %v3883, %v3678
    %v3900 = vadd.f32 %v3884, %v3678
    %v3901 = vadd.f32 %v3885, %v3678
    %v3902 = vadd.f32 %v3886, %v3678
    %v3903 = vadd.f32 %v3887, %v3678
    %v3904 = vadd.f32 %v3888, %v3678
    %vm3905 = vcmp.gt.f32.partialorder %v3889, 0.0
    %vm3906 = vcmp.gt.f32.partialorder %v3890, 0.0
    %vm3907 = vcmp.gt.f32.partialorder %v3891, 0.0
    %vm3908 = vcmp.gt.f32.partialorder %v3892, 0.0
    %vm3909 = vcmp.gt.f32.partialorder %v3893, 0.0
    %vm3910 = vcmp.gt.f32.partialorder %v3894, 0.0
    %vm3911 = vcmp.gt.f32.partialorder %v3895, 0.0
    %vm3912 = vcmp.gt.f32.partialorder %v3896, 0.0
    %vm3913 = vcmp.gt.f32.partialorder %v3897, 0.0
    %vm3914 = vcmp.gt.f32.partialorder %v3898, 0.0
    %vm3915 = vcmp.gt.f32.partialorder %v3899, 0.0
    %vm3916 = vcmp.gt.f32.partialorder %v3900, 0.0
    %vm3917 = vcmp.gt.f32.partialorder %v3901, 0.0
    %vm3918 = vcmp.gt.f32.partialorder %v3902, 0.0
    %vm3919 = vcmp.gt.f32.partialorder %v3903, 0.0
    %vm3920 = vcmp.gt.f32.partialorder %v3904, 0.0
    %v3921 = vmin.f32 %v3889, 0.0
    %v3922 = vmin.f32 %v3890, 0.0
    %v3923 = vmin.f32 %v3891, 0.0
    %v3924 = vmin.f32 %v3892, 0.0
    %v3925 = vmin.f32 %v3893, 0.0
    %v3926 = vmin.f32 %v3894, 0.0
    %v3927 = vmin.f32 %v3895, 0.0
    %v3928 = vmin.f32 %v3896, 0.0
    %v3929 = vmin.f32 %v3897, 0.0
    %v3930 = vmin.f32 %v3898, 0.0
    %v3931 = vmin.f32 %v3899, 0.0
    %v3932 = vmin.f32 %v3900, 0.0
    %v3933 = vmin.f32 %v3901, 0.0
    %v3934 = vmin.f32 %v3902, 0.0
    %v3935 = vmin.f32 %v3903, 0.0
    %v3936 = vmin.f32 %v3904, 0.0
    %v3937 = vmul.f32 %v3921, 1.442695
    %v3938 = vpow.pop %v3937
    %v3939 = vmul.f32 %v3922, 1.442695
    %v3940 = vpow.pop %v3939
    %v3941 = vmul.f32 %v3923, 1.442695
    %v3942 = vpow.pop %v3941
    %v3943 = vmul.f32 %v3924, 1.442695
    %v3944 = vpow.pop %v3943
    %v3945 = vmul.f32 %v3925, 1.442695
    %v3946 = vpow.pop %v3945
    %v3947 = vmul.f32 %v3926, 1.442695
    %v3948 = vpow.pop %v3947
    %v3949 = vmul.f32 %v3927, 1.442695
    %v3950 = vpow.pop %v3949
    %v3951 = vmul.f32 %v3928, 1.442695
    %v3952 = vpow.pop %v3951
    %v3953 = vmul.f32 %v3929, 1.442695
    %v3954 = vpow.pop %v3953
    %v3955 = vmul.f32 %v3930, 1.442695
    %v3956 = vpow.pop %v3955
    %v3957 = vmul.f32 %v3931, 1.442695
    %v3958 = vpow.pop %v3957
    %v3959 = vmul.f32 %v3932, 1.442695
    %v3960 = vpow.pop %v3959
    %v3961 = vmul.f32 %v3933, 1.442695
    %v3962 = vpow.pop %v3961
    %v3963 = vmul.f32 %v3934, 1.442695
    %v3964 = vpow.pop %v3963
    %v3965 = vmul.f32 %v3935, 1.442695
    %v3966 = vpow.pop %v3965
    %v3967 = vmul.f32 %v3936, 1.442695
    %v3968 = vpow.pop %v3967
    %v3969 = vsub.f32 %v3938, 1.0
    %v3970 = vsub.f32 %v3940, 1.0
    %v3971 = vsub.f32 %v3942, 1.0
    %v3972 = vsub.f32 %v3944, 1.0
    %v3973 = vsub.f32 %v3946, 1.0
    %v3974 = vsub.f32 %v3948, 1.0
    %v3975 = vsub.f32 %v3950, 1.0
    %v3976 = vsub.f32 %v3952, 1.0
    %v3977 = vsub.f32 %v3954, 1.0
    %v3978 = vsub.f32 %v3956, 1.0
    %v3979 = vsub.f32 %v3958, 1.0
    %v3980 = vsub.f32 %v3960, 1.0
    %v3981 = vsub.f32 %v3962, 1.0
    %v3982 = vsub.f32 %v3964, 1.0
    %v3983 = vsub.f32 %v3966, 1.0
    %v3984 = vsub.f32 %v3968, 1.0
    %v3985 = vsel %vm3905, %v3889, %v3969
    %v3986 = vsel %vm3906, %v3890, %v3970
    %v3987 = vsel %vm3907, %v3891, %v3971
    %v3988 = vsel %vm3908, %v3892, %v3972
    %v3989 = vsel %vm3909, %v3893, %v3973
    %v3990 = vsel %vm3910, %v3894, %v3974
    %v3991 = vsel %vm3911, %v3895, %v3975
    %v3992 = vsel %vm3912, %v3896, %v3976
    %v3993 = vsel %vm3913, %v3897, %v3977
    %v3994 = vsel %vm3914, %v3898, %v3978
    %v3995 = vsel %vm3915, %v3899, %v3979
    %v3996 = vsel %vm3916, %v3900, %v3980
    %v3997 = vsel %vm3917, %v3901, %v3981
    %v3998 = vsel %vm3918, %v3902, %v3982
    %v3999 = vsel %vm3919, %v3903, %v3983
    %v4000 = vsel %vm3920, %v3904, %v3984
    %vm4001 = vcmask 130112
    %4002 = vst.msk [vmem:[%s6] sm:$0xff] %vm4001, %v3985
    %4003 = vst.msk [vmem:[%s6 + $0x8] sm:$0xff] %vm4001, %v3986
    %4004 = vst.msk [vmem:[%s6 + $0x10] sm:$0xff] %vm4001, %v3987
    %4005 = vst.msk [vmem:[%s6 + $0x18] sm:$0xff] %vm4001, %v3988
    %4006 = vst.msk [vmem:[%s6 + $0x20] sm:$0xff] %vm4001, %v3989
    %4007 = vst.msk [vmem:[%s6 + $0x28] sm:$0xff] %vm4001, %v3990
    %4008 = vst.msk [vmem:[%s6 + $0x30] sm:$0xff] %vm4001, %v3991
    %4009 = vst.msk [vmem:[%s6 + $0x38] sm:$0xff] %vm4001, %v3992
    %4010 = vst.msk [vmem:[%s6 + $0x40] sm:$0xff] %vm4001, %v3993
    %4011 = vst.msk [vmem:[%s6 + $0x48] sm:$0xff] %vm4001, %v3994
    %4012 = vst.msk [vmem:[%s6 + $0x50] sm:$0xff] %vm4001, %v3995
    %4013 = vst.msk [vmem:[%s6 + $0x58] sm:$0xff] %vm4001, %v3996
    %4014 = vst.msk [vmem:[%s6 + $0x60] sm:$0xff] %vm4001, %v3997
    %4015 = vst.msk [vmem:[%s6 + $0x68] sm:$0xff] %vm4001, %v3998
    %4016 = vst.msk [vmem:[%s6 + $0x70] sm:$0xff] %vm4001, %v3999
    %4017 = vst.msk [vmem:[%s6 + $0x78] sm:$0xff] %vm4001, %v4000
    %4018 = vset.pattern.permute.xlu0 2
    %4019 = vperm.xlu0 %4018, %v3548
    %v4020 = vpop.permute.xlu0 %4019
    %4022 = vset.pattern.permute.xlu0 2
    %4023 = vperm.xlu0 %4022, %v3549
    %v4024 = vpop.permute.xlu0 %4023
    %4026 = vset.pattern.permute.xlu0 2
    %4027 = vperm.xlu0 %4026, %v3550
    %v4028 = vpop.permute.xlu0 %4027
    %4030 = vset.pattern.permute.xlu0 2
    %4031 = vperm.xlu0 %4030, %v3551
    %v4032 = vpop.permute.xlu0 %4031
    %4034 = vset.pattern.permute.xlu0 2
    %4035 = vperm.xlu0 %4034, %v3552
    %v4036 = vpop.permute.xlu0 %4035
    %4038 = vset.pattern.permute.xlu0 2
    %4039 = vperm.xlu0 %4038, %v3553
    %v4040 = vpop.permute.xlu0 %4039
    %4042 = vset.pattern.permute.xlu0 2
    %4043 = vperm.xlu0 %4042, %v3554
    %v4044 = vpop.permute.xlu0 %4043
    %4046 = vset.pattern.permute.xlu0 2
    %4047 = vperm.xlu0 %4046, %v3555
    %v4048 = vpop.permute.xlu0 %4047
    %4050 = vset.pattern.permute.xlu0 2
    %4051 = vperm.xlu0 %4050, %v3556
    %v4052 = vpop.permute.xlu0 %4051
    %4054 = vset.pattern.permute.xlu0 2
    %4055 = vperm.xlu0 %4054, %v3557
    %v4056 = vpop.permute.xlu0 %4055
    %4058 = vset.pattern.permute.xlu0 2
    %4059 = vperm.xlu0 %4058, %v3558
    %v4060 = vpop.permute.xlu0 %4059
    %4062 = vset.pattern.permute.xlu0 2
    %4063 = vperm.xlu0 %4062, %v3559
    %v4064 = vpop.permute.xlu0 %4063
    %4066 = vset.pattern.permute.xlu0 2
    %4067 = vperm.xlu0 %4066, %v3560
    %v4068 = vpop.permute.xlu0 %4067
    %4070 = vset.pattern.permute.xlu0 2
    %4071 = vperm.xlu0 %4070, %v3561
    %v4072 = vpop.permute.xlu0 %4071
    %4074 = vset.pattern.permute.xlu0 2
    %4075 = vperm.xlu0 %4074, %v3562
    %v4076 = vpop.permute.xlu0 %4075
    %4078 = vset.pattern.permute.xlu0 2
    %4079 = vperm.xlu0 %4078, %v3563
    %v4080 = vpop.permute.xlu0 %4079
    %v4082 = vmul.f32 %v3565, %v4020
    %v4083 = vmul.f32 %v3566, %v4024
    %v4084 = vmul.f32 %v3567, %v4028
    %v4085 = vmul.f32 %v3568, %v4032
    %v4086 = vmul.f32 %v3569, %v4036
    %v4087 = vmul.f32 %v3570, %v4040
    %v4088 = vmul.f32 %v3571, %v4044
    %v4089 = vmul.f32 %v3572, %v4048
    %v4090 = vmul.f32 %v3573, %v4052
    %v4091 = vmul.f32 %v3574, %v4056
    %v4092 = vmul.f32 %v3575, %v4060
    %v4093 = vmul.f32 %v3576, %v4064
    %v4094 = vmul.f32 %v3577, %v4068
    %v4095 = vmul.f32 %v3578, %v4072
    %v4096 = vmul.f32 %v3579, %v4076
    %v4097 = vmul.f32 %v3580, %v4080
    %v4098 = vadd.f32 %v4082, %v3678
    %v4099 = vadd.f32 %v4083, %v3678
    %v4100 = vadd.f32 %v4084, %v3678
    %v4101 = vadd.f32 %v4085, %v3678
    %v4102 = vadd.f32 %v4086, %v3678
    %v4103 = vadd.f32 %v4087, %v3678
    %v4104 = vadd.f32 %v4088, %v3678
    %v4105 = vadd.f32 %v4089, %v3678
    %v4106 = vadd.f32 %v4090, %v3678
    %v4107 = vadd.f32 %v4091, %v3678
    %v4108 = vadd.f32 %v4092, %v3678
    %v4109 = vadd.f32 %v4093, %v3678
    %v4110 = vadd.f32 %v4094, %v3678
    %v4111 = vadd.f32 %v4095, %v3678
    %v4112 = vadd.f32 %v4096, %v3678
    %v4113 = vadd.f32 %v4097, %v3678
    %vm4114 = vcmp.gt.f32.partialorder %v4098, 0.0
    %vm4115 = vcmp.gt.f32.partialorder %v4099, 0.0
    %vm4116 = vcmp.gt.f32.partialorder %v4100, 0.0
    %vm4117 = vcmp.gt.f32.partialorder %v4101, 0.0
    %vm4118 = vcmp.gt.f32.partialorder %v4102, 0.0
    %vm4119 = vcmp.gt.f32.partialorder %v4103, 0.0
    %vm4120 = vcmp.gt.f32.partialorder %v4104, 0.0
    %vm4121 = vcmp.gt.f32.partialorder %v4105, 0.0
    %vm4122 = vcmp.gt.f32.partialorder %v4106, 0.0
    %vm4123 = vcmp.gt.f32.partialorder %v4107, 0.0
    %vm4124 = vcmp.gt.f32.partialorder %v4108, 0.0
    %vm4125 = vcmp.gt.f32.partialorder %v4109, 0.0
    %vm4126 = vcmp.gt.f32.partialorder %v4110, 0.0
    %vm4127 = vcmp.gt.f32.partialorder %v4111, 0.0
    %vm4128 = vcmp.gt.f32.partialorder %v4112, 0.0
    %vm4129 = vcmp.gt.f32.partialorder %v4113, 0.0
    %v4130 = vmin.f32 %v4098, 0.0
    %v4131 = vmin.f32 %v4099, 0.0
    %v4132 = vmin.f32 %v4100, 0.0
    %v4133 = vmin.f32 %v4101, 0.0
    %v4134 = vmin.f32 %v4102, 0.0
    %v4135 = vmin.f32 %v4103, 0.0
    %v4136 = vmin.f32 %v4104, 0.0
    %v4137 = vmin.f32 %v4105, 0.0
    %v4138 = vmin.f32 %v4106, 0.0
    %v4139 = vmin.f32 %v4107, 0.0
    %v4140 = vmin.f32 %v4108, 0.0
    %v4141 = vmin.f32 %v4109, 0.0
    %v4142 = vmin.f32 %v4110, 0.0
    %v4143 = vmin.f32 %v4111, 0.0
    %v4144 = vmin.f32 %v4112, 0.0
    %v4145 = vmin.f32 %v4113, 0.0
    %v4146 = vmul.f32 %v4130, 1.442695
    %v4147 = vpow.pop %v4146
    %v4148 = vmul.f32 %v4131, 1.442695
    %v4149 = vpow.pop %v4148
    %v4150 = vmul.f32 %v4132, 1.442695
    %v4151 = vpow.pop %v4150
    %v4152 = vmul.f32 %v4133, 1.442695
    %v4153 = vpow.pop %v4152
    %v4154 = vmul.f32 %v4134, 1.442695
    %v4155 = vpow.pop %v4154
    %v4156 = vmul.f32 %v4135, 1.442695
    %v4157 = vpow.pop %v4156
    %v4158 = vmul.f32 %v4136, 1.442695
    %v4159 = vpow.pop %v4158
    %v4160 = vmul.f32 %v4137, 1.442695
    %v4161 = vpow.pop %v4160
    %v4162 = vmul.f32 %v4138, 1.442695
    %v4163 = vpow.pop %v4162
    %v4164 = vmul.f32 %v4139, 1.442695
    %v4165 = vpow.pop %v4164
    %v4166 = vmul.f32 %v4140, 1.442695
    %v4167 = vpow.pop %v4166
    %v4168 = vmul.f32 %v4141, 1.442695
    %v4169 = vpow.pop %v4168
    %v4170 = vmul.f32 %v4142, 1.442695
    %v4171 = vpow.pop %v4170
    %v4172 = vmul.f32 %v4143, 1.442695
    %v4173 = vpow.pop %v4172
    %v4174 = vmul.f32 %v4144, 1.442695
    %v4175 = vpow.pop %v4174
    %v4176 = vmul.f32 %v4145, 1.442695
    %v4177 = vpow.pop %v4176
    %v4178 = vsub.f32 %v4147, 1.0
    %v4179 = vsub.f32 %v4149, 1.0
    %v4180 = vsub.f32 %v4151, 1.0
    %v4181 = vsub.f32 %v4153, 1.0
    %v4182 = vsub.f32 %v4155, 1.0
    %v4183 = vsub.f32 %v4157, 1.0
    %v4184 = vsub.f32 %v4159, 1.0
    %v4185 = vsub.f32 %v4161, 1.0
    %v4186 = vsub.f32 %v4163, 1.0
    %v4187 = vsub.f32 %v4165, 1.0
    %v4188 = vsub.f32 %v4167, 1.0
    %v4189 = vsub.f32 %v4169, 1.0
    %v4190 = vsub.f32 %v4171, 1.0
    %v4191 = vsub.f32 %v4173, 1.0
    %v4192 = vsub.f32 %v4175, 1.0
    %v4193 = vsub.f32 %v4177, 1.0
    %v4194 = vsel %vm4114, %v4098, %v4178
    %v4195 = vsel %vm4115, %v4099, %v4179
    %v4196 = vsel %vm4116, %v4100, %v4180
    %v4197 = vsel %vm4117, %v4101, %v4181
    %v4198 = vsel %vm4118, %v4102, %v4182
    %v4199 = vsel %vm4119, %v4103, %v4183
    %v4200 = vsel %vm4120, %v4104, %v4184
    %v4201 = vsel %vm4121, %v4105, %v4185
    %v4202 = vsel %vm4122, %v4106, %v4186
    %v4203 = vsel %vm4123, %v4107, %v4187
    %v4204 = vsel %vm4124, %v4108, %v4188
    %v4205 = vsel %vm4125, %v4109, %v4189
    %v4206 = vsel %vm4126, %v4110, %v4190
    %v4207 = vsel %vm4127, %v4111, %v4191
    %v4208 = vsel %vm4128, %v4112, %v4192
    %v4209 = vsel %vm4129, %v4113, %v4193
    %vm4210 = vcmask 195712
    %4211 = vst.msk [vmem:[%s6] sm:$0xff] %vm4210, %v4194
    %4212 = vst.msk [vmem:[%s6 + $0x8] sm:$0xff] %vm4210, %v4195
    %4213 = vst.msk [vmem:[%s6 + $0x10] sm:$0xff] %vm4210, %v4196
    %4214 = vst.msk [vmem:[%s6 + $0x18] sm:$0xff] %vm4210, %v4197
    %4215 = vst.msk [vmem:[%s6 + $0x20] sm:$0xff] %vm4210, %v4198
    %4216 = vst.msk [vmem:[%s6 + $0x28] sm:$0xff] %vm4210, %v4199
    %4217 = vst.msk [vmem:[%s6 + $0x30] sm:$0xff] %vm4210, %v4200
    %4218 = vst.msk [vmem:[%s6 + $0x38] sm:$0xff] %vm4210, %v4201
    %4219 = vst.msk [vmem:[%s6 + $0x40] sm:$0xff] %vm4210, %v4202
    %4220 = vst.msk [vmem:[%s6 + $0x48] sm:$0xff] %vm4210, %v4203
    %4221 = vst.msk [vmem:[%s6 + $0x50] sm:$0xff] %vm4210, %v4204
    %4222 = vst.msk [vmem:[%s6 + $0x58] sm:$0xff] %vm4210, %v4205
    %4223 = vst.msk [vmem:[%s6 + $0x60] sm:$0xff] %vm4210, %v4206
    %4224 = vst.msk [vmem:[%s6 + $0x68] sm:$0xff] %vm4210, %v4207
    %4225 = vst.msk [vmem:[%s6 + $0x70] sm:$0xff] %vm4210, %v4208
    %4226 = vst.msk [vmem:[%s6 + $0x78] sm:$0xff] %vm4210, %v4209
    %4227 = vset.pattern.permute.xlu0 3
    %4228 = vperm.xlu0 %4227, %v3548
    %v4229 = vpop.permute.xlu0 %4228
    %4231 = vset.pattern.permute.xlu0 3
    %4232 = vperm.xlu0 %4231, %v3549
    %v4233 = vpop.permute.xlu0 %4232
    %4235 = vset.pattern.permute.xlu0 3
    %4236 = vperm.xlu0 %4235, %v3550
    %v4237 = vpop.permute.xlu0 %4236
    %4239 = vset.pattern.permute.xlu0 3
    %4240 = vperm.xlu0 %4239, %v3551
    %v4241 = vpop.permute.xlu0 %4240
    %4243 = vset.pattern.permute.xlu0 3
    %4244 = vperm.xlu0 %4243, %v3552
    %v4245 = vpop.permute.xlu0 %4244
    %4247 = vset.pattern.permute.xlu0 3
    %4248 = vperm.xlu0 %4247, %v3553
    %v4249 = vpop.permute.xlu0 %4248
    %4251 = vset.pattern.permute.xlu0 3
    %4252 = vperm.xlu0 %4251, %v3554
    %v4253 = vpop.permute.xlu0 %4252
    %4255 = vset.pattern.permute.xlu0 3
    %4256 = vperm.xlu0 %4255, %v3555
    %v4257 = vpop.permute.xlu0 %4256
    %4259 = vset.pattern.permute.xlu0 3
    %4260 = vperm.xlu0 %4259, %v3556
    %v4261 = vpop.permute.xlu0 %4260
    %4263 = vset.pattern.permute.xlu0 3
    %4264 = vperm.xlu0 %4263, %v3557
    %v4265 = vpop.permute.xlu0 %4264
    %4267 = vset.pattern.permute.xlu0 3
    %4268 = vperm.xlu0 %4267, %v3558
    %v4269 = vpop.permute.xlu0 %4268
    %4271 = vset.pattern.permute.xlu0 3
    %4272 = vperm.xlu0 %4271, %v3559
    %v4273 = vpop.permute.xlu0 %4272
    %4275 = vset.pattern.permute.xlu0 3
    %4276 = vperm.xlu0 %4275, %v3560
    %v4277 = vpop.permute.xlu0 %4276
    %4279 = vset.pattern.permute.xlu0 3
    %4280 = vperm.xlu0 %4279, %v3561
    %v4281 = vpop.permute.xlu0 %4280
    %4283 = vset.pattern.permute.xlu0 3
    %4284 = vperm.xlu0 %4283, %v3562
    %v4285 = vpop.permute.xlu0 %4284
    %4287 = vset.pattern.permute.xlu0 3
    %4288 = vperm.xlu0 %4287, %v3563
    %v4289 = vpop.permute.xlu0 %4288
    %v4291 = vmul.f32 %v3565, %v4229
    %v4292 = vmul.f32 %v3566, %v4233
    %v4293 = vmul.f32 %v3567, %v4237
    %v4294 = vmul.f32 %v3568, %v4241
    %v4295 = vmul.f32 %v3569, %v4245
    %v4296 = vmul.f32 %v3570, %v4249
    %v4297 = vmul.f32 %v3571, %v4253
    %v4298 = vmul.f32 %v3572, %v4257
    %v4299 = vmul.f32 %v3573, %v4261
    %v4300 = vmul.f32 %v3574, %v4265
    %v4301 = vmul.f32 %v3575, %v4269
    %v4302 = vmul.f32 %v3576, %v4273
    %v4303 = vmul.f32 %v3577, %v4277
    %v4304 = vmul.f32 %v3578, %v4281
    %v4305 = vmul.f32 %v3579, %v4285
    %v4306 = vmul.f32 %v3580, %v4289
    %v4307 = vadd.f32 %v4291, %v3678
    %v4308 = vadd.f32 %v4292, %v3678
    %v4309 = vadd.f32 %v4293, %v3678
    %v4310 = vadd.f32 %v4294, %v3678
    %v4311 = vadd.f32 %v4295, %v3678
    %v4312 = vadd.f32 %v4296, %v3678
    %v4313 = vadd.f32 %v4297, %v3678
    %v4314 = vadd.f32 %v4298, %v3678
    %v4315 = vadd.f32 %v4299, %v3678
    %v4316 = vadd.f32 %v4300, %v3678
    %v4317 = vadd.f32 %v4301, %v3678
    %v4318 = vadd.f32 %v4302, %v3678
    %v4319 = vadd.f32 %v4303, %v3678
    %v4320 = vadd.f32 %v4304, %v3678
    %v4321 = vadd.f32 %v4305, %v3678
    %v4322 = vadd.f32 %v4306, %v3678
    %vm4323 = vcmp.gt.f32.partialorder %v4307, 0.0
    %vm4324 = vcmp.gt.f32.partialorder %v4308, 0.0
    %vm4325 = vcmp.gt.f32.partialorder %v4309, 0.0
    %vm4326 = vcmp.gt.f32.partialorder %v4310, 0.0
    %vm4327 = vcmp.gt.f32.partialorder %v4311, 0.0
    %vm4328 = vcmp.gt.f32.partialorder %v4312, 0.0
    %vm4329 = vcmp.gt.f32.partialorder %v4313, 0.0
    %vm4330 = vcmp.gt.f32.partialorder %v4314, 0.0
    %vm4331 = vcmp.gt.f32.partialorder %v4315, 0.0
    %vm4332 = vcmp.gt.f32.partialorder %v4316, 0.0
    %vm4333 = vcmp.gt.f32.partialorder %v4317, 0.0
    %vm4334 = vcmp.gt.f32.partialorder %v4318, 0.0
    %vm4335 = vcmp.gt.f32.partialorder %v4319, 0.0
    %vm4336 = vcmp.gt.f32.partialorder %v4320, 0.0
    %vm4337 = vcmp.gt.f32.partialorder %v4321, 0.0
    %vm4338 = vcmp.gt.f32.partialorder %v4322, 0.0
    %v4339 = vmin.f32 %v4307, 0.0
    %v4340 = vmin.f32 %v4308, 0.0
    %v4341 = vmin.f32 %v4309, 0.0
    %v4342 = vmin.f32 %v4310, 0.0
    %v4343 = vmin.f32 %v4311, 0.0
    %v4344 = vmin.f32 %v4312, 0.0
    %v4345 = vmin.f32 %v4313, 0.0
    %v4346 = vmin.f32 %v4314, 0.0
    %v4347 = vmin.f32 %v4315, 0.0
    %v4348 = vmin.f32 %v4316, 0.0
    %v4349 = vmin.f32 %v4317, 0.0
    %v4350 = vmin.f32 %v4318, 0.0
    %v4351 = vmin.f32 %v4319, 0.0
    %v4352 = vmin.f32 %v4320, 0.0
    %v4353 = vmin.f32 %v4321, 0.0
    %v4354 = vmin.f32 %v4322, 0.0
    %v4355 = vmul.f32 %v4339, 1.442695
    %v4356 = vpow.pop %v4355
    %v4357 = vmul.f32 %v4340, 1.442695
    %v4358 = vpow.pop %v4357
    %v4359 = vmul.f32 %v4341, 1.442695
    %v4360 = vpow.pop %v4359
    %v4361 = vmul.f32 %v4342, 1.442695
    %v4362 = vpow.pop %v4361
    %v4363 = vmul.f32 %v4343, 1.442695
    %v4364 = vpow.pop %v4363
    %v4365 = vmul.f32 %v4344, 1.442695
    %v4366 = vpow.pop %v4365
    %v4367 = vmul.f32 %v4345, 1.442695
    %v4368 = vpow.pop %v4367
    %v4369 = vmul.f32 %v4346, 1.442695
    %v4370 = vpow.pop %v4369
    %v4371 = vmul.f32 %v4347, 1.442695
    %v4372 = vpow.pop %v4371
    %v4373 = vmul.f32 %v4348, 1.442695
    %v4374 = vpow.pop %v4373
    %v4375 = vmul.f32 %v4349, 1.442695
    %v4376 = vpow.pop %v4375
    %v4377 = vmul.f32 %v4350, 1.442695
    %v4378 = vpow.pop %v4377
    %v4379 = vmul.f32 %v4351, 1.442695
    %v4380 = vpow.pop %v4379
    %v4381 = vmul.f32 %v4352, 1.442695
    %v4382 = vpow.pop %v4381
    %v4383 = vmul.f32 %v4353, 1.442695
    %v4384 = vpow.pop %v4383
    %v4385 = vmul.f32 %v4354, 1.442695
    %v4386 = vpow.pop %v4385
    %v4387 = vsub.f32 %v4356, 1.0
    %v4388 = vsub.f32 %v4358, 1.0
    %v4389 = vsub.f32 %v4360, 1.0
    %v4390 = vsub.f32 %v4362, 1.0
    %v4391 = vsub.f32 %v4364, 1.0
    %v4392 = vsub.f32 %v4366, 1.0
    %v4393 = vsub.f32 %v4368, 1.0
    %v4394 = vsub.f32 %v4370, 1.0
    %v4395 = vsub.f32 %v4372, 1.0
    %v4396 = vsub.f32 %v4374, 1.0
    %v4397 = vsub.f32 %v4376, 1.0
    %v4398 = vsub.f32 %v4378, 1.0
    %v4399 = vsub.f32 %v4380, 1.0
    %v4400 = vsub.f32 %v4382, 1.0
    %v4401 = vsub.f32 %v4384, 1.0
    %v4402 = vsub.f32 %v4386, 1.0
    %v4403 = vsel %vm4323, %v4307, %v4387
    %v4404 = vsel %vm4324, %v4308, %v4388
    %v4405 = vsel %vm4325, %v4309, %v4389
    %v4406 = vsel %vm4326, %v4310, %v4390
    %v4407 = vsel %vm4327, %v4311, %v4391
    %v4408 = vsel %vm4328, %v4312, %v4392
    %v4409 = vsel %vm4329, %v4313, %v4393
    %v4410 = vsel %vm4330, %v4314, %v4394
    %v4411 = vsel %vm4331, %v4315, %v4395
    %v4412 = vsel %vm4332, %v4316, %v4396
    %v4413 = vsel %vm4333, %v4317, %v4397
    %v4414 = vsel %vm4334, %v4318, %v4398
    %v4415 = vsel %vm4335, %v4319, %v4399
    %v4416 = vsel %vm4336, %v4320, %v4400
    %v4417 = vsel %vm4337, %v4321, %v4401
    %v4418 = vsel %vm4338, %v4322, %v4402
    %vm4419 = vcmask 261312
    %4420 = vst.msk [vmem:[%s6] sm:$0xff] %vm4419, %v4403
    %4421 = vst.msk [vmem:[%s6 + $0x8] sm:$0xff] %vm4419, %v4404
    %4422 = vst.msk [vmem:[%s6 + $0x10] sm:$0xff] %vm4419, %v4405
    %4423 = vst.msk [vmem:[%s6 + $0x18] sm:$0xff] %vm4419, %v4406
    %4424 = vst.msk [vmem:[%s6 + $0x20] sm:$0xff] %vm4419, %v4407
    %4425 = vst.msk [vmem:[%s6 + $0x28] sm:$0xff] %vm4419, %v4408
    %4426 = vst.msk [vmem:[%s6 + $0x30] sm:$0xff] %vm4419, %v4409
    %4427 = vst.msk [vmem:[%s6 + $0x38] sm:$0xff] %vm4419, %v4410
    %4428 = vst.msk [vmem:[%s6 + $0x40] sm:$0xff] %vm4419, %v4411
    %4429 = vst.msk [vmem:[%s6 + $0x48] sm:$0xff] %vm4419, %v4412
    %4430 = vst.msk [vmem:[%s6 + $0x50] sm:$0xff] %vm4419, %v4413
    %4431 = vst.msk [vmem:[%s6 + $0x58] sm:$0xff] %vm4419, %v4414
    %4432 = vst.msk [vmem:[%s6 + $0x60] sm:$0xff] %vm4419, %v4415
    %4433 = vst.msk [vmem:[%s6 + $0x68] sm:$0xff] %vm4419, %v4416
    %4434 = vst.msk [vmem:[%s6 + $0x70] sm:$0xff] %vm4419, %v4417
    %4435 = vst.msk [vmem:[%s6 + $0x78] sm:$0xff] %vm4419, %v4418
  $region33: #{_gat_forward.5} parent=0 // pred_fallthru
    _
  // Predicated region
  $region34: #{_gat_forward.5} parent=0 // pred_check
    _
  $region35: #{_gat_forward.5} parent=0 // pred_check_branch
    %4437 = sbr.rel (0) target = $region37
  $region36: #{_gat_forward.5} parent=0 // pred_region
    _
  $region37: #{_gat_forward.5} parent=0 // pred_fallthru
    _
  // Predicated region
  $region38: #{_gat_forward.5} parent=0 // pred_check
    _
  $region39: #{_gat_forward.5} parent=0 // pred_check_branch
    %4439 = sbr.rel (0) target = $region41
  $region40: #{_gat_forward.5} parent=0 // pred_region
    _
  $region41: #{_gat_forward.5} parent=0 // pred_fallthru
    _

</llo_original>
